<compile_context>
chip_gen: v7x
topology: tpu7x:2x2x1
jax: 0.10.0
libtpu: 0.0.40
codegen_flags: <defaults>
</compile_context>

<pallas_src>
import numpy as np

import jax
import jax.numpy as jnp
from jax import lax
from jax.experimental import pallas as pl
from jax.experimental.pallas import tpu as pltpu

# ---------------------------------------------------------------------------
# Static LeNet-5 / MNIST geometry (the PyTorch module hard-codes 28x28 input)
# ---------------------------------------------------------------------------
TILE_B = 8                    # samples per grid step (multiple of 8 sublanes)
KH = KW = 5                   # conv kernel size
IN_HW = 28                    # MNIST spatial size
PAD_HW = IN_HW + 4            # conv1 has padding=2  -> 32
H1 = PAD_HW - KH + 1          # 28  conv1 output spatial
OC1 = 6
H1P = H1 // 2                 # 14  pool1 output spatial
H2 = H1P - KH + 1             # 10  conv2 output spatial
OC2 = 16
H2P = H2 // 2                 # 5   pool2 output spatial


# ---------------------------------------------------------------------------
# Host-side (one-time) weight re-layout helpers
# ---------------------------------------------------------------------------
def _banded_conv_weight(w, in_w):
    """Fold the kernel-width + input-channel contraction of a conv into banded
    matmul weights, one matrix per kernel row.

    w: (OC, C, KH, KW)  ->  band: (KH, in_w*C, out_w*OC) with
    band[ki, x*C + c, ow*OC + oc] = w[oc, c, ki, x - ow]  for 0 <= x - ow < KW.
    """
    w = np.asarray(w, np.float32)
    oc_n, c_n, kh, kw = w.shape
    out_w = in_w - kw + 1
    band = np.zeros((kh, in_w * c_n, out_w * oc_n), np.float32)
    for ki in range(kh):
        for ow in range(out_w):
            for kj in range(kw):
                x = ow + kj
                band[ki, x * c_n:(x + 1) * c_n,
                     ow * oc_n:(ow + 1) * oc_n] = w[:, :, ki, kj].T
    return band


def _height_pool(n):
    """(n//2, n) matrix: 0.5 where column//2 == row (stride-2 pair average)."""
    r = np.arange(n // 2)[:, None]
    c = np.arange(n)[None, :]
    return ((c // 2) == r).astype(np.float32) * 0.5


def _width_pool(n_w, n_c):
    """(n_w*n_c, (n_w//2)*n_c) matrix: stride-2 pair average over the width of a
    width-channel-interleaved lane axis (lane index = w*n_c + c)."""
    m = np.zeros((n_w * n_c, (n_w // 2) * n_c), np.float32)
    for w in range(n_w):
        for c in range(n_c):
            m[w * n_c + c, (w // 2) * n_c + c] = 0.5
    return m


def prepare_params(params):
    """Convert PyTorch-layout parameters into the fused kernel's layout (bf16)."""
    bf16 = jnp.bfloat16
    f32 = jnp.float32
    c1w = np.asarray(params["conv1_w"], np.float32)
    c2w = np.asarray(params["conv2_w"], np.float32)

    # fc1 rows are in torch .view order (oc, i, j); re-order to the kernel's
    # pooled layout (i, j*OC2 + oc) so no in-kernel reshuffle is needed.
    f1w = np.asarray(params["fc1_w"], np.float32)                # (400, 120)
    n_fc1 = f1w.shape[1]
    f1w = f1w.reshape(OC2, H2P, H2P, n_fc1).transpose(1, 2, 0, 3)
    f1w = f1w.reshape(H2P, H2P * OC2, n_fc1)                     # (5, 80, 120)

    kp = {
        "w1_band": jnp.asarray(_banded_conv_weight(c1w, PAD_HW), bf16),
        "b1_lane": jnp.asarray(
            np.tile(np.asarray(params["conv1_b"], np.float32), H1))[None, :],
        "hp1": jnp.asarray(_height_pool(H1), bf16),              # (14, 28)
        "wp1": jnp.asarray(_width_pool(H1, OC1), bf16),          # (168, 84)
        "w2_band": jnp.asarray(_banded_conv_weight(c2w, H1P), bf16),
        "b2_lane": jnp.asarray(
            np.tile(np.asarray(params["conv2_b"], np.float32), H2))[None, :],
        "hp2": jnp.asarray(_height_pool(H2), bf16),              # (5, 10)
        "wp2": jnp.asarray(_width_pool(H2, OC2), bf16),          # (160, 80)
        "w_fc1": jnp.asarray(f1w, bf16),                         # (5, 80, 120)
        "b_fc1": jnp.asarray(params["fc1_b"], f32)[None, :],
        "w_fc2": jnp.asarray(params["fc2_w"], bf16),
        "b_fc2": jnp.asarray(params["fc2_b"], f32)[None, :],
        "w_fc3": jnp.asarray(params["fc3_w"], bf16),
        "b_fc3": jnp.asarray(params["fc3_b"], f32)[None, :],
    }
    return kp


# ---------------------------------------------------------------------------
# The fused Pallas kernel: whole LeNet-5 forward for one batch tile
# ---------------------------------------------------------------------------
def _lenet_kernel(x_ref, w1b_ref, b1_ref, hp1_ref, wp1_ref,
                  w2b_ref, b2_ref, hp2_ref, wp2_ref,
                  wf1_ref, bf1_ref, wf2_ref, bf2_ref, wf3_ref, bf3_ref,
                  o_ref):
    f32 = jnp.float32
    bf16 = jnp.bfloat16

    feats = []                                   # per-sample pooled2 (5, 80) f32
    for b in range(TILE_B):
        xb = x_ref[b * PAD_HW:(b + 1) * PAD_HW, :]          # (32, 32*C) bf16
        # conv1 + bias + ReLU -> (28, 28*6); lane index = ow*6 + oc
        y1 = jnp.dot(xb[0:H1, :], w1b_ref[0], preferred_element_type=f32)
        for ki in range(1, KH):
            y1 = y1 + jnp.dot(xb[ki:ki + H1, :], w1b_ref[ki],
                              preferred_element_type=f32)
        y1 = jnp.maximum(y1 + b1_ref[...], 0.0).astype(bf16)
        # 2x2 average pool -> (14, 14*6)
        p1 = jnp.dot(hp1_ref[...], y1, preferred_element_type=f32)
        p1 = jnp.dot(p1.astype(bf16), wp1_ref[...], preferred_element_type=f32)
        p1 = p1.astype(bf16)
        # conv2 + bias + ReLU -> (10, 10*16); lane index = ow*16 + oc
        y2 = jnp.dot(p1[0:H2, :], w2b_ref[0], preferred_element_type=f32)
        for ki in range(1, KH):
            y2 = y2 + jnp.dot(p1[ki:ki + H2, :], w2b_ref[ki],
                              preferred_element_type=f32)
        y2 = jnp.maximum(y2 + b2_ref[...], 0.0).astype(bf16)
        # 2x2 average pool -> (5, 5*16)
        p2 = jnp.dot(hp2_ref[...], y2, preferred_element_type=f32)
        p2 = jnp.dot(p2.astype(bf16), wp2_ref[...], preferred_element_type=f32)
        feats.append(p2)

    # fc1: torch's flatten is folded into wf1's row layout; contract the 5
    # pooled "height" slabs, batched over the TILE_B samples of this grid step.
    n_fc1 = wf1_ref.shape[2]
    h1 = jnp.zeros((TILE_B, n_fc1), f32)
    for i in range(H2P):
        a_i = jnp.concatenate([f[i:i + 1, :] for f in feats], axis=0)  # (TB, 80)
        h1 = h1 + jnp.dot(a_i.astype(bf16), wf1_ref[i],
                          preferred_element_type=f32)
    h1 = jnp.maximum(h1 + bf1_ref[...], 0.0).astype(bf16)
    # fc2 + ReLU, fc3 (no ReLU)
    h2 = jnp.dot(h1, wf2_ref[...], preferred_element_type=f32) + bf2_ref[...]
    h2 = jnp.maximum(h2, 0.0).astype(bf16)
    logits = jnp.dot(h2, wf3_ref[...], preferred_element_type=f32) + bf3_ref[...]
    o_ref[...] = logits.astype(o_ref.dtype)


# ---------------------------------------------------------------------------
# Forward wrapper (single pallas_call)
# ---------------------------------------------------------------------------
@jax.jit
def lenet5_forward(kparams, x):
    """x: (B, 784) flat MNIST (or (B, C, 28, 28)); returns (B, num_classes)."""
    c_in = kparams["w1_band"].shape[1] // PAD_HW
    n_cls = kparams["w_fc3"].shape[1]
    B = x.shape[0]
    if x.ndim == 2:
        x = x.reshape(B, c_in, IN_HW, IN_HW)     # handles both 1- and 3-channel
    x = x.astype(jnp.float32)

    # Pad batch to a multiple of TILE_B and spatial by 2 (conv1 padding=2).
    Bp = ((B + TILE_B - 1) // TILE_B) * TILE_B
    x = jnp.pad(x, ((0, Bp - B), (0, 0), (2, 2), (2, 2)))
    # Channels-last interleaved 2-D layout: row = b*32 + h, lane = w*C + c.
    x2d = jnp.transpose(x, (0, 2, 3, 1)).reshape(Bp * PAD_HW, PAD_HW * c_in)
    x2d = x2d.astype(jnp.bfloat16)

    weights = [kparams[k] for k in
               ("w1_band", "b1_lane", "hp1", "wp1", "w2_band", "b2_lane",
                "hp2", "wp2", "w_fc1", "b_fc1", "w_fc2", "b_fc2",
                "w_fc3", "b_fc3")]

    def _full_spec(arr):
        nd = arr.ndim
        return pl.BlockSpec(arr.shape, lambda i: (0,) * nd)

    in_specs = [pl.BlockSpec((TILE_B * PAD_HW, PAD_HW * c_in), lambda i: (i, 0))]
    in_specs += [_full_spec(w) for w in weights]
    out_specs = pl.BlockSpec((TILE_B, n_cls), lambda i: (i, 0))

    # Advisory cost estimate (MACs of every matmul in the fused kernel).
    macs = (KH * H1 * (PAD_HW * c_in) * (H1 * OC1)
            + H1P * H1 * (H1 * OC1) + H1P * (H1 * OC1) * (H1P * OC1)
            + KH * H2 * (H1P * OC1) * (H2 * OC2)
            + H2P * H2 * (H2 * OC2) + H2P * (H2 * OC2) * (H2P * OC2)
            + (H2P * H2P * OC2) * kparams["w_fc1"].shape[2]
            + kparams["w_fc2"].shape[0] * kparams["w_fc2"].shape[1]
            + kparams["w_fc3"].shape[0] * n_cls)
    bytes_accessed = int(x2d.size * 2 + Bp * n_cls * 4 +
                         sum(int(np.prod(w.shape)) * w.dtype.itemsize
                             for w in weights))
    cost = pl.CostEstimate(flops=int(2 * Bp * macs), transcendentals=0,
                           bytes_accessed=bytes_accessed)

    out = pl.pallas_call(
        _lenet_kernel,
        out_shape=jax.ShapeDtypeStruct((Bp, n_cls), jnp.float32),
        grid=(Bp // TILE_B,),
        in_specs=in_specs,
        out_specs=out_specs,
        compiler_params=pltpu.CompilerParams(
            dimension_semantics=("parallel",),
            vmem_limit_bytes=32 * 1024 * 1024),
        cost_estimate=cost,
    )(x2d, *weights)
    return out[:B]


# ---------------------------------------------------------------------------
# Parameter init (PyTorch-layout) and a pure-JAX fp32 reference for checking
# ---------------------------------------------------------------------------
def init_params(key, num_classes=10, in_channels=1):
    ks = jax.random.split(key, 10)
    scale = 0.05
    return {
        "conv1_w": scale * jax.random.normal(ks[0], (6, in_channels, 5, 5), jnp.float32),
        "conv1_b": scale * jax.random.normal(ks[1], (6,), jnp.float32),
        "conv2_w": scale * jax.random.normal(ks[2], (16, 6, 5, 5), jnp.float32),
        "conv2_b": scale * jax.random.normal(ks[3], (16,), jnp.float32),
        "fc1_w": scale * jax.random.normal(ks[4], (400, 120), jnp.float32),
        "fc1_b": scale * jax.random.normal(ks[5], (120,), jnp.float32),
        "fc2_w": scale * jax.random.normal(ks[6], (120, 84), jnp.float32),
        "fc2_b": scale * jax.random.normal(ks[7], (84,), jnp.float32),
        "fc3_w": scale * jax.random.normal(ks[8], (84, num_classes), jnp.float32),
        "fc3_b": scale * jax.random.normal(ks[9], (num_classes,), jnp.float32),
    }


def lenet5_reference(params, x):
    B = x.shape[0]
    c_in = params["conv1_w"].shape[1]
    if x.ndim == 2:
        x = x.reshape(B, c_in, IN_HW, IN_HW)
    v = x.astype(jnp.float32)

    def conv(v, w, b, pad):
        dn = lax.conv_dimension_numbers(v.shape, w.shape, ("NCHW", "OIHW", "NCHW"))
        y = lax.conv_general_dilated(v, w, (1, 1), [(pad, pad), (pad, pad)],
                                     dimension_numbers=dn)
        return y + b[None, :, None, None]

    def avgpool(v):
        return 0.25 * (v[:, :, 0::2, 0::2] + v[:, :, 0::2, 1::2]
                       + v[:, :, 1::2, 0::2] + v[:, :, 1::2, 1::2])

    v = jnp.maximum(conv(v, params["conv1_w"], params["conv1_b"], 2), 0.0)
    v = avgpool(v)
    v = jnp.maximum(conv(v, params["conv2_w"], params["conv2_b"], 0), 0.0)
    v = avgpool(v)
    v = v.reshape(B, -1)
    v = jnp.maximum(v @ params["fc1_w"] + params["fc1_b"], 0.0)
    v = jnp.maximum(v @ params["fc2_w"] + params["fc2_b"], 0.0)
    return v @ params["fc3_w"] + params["fc3_b"]


if __name__ == "__main__":
    key = jax.random.PRNGKey(0)
    pkey, xkey = jax.random.split(key)
    params = init_params(pkey)                  # feature_dim=784 -> 1 channel
    kparams = prepare_params(params)

    x = jax.random.normal(xkey, (2, 784), jnp.float32)   # small flat MNIST batch

    out = jax.block_until_ready(lenet5_forward(kparams, x))
    assert out.shape == (2, 10), out.shape
    assert out.dtype == jnp.float32

    # Sanity check vs a pure-JAX fp32 reference; the kernel uses bf16 MXU inputs
    # with fp32 accumulation, so compare with a scale-aware tolerance.
    ref = jax.block_until_ready(lenet5_reference(params, x))
    scale = float(jnp.max(jnp.abs(ref))) + 1e-6
    err = float(jnp.max(jnp.abs(out - ref)))
    assert err <= 0.1 * scale + 1e-5, (err, scale)

    print("KERNEL_OK")
</pallas_src>

<mosaic_0001>
module attributes {stable_mosaic.version = 11 : i64} {
  func.func @_lenet_kernel(%arg0: i32, %arg1: memref<256x32xbf16, #tpu.memory_space<vmem>>, %arg2: memref<5x32x168xbf16, #tpu.memory_space<vmem>>, %arg3: memref<1x168xf32, #tpu.memory_space<vmem>>, %arg4: memref<14x28xbf16, #tpu.memory_space<vmem>>, %arg5: memref<168x84xbf16, #tpu.memory_space<vmem>>, %arg6: memref<5x84x160xbf16, #tpu.memory_space<vmem>>, %arg7: memref<1x160xf32, #tpu.memory_space<vmem>>, %arg8: memref<5x10xbf16, #tpu.memory_space<vmem>>, %arg9: memref<160x80xbf16, #tpu.memory_space<vmem>>, %arg10: memref<5x80x120xbf16, #tpu.memory_space<vmem>>, %arg11: memref<1x120xf32, #tpu.memory_space<vmem>>, %arg12: memref<120x84xbf16, #tpu.memory_space<vmem>>, %arg13: memref<1x84xf32, #tpu.memory_space<vmem>>, %arg14: memref<84x10xbf16, #tpu.memory_space<vmem>>, %arg15: memref<1x10xf32, #tpu.memory_space<vmem>>, %arg16: memref<8x10xf32, #tpu.memory_space<vmem>>) attributes {dimension_semantics = [#tpu.dimension_semantics<parallel>], iteration_bounds = array<i64: 1>, scalar_prefetch = 0 : i64, scratch_operands = 0 : i64, tpu.core_type = #tpu.core_type<tc>, window_params = [{transform_indices = @transform_0, window_bounds = array<i64: 256, 32>}, {pipeline_mode = #tpu.pipeline_mode<synchronous>, transform_indices = @transform_1, window_bounds = array<i64: 5, 32, 168>}, {pipeline_mode = #tpu.pipeline_mode<synchronous>, transform_indices = @transform_2, window_bounds = array<i64: 1, 168>}, {pipeline_mode = #tpu.pipeline_mode<synchronous>, transform_indices = @transform_3, window_bounds = array<i64: 14, 28>}, {pipeline_mode = #tpu.pipeline_mode<synchronous>, transform_indices = @transform_4, window_bounds = array<i64: 168, 84>}, {pipeline_mode = #tpu.pipeline_mode<synchronous>, transform_indices = @transform_5, window_bounds = array<i64: 5, 84, 160>}, {pipeline_mode = #tpu.pipeline_mode<synchronous>, transform_indices = @transform_6, window_bounds = array<i64: 1, 160>}, {pipeline_mode = #tpu.pipeline_mode<synchronous>, transform_indices = @transform_7, window_bounds = array<i64: 5, 10>}, {pipeline_mode = #tpu.pipeline_mode<synchronous>, transform_indices = @transform_8, window_bounds = array<i64: 160, 80>}, {pipeline_mode = #tpu.pipeline_mode<synchronous>, transform_indices = @transform_9, window_bounds = array<i64: 5, 80, 120>}, {pipeline_mode = #tpu.pipeline_mode<synchronous>, transform_indices = @transform_10, window_bounds = array<i64: 1, 120>}, {pipeline_mode = #tpu.pipeline_mode<synchronous>, transform_indices = @transform_11, window_bounds = array<i64: 120, 84>}, {pipeline_mode = #tpu.pipeline_mode<synchronous>, transform_indices = @transform_12, window_bounds = array<i64: 1, 84>}, {pipeline_mode = #tpu.pipeline_mode<synchronous>, transform_indices = @transform_13, window_bounds = array<i64: 84, 10>}, {pipeline_mode = #tpu.pipeline_mode<synchronous>, transform_indices = @transform_14, window_bounds = array<i64: 1, 10>}, {transform_indices = @transform_15, window_bounds = array<i64: 8, 10>}]} {
    %c0 = arith.constant 0 : index
    %c0_0 = arith.constant 0 : index
    %0 = vector.load %arg1[%c0, %c0_0] : memref<256x32xbf16, #tpu.memory_space<vmem>>, vector<32x32xbf16>
    %1 = vector.extract_strided_slice %0 {offsets = [0, 0], sizes = [28, 32], strides = [1, 1]} : vector<32x32xbf16> to vector<28x32xbf16>
    %c0_1 = arith.constant 0 : index
    %c0_2 = arith.constant 0 : index
    %c0_3 = arith.constant 0 : index
    %2 = vector.load %arg2[%c0_1, %c0_2, %c0_3] : memref<5x32x168xbf16, #tpu.memory_space<vmem>>, vector<1x32x168xbf16>
    %3 = vector.shape_cast %2 : vector<1x32x168xbf16> to vector<32x168xbf16>
    %cst = arith.constant dense<0.000000e+00> : vector<28x168xf32>
    %4 = tpu.matmul %1, %3, %cst {dimension_numbers = #tpu.dot_dimension_numbers<[1], [0], [0], [1], [0, 0, 1, 1], [], []>} : vector<28x32xbf16>, vector<32x168xbf16>, vector<28x168xf32> -> vector<28x168xf32>
    %5 = vector.extract_strided_slice %0 {offsets = [1, 0], sizes = [28, 32], strides = [1, 1]} : vector<32x32xbf16> to vector<28x32xbf16>
    %c1 = arith.constant 1 : index
    %c0_4 = arith.constant 0 : index
    %c0_5 = arith.constant 0 : index
    %6 = vector.load %arg2[%c1, %c0_4, %c0_5] : memref<5x32x168xbf16, #tpu.memory_space<vmem>>, vector<1x32x168xbf16>
    %7 = vector.shape_cast %6 : vector<1x32x168xbf16> to vector<32x168xbf16>
    %cst_6 = arith.constant dense<0.000000e+00> : vector<28x168xf32>
    %8 = tpu.matmul %5, %7, %cst_6 {dimension_numbers = #tpu.dot_dimension_numbers<[1], [0], [0], [1], [0, 0, 1, 1], [], []>} : vector<28x32xbf16>, vector<32x168xbf16>, vector<28x168xf32> -> vector<28x168xf32>
    %9 = arith.addf %4, %8 : vector<28x168xf32>
    %10 = vector.extract_strided_slice %0 {offsets = [2, 0], sizes = [28, 32], strides = [1, 1]} : vector<32x32xbf16> to vector<28x32xbf16>
    %c2 = arith.constant 2 : index
    %c0_7 = arith.constant 0 : index
    %c0_8 = arith.constant 0 : index
    %11 = vector.load %arg2[%c2, %c0_7, %c0_8] : memref<5x32x168xbf16, #tpu.memory_space<vmem>>, vector<1x32x168xbf16>
    %12 = vector.shape_cast %11 : vector<1x32x168xbf16> to vector<32x168xbf16>
    %cst_9 = arith.constant dense<0.000000e+00> : vector<28x168xf32>
    %13 = tpu.matmul %10, %12, %cst_9 {dimension_numbers = #tpu.dot_dimension_numbers<[1], [0], [0], [1], [0, 0, 1, 1], [], []>} : vector<28x32xbf16>, vector<32x168xbf16>, vector<28x168xf32> -> vector<28x168xf32>
    %14 = arith.addf %9, %13 : vector<28x168xf32>
    %15 = vector.extract_strided_slice %0 {offsets = [3, 0], sizes = [28, 32], strides = [1, 1]} : vector<32x32xbf16> to vector<28x32xbf16>
    %c3 = arith.constant 3 : index
    %c0_10 = arith.constant 0 : index
    %c0_11 = arith.constant 0 : index
    %16 = vector.load %arg2[%c3, %c0_10, %c0_11] : memref<5x32x168xbf16, #tpu.memory_space<vmem>>, vector<1x32x168xbf16>
    %17 = vector.shape_cast %16 : vector<1x32x168xbf16> to vector<32x168xbf16>
    %cst_12 = arith.constant dense<0.000000e+00> : vector<28x168xf32>
    %18 = tpu.matmul %15, %17, %cst_12 {dimension_numbers = #tpu.dot_dimension_numbers<[1], [0], [0], [1], [0, 0, 1, 1], [], []>} : vector<28x32xbf16>, vector<32x168xbf16>, vector<28x168xf32> -> vector<28x168xf32>
    %19 = arith.addf %14, %18 : vector<28x168xf32>
    %20 = vector.extract_strided_slice %0 {offsets = [4, 0], sizes = [28, 32], strides = [1, 1]} : vector<32x32xbf16> to vector<28x32xbf16>
    %c4 = arith.constant 4 : index
    %c0_13 = arith.constant 0 : index
    %c0_14 = arith.constant 0 : index
    %21 = vector.load %arg2[%c4, %c0_13, %c0_14] : memref<5x32x168xbf16, #tpu.memory_space<vmem>>, vector<1x32x168xbf16>
    %22 = vector.shape_cast %21 : vector<1x32x168xbf16> to vector<32x168xbf16>
    %cst_15 = arith.constant dense<0.000000e+00> : vector<28x168xf32>
    %23 = tpu.matmul %20, %22, %cst_15 {dimension_numbers = #tpu.dot_dimension_numbers<[1], [0], [0], [1], [0, 0, 1, 1], [], []>} : vector<28x32xbf16>, vector<32x168xbf16>, vector<28x168xf32> -> vector<28x168xf32>
    %24 = arith.addf %19, %23 : vector<28x168xf32>
    %c0_16 = arith.constant 0 : index
    %c0_17 = arith.constant 0 : index
    %25 = vector.load %arg3[%c0_16, %c0_17] : memref<1x168xf32, #tpu.memory_space<vmem>>, vector<1x168xf32>
    %26 = vector.broadcast %25 : vector<1x168xf32> to vector<28x168xf32>
    %27 = arith.addf %24, %26 : vector<28x168xf32>
    %cst_18 = arith.constant 0.000000e+00 : f32
    %28 = vector.broadcast %cst_18 : f32 to vector<28x168xf32>
    %29 = arith.maximumf %27, %28 : vector<28x168xf32>
    %30 = arith.truncf %29 : vector<28x168xf32> to vector<28x168xbf16>
    %c0_19 = arith.constant 0 : index
    %c0_20 = arith.constant 0 : index
    %31 = vector.load %arg4[%c0_19, %c0_20] : memref<14x28xbf16, #tpu.memory_space<vmem>>, vector<14x28xbf16>
    %cst_21 = arith.constant dense<0.000000e+00> : vector<14x168xf32>
    %32 = tpu.matmul %31, %30, %cst_21 {dimension_numbers = #tpu.dot_dimension_numbers<[1], [0], [0], [1], [0, 0, 1, 1], [], []>} : vector<14x28xbf16>, vector<28x168xbf16>, vector<14x168xf32> -> vector<14x168xf32>
    %33 = arith.truncf %32 : vector<14x168xf32> to vector<14x168xbf16>
    %c0_22 = arith.constant 0 : index
    %c0_23 = arith.constant 0 : index
    %34 = vector.load %arg5[%c0_22, %c0_23] : memref<168x84xbf16, #tpu.memory_space<vmem>>, vector<168x84xbf16>
    %cst_24 = arith.constant dense<0.000000e+00> : vector<14x84xf32>
    %35 = tpu.matmul %33, %34, %cst_24 {dimension_numbers = #tpu.dot_dimension_numbers<[1], [0], [0], [1], [0, 0, 1, 1], [], []>} : vector<14x168xbf16>, vector<168x84xbf16>, vector<14x84xf32> -> vector<14x84xf32>
    %36 = arith.truncf %35 : vector<14x84xf32> to vector<14x84xbf16>
    %37 = vector.extract_strided_slice %36 {offsets = [0, 0], sizes = [10, 84], strides = [1, 1]} : vector<14x84xbf16> to vector<10x84xbf16>
    %c0_25 = arith.constant 0 : index
    %c0_26 = arith.constant 0 : index
    %c0_27 = arith.constant 0 : index
    %38 = vector.load %arg6[%c0_25, %c0_26, %c0_27] : memref<5x84x160xbf16, #tpu.memory_space<vmem>>, vector<1x84x160xbf16>
    %39 = vector.shape_cast %38 : vector<1x84x160xbf16> to vector<84x160xbf16>
    %cst_28 = arith.constant dense<0.000000e+00> : vector<10x160xf32>
    %40 = tpu.matmul %37, %39, %cst_28 {dimension_numbers = #tpu.dot_dimension_numbers<[1], [0], [0], [1], [0, 0, 1, 1], [], []>} : vector<10x84xbf16>, vector<84x160xbf16>, vector<10x160xf32> -> vector<10x160xf32>
    %41 = vector.extract_strided_slice %36 {offsets = [1, 0], sizes = [10, 84], strides = [1, 1]} : vector<14x84xbf16> to vector<10x84xbf16>
    %c1_29 = arith.constant 1 : index
    %c0_30 = arith.constant 0 : index
    %c0_31 = arith.constant 0 : index
    %42 = vector.load %arg6[%c1_29, %c0_30, %c0_31] : memref<5x84x160xbf16, #tpu.memory_space<vmem>>, vector<1x84x160xbf16>
    %43 = vector.shape_cast %42 : vector<1x84x160xbf16> to vector<84x160xbf16>
    %cst_32 = arith.constant dense<0.000000e+00> : vector<10x160xf32>
    %44 = tpu.matmul %41, %43, %cst_32 {dimension_numbers = #tpu.dot_dimension_numbers<[1], [0], [0], [1], [0, 0, 1, 1], [], []>} : vector<10x84xbf16>, vector<84x160xbf16>, vector<10x160xf32> -> vector<10x160xf32>
    %45 = arith.addf %40, %44 : vector<10x160xf32>
    %46 = vector.extract_strided_slice %36 {offsets = [2, 0], sizes = [10, 84], strides = [1, 1]} : vector<14x84xbf16> to vector<10x84xbf16>
    %c2_33 = arith.constant 2 : index
    %c0_34 = arith.constant 0 : index
    %c0_35 = arith.constant 0 : index
    %47 = vector.load %arg6[%c2_33, %c0_34, %c0_35] : memref<5x84x160xbf16, #tpu.memory_space<vmem>>, vector<1x84x160xbf16>
    %48 = vector.shape_cast %47 : vector<1x84x160xbf16> to vector<84x160xbf16>
    %cst_36 = arith.constant dense<0.000000e+00> : vector<10x160xf32>
    %49 = tpu.matmul %46, %48, %cst_36 {dimension_numbers = #tpu.dot_dimension_numbers<[1], [0], [0], [1], [0, 0, 1, 1], [], []>} : vector<10x84xbf16>, vector<84x160xbf16>, vector<10x160xf32> -> vector<10x160xf32>
    %50 = arith.addf %45, %49 : vector<10x160xf32>
    %51 = vector.extract_strided_slice %36 {offsets = [3, 0], sizes = [10, 84], strides = [1, 1]} : vector<14x84xbf16> to vector<10x84xbf16>
    %c3_37 = arith.constant 3 : index
    %c0_38 = arith.constant 0 : index
    %c0_39 = arith.constant 0 : index
    %52 = vector.load %arg6[%c3_37, %c0_38, %c0_39] : memref<5x84x160xbf16, #tpu.memory_space<vmem>>, vector<1x84x160xbf16>
    %53 = vector.shape_cast %52 : vector<1x84x160xbf16> to vector<84x160xbf16>
    %cst_40 = arith.constant dense<0.000000e+00> : vector<10x160xf32>
    %54 = tpu.matmul %51, %53, %cst_40 {dimension_numbers = #tpu.dot_dimension_numbers<[1], [0], [0], [1], [0, 0, 1, 1], [], []>} : vector<10x84xbf16>, vector<84x160xbf16>, vector<10x160xf32> -> vector<10x160xf32>
    %55 = arith.addf %50, %54 : vector<10x160xf32>
    %56 = vector.extract_strided_slice %36 {offsets = [4, 0], sizes = [10, 84], strides = [1, 1]} : vector<14x84xbf16> to vector<10x84xbf16>
    %c4_41 = arith.constant 4 : index
    %c0_42 = arith.constant 0 : index
    %c0_43 = arith.constant 0 : index
    %57 = vector.load %arg6[%c4_41, %c0_42, %c0_43] : memref<5x84x160xbf16, #tpu.memory_space<vmem>>, vector<1x84x160xbf16>
    %58 = vector.shape_cast %57 : vector<1x84x160xbf16> to vector<84x160xbf16>
    %cst_44 = arith.constant dense<0.000000e+00> : vector<10x160xf32>
    %59 = tpu.matmul %56, %58, %cst_44 {dimension_numbers = #tpu.dot_dimension_numbers<[1], [0], [0], [1], [0, 0, 1, 1], [], []>} : vector<10x84xbf16>, vector<84x160xbf16>, vector<10x160xf32> -> vector<10x160xf32>
    %60 = arith.addf %55, %59 : vector<10x160xf32>
    %c0_45 = arith.constant 0 : index
    %c0_46 = arith.constant 0 : index
    %61 = vector.load %arg7[%c0_45, %c0_46] : memref<1x160xf32, #tpu.memory_space<vmem>>, vector<1x160xf32>
    %62 = vector.broadcast %61 : vector<1x160xf32> to vector<10x160xf32>
    %63 = arith.addf %60, %62 : vector<10x160xf32>
    %cst_47 = arith.constant 0.000000e+00 : f32
    %64 = vector.broadcast %cst_47 : f32 to vector<10x160xf32>
    %65 = arith.maximumf %63, %64 : vector<10x160xf32>
    %66 = arith.truncf %65 : vector<10x160xf32> to vector<10x160xbf16>
    %c0_48 = arith.constant 0 : index
    %c0_49 = arith.constant 0 : index
    %67 = vector.load %arg8[%c0_48, %c0_49] : memref<5x10xbf16, #tpu.memory_space<vmem>>, vector<5x10xbf16>
    %cst_50 = arith.constant dense<0.000000e+00> : vector<5x160xf32>
    %68 = tpu.matmul %67, %66, %cst_50 {dimension_numbers = #tpu.dot_dimension_numbers<[1], [0], [0], [1], [0, 0, 1, 1], [], []>} : vector<5x10xbf16>, vector<10x160xbf16>, vector<5x160xf32> -> vector<5x160xf32>
    %69 = arith.truncf %68 : vector<5x160xf32> to vector<5x160xbf16>
    %c0_51 = arith.constant 0 : index
    %c0_52 = arith.constant 0 : index
    %70 = vector.load %arg9[%c0_51, %c0_52] : memref<160x80xbf16, #tpu.memory_space<vmem>>, vector<160x80xbf16>
    %cst_53 = arith.constant dense<0.000000e+00> : vector<5x80xf32>
    %71 = tpu.matmul %69, %70, %cst_53 {dimension_numbers = #tpu.dot_dimension_numbers<[1], [0], [0], [1], [0, 0, 1, 1], [], []>} : vector<5x160xbf16>, vector<160x80xbf16>, vector<5x80xf32> -> vector<5x80xf32>
    %c32 = arith.constant 32 : index
    %c0_54 = arith.constant 0 : index
    %72 = vector.load %arg1[%c32, %c0_54] : memref<256x32xbf16, #tpu.memory_space<vmem>>, vector<32x32xbf16>
    %73 = vector.extract_strided_slice %72 {offsets = [0, 0], sizes = [28, 32], strides = [1, 1]} : vector<32x32xbf16> to vector<28x32xbf16>
    %c0_55 = arith.constant 0 : index
    %c0_56 = arith.constant 0 : index
    %c0_57 = arith.constant 0 : index
    %74 = vector.load %arg2[%c0_55, %c0_56, %c0_57] : memref<5x32x168xbf16, #tpu.memory_space<vmem>>, vector<1x32x168xbf16>
    %75 = vector.shape_cast %74 : vector<1x32x168xbf16> to vector<32x168xbf16>
    %cst_58 = arith.constant dense<0.000000e+00> : vector<28x168xf32>
    %76 = tpu.matmul %73, %75, %cst_58 {dimension_numbers = #tpu.dot_dimension_numbers<[1], [0], [0], [1], [0, 0, 1, 1], [], []>} : vector<28x32xbf16>, vector<32x168xbf16>, vector<28x168xf32> -> vector<28x168xf32>
    %77 = vector.extract_strided_slice %72 {offsets = [1, 0], sizes = [28, 32], strides = [1, 1]} : vector<32x32xbf16> to vector<28x32xbf16>
    %c1_59 = arith.constant 1 : index
    %c0_60 = arith.constant 0 : index
    %c0_61 = arith.constant 0 : index
    %78 = vector.load %arg2[%c1_59, %c0_60, %c0_61] : memref<5x32x168xbf16, #tpu.memory_space<vmem>>, vector<1x32x168xbf16>
    %79 = vector.shape_cast %78 : vector<1x32x168xbf16> to vector<32x168xbf16>
    %cst_62 = arith.constant dense<0.000000e+00> : vector<28x168xf32>
    %80 = tpu.matmul %77, %79, %cst_62 {dimension_numbers = #tpu.dot_dimension_numbers<[1], [0], [0], [1], [0, 0, 1, 1], [], []>} : vector<28x32xbf16>, vector<32x168xbf16>, vector<28x168xf32> -> vector<28x168xf32>
    %81 = arith.addf %76, %80 : vector<28x168xf32>
    %82 = vector.extract_strided_slice %72 {offsets = [2, 0], sizes = [28, 32], strides = [1, 1]} : vector<32x32xbf16> to vector<28x32xbf16>
    %c2_63 = arith.constant 2 : index
    %c0_64 = arith.constant 0 : index
    %c0_65 = arith.constant 0 : index
    %83 = vector.load %arg2[%c2_63, %c0_64, %c0_65] : memref<5x32x168xbf16, #tpu.memory_space<vmem>>, vector<1x32x168xbf16>
    %84 = vector.shape_cast %83 : vector<1x32x168xbf16> to vector<32x168xbf16>
    %cst_66 = arith.constant dense<0.000000e+00> : vector<28x168xf32>
    %85 = tpu.matmul %82, %84, %cst_66 {dimension_numbers = #tpu.dot_dimension_numbers<[1], [0], [0], [1], [0, 0, 1, 1], [], []>} : vector<28x32xbf16>, vector<32x168xbf16>, vector<28x168xf32> -> vector<28x168xf32>
    %86 = arith.addf %81, %85 : vector<28x168xf32>
    %87 = vector.extract_strided_slice %72 {offsets = [3, 0], sizes = [28, 32], strides = [1, 1]} : vector<32x32xbf16> to vector<28x32xbf16>
    %c3_67 = arith.constant 3 : index
    %c0_68 = arith.constant 0 : index
    %c0_69 = arith.constant 0 : index
    %88 = vector.load %arg2[%c3_67, %c0_68, %c0_69] : memref<5x32x168xbf16, #tpu.memory_space<vmem>>, vector<1x32x168xbf16>
    %89 = vector.shape_cast %88 : vector<1x32x168xbf16> to vector<32x168xbf16>
    %cst_70 = arith.constant dense<0.000000e+00> : vector<28x168xf32>
    %90 = tpu.matmul %87, %89, %cst_70 {dimension_numbers = #tpu.dot_dimension_numbers<[1], [0], [0], [1], [0, 0, 1, 1], [], []>} : vector<28x32xbf16>, vector<32x168xbf16>, vector<28x168xf32> -> vector<28x168xf32>
    %91 = arith.addf %86, %90 : vector<28x168xf32>
    %92 = vector.extract_strided_slice %72 {offsets = [4, 0], sizes = [28, 32], strides = [1, 1]} : vector<32x32xbf16> to vector<28x32xbf16>
    %c4_71 = arith.constant 4 : index
    %c0_72 = arith.constant 0 : index
    %c0_73 = arith.constant 0 : index
    %93 = vector.load %arg2[%c4_71, %c0_72, %c0_73] : memref<5x32x168xbf16, #tpu.memory_space<vmem>>, vector<1x32x168xbf16>
    %94 = vector.shape_cast %93 : vector<1x32x168xbf16> to vector<32x168xbf16>
    %cst_74 = arith.constant dense<0.000000e+00> : vector<28x168xf32>
    %95 = tpu.matmul %92, %94, %cst_74 {dimension_numbers = #tpu.dot_dimension_numbers<[1], [0], [0], [1], [0, 0, 1, 1], [], []>} : vector<28x32xbf16>, vector<32x168xbf16>, vector<28x168xf32> -> vector<28x168xf32>
    %96 = arith.addf %91, %95 : vector<28x168xf32>
    %c0_75 = arith.constant 0 : index
    %c0_76 = arith.constant 0 : index
    %97 = vector.load %arg3[%c0_75, %c0_76] : memref<1x168xf32, #tpu.memory_space<vmem>>, vector<1x168xf32>
    %98 = vector.broadcast %97 : vector<1x168xf32> to vector<28x168xf32>
    %99 = arith.addf %96, %98 : vector<28x168xf32>
    %cst_77 = arith.constant 0.000000e+00 : f32
    %100 = vector.broadcast %cst_77 : f32 to vector<28x168xf32>
    %101 = arith.maximumf %99, %100 : vector<28x168xf32>
    %102 = arith.truncf %101 : vector<28x168xf32> to vector<28x168xbf16>
    %c0_78 = arith.constant 0 : index
    %c0_79 = arith.constant 0 : index
    %103 = vector.load %arg4[%c0_78, %c0_79] : memref<14x28xbf16, #tpu.memory_space<vmem>>, vector<14x28xbf16>
    %cst_80 = arith.constant dense<0.000000e+00> : vector<14x168xf32>
    %104 = tpu.matmul %103, %102, %cst_80 {dimension_numbers = #tpu.dot_dimension_numbers<[1], [0], [0], [1], [0, 0, 1, 1], [], []>} : vector<14x28xbf16>, vector<28x168xbf16>, vector<14x168xf32> -> vector<14x168xf32>
    %105 = arith.truncf %104 : vector<14x168xf32> to vector<14x168xbf16>
    %c0_81 = arith.constant 0 : index
    %c0_82 = arith.constant 0 : index
    %106 = vector.load %arg5[%c0_81, %c0_82] : memref<168x84xbf16, #tpu.memory_space<vmem>>, vector<168x84xbf16>
    %cst_83 = arith.constant dense<0.000000e+00> : vector<14x84xf32>
    %107 = tpu.matmul %105, %106, %cst_83 {dimension_numbers = #tpu.dot_dimension_numbers<[1], [0], [0], [1], [0, 0, 1, 1], [], []>} : vector<14x168xbf16>, vector<168x84xbf16>, vector<14x84xf32> -> vector<14x84xf32>
    %108 = arith.truncf %107 : vector<14x84xf32> to vector<14x84xbf16>
    %109 = vector.extract_strided_slice %108 {offsets = [0, 0], sizes = [10, 84], strides = [1, 1]} : vector<14x84xbf16> to vector<10x84xbf16>
    %c0_84 = arith.constant 0 : index
    %c0_85 = arith.constant 0 : index
    %c0_86 = arith.constant 0 : index
    %110 = vector.load %arg6[%c0_84, %c0_85, %c0_86] : memref<5x84x160xbf16, #tpu.memory_space<vmem>>, vector<1x84x160xbf16>
    %111 = vector.shape_cast %110 : vector<1x84x160xbf16> to vector<84x160xbf16>
    %cst_87 = arith.constant dense<0.000000e+00> : vector<10x160xf32>
    %112 = tpu.matmul %109, %111, %cst_87 {dimension_numbers = #tpu.dot_dimension_numbers<[1], [0], [0], [1], [0, 0, 1, 1], [], []>} : vector<10x84xbf16>, vector<84x160xbf16>, vector<10x160xf32> -> vector<10x160xf32>
    %113 = vector.extract_strided_slice %108 {offsets = [1, 0], sizes = [10, 84], strides = [1, 1]} : vector<14x84xbf16> to vector<10x84xbf16>
    %c1_88 = arith.constant 1 : index
    %c0_89 = arith.constant 0 : index
    %c0_90 = arith.constant 0 : index
    %114 = vector.load %arg6[%c1_88, %c0_89, %c0_90] : memref<5x84x160xbf16, #tpu.memory_space<vmem>>, vector<1x84x160xbf16>
    %115 = vector.shape_cast %114 : vector<1x84x160xbf16> to vector<84x160xbf16>
    %cst_91 = arith.constant dense<0.000000e+00> : vector<10x160xf32>
    %116 = tpu.matmul %113, %115, %cst_91 {dimension_numbers = #tpu.dot_dimension_numbers<[1], [0], [0], [1], [0, 0, 1, 1], [], []>} : vector<10x84xbf16>, vector<84x160xbf16>, vector<10x160xf32> -> vector<10x160xf32>
    %117 = arith.addf %112, %116 : vector<10x160xf32>
    %118 = vector.extract_strided_slice %108 {offsets = [2, 0], sizes = [10, 84], strides = [1, 1]} : vector<14x84xbf16> to vector<10x84xbf16>
    %c2_92 = arith.constant 2 : index
    %c0_93 = arith.constant 0 : index
    %c0_94 = arith.constant 0 : index
    %119 = vector.load %arg6[%c2_92, %c0_93, %c0_94] : memref<5x84x160xbf16, #tpu.memory_space<vmem>>, vector<1x84x160xbf16>
    %120 = vector.shape_cast %119 : vector<1x84x160xbf16> to vector<84x160xbf16>
    %cst_95 = arith.constant dense<0.000000e+00> : vector<10x160xf32>
    %121 = tpu.matmul %118, %120, %cst_95 {dimension_numbers = #tpu.dot_dimension_numbers<[1], [0], [0], [1], [0, 0, 1, 1], [], []>} : vector<10x84xbf16>, vector<84x160xbf16>, vector<10x160xf32> -> vector<10x160xf32>
    %122 = arith.addf %117, %121 : vector<10x160xf32>
    %123 = vector.extract_strided_slice %108 {offsets = [3, 0], sizes = [10, 84], strides = [1, 1]} : vector<14x84xbf16> to vector<10x84xbf16>
    %c3_96 = arith.constant 3 : index
    %c0_97 = arith.constant 0 : index
    %c0_98 = arith.constant 0 : index
    %124 = vector.load %arg6[%c3_96, %c0_97, %c0_98] : memref<5x84x160xbf16, #tpu.memory_space<vmem>>, vector<1x84x160xbf16>
    %125 = vector.shape_cast %124 : vector<1x84x160xbf16> to vector<84x160xbf16>
    %cst_99 = arith.constant dense<0.000000e+00> : vector<10x160xf32>
    %126 = tpu.matmul %123, %125, %cst_99 {dimension_numbers = #tpu.dot_dimension_numbers<[1], [0], [0], [1], [0, 0, 1, 1], [], []>} : vector<10x84xbf16>, vector<84x160xbf16>, vector<10x160xf32> -> vector<10x160xf32>
    %127 = arith.addf %122, %126 : vector<10x160xf32>
    %128 = vector.extract_strided_slice %108 {offsets = [4, 0], sizes = [10, 84], strides = [1, 1]} : vector<14x84xbf16> to vector<10x84xbf16>
    %c4_100 = arith.constant 4 : index
    %c0_101 = arith.constant 0 : index
    %c0_102 = arith.constant 0 : index
    %129 = vector.load %arg6[%c4_100, %c0_101, %c0_102] : memref<5x84x160xbf16, #tpu.memory_space<vmem>>, vector<1x84x160xbf16>
    %130 = vector.shape_cast %129 : vector<1x84x160xbf16> to vector<84x160xbf16>
    %cst_103 = arith.constant dense<0.000000e+00> : vector<10x160xf32>
    %131 = tpu.matmul %128, %130, %cst_103 {dimension_numbers = #tpu.dot_dimension_numbers<[1], [0], [0], [1], [0, 0, 1, 1], [], []>} : vector<10x84xbf16>, vector<84x160xbf16>, vector<10x160xf32> -> vector<10x160xf32>
    %132 = arith.addf %127, %131 : vector<10x160xf32>
    %c0_104 = arith.constant 0 : index
    %c0_105 = arith.constant 0 : index
    %133 = vector.load %arg7[%c0_104, %c0_105] : memref<1x160xf32, #tpu.memory_space<vmem>>, vector<1x160xf32>
    %134 = vector.broadcast %133 : vector<1x160xf32> to vector<10x160xf32>
    %135 = arith.addf %132, %134 : vector<10x160xf32>
    %cst_106 = arith.constant 0.000000e+00 : f32
    %136 = vector.broadcast %cst_106 : f32 to vector<10x160xf32>
    %137 = arith.maximumf %135, %136 : vector<10x160xf32>
    %138 = arith.truncf %137 : vector<10x160xf32> to vector<10x160xbf16>
    %c0_107 = arith.constant 0 : index
    %c0_108 = arith.constant 0 : index
    %139 = vector.load %arg8[%c0_107, %c0_108] : memref<5x10xbf16, #tpu.memory_space<vmem>>, vector<5x10xbf16>
    %cst_109 = arith.constant dense<0.000000e+00> : vector<5x160xf32>
    %140 = tpu.matmul %139, %138, %cst_109 {dimension_numbers = #tpu.dot_dimension_numbers<[1], [0], [0], [1], [0, 0, 1, 1], [], []>} : vector<5x10xbf16>, vector<10x160xbf16>, vector<5x160xf32> -> vector<5x160xf32>
    %141 = arith.truncf %140 : vector<5x160xf32> to vector<5x160xbf16>
    %c0_110 = arith.constant 0 : index
    %c0_111 = arith.constant 0 : index
    %142 = vector.load %arg9[%c0_110, %c0_111] : memref<160x80xbf16, #tpu.memory_space<vmem>>, vector<160x80xbf16>
    %cst_112 = arith.constant dense<0.000000e+00> : vector<5x80xf32>
    %143 = tpu.matmul %141, %142, %cst_112 {dimension_numbers = #tpu.dot_dimension_numbers<[1], [0], [0], [1], [0, 0, 1, 1], [], []>} : vector<5x160xbf16>, vector<160x80xbf16>, vector<5x80xf32> -> vector<5x80xf32>
    %c64 = arith.constant 64 : index
    %c0_113 = arith.constant 0 : index
    %144 = vector.load %arg1[%c64, %c0_113] : memref<256x32xbf16, #tpu.memory_space<vmem>>, vector<32x32xbf16>
    %145 = vector.extract_strided_slice %144 {offsets = [0, 0], sizes = [28, 32], strides = [1, 1]} : vector<32x32xbf16> to vector<28x32xbf16>
    %c0_114 = arith.constant 0 : index
    %c0_115 = arith.constant 0 : index
    %c0_116 = arith.constant 0 : index
    %146 = vector.load %arg2[%c0_114, %c0_115, %c0_116] : memref<5x32x168xbf16, #tpu.memory_space<vmem>>, vector<1x32x168xbf16>
    %147 = vector.shape_cast %146 : vector<1x32x168xbf16> to vector<32x168xbf16>
    %cst_117 = arith.constant dense<0.000000e+00> : vector<28x168xf32>
    %148 = tpu.matmul %145, %147, %cst_117 {dimension_numbers = #tpu.dot_dimension_numbers<[1], [0], [0], [1], [0, 0, 1, 1], [], []>} : vector<28x32xbf16>, vector<32x168xbf16>, vector<28x168xf32> -> vector<28x168xf32>
    %149 = vector.extract_strided_slice %144 {offsets = [1, 0], sizes = [28, 32], strides = [1, 1]} : vector<32x32xbf16> to vector<28x32xbf16>
    %c1_118 = arith.constant 1 : index
    %c0_119 = arith.constant 0 : index
    %c0_120 = arith.constant 0 : index
    %150 = vector.load %arg2[%c1_118, %c0_119, %c0_120] : memref<5x32x168xbf16, #tpu.memory_space<vmem>>, vector<1x32x168xbf16>
    %151 = vector.shape_cast %150 : vector<1x32x168xbf16> to vector<32x168xbf16>
    %cst_121 = arith.constant dense<0.000000e+00> : vector<28x168xf32>
    %152 = tpu.matmul %149, %151, %cst_121 {dimension_numbers = #tpu.dot_dimension_numbers<[1], [0], [0], [1], [0, 0, 1, 1], [], []>} : vector<28x32xbf16>, vector<32x168xbf16>, vector<28x168xf32> -> vector<28x168xf32>
    %153 = arith.addf %148, %152 : vector<28x168xf32>
    %154 = vector.extract_strided_slice %144 {offsets = [2, 0], sizes = [28, 32], strides = [1, 1]} : vector<32x32xbf16> to vector<28x32xbf16>
    %c2_122 = arith.constant 2 : index
    %c0_123 = arith.constant 0 : index
    %c0_124 = arith.constant 0 : index
    %155 = vector.load %arg2[%c2_122, %c0_123, %c0_124] : memref<5x32x168xbf16, #tpu.memory_space<vmem>>, vector<1x32x168xbf16>
    %156 = vector.shape_cast %155 : vector<1x32x168xbf16> to vector<32x168xbf16>
    %cst_125 = arith.constant dense<0.000000e+00> : vector<28x168xf32>
    %157 = tpu.matmul %154, %156, %cst_125 {dimension_numbers = #tpu.dot_dimension_numbers<[1], [0], [0], [1], [0, 0, 1, 1], [], []>} : vector<28x32xbf16>, vector<32x168xbf16>, vector<28x168xf32> -> vector<28x168xf32>
    %158 = arith.addf %153, %157 : vector<28x168xf32>
    %159 = vector.extract_strided_slice %144 {offsets = [3, 0], sizes = [28, 32], strides = [1, 1]} : vector<32x32xbf16> to vector<28x32xbf16>
    %c3_126 = arith.constant 3 : index
    %c0_127 = arith.constant 0 : index
    %c0_128 = arith.constant 0 : index
    %160 = vector.load %arg2[%c3_126, %c0_127, %c0_128] : memref<5x32x168xbf16, #tpu.memory_space<vmem>>, vector<1x32x168xbf16>
    %161 = vector.shape_cast %160 : vector<1x32x168xbf16> to vector<32x168xbf16>
    %cst_129 = arith.constant dense<0.000000e+00> : vector<28x168xf32>
    %162 = tpu.matmul %159, %161, %cst_129 {dimension_numbers = #tpu.dot_dimension_numbers<[1], [0], [0], [1], [0, 0, 1, 1], [], []>} : vector<28x32xbf16>, vector<32x168xbf16>, vector<28x168xf32> -> vector<28x168xf32>
    %163 = arith.addf %158, %162 : vector<28x168xf32>
    %164 = vector.extract_strided_slice %144 {offsets = [4, 0], sizes = [28, 32], strides = [1, 1]} : vector<32x32xbf16> to vector<28x32xbf16>
    %c4_130 = arith.constant 4 : index
    %c0_131 = arith.constant 0 : index
    %c0_132 = arith.constant 0 : index
    %165 = vector.load %arg2[%c4_130, %c0_131, %c0_132] : memref<5x32x168xbf16, #tpu.memory_space<vmem>>, vector<1x32x168xbf16>
    %166 = vector.shape_cast %165 : vector<1x32x168xbf16> to vector<32x168xbf16>
    %cst_133 = arith.constant dense<0.000000e+00> : vector<28x168xf32>
    %167 = tpu.matmul %164, %166, %cst_133 {dimension_numbers = #tpu.dot_dimension_numbers<[1], [0], [0], [1], [0, 0, 1, 1], [], []>} : vector<28x32xbf16>, vector<32x168xbf16>, vector<28x168xf32> -> vector<28x168xf32>
    %168 = arith.addf %163, %167 : vector<28x168xf32>
    %c0_134 = arith.constant 0 : index
    %c0_135 = arith.constant 0 : index
    %169 = vector.load %arg3[%c0_134, %c0_135] : memref<1x168xf32, #tpu.memory_space<vmem>>, vector<1x168xf32>
    %170 = vector.broadcast %169 : vector<1x168xf32> to vector<28x168xf32>
    %171 = arith.addf %168, %170 : vector<28x168xf32>
    %cst_136 = arith.constant 0.000000e+00 : f32
    %172 = vector.broadcast %cst_136 : f32 to vector<28x168xf32>
    %173 = arith.maximumf %171, %172 : vector<28x168xf32>
    %174 = arith.truncf %173 : vector<28x168xf32> to vector<28x168xbf16>
    %c0_137 = arith.constant 0 : index
    %c0_138 = arith.constant 0 : index
    %175 = vector.load %arg4[%c0_137, %c0_138] : memref<14x28xbf16, #tpu.memory_space<vmem>>, vector<14x28xbf16>
    %cst_139 = arith.constant dense<0.000000e+00> : vector<14x168xf32>
    %176 = tpu.matmul %175, %174, %cst_139 {dimension_numbers = #tpu.dot_dimension_numbers<[1], [0], [0], [1], [0, 0, 1, 1], [], []>} : vector<14x28xbf16>, vector<28x168xbf16>, vector<14x168xf32> -> vector<14x168xf32>
    %177 = arith.truncf %176 : vector<14x168xf32> to vector<14x168xbf16>
    %c0_140 = arith.constant 0 : index
    %c0_141 = arith.constant 0 : index
    %178 = vector.load %arg5[%c0_140, %c0_141] : memref<168x84xbf16, #tpu.memory_space<vmem>>, vector<168x84xbf16>
    %cst_142 = arith.constant dense<0.000000e+00> : vector<14x84xf32>
    %179 = tpu.matmul %177, %178, %cst_142 {dimension_numbers = #tpu.dot_dimension_numbers<[1], [0], [0], [1], [0, 0, 1, 1], [], []>} : vector<14x168xbf16>, vector<168x84xbf16>, vector<14x84xf32> -> vector<14x84xf32>
    %180 = arith.truncf %179 : vector<14x84xf32> to vector<14x84xbf16>
    %181 = vector.extract_strided_slice %180 {offsets = [0, 0], sizes = [10, 84], strides = [1, 1]} : vector<14x84xbf16> to vector<10x84xbf16>
    %c0_143 = arith.constant 0 : index
    %c0_144 = arith.constant 0 : index
    %c0_145 = arith.constant 0 : index
    %182 = vector.load %arg6[%c0_143, %c0_144, %c0_145] : memref<5x84x160xbf16, #tpu.memory_space<vmem>>, vector<1x84x160xbf16>
    %183 = vector.shape_cast %182 : vector<1x84x160xbf16> to vector<84x160xbf16>
    %cst_146 = arith.constant dense<0.000000e+00> : vector<10x160xf32>
    %184 = tpu.matmul %181, %183, %cst_146 {dimension_numbers = #tpu.dot_dimension_numbers<[1], [0], [0], [1], [0, 0, 1, 1], [], []>} : vector<10x84xbf16>, vector<84x160xbf16>, vector<10x160xf32> -> vector<10x160xf32>
    %185 = vector.extract_strided_slice %180 {offsets = [1, 0], sizes = [10, 84], strides = [1, 1]} : vector<14x84xbf16> to vector<10x84xbf16>
    %c1_147 = arith.constant 1 : index
    %c0_148 = arith.constant 0 : index
    %c0_149 = arith.constant 0 : index
    %186 = vector.load %arg6[%c1_147, %c0_148, %c0_149] : memref<5x84x160xbf16, #tpu.memory_space<vmem>>, vector<1x84x160xbf16>
    %187 = vector.shape_cast %186 : vector<1x84x160xbf16> to vector<84x160xbf16>
    %cst_150 = arith.constant dense<0.000000e+00> : vector<10x160xf32>
    %188 = tpu.matmul %185, %187, %cst_150 {dimension_numbers = #tpu.dot_dimension_numbers<[1], [0], [0], [1], [0, 0, 1, 1], [], []>} : vector<10x84xbf16>, vector<84x160xbf16>, vector<10x160xf32> -> vector<10x160xf32>
    %189 = arith.addf %184, %188 : vector<10x160xf32>
    %190 = vector.extract_strided_slice %180 {offsets = [2, 0], sizes = [10, 84], strides = [1, 1]} : vector<14x84xbf16> to vector<10x84xbf16>
    %c2_151 = arith.constant 2 : index
    %c0_152 = arith.constant 0 : index
    %c0_153 = arith.constant 0 : index
    %191 = vector.load %arg6[%c2_151, %c0_152, %c0_153] : memref<5x84x160xbf16, #tpu.memory_space<vmem>>, vector<1x84x160xbf16>
    %192 = vector.shape_cast %191 : vector<1x84x160xbf16> to vector<84x160xbf16>
    %cst_154 = arith.constant dense<0.000000e+00> : vector<10x160xf32>
    %193 = tpu.matmul %190, %192, %cst_154 {dimension_numbers = #tpu.dot_dimension_numbers<[1], [0], [0], [1], [0, 0, 1, 1], [], []>} : vector<10x84xbf16>, vector<84x160xbf16>, vector<10x160xf32> -> vector<10x160xf32>
    %194 = arith.addf %189, %193 : vector<10x160xf32>
    %195 = vector.extract_strided_slice %180 {offsets = [3, 0], sizes = [10, 84], strides = [1, 1]} : vector<14x84xbf16> to vector<10x84xbf16>
    %c3_155 = arith.constant 3 : index
    %c0_156 = arith.constant 0 : index
    %c0_157 = arith.constant 0 : index
    %196 = vector.load %arg6[%c3_155, %c0_156, %c0_157] : memref<5x84x160xbf16, #tpu.memory_space<vmem>>, vector<1x84x160xbf16>
    %197 = vector.shape_cast %196 : vector<1x84x160xbf16> to vector<84x160xbf16>
    %cst_158 = arith.constant dense<0.000000e+00> : vector<10x160xf32>
    %198 = tpu.matmul %195, %197, %cst_158 {dimension_numbers = #tpu.dot_dimension_numbers<[1], [0], [0], [1], [0, 0, 1, 1], [], []>} : vector<10x84xbf16>, vector<84x160xbf16>, vector<10x160xf32> -> vector<10x160xf32>
    %199 = arith.addf %194, %198 : vector<10x160xf32>
    %200 = vector.extract_strided_slice %180 {offsets = [4, 0], sizes = [10, 84], strides = [1, 1]} : vector<14x84xbf16> to vector<10x84xbf16>
    %c4_159 = arith.constant 4 : index
    %c0_160 = arith.constant 0 : index
    %c0_161 = arith.constant 0 : index
    %201 = vector.load %arg6[%c4_159, %c0_160, %c0_161] : memref<5x84x160xbf16, #tpu.memory_space<vmem>>, vector<1x84x160xbf16>
    %202 = vector.shape_cast %201 : vector<1x84x160xbf16> to vector<84x160xbf16>
    %cst_162 = arith.constant dense<0.000000e+00> : vector<10x160xf32>
    %203 = tpu.matmul %200, %202, %cst_162 {dimension_numbers = #tpu.dot_dimension_numbers<[1], [0], [0], [1], [0, 0, 1, 1], [], []>} : vector<10x84xbf16>, vector<84x160xbf16>, vector<10x160xf32> -> vector<10x160xf32>
    %204 = arith.addf %199, %203 : vector<10x160xf32>
    %c0_163 = arith.constant 0 : index
    %c0_164 = arith.constant 0 : index
    %205 = vector.load %arg7[%c0_163, %c0_164] : memref<1x160xf32, #tpu.memory_space<vmem>>, vector<1x160xf32>
    %206 = vector.broadcast %205 : vector<1x160xf32> to vector<10x160xf32>
    %207 = arith.addf %204, %206 : vector<10x160xf32>
    %cst_165 = arith.constant 0.000000e+00 : f32
    %208 = vector.broadcast %cst_165 : f32 to vector<10x160xf32>
    %209 = arith.maximumf %207, %208 : vector<10x160xf32>
    %210 = arith.truncf %209 : vector<10x160xf32> to vector<10x160xbf16>
    %c0_166 = arith.constant 0 : index
    %c0_167 = arith.constant 0 : index
    %211 = vector.load %arg8[%c0_166, %c0_167] : memref<5x10xbf16, #tpu.memory_space<vmem>>, vector<5x10xbf16>
    %cst_168 = arith.constant dense<0.000000e+00> : vector<5x160xf32>
    %212 = tpu.matmul %211, %210, %cst_168 {dimension_numbers = #tpu.dot_dimension_numbers<[1], [0], [0], [1], [0, 0, 1, 1], [], []>} : vector<5x10xbf16>, vector<10x160xbf16>, vector<5x160xf32> -> vector<5x160xf32>
    %213 = arith.truncf %212 : vector<5x160xf32> to vector<5x160xbf16>
    %c0_169 = arith.constant 0 : index
    %c0_170 = arith.constant 0 : index
    %214 = vector.load %arg9[%c0_169, %c0_170] : memref<160x80xbf16, #tpu.memory_space<vmem>>, vector<160x80xbf16>
    %cst_171 = arith.constant dense<0.000000e+00> : vector<5x80xf32>
    %215 = tpu.matmul %213, %214, %cst_171 {dimension_numbers = #tpu.dot_dimension_numbers<[1], [0], [0], [1], [0, 0, 1, 1], [], []>} : vector<5x160xbf16>, vector<160x80xbf16>, vector<5x80xf32> -> vector<5x80xf32>
    %c96 = arith.constant 96 : index
    %c0_172 = arith.constant 0 : index
    %216 = vector.load %arg1[%c96, %c0_172] : memref<256x32xbf16, #tpu.memory_space<vmem>>, vector<32x32xbf16>
    %217 = vector.extract_strided_slice %216 {offsets = [0, 0], sizes = [28, 32], strides = [1, 1]} : vector<32x32xbf16> to vector<28x32xbf16>
    %c0_173 = arith.constant 0 : index
    %c0_174 = arith.constant 0 : index
    %c0_175 = arith.constant 0 : index
    %218 = vector.load %arg2[%c0_173, %c0_174, %c0_175] : memref<5x32x168xbf16, #tpu.memory_space<vmem>>, vector<1x32x168xbf16>
    %219 = vector.shape_cast %218 : vector<1x32x168xbf16> to vector<32x168xbf16>
    %cst_176 = arith.constant dense<0.000000e+00> : vector<28x168xf32>
    %220 = tpu.matmul %217, %219, %cst_176 {dimension_numbers = #tpu.dot_dimension_numbers<[1], [0], [0], [1], [0, 0, 1, 1], [], []>} : vector<28x32xbf16>, vector<32x168xbf16>, vector<28x168xf32> -> vector<28x168xf32>
    %221 = vector.extract_strided_slice %216 {offsets = [1, 0], sizes = [28, 32], strides = [1, 1]} : vector<32x32xbf16> to vector<28x32xbf16>
    %c1_177 = arith.constant 1 : index
    %c0_178 = arith.constant 0 : index
    %c0_179 = arith.constant 0 : index
    %222 = vector.load %arg2[%c1_177, %c0_178, %c0_179] : memref<5x32x168xbf16, #tpu.memory_space<vmem>>, vector<1x32x168xbf16>
    %223 = vector.shape_cast %222 : vector<1x32x168xbf16> to vector<32x168xbf16>
    %cst_180 = arith.constant dense<0.000000e+00> : vector<28x168xf32>
    %224 = tpu.matmul %221, %223, %cst_180 {dimension_numbers = #tpu.dot_dimension_numbers<[1], [0], [0], [1], [0, 0, 1, 1], [], []>} : vector<28x32xbf16>, vector<32x168xbf16>, vector<28x168xf32> -> vector<28x168xf32>
    %225 = arith.addf %220, %224 : vector<28x168xf32>
    %226 = vector.extract_strided_slice %216 {offsets = [2, 0], sizes = [28, 32], strides = [1, 1]} : vector<32x32xbf16> to vector<28x32xbf16>
    %c2_181 = arith.constant 2 : index
    %c0_182 = arith.constant 0 : index
    %c0_183 = arith.constant 0 : index
    %227 = vector.load %arg2[%c2_181, %c0_182, %c0_183] : memref<5x32x168xbf16, #tpu.memory_space<vmem>>, vector<1x32x168xbf16>
    %228 = vector.shape_cast %227 : vector<1x32x168xbf16> to vector<32x168xbf16>
    %cst_184 = arith.constant dense<0.000000e+00> : vector<28x168xf32>
    %229 = tpu.matmul %226, %228, %cst_184 {dimension_numbers = #tpu.dot_dimension_numbers<[1], [0], [0], [1], [0, 0, 1, 1], [], []>} : vector<28x32xbf16>, vector<32x168xbf16>, vector<28x168xf32> -> vector<28x168xf32>
    %230 = arith.addf %225, %229 : vector<28x168xf32>
    %231 = vector.extract_strided_slice %216 {offsets = [3, 0], sizes = [28, 32], strides = [1, 1]} : vector<32x32xbf16> to vector<28x32xbf16>
    %c3_185 = arith.constant 3 : index
    %c0_186 = arith.constant 0 : index
    %c0_187 = arith.constant 0 : index
    %232 = vector.load %arg2[%c3_185, %c0_186, %c0_187] : memref<5x32x168xbf16, #tpu.memory_space<vmem>>, vector<1x32x168xbf16>
    %233 = vector.shape_cast %232 : vector<1x32x168xbf16> to vector<32x168xbf16>
    %cst_188 = arith.constant dense<0.000000e+00> : vector<28x168xf32>
    %234 = tpu.matmul %231, %233, %cst_188 {dimension_numbers = #tpu.dot_dimension_numbers<[1], [0], [0], [1], [0, 0, 1, 1], [], []>} : vector<28x32xbf16>, vector<32x168xbf16>, vector<28x168xf32> -> vector<28x168xf32>
    %235 = arith.addf %230, %234 : vector<28x168xf32>
    %236 = vector.extract_strided_slice %216 {offsets = [4, 0], sizes = [28, 32], strides = [1, 1]} : vector<32x32xbf16> to vector<28x32xbf16>
    %c4_189 = arith.constant 4 : index
    %c0_190 = arith.constant 0 : index
    %c0_191 = arith.constant 0 : index
    %237 = vector.load %arg2[%c4_189, %c0_190, %c0_191] : memref<5x32x168xbf16, #tpu.memory_space<vmem>>, vector<1x32x168xbf16>
    %238 = vector.shape_cast %237 : vector<1x32x168xbf16> to vector<32x168xbf16>
    %cst_192 = arith.constant dense<0.000000e+00> : vector<28x168xf32>
    %239 = tpu.matmul %236, %238, %cst_192 {dimension_numbers = #tpu.dot_dimension_numbers<[1], [0], [0], [1], [0, 0, 1, 1], [], []>} : vector<28x32xbf16>, vector<32x168xbf16>, vector<28x168xf32> -> vector<28x168xf32>
    %240 = arith.addf %235, %239 : vector<28x168xf32>
    %c0_193 = arith.constant 0 : index
    %c0_194 = arith.constant 0 : index
    %241 = vector.load %arg3[%c0_193, %c0_194] : memref<1x168xf32, #tpu.memory_space<vmem>>, vector<1x168xf32>
    %242 = vector.broadcast %241 : vector<1x168xf32> to vector<28x168xf32>
    %243 = arith.addf %240, %242 : vector<28x168xf32>
    %cst_195 = arith.constant 0.000000e+00 : f32
    %244 = vector.broadcast %cst_195 : f32 to vector<28x168xf32>
    %245 = arith.maximumf %243, %244 : vector<28x168xf32>
    %246 = arith.truncf %245 : vector<28x168xf32> to vector<28x168xbf16>
    %c0_196 = arith.constant 0 : index
    %c0_197 = arith.constant 0 : index
    %247 = vector.load %arg4[%c0_196, %c0_197] : memref<14x28xbf16, #tpu.memory_space<vmem>>, vector<14x28xbf16>
    %cst_198 = arith.constant dense<0.000000e+00> : vector<14x168xf32>
    %248 = tpu.matmul %247, %246, %cst_198 {dimension_numbers = #tpu.dot_dimension_numbers<[1], [0], [0], [1], [0, 0, 1, 1], [], []>} : vector<14x28xbf16>, vector<28x168xbf16>, vector<14x168xf32> -> vector<14x168xf32>
    %249 = arith.truncf %248 : vector<14x168xf32> to vector<14x168xbf16>
    %c0_199 = arith.constant 0 : index
    %c0_200 = arith.constant 0 : index
    %250 = vector.load %arg5[%c0_199, %c0_200] : memref<168x84xbf16, #tpu.memory_space<vmem>>, vector<168x84xbf16>
    %cst_201 = arith.constant dense<0.000000e+00> : vector<14x84xf32>
    %251 = tpu.matmul %249, %250, %cst_201 {dimension_numbers = #tpu.dot_dimension_numbers<[1], [0], [0], [1], [0, 0, 1, 1], [], []>} : vector<14x168xbf16>, vector<168x84xbf16>, vector<14x84xf32> -> vector<14x84xf32>
    %252 = arith.truncf %251 : vector<14x84xf32> to vector<14x84xbf16>
    %253 = vector.extract_strided_slice %252 {offsets = [0, 0], sizes = [10, 84], strides = [1, 1]} : vector<14x84xbf16> to vector<10x84xbf16>
    %c0_202 = arith.constant 0 : index
    %c0_203 = arith.constant 0 : index
    %c0_204 = arith.constant 0 : index
    %254 = vector.load %arg6[%c0_202, %c0_203, %c0_204] : memref<5x84x160xbf16, #tpu.memory_space<vmem>>, vector<1x84x160xbf16>
    %255 = vector.shape_cast %254 : vector<1x84x160xbf16> to vector<84x160xbf16>
    %cst_205 = arith.constant dense<0.000000e+00> : vector<10x160xf32>
    %256 = tpu.matmul %253, %255, %cst_205 {dimension_numbers = #tpu.dot_dimension_numbers<[1], [0], [0], [1], [0, 0, 1, 1], [], []>} : vector<10x84xbf16>, vector<84x160xbf16>, vector<10x160xf32> -> vector<10x160xf32>
    %257 = vector.extract_strided_slice %252 {offsets = [1, 0], sizes = [10, 84], strides = [1, 1]} : vector<14x84xbf16> to vector<10x84xbf16>
    %c1_206 = arith.constant 1 : index
    %c0_207 = arith.constant 0 : index
    %c0_208 = arith.constant 0 : index
    %258 = vector.load %arg6[%c1_206, %c0_207, %c0_208] : memref<5x84x160xbf16, #tpu.memory_space<vmem>>, vector<1x84x160xbf16>
    %259 = vector.shape_cast %258 : vector<1x84x160xbf16> to vector<84x160xbf16>
    %cst_209 = arith.constant dense<0.000000e+00> : vector<10x160xf32>
    %260 = tpu.matmul %257, %259, %cst_209 {dimension_numbers = #tpu.dot_dimension_numbers<[1], [0], [0], [1], [0, 0, 1, 1], [], []>} : vector<10x84xbf16>, vector<84x160xbf16>, vector<10x160xf32> -> vector<10x160xf32>
    %261 = arith.addf %256, %260 : vector<10x160xf32>
    %262 = vector.extract_strided_slice %252 {offsets = [2, 0], sizes = [10, 84], strides = [1, 1]} : vector<14x84xbf16> to vector<10x84xbf16>
    %c2_210 = arith.constant 2 : index
    %c0_211 = arith.constant 0 : index
    %c0_212 = arith.constant 0 : index
    %263 = vector.load %arg6[%c2_210, %c0_211, %c0_212] : memref<5x84x160xbf16, #tpu.memory_space<vmem>>, vector<1x84x160xbf16>
    %264 = vector.shape_cast %263 : vector<1x84x160xbf16> to vector<84x160xbf16>
    %cst_213 = arith.constant dense<0.000000e+00> : vector<10x160xf32>
    %265 = tpu.matmul %262, %264, %cst_213 {dimension_numbers = #tpu.dot_dimension_numbers<[1], [0], [0], [1], [0, 0, 1, 1], [], []>} : vector<10x84xbf16>, vector<84x160xbf16>, vector<10x160xf32> -> vector<10x160xf32>
    %266 = arith.addf %261, %265 : vector<10x160xf32>
    %267 = vector.extract_strided_slice %252 {offsets = [3, 0], sizes = [10, 84], strides = [1, 1]} : vector<14x84xbf16> to vector<10x84xbf16>
    %c3_214 = arith.constant 3 : index
    %c0_215 = arith.constant 0 : index
    %c0_216 = arith.constant 0 : index
    %268 = vector.load %arg6[%c3_214, %c0_215, %c0_216] : memref<5x84x160xbf16, #tpu.memory_space<vmem>>, vector<1x84x160xbf16>
    %269 = vector.shape_cast %268 : vector<1x84x160xbf16> to vector<84x160xbf16>
    %cst_217 = arith.constant dense<0.000000e+00> : vector<10x160xf32>
    %270 = tpu.matmul %267, %269, %cst_217 {dimension_numbers = #tpu.dot_dimension_numbers<[1], [0], [0], [1], [0, 0, 1, 1], [], []>} : vector<10x84xbf16>, vector<84x160xbf16>, vector<10x160xf32> -> vector<10x160xf32>
    %271 = arith.addf %266, %270 : vector<10x160xf32>
    %272 = vector.extract_strided_slice %252 {offsets = [4, 0], sizes = [10, 84], strides = [1, 1]} : vector<14x84xbf16> to vector<10x84xbf16>
    %c4_218 = arith.constant 4 : index
    %c0_219 = arith.constant 0 : index
    %c0_220 = arith.constant 0 : index
    %273 = vector.load %arg6[%c4_218, %c0_219, %c0_220] : memref<5x84x160xbf16, #tpu.memory_space<vmem>>, vector<1x84x160xbf16>
    %274 = vector.shape_cast %273 : vector<1x84x160xbf16> to vector<84x160xbf16>
    %cst_221 = arith.constant dense<0.000000e+00> : vector<10x160xf32>
    %275 = tpu.matmul %272, %274, %cst_221 {dimension_numbers = #tpu.dot_dimension_numbers<[1], [0], [0], [1], [0, 0, 1, 1], [], []>} : vector<10x84xbf16>, vector<84x160xbf16>, vector<10x160xf32> -> vector<10x160xf32>
    %276 = arith.addf %271, %275 : vector<10x160xf32>
    %c0_222 = arith.constant 0 : index
    %c0_223 = arith.constant 0 : index
    %277 = vector.load %arg7[%c0_222, %c0_223] : memref<1x160xf32, #tpu.memory_space<vmem>>, vector<1x160xf32>
    %278 = vector.broadcast %277 : vector<1x160xf32> to vector<10x160xf32>
    %279 = arith.addf %276, %278 : vector<10x160xf32>
    %cst_224 = arith.constant 0.000000e+00 : f32
    %280 = vector.broadcast %cst_224 : f32 to vector<10x160xf32>
    %281 = arith.maximumf %279, %280 : vector<10x160xf32>
    %282 = arith.truncf %281 : vector<10x160xf32> to vector<10x160xbf16>
    %c0_225 = arith.constant 0 : index
    %c0_226 = arith.constant 0 : index
    %283 = vector.load %arg8[%c0_225, %c0_226] : memref<5x10xbf16, #tpu.memory_space<vmem>>, vector<5x10xbf16>
    %cst_227 = arith.constant dense<0.000000e+00> : vector<5x160xf32>
    %284 = tpu.matmul %283, %282, %cst_227 {dimension_numbers = #tpu.dot_dimension_numbers<[1], [0], [0], [1], [0, 0, 1, 1], [], []>} : vector<5x10xbf16>, vector<10x160xbf16>, vector<5x160xf32> -> vector<5x160xf32>
    %285 = arith.truncf %284 : vector<5x160xf32> to vector<5x160xbf16>
    %c0_228 = arith.constant 0 : index
    %c0_229 = arith.constant 0 : index
    %286 = vector.load %arg9[%c0_228, %c0_229] : memref<160x80xbf16, #tpu.memory_space<vmem>>, vector<160x80xbf16>
    %cst_230 = arith.constant dense<0.000000e+00> : vector<5x80xf32>
    %287 = tpu.matmul %285, %286, %cst_230 {dimension_numbers = #tpu.dot_dimension_numbers<[1], [0], [0], [1], [0, 0, 1, 1], [], []>} : vector<5x160xbf16>, vector<160x80xbf16>, vector<5x80xf32> -> vector<5x80xf32>
    %c128 = arith.constant 128 : index
    %c0_231 = arith.constant 0 : index
    %288 = vector.load %arg1[%c128, %c0_231] : memref<256x32xbf16, #tpu.memory_space<vmem>>, vector<32x32xbf16>
    %289 = vector.extract_strided_slice %288 {offsets = [0, 0], sizes = [28, 32], strides = [1, 1]} : vector<32x32xbf16> to vector<28x32xbf16>
    %c0_232 = arith.constant 0 : index
    %c0_233 = arith.constant 0 : index
    %c0_234 = arith.constant 0 : index
    %290 = vector.load %arg2[%c0_232, %c0_233, %c0_234] : memref<5x32x168xbf16, #tpu.memory_space<vmem>>, vector<1x32x168xbf16>
    %291 = vector.shape_cast %290 : vector<1x32x168xbf16> to vector<32x168xbf16>
    %cst_235 = arith.constant dense<0.000000e+00> : vector<28x168xf32>
    %292 = tpu.matmul %289, %291, %cst_235 {dimension_numbers = #tpu.dot_dimension_numbers<[1], [0], [0], [1], [0, 0, 1, 1], [], []>} : vector<28x32xbf16>, vector<32x168xbf16>, vector<28x168xf32> -> vector<28x168xf32>
    %293 = vector.extract_strided_slice %288 {offsets = [1, 0], sizes = [28, 32], strides = [1, 1]} : vector<32x32xbf16> to vector<28x32xbf16>
    %c1_236 = arith.constant 1 : index
    %c0_237 = arith.constant 0 : index
    %c0_238 = arith.constant 0 : index
    %294 = vector.load %arg2[%c1_236, %c0_237, %c0_238] : memref<5x32x168xbf16, #tpu.memory_space<vmem>>, vector<1x32x168xbf16>
    %295 = vector.shape_cast %294 : vector<1x32x168xbf16> to vector<32x168xbf16>
    %cst_239 = arith.constant dense<0.000000e+00> : vector<28x168xf32>
    %296 = tpu.matmul %293, %295, %cst_239 {dimension_numbers = #tpu.dot_dimension_numbers<[1], [0], [0], [1], [0, 0, 1, 1], [], []>} : vector<28x32xbf16>, vector<32x168xbf16>, vector<28x168xf32> -> vector<28x168xf32>
    %297 = arith.addf %292, %296 : vector<28x168xf32>
    %298 = vector.extract_strided_slice %288 {offsets = [2, 0], sizes = [28, 32], strides = [1, 1]} : vector<32x32xbf16> to vector<28x32xbf16>
    %c2_240 = arith.constant 2 : index
    %c0_241 = arith.constant 0 : index
    %c0_242 = arith.constant 0 : index
    %299 = vector.load %arg2[%c2_240, %c0_241, %c0_242] : memref<5x32x168xbf16, #tpu.memory_space<vmem>>, vector<1x32x168xbf16>
    %300 = vector.shape_cast %299 : vector<1x32x168xbf16> to vector<32x168xbf16>
    %cst_243 = arith.constant dense<0.000000e+00> : vector<28x168xf32>
    %301 = tpu.matmul %298, %300, %cst_243 {dimension_numbers = #tpu.dot_dimension_numbers<[1], [0], [0], [1], [0, 0, 1, 1], [], []>} : vector<28x32xbf16>, vector<32x168xbf16>, vector<28x168xf32> -> vector<28x168xf32>
    %302 = arith.addf %297, %301 : vector<28x168xf32>
    %303 = vector.extract_strided_slice %288 {offsets = [3, 0], sizes = [28, 32], strides = [1, 1]} : vector<32x32xbf16> to vector<28x32xbf16>
    %c3_244 = arith.constant 3 : index
    %c0_245 = arith.constant 0 : index
    %c0_246 = arith.constant 0 : index
    %304 = vector.load %arg2[%c3_244, %c0_245, %c0_246] : memref<5x32x168xbf16, #tpu.memory_space<vmem>>, vector<1x32x168xbf16>
    %305 = vector.shape_cast %304 : vector<1x32x168xbf16> to vector<32x168xbf16>
    %cst_247 = arith.constant dense<0.000000e+00> : vector<28x168xf32>
    %306 = tpu.matmul %303, %305, %cst_247 {dimension_numbers = #tpu.dot_dimension_numbers<[1], [0], [0], [1], [0, 0, 1, 1], [], []>} : vector<28x32xbf16>, vector<32x168xbf16>, vector<28x168xf32> -> vector<28x168xf32>
    %307 = arith.addf %302, %306 : vector<28x168xf32>
    %308 = vector.extract_strided_slice %288 {offsets = [4, 0], sizes = [28, 32], strides = [1, 1]} : vector<32x32xbf16> to vector<28x32xbf16>
    %c4_248 = arith.constant 4 : index
    %c0_249 = arith.constant 0 : index
    %c0_250 = arith.constant 0 : index
    %309 = vector.load %arg2[%c4_248, %c0_249, %c0_250] : memref<5x32x168xbf16, #tpu.memory_space<vmem>>, vector<1x32x168xbf16>
    %310 = vector.shape_cast %309 : vector<1x32x168xbf16> to vector<32x168xbf16>
    %cst_251 = arith.constant dense<0.000000e+00> : vector<28x168xf32>
    %311 = tpu.matmul %308, %310, %cst_251 {dimension_numbers = #tpu.dot_dimension_numbers<[1], [0], [0], [1], [0, 0, 1, 1], [], []>} : vector<28x32xbf16>, vector<32x168xbf16>, vector<28x168xf32> -> vector<28x168xf32>
    %312 = arith.addf %307, %311 : vector<28x168xf32>
    %c0_252 = arith.constant 0 : index
    %c0_253 = arith.constant 0 : index
    %313 = vector.load %arg3[%c0_252, %c0_253] : memref<1x168xf32, #tpu.memory_space<vmem>>, vector<1x168xf32>
    %314 = vector.broadcast %313 : vector<1x168xf32> to vector<28x168xf32>
    %315 = arith.addf %312, %314 : vector<28x168xf32>
    %cst_254 = arith.constant 0.000000e+00 : f32
    %316 = vector.broadcast %cst_254 : f32 to vector<28x168xf32>
    %317 = arith.maximumf %315, %316 : vector<28x168xf32>
    %318 = arith.truncf %317 : vector<28x168xf32> to vector<28x168xbf16>
    %c0_255 = arith.constant 0 : index
    %c0_256 = arith.constant 0 : index
    %319 = vector.load %arg4[%c0_255, %c0_256] : memref<14x28xbf16, #tpu.memory_space<vmem>>, vector<14x28xbf16>
    %cst_257 = arith.constant dense<0.000000e+00> : vector<14x168xf32>
    %320 = tpu.matmul %319, %318, %cst_257 {dimension_numbers = #tpu.dot_dimension_numbers<[1], [0], [0], [1], [0, 0, 1, 1], [], []>} : vector<14x28xbf16>, vector<28x168xbf16>, vector<14x168xf32> -> vector<14x168xf32>
    %321 = arith.truncf %320 : vector<14x168xf32> to vector<14x168xbf16>
    %c0_258 = arith.constant 0 : index
    %c0_259 = arith.constant 0 : index
    %322 = vector.load %arg5[%c0_258, %c0_259] : memref<168x84xbf16, #tpu.memory_space<vmem>>, vector<168x84xbf16>
    %cst_260 = arith.constant dense<0.000000e+00> : vector<14x84xf32>
    %323 = tpu.matmul %321, %322, %cst_260 {dimension_numbers = #tpu.dot_dimension_numbers<[1], [0], [0], [1], [0, 0, 1, 1], [], []>} : vector<14x168xbf16>, vector<168x84xbf16>, vector<14x84xf32> -> vector<14x84xf32>
    %324 = arith.truncf %323 : vector<14x84xf32> to vector<14x84xbf16>
    %325 = vector.extract_strided_slice %324 {offsets = [0, 0], sizes = [10, 84], strides = [1, 1]} : vector<14x84xbf16> to vector<10x84xbf16>
    %c0_261 = arith.constant 0 : index
    %c0_262 = arith.constant 0 : index
    %c0_263 = arith.constant 0 : index
    %326 = vector.load %arg6[%c0_261, %c0_262, %c0_263] : memref<5x84x160xbf16, #tpu.memory_space<vmem>>, vector<1x84x160xbf16>
    %327 = vector.shape_cast %326 : vector<1x84x160xbf16> to vector<84x160xbf16>
    %cst_264 = arith.constant dense<0.000000e+00> : vector<10x160xf32>
    %328 = tpu.matmul %325, %327, %cst_264 {dimension_numbers = #tpu.dot_dimension_numbers<[1], [0], [0], [1], [0, 0, 1, 1], [], []>} : vector<10x84xbf16>, vector<84x160xbf16>, vector<10x160xf32> -> vector<10x160xf32>
    %329 = vector.extract_strided_slice %324 {offsets = [1, 0], sizes = [10, 84], strides = [1, 1]} : vector<14x84xbf16> to vector<10x84xbf16>
    %c1_265 = arith.constant 1 : index
    %c0_266 = arith.constant 0 : index
    %c0_267 = arith.constant 0 : index
    %330 = vector.load %arg6[%c1_265, %c0_266, %c0_267] : memref<5x84x160xbf16, #tpu.memory_space<vmem>>, vector<1x84x160xbf16>
    %331 = vector.shape_cast %330 : vector<1x84x160xbf16> to vector<84x160xbf16>
    %cst_268 = arith.constant dense<0.000000e+00> : vector<10x160xf32>
    %332 = tpu.matmul %329, %331, %cst_268 {dimension_numbers = #tpu.dot_dimension_numbers<[1], [0], [0], [1], [0, 0, 1, 1], [], []>} : vector<10x84xbf16>, vector<84x160xbf16>, vector<10x160xf32> -> vector<10x160xf32>
    %333 = arith.addf %328, %332 : vector<10x160xf32>
    %334 = vector.extract_strided_slice %324 {offsets = [2, 0], sizes = [10, 84], strides = [1, 1]} : vector<14x84xbf16> to vector<10x84xbf16>
    %c2_269 = arith.constant 2 : index
    %c0_270 = arith.constant 0 : index
    %c0_271 = arith.constant 0 : index
    %335 = vector.load %arg6[%c2_269, %c0_270, %c0_271] : memref<5x84x160xbf16, #tpu.memory_space<vmem>>, vector<1x84x160xbf16>
    %336 = vector.shape_cast %335 : vector<1x84x160xbf16> to vector<84x160xbf16>
    %cst_272 = arith.constant dense<0.000000e+00> : vector<10x160xf32>
    %337 = tpu.matmul %334, %336, %cst_272 {dimension_numbers = #tpu.dot_dimension_numbers<[1], [0], [0], [1], [0, 0, 1, 1], [], []>} : vector<10x84xbf16>, vector<84x160xbf16>, vector<10x160xf32> -> vector<10x160xf32>
    %338 = arith.addf %333, %337 : vector<10x160xf32>
    %339 = vector.extract_strided_slice %324 {offsets = [3, 0], sizes = [10, 84], strides = [1, 1]} : vector<14x84xbf16> to vector<10x84xbf16>
    %c3_273 = arith.constant 3 : index
    %c0_274 = arith.constant 0 : index
    %c0_275 = arith.constant 0 : index
    %340 = vector.load %arg6[%c3_273, %c0_274, %c0_275] : memref<5x84x160xbf16, #tpu.memory_space<vmem>>, vector<1x84x160xbf16>
    %341 = vector.shape_cast %340 : vector<1x84x160xbf16> to vector<84x160xbf16>
    %cst_276 = arith.constant dense<0.000000e+00> : vector<10x160xf32>
    %342 = tpu.matmul %339, %341, %cst_276 {dimension_numbers = #tpu.dot_dimension_numbers<[1], [0], [0], [1], [0, 0, 1, 1], [], []>} : vector<10x84xbf16>, vector<84x160xbf16>, vector<10x160xf32> -> vector<10x160xf32>
    %343 = arith.addf %338, %342 : vector<10x160xf32>
    %344 = vector.extract_strided_slice %324 {offsets = [4, 0], sizes = [10, 84], strides = [1, 1]} : vector<14x84xbf16> to vector<10x84xbf16>
    %c4_277 = arith.constant 4 : index
    %c0_278 = arith.constant 0 : index
    %c0_279 = arith.constant 0 : index
    %345 = vector.load %arg6[%c4_277, %c0_278, %c0_279] : memref<5x84x160xbf16, #tpu.memory_space<vmem>>, vector<1x84x160xbf16>
    %346 = vector.shape_cast %345 : vector<1x84x160xbf16> to vector<84x160xbf16>
    %cst_280 = arith.constant dense<0.000000e+00> : vector<10x160xf32>
    %347 = tpu.matmul %344, %346, %cst_280 {dimension_numbers = #tpu.dot_dimension_numbers<[1], [0], [0], [1], [0, 0, 1, 1], [], []>} : vector<10x84xbf16>, vector<84x160xbf16>, vector<10x160xf32> -> vector<10x160xf32>
    %348 = arith.addf %343, %347 : vector<10x160xf32>
    %c0_281 = arith.constant 0 : index
    %c0_282 = arith.constant 0 : index
    %349 = vector.load %arg7[%c0_281, %c0_282] : memref<1x160xf32, #tpu.memory_space<vmem>>, vector<1x160xf32>
    %350 = vector.broadcast %349 : vector<1x160xf32> to vector<10x160xf32>
    %351 = arith.addf %348, %350 : vector<10x160xf32>
    %cst_283 = arith.constant 0.000000e+00 : f32
    %352 = vector.broadcast %cst_283 : f32 to vector<10x160xf32>
    %353 = arith.maximumf %351, %352 : vector<10x160xf32>
    %354 = arith.truncf %353 : vector<10x160xf32> to vector<10x160xbf16>
    %c0_284 = arith.constant 0 : index
    %c0_285 = arith.constant 0 : index
    %355 = vector.load %arg8[%c0_284, %c0_285] : memref<5x10xbf16, #tpu.memory_space<vmem>>, vector<5x10xbf16>
    %cst_286 = arith.constant dense<0.000000e+00> : vector<5x160xf32>
    %356 = tpu.matmul %355, %354, %cst_286 {dimension_numbers = #tpu.dot_dimension_numbers<[1], [0], [0], [1], [0, 0, 1, 1], [], []>} : vector<5x10xbf16>, vector<10x160xbf16>, vector<5x160xf32> -> vector<5x160xf32>
    %357 = arith.truncf %356 : vector<5x160xf32> to vector<5x160xbf16>
    %c0_287 = arith.constant 0 : index
    %c0_288 = arith.constant 0 : index
    %358 = vector.load %arg9[%c0_287, %c0_288] : memref<160x80xbf16, #tpu.memory_space<vmem>>, vector<160x80xbf16>
    %cst_289 = arith.constant dense<0.000000e+00> : vector<5x80xf32>
    %359 = tpu.matmul %357, %358, %cst_289 {dimension_numbers = #tpu.dot_dimension_numbers<[1], [0], [0], [1], [0, 0, 1, 1], [], []>} : vector<5x160xbf16>, vector<160x80xbf16>, vector<5x80xf32> -> vector<5x80xf32>
    %c160 = arith.constant 160 : index
    %c0_290 = arith.constant 0 : index
    %360 = vector.load %arg1[%c160, %c0_290] : memref<256x32xbf16, #tpu.memory_space<vmem>>, vector<32x32xbf16>
    %361 = vector.extract_strided_slice %360 {offsets = [0, 0], sizes = [28, 32], strides = [1, 1]} : vector<32x32xbf16> to vector<28x32xbf16>
    %c0_291 = arith.constant 0 : index
    %c0_292 = arith.constant 0 : index
    %c0_293 = arith.constant 0 : index
    %362 = vector.load %arg2[%c0_291, %c0_292, %c0_293] : memref<5x32x168xbf16, #tpu.memory_space<vmem>>, vector<1x32x168xbf16>
    %363 = vector.shape_cast %362 : vector<1x32x168xbf16> to vector<32x168xbf16>
    %cst_294 = arith.constant dense<0.000000e+00> : vector<28x168xf32>
    %364 = tpu.matmul %361, %363, %cst_294 {dimension_numbers = #tpu.dot_dimension_numbers<[1], [0], [0], [1], [0, 0, 1, 1], [], []>} : vector<28x32xbf16>, vector<32x168xbf16>, vector<28x168xf32> -> vector<28x168xf32>
    %365 = vector.extract_strided_slice %360 {offsets = [1, 0], sizes = [28, 32], strides = [1, 1]} : vector<32x32xbf16> to vector<28x32xbf16>
    %c1_295 = arith.constant 1 : index
    %c0_296 = arith.constant 0 : index
    %c0_297 = arith.constant 0 : index
    %366 = vector.load %arg2[%c1_295, %c0_296, %c0_297] : memref<5x32x168xbf16, #tpu.memory_space<vmem>>, vector<1x32x168xbf16>
    %367 = vector.shape_cast %366 : vector<1x32x168xbf16> to vector<32x168xbf16>
    %cst_298 = arith.constant dense<0.000000e+00> : vector<28x168xf32>
    %368 = tpu.matmul %365, %367, %cst_298 {dimension_numbers = #tpu.dot_dimension_numbers<[1], [0], [0], [1], [0, 0, 1, 1], [], []>} : vector<28x32xbf16>, vector<32x168xbf16>, vector<28x168xf32> -> vector<28x168xf32>
    %369 = arith.addf %364, %368 : vector<28x168xf32>
    %370 = vector.extract_strided_slice %360 {offsets = [2, 0], sizes = [28, 32], strides = [1, 1]} : vector<32x32xbf16> to vector<28x32xbf16>
    %c2_299 = arith.constant 2 : index
    %c0_300 = arith.constant 0 : index
    %c0_301 = arith.constant 0 : index
    %371 = vector.load %arg2[%c2_299, %c0_300, %c0_301] : memref<5x32x168xbf16, #tpu.memory_space<vmem>>, vector<1x32x168xbf16>
    %372 = vector.shape_cast %371 : vector<1x32x168xbf16> to vector<32x168xbf16>
    %cst_302 = arith.constant dense<0.000000e+00> : vector<28x168xf32>
    %373 = tpu.matmul %370, %372, %cst_302 {dimension_numbers = #tpu.dot_dimension_numbers<[1], [0], [0], [1], [0, 0, 1, 1], [], []>} : vector<28x32xbf16>, vector<32x168xbf16>, vector<28x168xf32> -> vector<28x168xf32>
    %374 = arith.addf %369, %373 : vector<28x168xf32>
    %375 = vector.extract_strided_slice %360 {offsets = [3, 0], sizes = [28, 32], strides = [1, 1]} : vector<32x32xbf16> to vector<28x32xbf16>
    %c3_303 = arith.constant 3 : index
    %c0_304 = arith.constant 0 : index
    %c0_305 = arith.constant 0 : index
    %376 = vector.load %arg2[%c3_303, %c0_304, %c0_305] : memref<5x32x168xbf16, #tpu.memory_space<vmem>>, vector<1x32x168xbf16>
    %377 = vector.shape_cast %376 : vector<1x32x168xbf16> to vector<32x168xbf16>
    %cst_306 = arith.constant dense<0.000000e+00> : vector<28x168xf32>
    %378 = tpu.matmul %375, %377, %cst_306 {dimension_numbers = #tpu.dot_dimension_numbers<[1], [0], [0], [1], [0, 0, 1, 1], [], []>} : vector<28x32xbf16>, vector<32x168xbf16>, vector<28x168xf32> -> vector<28x168xf32>
    %379 = arith.addf %374, %378 : vector<28x168xf32>
    %380 = vector.extract_strided_slice %360 {offsets = [4, 0], sizes = [28, 32], strides = [1, 1]} : vector<32x32xbf16> to vector<28x32xbf16>
    %c4_307 = arith.constant 4 : index
    %c0_308 = arith.constant 0 : index
    %c0_309 = arith.constant 0 : index
    %381 = vector.load %arg2[%c4_307, %c0_308, %c0_309] : memref<5x32x168xbf16, #tpu.memory_space<vmem>>, vector<1x32x168xbf16>
    %382 = vector.shape_cast %381 : vector<1x32x168xbf16> to vector<32x168xbf16>
    %cst_310 = arith.constant dense<0.000000e+00> : vector<28x168xf32>
    %383 = tpu.matmul %380, %382, %cst_310 {dimension_numbers = #tpu.dot_dimension_numbers<[1], [0], [0], [1], [0, 0, 1, 1], [], []>} : vector<28x32xbf16>, vector<32x168xbf16>, vector<28x168xf32> -> vector<28x168xf32>
    %384 = arith.addf %379, %383 : vector<28x168xf32>
    %c0_311 = arith.constant 0 : index
    %c0_312 = arith.constant 0 : index
    %385 = vector.load %arg3[%c0_311, %c0_312] : memref<1x168xf32, #tpu.memory_space<vmem>>, vector<1x168xf32>
    %386 = vector.broadcast %385 : vector<1x168xf32> to vector<28x168xf32>
    %387 = arith.addf %384, %386 : vector<28x168xf32>
    %cst_313 = arith.constant 0.000000e+00 : f32
    %388 = vector.broadcast %cst_313 : f32 to vector<28x168xf32>
    %389 = arith.maximumf %387, %388 : vector<28x168xf32>
    %390 = arith.truncf %389 : vector<28x168xf32> to vector<28x168xbf16>
    %c0_314 = arith.constant 0 : index
    %c0_315 = arith.constant 0 : index
    %391 = vector.load %arg4[%c0_314, %c0_315] : memref<14x28xbf16, #tpu.memory_space<vmem>>, vector<14x28xbf16>
    %cst_316 = arith.constant dense<0.000000e+00> : vector<14x168xf32>
    %392 = tpu.matmul %391, %390, %cst_316 {dimension_numbers = #tpu.dot_dimension_numbers<[1], [0], [0], [1], [0, 0, 1, 1], [], []>} : vector<14x28xbf16>, vector<28x168xbf16>, vector<14x168xf32> -> vector<14x168xf32>
    %393 = arith.truncf %392 : vector<14x168xf32> to vector<14x168xbf16>
    %c0_317 = arith.constant 0 : index
    %c0_318 = arith.constant 0 : index
    %394 = vector.load %arg5[%c0_317, %c0_318] : memref<168x84xbf16, #tpu.memory_space<vmem>>, vector<168x84xbf16>
    %cst_319 = arith.constant dense<0.000000e+00> : vector<14x84xf32>
    %395 = tpu.matmul %393, %394, %cst_319 {dimension_numbers = #tpu.dot_dimension_numbers<[1], [0], [0], [1], [0, 0, 1, 1], [], []>} : vector<14x168xbf16>, vector<168x84xbf16>, vector<14x84xf32> -> vector<14x84xf32>
    %396 = arith.truncf %395 : vector<14x84xf32> to vector<14x84xbf16>
    %397 = vector.extract_strided_slice %396 {offsets = [0, 0], sizes = [10, 84], strides = [1, 1]} : vector<14x84xbf16> to vector<10x84xbf16>
    %c0_320 = arith.constant 0 : index
    %c0_321 = arith.constant 0 : index
    %c0_322 = arith.constant 0 : index
    %398 = vector.load %arg6[%c0_320, %c0_321, %c0_322] : memref<5x84x160xbf16, #tpu.memory_space<vmem>>, vector<1x84x160xbf16>
    %399 = vector.shape_cast %398 : vector<1x84x160xbf16> to vector<84x160xbf16>
    %cst_323 = arith.constant dense<0.000000e+00> : vector<10x160xf32>
    %400 = tpu.matmul %397, %399, %cst_323 {dimension_numbers = #tpu.dot_dimension_numbers<[1], [0], [0], [1], [0, 0, 1, 1], [], []>} : vector<10x84xbf16>, vector<84x160xbf16>, vector<10x160xf32> -> vector<10x160xf32>
    %401 = vector.extract_strided_slice %396 {offsets = [1, 0], sizes = [10, 84], strides = [1, 1]} : vector<14x84xbf16> to vector<10x84xbf16>
    %c1_324 = arith.constant 1 : index
    %c0_325 = arith.constant 0 : index
    %c0_326 = arith.constant 0 : index
    %402 = vector.load %arg6[%c1_324, %c0_325, %c0_326] : memref<5x84x160xbf16, #tpu.memory_space<vmem>>, vector<1x84x160xbf16>
    %403 = vector.shape_cast %402 : vector<1x84x160xbf16> to vector<84x160xbf16>
    %cst_327 = arith.constant dense<0.000000e+00> : vector<10x160xf32>
    %404 = tpu.matmul %401, %403, %cst_327 {dimension_numbers = #tpu.dot_dimension_numbers<[1], [0], [0], [1], [0, 0, 1, 1], [], []>} : vector<10x84xbf16>, vector<84x160xbf16>, vector<10x160xf32> -> vector<10x160xf32>
    %405 = arith.addf %400, %404 : vector<10x160xf32>
    %406 = vector.extract_strided_slice %396 {offsets = [2, 0], sizes = [10, 84], strides = [1, 1]} : vector<14x84xbf16> to vector<10x84xbf16>
    %c2_328 = arith.constant 2 : index
    %c0_329 = arith.constant 0 : index
    %c0_330 = arith.constant 0 : index
    %407 = vector.load %arg6[%c2_328, %c0_329, %c0_330] : memref<5x84x160xbf16, #tpu.memory_space<vmem>>, vector<1x84x160xbf16>
    %408 = vector.shape_cast %407 : vector<1x84x160xbf16> to vector<84x160xbf16>
    %cst_331 = arith.constant dense<0.000000e+00> : vector<10x160xf32>
    %409 = tpu.matmul %406, %408, %cst_331 {dimension_numbers = #tpu.dot_dimension_numbers<[1], [0], [0], [1], [0, 0, 1, 1], [], []>} : vector<10x84xbf16>, vector<84x160xbf16>, vector<10x160xf32> -> vector<10x160xf32>
    %410 = arith.addf %405, %409 : vector<10x160xf32>
    %411 = vector.extract_strided_slice %396 {offsets = [3, 0], sizes = [10, 84], strides = [1, 1]} : vector<14x84xbf16> to vector<10x84xbf16>
    %c3_332 = arith.constant 3 : index
    %c0_333 = arith.constant 0 : index
    %c0_334 = arith.constant 0 : index
    %412 = vector.load %arg6[%c3_332, %c0_333, %c0_334] : memref<5x84x160xbf16, #tpu.memory_space<vmem>>, vector<1x84x160xbf16>
    %413 = vector.shape_cast %412 : vector<1x84x160xbf16> to vector<84x160xbf16>
    %cst_335 = arith.constant dense<0.000000e+00> : vector<10x160xf32>
    %414 = tpu.matmul %411, %413, %cst_335 {dimension_numbers = #tpu.dot_dimension_numbers<[1], [0], [0], [1], [0, 0, 1, 1], [], []>} : vector<10x84xbf16>, vector<84x160xbf16>, vector<10x160xf32> -> vector<10x160xf32>
    %415 = arith.addf %410, %414 : vector<10x160xf32>
    %416 = vector.extract_strided_slice %396 {offsets = [4, 0], sizes = [10, 84], strides = [1, 1]} : vector<14x84xbf16> to vector<10x84xbf16>
    %c4_336 = arith.constant 4 : index
    %c0_337 = arith.constant 0 : index
    %c0_338 = arith.constant 0 : index
    %417 = vector.load %arg6[%c4_336, %c0_337, %c0_338] : memref<5x84x160xbf16, #tpu.memory_space<vmem>>, vector<1x84x160xbf16>
    %418 = vector.shape_cast %417 : vector<1x84x160xbf16> to vector<84x160xbf16>
    %cst_339 = arith.constant dense<0.000000e+00> : vector<10x160xf32>
    %419 = tpu.matmul %416, %418, %cst_339 {dimension_numbers = #tpu.dot_dimension_numbers<[1], [0], [0], [1], [0, 0, 1, 1], [], []>} : vector<10x84xbf16>, vector<84x160xbf16>, vector<10x160xf32> -> vector<10x160xf32>
    %420 = arith.addf %415, %419 : vector<10x160xf32>
    %c0_340 = arith.constant 0 : index
    %c0_341 = arith.constant 0 : index
    %421 = vector.load %arg7[%c0_340, %c0_341] : memref<1x160xf32, #tpu.memory_space<vmem>>, vector<1x160xf32>
    %422 = vector.broadcast %421 : vector<1x160xf32> to vector<10x160xf32>
    %423 = arith.addf %420, %422 : vector<10x160xf32>
    %cst_342 = arith.constant 0.000000e+00 : f32
    %424 = vector.broadcast %cst_342 : f32 to vector<10x160xf32>
    %425 = arith.maximumf %423, %424 : vector<10x160xf32>
    %426 = arith.truncf %425 : vector<10x160xf32> to vector<10x160xbf16>
    %c0_343 = arith.constant 0 : index
    %c0_344 = arith.constant 0 : index
    %427 = vector.load %arg8[%c0_343, %c0_344] : memref<5x10xbf16, #tpu.memory_space<vmem>>, vector<5x10xbf16>
    %cst_345 = arith.constant dense<0.000000e+00> : vector<5x160xf32>
    %428 = tpu.matmul %427, %426, %cst_345 {dimension_numbers = #tpu.dot_dimension_numbers<[1], [0], [0], [1], [0, 0, 1, 1], [], []>} : vector<5x10xbf16>, vector<10x160xbf16>, vector<5x160xf32> -> vector<5x160xf32>
    %429 = arith.truncf %428 : vector<5x160xf32> to vector<5x160xbf16>
    %c0_346 = arith.constant 0 : index
    %c0_347 = arith.constant 0 : index
    %430 = vector.load %arg9[%c0_346, %c0_347] : memref<160x80xbf16, #tpu.memory_space<vmem>>, vector<160x80xbf16>
    %cst_348 = arith.constant dense<0.000000e+00> : vector<5x80xf32>
    %431 = tpu.matmul %429, %430, %cst_348 {dimension_numbers = #tpu.dot_dimension_numbers<[1], [0], [0], [1], [0, 0, 1, 1], [], []>} : vector<5x160xbf16>, vector<160x80xbf16>, vector<5x80xf32> -> vector<5x80xf32>
    %c192 = arith.constant 192 : index
    %c0_349 = arith.constant 0 : index
    %432 = vector.load %arg1[%c192, %c0_349] : memref<256x32xbf16, #tpu.memory_space<vmem>>, vector<32x32xbf16>
    %433 = vector.extract_strided_slice %432 {offsets = [0, 0], sizes = [28, 32], strides = [1, 1]} : vector<32x32xbf16> to vector<28x32xbf16>
    %c0_350 = arith.constant 0 : index
    %c0_351 = arith.constant 0 : index
    %c0_352 = arith.constant 0 : index
    %434 = vector.load %arg2[%c0_350, %c0_351, %c0_352] : memref<5x32x168xbf16, #tpu.memory_space<vmem>>, vector<1x32x168xbf16>
    %435 = vector.shape_cast %434 : vector<1x32x168xbf16> to vector<32x168xbf16>
    %cst_353 = arith.constant dense<0.000000e+00> : vector<28x168xf32>
    %436 = tpu.matmul %433, %435, %cst_353 {dimension_numbers = #tpu.dot_dimension_numbers<[1], [0], [0], [1], [0, 0, 1, 1], [], []>} : vector<28x32xbf16>, vector<32x168xbf16>, vector<28x168xf32> -> vector<28x168xf32>
    %437 = vector.extract_strided_slice %432 {offsets = [1, 0], sizes = [28, 32], strides = [1, 1]} : vector<32x32xbf16> to vector<28x32xbf16>
    %c1_354 = arith.constant 1 : index
    %c0_355 = arith.constant 0 : index
    %c0_356 = arith.constant 0 : index
    %438 = vector.load %arg2[%c1_354, %c0_355, %c0_356] : memref<5x32x168xbf16, #tpu.memory_space<vmem>>, vector<1x32x168xbf16>
    %439 = vector.shape_cast %438 : vector<1x32x168xbf16> to vector<32x168xbf16>
    %cst_357 = arith.constant dense<0.000000e+00> : vector<28x168xf32>
    %440 = tpu.matmul %437, %439, %cst_357 {dimension_numbers = #tpu.dot_dimension_numbers<[1], [0], [0], [1], [0, 0, 1, 1], [], []>} : vector<28x32xbf16>, vector<32x168xbf16>, vector<28x168xf32> -> vector<28x168xf32>
    %441 = arith.addf %436, %440 : vector<28x168xf32>
    %442 = vector.extract_strided_slice %432 {offsets = [2, 0], sizes = [28, 32], strides = [1, 1]} : vector<32x32xbf16> to vector<28x32xbf16>
    %c2_358 = arith.constant 2 : index
    %c0_359 = arith.constant 0 : index
    %c0_360 = arith.constant 0 : index
    %443 = vector.load %arg2[%c2_358, %c0_359, %c0_360] : memref<5x32x168xbf16, #tpu.memory_space<vmem>>, vector<1x32x168xbf16>
    %444 = vector.shape_cast %443 : vector<1x32x168xbf16> to vector<32x168xbf16>
    %cst_361 = arith.constant dense<0.000000e+00> : vector<28x168xf32>
    %445 = tpu.matmul %442, %444, %cst_361 {dimension_numbers = #tpu.dot_dimension_numbers<[1], [0], [0], [1], [0, 0, 1, 1], [], []>} : vector<28x32xbf16>, vector<32x168xbf16>, vector<28x168xf32> -> vector<28x168xf32>
    %446 = arith.addf %441, %445 : vector<28x168xf32>
    %447 = vector.extract_strided_slice %432 {offsets = [3, 0], sizes = [28, 32], strides = [1, 1]} : vector<32x32xbf16> to vector<28x32xbf16>
    %c3_362 = arith.constant 3 : index
    %c0_363 = arith.constant 0 : index
    %c0_364 = arith.constant 0 : index
    %448 = vector.load %arg2[%c3_362, %c0_363, %c0_364] : memref<5x32x168xbf16, #tpu.memory_space<vmem>>, vector<1x32x168xbf16>
    %449 = vector.shape_cast %448 : vector<1x32x168xbf16> to vector<32x168xbf16>
    %cst_365 = arith.constant dense<0.000000e+00> : vector<28x168xf32>
    %450 = tpu.matmul %447, %449, %cst_365 {dimension_numbers = #tpu.dot_dimension_numbers<[1], [0], [0], [1], [0, 0, 1, 1], [], []>} : vector<28x32xbf16>, vector<32x168xbf16>, vector<28x168xf32> -> vector<28x168xf32>
    %451 = arith.addf %446, %450 : vector<28x168xf32>
    %452 = vector.extract_strided_slice %432 {offsets = [4, 0], sizes = [28, 32], strides = [1, 1]} : vector<32x32xbf16> to vector<28x32xbf16>
    %c4_366 = arith.constant 4 : index
    %c0_367 = arith.constant 0 : index
    %c0_368 = arith.constant 0 : index
    %453 = vector.load %arg2[%c4_366, %c0_367, %c0_368] : memref<5x32x168xbf16, #tpu.memory_space<vmem>>, vector<1x32x168xbf16>
    %454 = vector.shape_cast %453 : vector<1x32x168xbf16> to vector<32x168xbf16>
    %cst_369 = arith.constant dense<0.000000e+00> : vector<28x168xf32>
    %455 = tpu.matmul %452, %454, %cst_369 {dimension_numbers = #tpu.dot_dimension_numbers<[1], [0], [0], [1], [0, 0, 1, 1], [], []>} : vector<28x32xbf16>, vector<32x168xbf16>, vector<28x168xf32> -> vector<28x168xf32>
    %456 = arith.addf %451, %455 : vector<28x168xf32>
    %c0_370 = arith.constant 0 : index
    %c0_371 = arith.constant 0 : index
    %457 = vector.load %arg3[%c0_370, %c0_371] : memref<1x168xf32, #tpu.memory_space<vmem>>, vector<1x168xf32>
    %458 = vector.broadcast %457 : vector<1x168xf32> to vector<28x168xf32>
    %459 = arith.addf %456, %458 : vector<28x168xf32>
    %cst_372 = arith.constant 0.000000e+00 : f32
    %460 = vector.broadcast %cst_372 : f32 to vector<28x168xf32>
    %461 = arith.maximumf %459, %460 : vector<28x168xf32>
    %462 = arith.truncf %461 : vector<28x168xf32> to vector<28x168xbf16>
    %c0_373 = arith.constant 0 : index
    %c0_374 = arith.constant 0 : index
    %463 = vector.load %arg4[%c0_373, %c0_374] : memref<14x28xbf16, #tpu.memory_space<vmem>>, vector<14x28xbf16>
    %cst_375 = arith.constant dense<0.000000e+00> : vector<14x168xf32>
    %464 = tpu.matmul %463, %462, %cst_375 {dimension_numbers = #tpu.dot_dimension_numbers<[1], [0], [0], [1], [0, 0, 1, 1], [], []>} : vector<14x28xbf16>, vector<28x168xbf16>, vector<14x168xf32> -> vector<14x168xf32>
    %465 = arith.truncf %464 : vector<14x168xf32> to vector<14x168xbf16>
    %c0_376 = arith.constant 0 : index
    %c0_377 = arith.constant 0 : index
    %466 = vector.load %arg5[%c0_376, %c0_377] : memref<168x84xbf16, #tpu.memory_space<vmem>>, vector<168x84xbf16>
    %cst_378 = arith.constant dense<0.000000e+00> : vector<14x84xf32>
    %467 = tpu.matmul %465, %466, %cst_378 {dimension_numbers = #tpu.dot_dimension_numbers<[1], [0], [0], [1], [0, 0, 1, 1], [], []>} : vector<14x168xbf16>, vector<168x84xbf16>, vector<14x84xf32> -> vector<14x84xf32>
    %468 = arith.truncf %467 : vector<14x84xf32> to vector<14x84xbf16>
    %469 = vector.extract_strided_slice %468 {offsets = [0, 0], sizes = [10, 84], strides = [1, 1]} : vector<14x84xbf16> to vector<10x84xbf16>
    %c0_379 = arith.constant 0 : index
    %c0_380 = arith.constant 0 : index
    %c0_381 = arith.constant 0 : index
    %470 = vector.load %arg6[%c0_379, %c0_380, %c0_381] : memref<5x84x160xbf16, #tpu.memory_space<vmem>>, vector<1x84x160xbf16>
    %471 = vector.shape_cast %470 : vector<1x84x160xbf16> to vector<84x160xbf16>
    %cst_382 = arith.constant dense<0.000000e+00> : vector<10x160xf32>
    %472 = tpu.matmul %469, %471, %cst_382 {dimension_numbers = #tpu.dot_dimension_numbers<[1], [0], [0], [1], [0, 0, 1, 1], [], []>} : vector<10x84xbf16>, vector<84x160xbf16>, vector<10x160xf32> -> vector<10x160xf32>
    %473 = vector.extract_strided_slice %468 {offsets = [1, 0], sizes = [10, 84], strides = [1, 1]} : vector<14x84xbf16> to vector<10x84xbf16>
    %c1_383 = arith.constant 1 : index
    %c0_384 = arith.constant 0 : index
    %c0_385 = arith.constant 0 : index
    %474 = vector.load %arg6[%c1_383, %c0_384, %c0_385] : memref<5x84x160xbf16, #tpu.memory_space<vmem>>, vector<1x84x160xbf16>
    %475 = vector.shape_cast %474 : vector<1x84x160xbf16> to vector<84x160xbf16>
    %cst_386 = arith.constant dense<0.000000e+00> : vector<10x160xf32>
    %476 = tpu.matmul %473, %475, %cst_386 {dimension_numbers = #tpu.dot_dimension_numbers<[1], [0], [0], [1], [0, 0, 1, 1], [], []>} : vector<10x84xbf16>, vector<84x160xbf16>, vector<10x160xf32> -> vector<10x160xf32>
    %477 = arith.addf %472, %476 : vector<10x160xf32>
    %478 = vector.extract_strided_slice %468 {offsets = [2, 0], sizes = [10, 84], strides = [1, 1]} : vector<14x84xbf16> to vector<10x84xbf16>
    %c2_387 = arith.constant 2 : index
    %c0_388 = arith.constant 0 : index
    %c0_389 = arith.constant 0 : index
    %479 = vector.load %arg6[%c2_387, %c0_388, %c0_389] : memref<5x84x160xbf16, #tpu.memory_space<vmem>>, vector<1x84x160xbf16>
    %480 = vector.shape_cast %479 : vector<1x84x160xbf16> to vector<84x160xbf16>
    %cst_390 = arith.constant dense<0.000000e+00> : vector<10x160xf32>
    %481 = tpu.matmul %478, %480, %cst_390 {dimension_numbers = #tpu.dot_dimension_numbers<[1], [0], [0], [1], [0, 0, 1, 1], [], []>} : vector<10x84xbf16>, vector<84x160xbf16>, vector<10x160xf32> -> vector<10x160xf32>
    %482 = arith.addf %477, %481 : vector<10x160xf32>
    %483 = vector.extract_strided_slice %468 {offsets = [3, 0], sizes = [10, 84], strides = [1, 1]} : vector<14x84xbf16> to vector<10x84xbf16>
    %c3_391 = arith.constant 3 : index
    %c0_392 = arith.constant 0 : index
    %c0_393 = arith.constant 0 : index
    %484 = vector.load %arg6[%c3_391, %c0_392, %c0_393] : memref<5x84x160xbf16, #tpu.memory_space<vmem>>, vector<1x84x160xbf16>
    %485 = vector.shape_cast %484 : vector<1x84x160xbf16> to vector<84x160xbf16>
    %cst_394 = arith.constant dense<0.000000e+00> : vector<10x160xf32>
    %486 = tpu.matmul %483, %485, %cst_394 {dimension_numbers = #tpu.dot_dimension_numbers<[1], [0], [0], [1], [0, 0, 1, 1], [], []>} : vector<10x84xbf16>, vector<84x160xbf16>, vector<10x160xf32> -> vector<10x160xf32>
    %487 = arith.addf %482, %486 : vector<10x160xf32>
    %488 = vector.extract_strided_slice %468 {offsets = [4, 0], sizes = [10, 84], strides = [1, 1]} : vector<14x84xbf16> to vector<10x84xbf16>
    %c4_395 = arith.constant 4 : index
    %c0_396 = arith.constant 0 : index
    %c0_397 = arith.constant 0 : index
    %489 = vector.load %arg6[%c4_395, %c0_396, %c0_397] : memref<5x84x160xbf16, #tpu.memory_space<vmem>>, vector<1x84x160xbf16>
    %490 = vector.shape_cast %489 : vector<1x84x160xbf16> to vector<84x160xbf16>
    %cst_398 = arith.constant dense<0.000000e+00> : vector<10x160xf32>
    %491 = tpu.matmul %488, %490, %cst_398 {dimension_numbers = #tpu.dot_dimension_numbers<[1], [0], [0], [1], [0, 0, 1, 1], [], []>} : vector<10x84xbf16>, vector<84x160xbf16>, vector<10x160xf32> -> vector<10x160xf32>
    %492 = arith.addf %487, %491 : vector<10x160xf32>
    %c0_399 = arith.constant 0 : index
    %c0_400 = arith.constant 0 : index
    %493 = vector.load %arg7[%c0_399, %c0_400] : memref<1x160xf32, #tpu.memory_space<vmem>>, vector<1x160xf32>
    %494 = vector.broadcast %493 : vector<1x160xf32> to vector<10x160xf32>
    %495 = arith.addf %492, %494 : vector<10x160xf32>
    %cst_401 = arith.constant 0.000000e+00 : f32
    %496 = vector.broadcast %cst_401 : f32 to vector<10x160xf32>
    %497 = arith.maximumf %495, %496 : vector<10x160xf32>
    %498 = arith.truncf %497 : vector<10x160xf32> to vector<10x160xbf16>
    %c0_402 = arith.constant 0 : index
    %c0_403 = arith.constant 0 : index
    %499 = vector.load %arg8[%c0_402, %c0_403] : memref<5x10xbf16, #tpu.memory_space<vmem>>, vector<5x10xbf16>
    %cst_404 = arith.constant dense<0.000000e+00> : vector<5x160xf32>
    %500 = tpu.matmul %499, %498, %cst_404 {dimension_numbers = #tpu.dot_dimension_numbers<[1], [0], [0], [1], [0, 0, 1, 1], [], []>} : vector<5x10xbf16>, vector<10x160xbf16>, vector<5x160xf32> -> vector<5x160xf32>
    %501 = arith.truncf %500 : vector<5x160xf32> to vector<5x160xbf16>
    %c0_405 = arith.constant 0 : index
    %c0_406 = arith.constant 0 : index
    %502 = vector.load %arg9[%c0_405, %c0_406] : memref<160x80xbf16, #tpu.memory_space<vmem>>, vector<160x80xbf16>
    %cst_407 = arith.constant dense<0.000000e+00> : vector<5x80xf32>
    %503 = tpu.matmul %501, %502, %cst_407 {dimension_numbers = #tpu.dot_dimension_numbers<[1], [0], [0], [1], [0, 0, 1, 1], [], []>} : vector<5x160xbf16>, vector<160x80xbf16>, vector<5x80xf32> -> vector<5x80xf32>
    %c224 = arith.constant 224 : index
    %c0_408 = arith.constant 0 : index
    %504 = vector.load %arg1[%c224, %c0_408] : memref<256x32xbf16, #tpu.memory_space<vmem>>, vector<32x32xbf16>
    %505 = vector.extract_strided_slice %504 {offsets = [0, 0], sizes = [28, 32], strides = [1, 1]} : vector<32x32xbf16> to vector<28x32xbf16>
    %c0_409 = arith.constant 0 : index
    %c0_410 = arith.constant 0 : index
    %c0_411 = arith.constant 0 : index
    %506 = vector.load %arg2[%c0_409, %c0_410, %c0_411] : memref<5x32x168xbf16, #tpu.memory_space<vmem>>, vector<1x32x168xbf16>
    %507 = vector.shape_cast %506 : vector<1x32x168xbf16> to vector<32x168xbf16>
    %cst_412 = arith.constant dense<0.000000e+00> : vector<28x168xf32>
    %508 = tpu.matmul %505, %507, %cst_412 {dimension_numbers = #tpu.dot_dimension_numbers<[1], [0], [0], [1], [0, 0, 1, 1], [], []>} : vector<28x32xbf16>, vector<32x168xbf16>, vector<28x168xf32> -> vector<28x168xf32>
    %509 = vector.extract_strided_slice %504 {offsets = [1, 0], sizes = [28, 32], strides = [1, 1]} : vector<32x32xbf16> to vector<28x32xbf16>
    %c1_413 = arith.constant 1 : index
    %c0_414 = arith.constant 0 : index
    %c0_415 = arith.constant 0 : index
    %510 = vector.load %arg2[%c1_413, %c0_414, %c0_415] : memref<5x32x168xbf16, #tpu.memory_space<vmem>>, vector<1x32x168xbf16>
    %511 = vector.shape_cast %510 : vector<1x32x168xbf16> to vector<32x168xbf16>
    %cst_416 = arith.constant dense<0.000000e+00> : vector<28x168xf32>
    %512 = tpu.matmul %509, %511, %cst_416 {dimension_numbers = #tpu.dot_dimension_numbers<[1], [0], [0], [1], [0, 0, 1, 1], [], []>} : vector<28x32xbf16>, vector<32x168xbf16>, vector<28x168xf32> -> vector<28x168xf32>
    %513 = arith.addf %508, %512 : vector<28x168xf32>
    %514 = vector.extract_strided_slice %504 {offsets = [2, 0], sizes = [28, 32], strides = [1, 1]} : vector<32x32xbf16> to vector<28x32xbf16>
    %c2_417 = arith.constant 2 : index
    %c0_418 = arith.constant 0 : index
    %c0_419 = arith.constant 0 : index
    %515 = vector.load %arg2[%c2_417, %c0_418, %c0_419] : memref<5x32x168xbf16, #tpu.memory_space<vmem>>, vector<1x32x168xbf16>
    %516 = vector.shape_cast %515 : vector<1x32x168xbf16> to vector<32x168xbf16>
    %cst_420 = arith.constant dense<0.000000e+00> : vector<28x168xf32>
    %517 = tpu.matmul %514, %516, %cst_420 {dimension_numbers = #tpu.dot_dimension_numbers<[1], [0], [0], [1], [0, 0, 1, 1], [], []>} : vector<28x32xbf16>, vector<32x168xbf16>, vector<28x168xf32> -> vector<28x168xf32>
    %518 = arith.addf %513, %517 : vector<28x168xf32>
    %519 = vector.extract_strided_slice %504 {offsets = [3, 0], sizes = [28, 32], strides = [1, 1]} : vector<32x32xbf16> to vector<28x32xbf16>
    %c3_421 = arith.constant 3 : index
    %c0_422 = arith.constant 0 : index
    %c0_423 = arith.constant 0 : index
    %520 = vector.load %arg2[%c3_421, %c0_422, %c0_423] : memref<5x32x168xbf16, #tpu.memory_space<vmem>>, vector<1x32x168xbf16>
    %521 = vector.shape_cast %520 : vector<1x32x168xbf16> to vector<32x168xbf16>
    %cst_424 = arith.constant dense<0.000000e+00> : vector<28x168xf32>
    %522 = tpu.matmul %519, %521, %cst_424 {dimension_numbers = #tpu.dot_dimension_numbers<[1], [0], [0], [1], [0, 0, 1, 1], [], []>} : vector<28x32xbf16>, vector<32x168xbf16>, vector<28x168xf32> -> vector<28x168xf32>
    %523 = arith.addf %518, %522 : vector<28x168xf32>
    %524 = vector.extract_strided_slice %504 {offsets = [4, 0], sizes = [28, 32], strides = [1, 1]} : vector<32x32xbf16> to vector<28x32xbf16>
    %c4_425 = arith.constant 4 : index
    %c0_426 = arith.constant 0 : index
    %c0_427 = arith.constant 0 : index
    %525 = vector.load %arg2[%c4_425, %c0_426, %c0_427] : memref<5x32x168xbf16, #tpu.memory_space<vmem>>, vector<1x32x168xbf16>
    %526 = vector.shape_cast %525 : vector<1x32x168xbf16> to vector<32x168xbf16>
    %cst_428 = arith.constant dense<0.000000e+00> : vector<28x168xf32>
    %527 = tpu.matmul %524, %526, %cst_428 {dimension_numbers = #tpu.dot_dimension_numbers<[1], [0], [0], [1], [0, 0, 1, 1], [], []>} : vector<28x32xbf16>, vector<32x168xbf16>, vector<28x168xf32> -> vector<28x168xf32>
    %528 = arith.addf %523, %527 : vector<28x168xf32>
    %c0_429 = arith.constant 0 : index
    %c0_430 = arith.constant 0 : index
    %529 = vector.load %arg3[%c0_429, %c0_430] : memref<1x168xf32, #tpu.memory_space<vmem>>, vector<1x168xf32>
    %530 = vector.broadcast %529 : vector<1x168xf32> to vector<28x168xf32>
    %531 = arith.addf %528, %530 : vector<28x168xf32>
    %cst_431 = arith.constant 0.000000e+00 : f32
    %532 = vector.broadcast %cst_431 : f32 to vector<28x168xf32>
    %533 = arith.maximumf %531, %532 : vector<28x168xf32>
    %534 = arith.truncf %533 : vector<28x168xf32> to vector<28x168xbf16>
    %c0_432 = arith.constant 0 : index
    %c0_433 = arith.constant 0 : index
    %535 = vector.load %arg4[%c0_432, %c0_433] : memref<14x28xbf16, #tpu.memory_space<vmem>>, vector<14x28xbf16>
    %cst_434 = arith.constant dense<0.000000e+00> : vector<14x168xf32>
    %536 = tpu.matmul %535, %534, %cst_434 {dimension_numbers = #tpu.dot_dimension_numbers<[1], [0], [0], [1], [0, 0, 1, 1], [], []>} : vector<14x28xbf16>, vector<28x168xbf16>, vector<14x168xf32> -> vector<14x168xf32>
    %537 = arith.truncf %536 : vector<14x168xf32> to vector<14x168xbf16>
    %c0_435 = arith.constant 0 : index
    %c0_436 = arith.constant 0 : index
    %538 = vector.load %arg5[%c0_435, %c0_436] : memref<168x84xbf16, #tpu.memory_space<vmem>>, vector<168x84xbf16>
    %cst_437 = arith.constant dense<0.000000e+00> : vector<14x84xf32>
    %539 = tpu.matmul %537, %538, %cst_437 {dimension_numbers = #tpu.dot_dimension_numbers<[1], [0], [0], [1], [0, 0, 1, 1], [], []>} : vector<14x168xbf16>, vector<168x84xbf16>, vector<14x84xf32> -> vector<14x84xf32>
    %540 = arith.truncf %539 : vector<14x84xf32> to vector<14x84xbf16>
    %541 = vector.extract_strided_slice %540 {offsets = [0, 0], sizes = [10, 84], strides = [1, 1]} : vector<14x84xbf16> to vector<10x84xbf16>
    %c0_438 = arith.constant 0 : index
    %c0_439 = arith.constant 0 : index
    %c0_440 = arith.constant 0 : index
    %542 = vector.load %arg6[%c0_438, %c0_439, %c0_440] : memref<5x84x160xbf16, #tpu.memory_space<vmem>>, vector<1x84x160xbf16>
    %543 = vector.shape_cast %542 : vector<1x84x160xbf16> to vector<84x160xbf16>
    %cst_441 = arith.constant dense<0.000000e+00> : vector<10x160xf32>
    %544 = tpu.matmul %541, %543, %cst_441 {dimension_numbers = #tpu.dot_dimension_numbers<[1], [0], [0], [1], [0, 0, 1, 1], [], []>} : vector<10x84xbf16>, vector<84x160xbf16>, vector<10x160xf32> -> vector<10x160xf32>
    %545 = vector.extract_strided_slice %540 {offsets = [1, 0], sizes = [10, 84], strides = [1, 1]} : vector<14x84xbf16> to vector<10x84xbf16>
    %c1_442 = arith.constant 1 : index
    %c0_443 = arith.constant 0 : index
    %c0_444 = arith.constant 0 : index
    %546 = vector.load %arg6[%c1_442, %c0_443, %c0_444] : memref<5x84x160xbf16, #tpu.memory_space<vmem>>, vector<1x84x160xbf16>
    %547 = vector.shape_cast %546 : vector<1x84x160xbf16> to vector<84x160xbf16>
    %cst_445 = arith.constant dense<0.000000e+00> : vector<10x160xf32>
    %548 = tpu.matmul %545, %547, %cst_445 {dimension_numbers = #tpu.dot_dimension_numbers<[1], [0], [0], [1], [0, 0, 1, 1], [], []>} : vector<10x84xbf16>, vector<84x160xbf16>, vector<10x160xf32> -> vector<10x160xf32>
    %549 = arith.addf %544, %548 : vector<10x160xf32>
    %550 = vector.extract_strided_slice %540 {offsets = [2, 0], sizes = [10, 84], strides = [1, 1]} : vector<14x84xbf16> to vector<10x84xbf16>
    %c2_446 = arith.constant 2 : index
    %c0_447 = arith.constant 0 : index
    %c0_448 = arith.constant 0 : index
    %551 = vector.load %arg6[%c2_446, %c0_447, %c0_448] : memref<5x84x160xbf16, #tpu.memory_space<vmem>>, vector<1x84x160xbf16>
    %552 = vector.shape_cast %551 : vector<1x84x160xbf16> to vector<84x160xbf16>
    %cst_449 = arith.constant dense<0.000000e+00> : vector<10x160xf32>
    %553 = tpu.matmul %550, %552, %cst_449 {dimension_numbers = #tpu.dot_dimension_numbers<[1], [0], [0], [1], [0, 0, 1, 1], [], []>} : vector<10x84xbf16>, vector<84x160xbf16>, vector<10x160xf32> -> vector<10x160xf32>
    %554 = arith.addf %549, %553 : vector<10x160xf32>
    %555 = vector.extract_strided_slice %540 {offsets = [3, 0], sizes = [10, 84], strides = [1, 1]} : vector<14x84xbf16> to vector<10x84xbf16>
    %c3_450 = arith.constant 3 : index
    %c0_451 = arith.constant 0 : index
    %c0_452 = arith.constant 0 : index
    %556 = vector.load %arg6[%c3_450, %c0_451, %c0_452] : memref<5x84x160xbf16, #tpu.memory_space<vmem>>, vector<1x84x160xbf16>
    %557 = vector.shape_cast %556 : vector<1x84x160xbf16> to vector<84x160xbf16>
    %cst_453 = arith.constant dense<0.000000e+00> : vector<10x160xf32>
    %558 = tpu.matmul %555, %557, %cst_453 {dimension_numbers = #tpu.dot_dimension_numbers<[1], [0], [0], [1], [0, 0, 1, 1], [], []>} : vector<10x84xbf16>, vector<84x160xbf16>, vector<10x160xf32> -> vector<10x160xf32>
    %559 = arith.addf %554, %558 : vector<10x160xf32>
    %560 = vector.extract_strided_slice %540 {offsets = [4, 0], sizes = [10, 84], strides = [1, 1]} : vector<14x84xbf16> to vector<10x84xbf16>
    %c4_454 = arith.constant 4 : index
    %c0_455 = arith.constant 0 : index
    %c0_456 = arith.constant 0 : index
    %561 = vector.load %arg6[%c4_454, %c0_455, %c0_456] : memref<5x84x160xbf16, #tpu.memory_space<vmem>>, vector<1x84x160xbf16>
    %562 = vector.shape_cast %561 : vector<1x84x160xbf16> to vector<84x160xbf16>
    %cst_457 = arith.constant dense<0.000000e+00> : vector<10x160xf32>
    %563 = tpu.matmul %560, %562, %cst_457 {dimension_numbers = #tpu.dot_dimension_numbers<[1], [0], [0], [1], [0, 0, 1, 1], [], []>} : vector<10x84xbf16>, vector<84x160xbf16>, vector<10x160xf32> -> vector<10x160xf32>
    %564 = arith.addf %559, %563 : vector<10x160xf32>
    %c0_458 = arith.constant 0 : index
    %c0_459 = arith.constant 0 : index
    %565 = vector.load %arg7[%c0_458, %c0_459] : memref<1x160xf32, #tpu.memory_space<vmem>>, vector<1x160xf32>
    %566 = vector.broadcast %565 : vector<1x160xf32> to vector<10x160xf32>
    %567 = arith.addf %564, %566 : vector<10x160xf32>
    %cst_460 = arith.constant 0.000000e+00 : f32
    %568 = vector.broadcast %cst_460 : f32 to vector<10x160xf32>
    %569 = arith.maximumf %567, %568 : vector<10x160xf32>
    %570 = arith.truncf %569 : vector<10x160xf32> to vector<10x160xbf16>
    %c0_461 = arith.constant 0 : index
    %c0_462 = arith.constant 0 : index
    %571 = vector.load %arg8[%c0_461, %c0_462] : memref<5x10xbf16, #tpu.memory_space<vmem>>, vector<5x10xbf16>
    %cst_463 = arith.constant dense<0.000000e+00> : vector<5x160xf32>
    %572 = tpu.matmul %571, %570, %cst_463 {dimension_numbers = #tpu.dot_dimension_numbers<[1], [0], [0], [1], [0, 0, 1, 1], [], []>} : vector<5x10xbf16>, vector<10x160xbf16>, vector<5x160xf32> -> vector<5x160xf32>
    %573 = arith.truncf %572 : vector<5x160xf32> to vector<5x160xbf16>
    %c0_464 = arith.constant 0 : index
    %c0_465 = arith.constant 0 : index
    %574 = vector.load %arg9[%c0_464, %c0_465] : memref<160x80xbf16, #tpu.memory_space<vmem>>, vector<160x80xbf16>
    %cst_466 = arith.constant dense<0.000000e+00> : vector<5x80xf32>
    %575 = tpu.matmul %573, %574, %cst_466 {dimension_numbers = #tpu.dot_dimension_numbers<[1], [0], [0], [1], [0, 0, 1, 1], [], []>} : vector<5x160xbf16>, vector<160x80xbf16>, vector<5x80xf32> -> vector<5x80xf32>
    %cst_467 = arith.constant 0.000000e+00 : f32
    %576 = vector.broadcast %cst_467 : f32 to vector<8x120xf32>
    %577 = vector.extract_strided_slice %71 {offsets = [0, 0], sizes = [1, 80], strides = [1, 1]} : vector<5x80xf32> to vector<1x80xf32>
    %578 = vector.extract_strided_slice %143 {offsets = [0, 0], sizes = [1, 80], strides = [1, 1]} : vector<5x80xf32> to vector<1x80xf32>
    %579 = vector.extract_strided_slice %215 {offsets = [0, 0], sizes = [1, 80], strides = [1, 1]} : vector<5x80xf32> to vector<1x80xf32>
    %580 = vector.extract_strided_slice %287 {offsets = [0, 0], sizes = [1, 80], strides = [1, 1]} : vector<5x80xf32> to vector<1x80xf32>
    %581 = vector.extract_strided_slice %359 {offsets = [0, 0], sizes = [1, 80], strides = [1, 1]} : vector<5x80xf32> to vector<1x80xf32>
    %582 = vector.extract_strided_slice %431 {offsets = [0, 0], sizes = [1, 80], strides = [1, 1]} : vector<5x80xf32> to vector<1x80xf32>
    %583 = vector.extract_strided_slice %503 {offsets = [0, 0], sizes = [1, 80], strides = [1, 1]} : vector<5x80xf32> to vector<1x80xf32>
    %584 = vector.extract_strided_slice %575 {offsets = [0, 0], sizes = [1, 80], strides = [1, 1]} : vector<5x80xf32> to vector<1x80xf32>
    %585 = tpu.concatenate %577, %578, %579, %580, %581, %582, %583, %584 in 0 : vector<1x80xf32>, vector<1x80xf32>, vector<1x80xf32>, vector<1x80xf32>, vector<1x80xf32>, vector<1x80xf32>, vector<1x80xf32>, vector<1x80xf32> -> vector<8x80xf32>
    %586 = arith.truncf %585 : vector<8x80xf32> to vector<8x80xbf16>
    %c0_468 = arith.constant 0 : index
    %c0_469 = arith.constant 0 : index
    %c0_470 = arith.constant 0 : index
    %587 = vector.load %arg10[%c0_468, %c0_469, %c0_470] : memref<5x80x120xbf16, #tpu.memory_space<vmem>>, vector<1x80x120xbf16>
    %588 = vector.shape_cast %587 : vector<1x80x120xbf16> to vector<80x120xbf16>
    %cst_471 = arith.constant dense<0.000000e+00> : vector<8x120xf32>
    %589 = tpu.matmul %586, %588, %cst_471 {dimension_numbers = #tpu.dot_dimension_numbers<[1], [0], [0], [1], [0, 0, 1, 1], [], []>} : vector<8x80xbf16>, vector<80x120xbf16>, vector<8x120xf32> -> vector<8x120xf32>
    %590 = arith.addf %576, %589 : vector<8x120xf32>
    %591 = vector.extract_strided_slice %71 {offsets = [1, 0], sizes = [1, 80], strides = [1, 1]} : vector<5x80xf32> to vector<1x80xf32>
    %592 = vector.extract_strided_slice %143 {offsets = [1, 0], sizes = [1, 80], strides = [1, 1]} : vector<5x80xf32> to vector<1x80xf32>
    %593 = vector.extract_strided_slice %215 {offsets = [1, 0], sizes = [1, 80], strides = [1, 1]} : vector<5x80xf32> to vector<1x80xf32>
    %594 = vector.extract_strided_slice %287 {offsets = [1, 0], sizes = [1, 80], strides = [1, 1]} : vector<5x80xf32> to vector<1x80xf32>
    %595 = vector.extract_strided_slice %359 {offsets = [1, 0], sizes = [1, 80], strides = [1, 1]} : vector<5x80xf32> to vector<1x80xf32>
    %596 = vector.extract_strided_slice %431 {offsets = [1, 0], sizes = [1, 80], strides = [1, 1]} : vector<5x80xf32> to vector<1x80xf32>
    %597 = vector.extract_strided_slice %503 {offsets = [1, 0], sizes = [1, 80], strides = [1, 1]} : vector<5x80xf32> to vector<1x80xf32>
    %598 = vector.extract_strided_slice %575 {offsets = [1, 0], sizes = [1, 80], strides = [1, 1]} : vector<5x80xf32> to vector<1x80xf32>
    %599 = tpu.concatenate %591, %592, %593, %594, %595, %596, %597, %598 in 0 : vector<1x80xf32>, vector<1x80xf32>, vector<1x80xf32>, vector<1x80xf32>, vector<1x80xf32>, vector<1x80xf32>, vector<1x80xf32>, vector<1x80xf32> -> vector<8x80xf32>
    %600 = arith.truncf %599 : vector<8x80xf32> to vector<8x80xbf16>
    %c1_472 = arith.constant 1 : index
    %c0_473 = arith.constant 0 : index
    %c0_474 = arith.constant 0 : index
    %601 = vector.load %arg10[%c1_472, %c0_473, %c0_474] : memref<5x80x120xbf16, #tpu.memory_space<vmem>>, vector<1x80x120xbf16>
    %602 = vector.shape_cast %601 : vector<1x80x120xbf16> to vector<80x120xbf16>
    %cst_475 = arith.constant dense<0.000000e+00> : vector<8x120xf32>
    %603 = tpu.matmul %600, %602, %cst_475 {dimension_numbers = #tpu.dot_dimension_numbers<[1], [0], [0], [1], [0, 0, 1, 1], [], []>} : vector<8x80xbf16>, vector<80x120xbf16>, vector<8x120xf32> -> vector<8x120xf32>
    %604 = arith.addf %590, %603 : vector<8x120xf32>
    %605 = vector.extract_strided_slice %71 {offsets = [2, 0], sizes = [1, 80], strides = [1, 1]} : vector<5x80xf32> to vector<1x80xf32>
    %606 = vector.extract_strided_slice %143 {offsets = [2, 0], sizes = [1, 80], strides = [1, 1]} : vector<5x80xf32> to vector<1x80xf32>
    %607 = vector.extract_strided_slice %215 {offsets = [2, 0], sizes = [1, 80], strides = [1, 1]} : vector<5x80xf32> to vector<1x80xf32>
    %608 = vector.extract_strided_slice %287 {offsets = [2, 0], sizes = [1, 80], strides = [1, 1]} : vector<5x80xf32> to vector<1x80xf32>
    %609 = vector.extract_strided_slice %359 {offsets = [2, 0], sizes = [1, 80], strides = [1, 1]} : vector<5x80xf32> to vector<1x80xf32>
    %610 = vector.extract_strided_slice %431 {offsets = [2, 0], sizes = [1, 80], strides = [1, 1]} : vector<5x80xf32> to vector<1x80xf32>
    %611 = vector.extract_strided_slice %503 {offsets = [2, 0], sizes = [1, 80], strides = [1, 1]} : vector<5x80xf32> to vector<1x80xf32>
    %612 = vector.extract_strided_slice %575 {offsets = [2, 0], sizes = [1, 80], strides = [1, 1]} : vector<5x80xf32> to vector<1x80xf32>
    %613 = tpu.concatenate %605, %606, %607, %608, %609, %610, %611, %612 in 0 : vector<1x80xf32>, vector<1x80xf32>, vector<1x80xf32>, vector<1x80xf32>, vector<1x80xf32>, vector<1x80xf32>, vector<1x80xf32>, vector<1x80xf32> -> vector<8x80xf32>
    %614 = arith.truncf %613 : vector<8x80xf32> to vector<8x80xbf16>
    %c2_476 = arith.constant 2 : index
    %c0_477 = arith.constant 0 : index
    %c0_478 = arith.constant 0 : index
    %615 = vector.load %arg10[%c2_476, %c0_477, %c0_478] : memref<5x80x120xbf16, #tpu.memory_space<vmem>>, vector<1x80x120xbf16>
    %616 = vector.shape_cast %615 : vector<1x80x120xbf16> to vector<80x120xbf16>
    %cst_479 = arith.constant dense<0.000000e+00> : vector<8x120xf32>
    %617 = tpu.matmul %614, %616, %cst_479 {dimension_numbers = #tpu.dot_dimension_numbers<[1], [0], [0], [1], [0, 0, 1, 1], [], []>} : vector<8x80xbf16>, vector<80x120xbf16>, vector<8x120xf32> -> vector<8x120xf32>
    %618 = arith.addf %604, %617 : vector<8x120xf32>
    %619 = vector.extract_strided_slice %71 {offsets = [3, 0], sizes = [1, 80], strides = [1, 1]} : vector<5x80xf32> to vector<1x80xf32>
    %620 = vector.extract_strided_slice %143 {offsets = [3, 0], sizes = [1, 80], strides = [1, 1]} : vector<5x80xf32> to vector<1x80xf32>
    %621 = vector.extract_strided_slice %215 {offsets = [3, 0], sizes = [1, 80], strides = [1, 1]} : vector<5x80xf32> to vector<1x80xf32>
    %622 = vector.extract_strided_slice %287 {offsets = [3, 0], sizes = [1, 80], strides = [1, 1]} : vector<5x80xf32> to vector<1x80xf32>
    %623 = vector.extract_strided_slice %359 {offsets = [3, 0], sizes = [1, 80], strides = [1, 1]} : vector<5x80xf32> to vector<1x80xf32>
    %624 = vector.extract_strided_slice %431 {offsets = [3, 0], sizes = [1, 80], strides = [1, 1]} : vector<5x80xf32> to vector<1x80xf32>
    %625 = vector.extract_strided_slice %503 {offsets = [3, 0], sizes = [1, 80], strides = [1, 1]} : vector<5x80xf32> to vector<1x80xf32>
    %626 = vector.extract_strided_slice %575 {offsets = [3, 0], sizes = [1, 80], strides = [1, 1]} : vector<5x80xf32> to vector<1x80xf32>
    %627 = tpu.concatenate %619, %620, %621, %622, %623, %624, %625, %626 in 0 : vector<1x80xf32>, vector<1x80xf32>, vector<1x80xf32>, vector<1x80xf32>, vector<1x80xf32>, vector<1x80xf32>, vector<1x80xf32>, vector<1x80xf32> -> vector<8x80xf32>
    %628 = arith.truncf %627 : vector<8x80xf32> to vector<8x80xbf16>
    %c3_480 = arith.constant 3 : index
    %c0_481 = arith.constant 0 : index
    %c0_482 = arith.constant 0 : index
    %629 = vector.load %arg10[%c3_480, %c0_481, %c0_482] : memref<5x80x120xbf16, #tpu.memory_space<vmem>>, vector<1x80x120xbf16>
    %630 = vector.shape_cast %629 : vector<1x80x120xbf16> to vector<80x120xbf16>
    %cst_483 = arith.constant dense<0.000000e+00> : vector<8x120xf32>
    %631 = tpu.matmul %628, %630, %cst_483 {dimension_numbers = #tpu.dot_dimension_numbers<[1], [0], [0], [1], [0, 0, 1, 1], [], []>} : vector<8x80xbf16>, vector<80x120xbf16>, vector<8x120xf32> -> vector<8x120xf32>
    %632 = arith.addf %618, %631 : vector<8x120xf32>
    %633 = vector.extract_strided_slice %71 {offsets = [4, 0], sizes = [1, 80], strides = [1, 1]} : vector<5x80xf32> to vector<1x80xf32>
    %634 = vector.extract_strided_slice %143 {offsets = [4, 0], sizes = [1, 80], strides = [1, 1]} : vector<5x80xf32> to vector<1x80xf32>
    %635 = vector.extract_strided_slice %215 {offsets = [4, 0], sizes = [1, 80], strides = [1, 1]} : vector<5x80xf32> to vector<1x80xf32>
    %636 = vector.extract_strided_slice %287 {offsets = [4, 0], sizes = [1, 80], strides = [1, 1]} : vector<5x80xf32> to vector<1x80xf32>
    %637 = vector.extract_strided_slice %359 {offsets = [4, 0], sizes = [1, 80], strides = [1, 1]} : vector<5x80xf32> to vector<1x80xf32>
    %638 = vector.extract_strided_slice %431 {offsets = [4, 0], sizes = [1, 80], strides = [1, 1]} : vector<5x80xf32> to vector<1x80xf32>
    %639 = vector.extract_strided_slice %503 {offsets = [4, 0], sizes = [1, 80], strides = [1, 1]} : vector<5x80xf32> to vector<1x80xf32>
    %640 = vector.extract_strided_slice %575 {offsets = [4, 0], sizes = [1, 80], strides = [1, 1]} : vector<5x80xf32> to vector<1x80xf32>
    %641 = tpu.concatenate %633, %634, %635, %636, %637, %638, %639, %640 in 0 : vector<1x80xf32>, vector<1x80xf32>, vector<1x80xf32>, vector<1x80xf32>, vector<1x80xf32>, vector<1x80xf32>, vector<1x80xf32>, vector<1x80xf32> -> vector<8x80xf32>
    %642 = arith.truncf %641 : vector<8x80xf32> to vector<8x80xbf16>
    %c4_484 = arith.constant 4 : index
    %c0_485 = arith.constant 0 : index
    %c0_486 = arith.constant 0 : index
    %643 = vector.load %arg10[%c4_484, %c0_485, %c0_486] : memref<5x80x120xbf16, #tpu.memory_space<vmem>>, vector<1x80x120xbf16>
    %644 = vector.shape_cast %643 : vector<1x80x120xbf16> to vector<80x120xbf16>
    %cst_487 = arith.constant dense<0.000000e+00> : vector<8x120xf32>
    %645 = tpu.matmul %642, %644, %cst_487 {dimension_numbers = #tpu.dot_dimension_numbers<[1], [0], [0], [1], [0, 0, 1, 1], [], []>} : vector<8x80xbf16>, vector<80x120xbf16>, vector<8x120xf32> -> vector<8x120xf32>
    %646 = arith.addf %632, %645 : vector<8x120xf32>
    %c0_488 = arith.constant 0 : index
    %c0_489 = arith.constant 0 : index
    %647 = vector.load %arg11[%c0_488, %c0_489] : memref<1x120xf32, #tpu.memory_space<vmem>>, vector<1x120xf32>
    %648 = vector.broadcast %647 : vector<1x120xf32> to vector<8x120xf32>
    %649 = arith.addf %646, %648 : vector<8x120xf32>
    %cst_490 = arith.constant 0.000000e+00 : f32
    %650 = vector.broadcast %cst_490 : f32 to vector<8x120xf32>
    %651 = arith.maximumf %649, %650 : vector<8x120xf32>
    %652 = arith.truncf %651 : vector<8x120xf32> to vector<8x120xbf16>
    %c0_491 = arith.constant 0 : index
    %c0_492 = arith.constant 0 : index
    %653 = vector.load %arg12[%c0_491, %c0_492] : memref<120x84xbf16, #tpu.memory_space<vmem>>, vector<120x84xbf16>
    %cst_493 = arith.constant dense<0.000000e+00> : vector<8x84xf32>
    %654 = tpu.matmul %652, %653, %cst_493 {dimension_numbers = #tpu.dot_dimension_numbers<[1], [0], [0], [1], [0, 0, 1, 1], [], []>} : vector<8x120xbf16>, vector<120x84xbf16>, vector<8x84xf32> -> vector<8x84xf32>
    %c0_494 = arith.constant 0 : index
    %c0_495 = arith.constant 0 : index
    %655 = vector.load %arg13[%c0_494, %c0_495] : memref<1x84xf32, #tpu.memory_space<vmem>>, vector<1x84xf32>
    %656 = vector.broadcast %655 : vector<1x84xf32> to vector<8x84xf32>
    %657 = arith.addf %654, %656 : vector<8x84xf32>
    %cst_496 = arith.constant 0.000000e+00 : f32
    %658 = vector.broadcast %cst_496 : f32 to vector<8x84xf32>
    %659 = arith.maximumf %657, %658 : vector<8x84xf32>
    %660 = arith.truncf %659 : vector<8x84xf32> to vector<8x84xbf16>
    %c0_497 = arith.constant 0 : index
    %c0_498 = arith.constant 0 : index
    %661 = vector.load %arg14[%c0_497, %c0_498] : memref<84x10xbf16, #tpu.memory_space<vmem>>, vector<84x10xbf16>
    %cst_499 = arith.constant dense<0.000000e+00> : vector<8x10xf32>
    %662 = tpu.matmul %660, %661, %cst_499 {dimension_numbers = #tpu.dot_dimension_numbers<[1], [0], [0], [1], [0, 0, 1, 1], [], []>} : vector<8x84xbf16>, vector<84x10xbf16>, vector<8x10xf32> -> vector<8x10xf32>
    %c0_500 = arith.constant 0 : index
    %c0_501 = arith.constant 0 : index
    %663 = vector.load %arg15[%c0_500, %c0_501] : memref<1x10xf32, #tpu.memory_space<vmem>>, vector<1x10xf32>
    %664 = vector.broadcast %663 : vector<1x10xf32> to vector<8x10xf32>
    %665 = arith.addf %662, %664 : vector<8x10xf32>
    %c0_502 = arith.constant 0 : index
    %c0_503 = arith.constant 0 : index
    %666 = vector.load %arg16[%c0_502, %c0_503] : memref<8x10xf32, #tpu.memory_space<vmem>>, vector<8x10xf32>
    tpu.vector_store %arg16[%c0_502, %c0_503], %665 {strides = array<i32>} : memref<8x10xf32, #tpu.memory_space<vmem>>, vector<8x10xf32>,
    return
  }
  func.func @transform_0(%arg0: i32) -> (i32, i32) {
    %c0_i32 = arith.constant 0 : i32
    %c0_i32_0 = arith.constant 0 : i32
    return %arg0, %c0_i32 : i32, i32
  }
  func.func @transform_1(%arg0: i32) -> (i32, i32, i32) {
    %c0_i32 = arith.constant 0 : i32
    %c0_i32_0 = arith.constant 0 : i32
    %c0_i32_1 = arith.constant 0 : i32
    %c0_i32_2 = arith.constant 0 : i32
    return %c0_i32, %c0_i32_0, %c0_i32_1 : i32, i32, i32
  }
  func.func @transform_2(%arg0: i32) -> (i32, i32) {
    %c0_i32 = arith.constant 0 : i32
    %c0_i32_0 = arith.constant 0 : i32
    %c0_i32_1 = arith.constant 0 : i32
    return %c0_i32, %c0_i32_0 : i32, i32
  }
  func.func @transform_3(%arg0: i32) -> (i32, i32) {
    %c0_i32 = arith.constant 0 : i32
    %c0_i32_0 = arith.constant 0 : i32
    %c0_i32_1 = arith.constant 0 : i32
    return %c0_i32, %c0_i32_0 : i32, i32
  }
  func.func @transform_4(%arg0: i32) -> (i32, i32) {
    %c0_i32 = arith.constant 0 : i32
    %c0_i32_0 = arith.constant 0 : i32
    %c0_i32_1 = arith.constant 0 : i32
    return %c0_i32, %c0_i32_0 : i32, i32
  }
  func.func @transform_5(%arg0: i32) -> (i32, i32, i32) {
    %c0_i32 = arith.constant 0 : i32
    %c0_i32_0 = arith.constant 0 : i32
    %c0_i32_1 = arith.constant 0 : i32
    %c0_i32_2 = arith.constant 0 : i32
    return %c0_i32, %c0_i32_0, %c0_i32_1 : i32, i32, i32
  }
  func.func @transform_6(%arg0: i32) -> (i32, i32) {
    %c0_i32 = arith.constant 0 : i32
    %c0_i32_0 = arith.constant 0 : i32
    %c0_i32_1 = arith.constant 0 : i32
    return %c0_i32, %c0_i32_0 : i32, i32
  }
  func.func @transform_7(%arg0: i32) -> (i32, i32) {
    %c0_i32 = arith.constant 0 : i32
    %c0_i32_0 = arith.constant 0 : i32
    %c0_i32_1 = arith.constant 0 : i32
    return %c0_i32, %c0_i32_0 : i32, i32
  }
  func.func @transform_8(%arg0: i32) -> (i32, i32) {
    %c0_i32 = arith.constant 0 : i32
    %c0_i32_0 = arith.constant 0 : i32
    %c0_i32_1 = arith.constant 0 : i32
    return %c0_i32, %c0_i32_0 : i32, i32
  }
  func.func @transform_9(%arg0: i32) -> (i32, i32, i32) {
    %c0_i32 = arith.constant 0 : i32
    %c0_i32_0 = arith.constant 0 : i32
    %c0_i32_1 = arith.constant 0 : i32
    %c0_i32_2 = arith.constant 0 : i32
    return %c0_i32, %c0_i32_0, %c0_i32_1 : i32, i32, i32
  }
  func.func @transform_10(%arg0: i32) -> (i32, i32) {
    %c0_i32 = arith.constant 0 : i32
    %c0_i32_0 = arith.constant 0 : i32
    %c0_i32_1 = arith.constant 0 : i32
    return %c0_i32, %c0_i32_0 : i32, i32
  }
  func.func @transform_11(%arg0: i32) -> (i32, i32) {
    %c0_i32 = arith.constant 0 : i32
    %c0_i32_0 = arith.constant 0 : i32
    %c0_i32_1 = arith.constant 0 : i32
    return %c0_i32, %c0_i32_0 : i32, i32
  }
  func.func @transform_12(%arg0: i32) -> (i32, i32) {
    %c0_i32 = arith.constant 0 : i32
    %c0_i32_0 = arith.constant 0 : i32
    %c0_i32_1 = arith.constant 0 : i32
    return %c0_i32, %c0_i32_0 : i32, i32
  }
  func.func @transform_13(%arg0: i32) -> (i32, i32) {
    %c0_i32 = arith.constant 0 : i32
    %c0_i32_0 = arith.constant 0 : i32
    %c0_i32_1 = arith.constant 0 : i32
    return %c0_i32, %c0_i32_0 : i32, i32
  }
  func.func @transform_14(%arg0: i32) -> (i32, i32) {
    %c0_i32 = arith.constant 0 : i32
    %c0_i32_0 = arith.constant 0 : i32
    %c0_i32_1 = arith.constant 0 : i32
    return %c0_i32, %c0_i32_0 : i32, i32
  }
  func.func @transform_15(%arg0: i32) -> (i32, i32) {
    %c0_i32 = arith.constant 0 : i32
    %c0_i32_0 = arith.constant 0 : i32
    return %arg0, %c0_i32 : i32, i32
  }
}

</mosaic_0001>

<llo_original>
// kernel: lenet5_forward.1
$region0: #{lenet5_forward.1}
  #allocation0 [shape = 'u32[]', space=smem, size = 0x4, offset = 0x4, fixed_abs, tag = 'smem constant byte address 0x4 - core index']
  #allocation1 [shape = 'u32[144,128]{1,0:T(1,128)}', space=vmem, size = 0x12000, scoped, tag = 'internal scratch']
  %s0 = inlined_call_operand.vmem [shape: bf16[256,32], index: 0, kind: input, shape index: {}]
  %s1 = inlined_call_operand.vmem [shape: bf16[5,32,168], index: 1, kind: input, shape index: {}]
  %s2 = inlined_call_operand.vmem [shape: f32[1,168], index: 2, kind: input, shape index: {}]
  %s3 = inlined_call_operand.vmem [shape: bf16[14,28], index: 3, kind: input, shape index: {}]
  %s4 = inlined_call_operand.vmem [shape: bf16[168,84], index: 4, kind: input, shape index: {}]
  %s5 = inlined_call_operand.vmem [shape: bf16[5,84,160], index: 5, kind: input, shape index: {}]
  %s6 = inlined_call_operand.vmem [shape: f32[1,160], index: 6, kind: input, shape index: {}]
  %s7 = inlined_call_operand.vmem [shape: bf16[5,10], index: 7, kind: input, shape index: {}]
  %s8 = inlined_call_operand.vmem [shape: bf16[160,80], index: 8, kind: input, shape index: {}]
  %s9 = inlined_call_operand.vmem [shape: bf16[5,80,120], index: 9, kind: input, shape index: {}]
  %s10 = inlined_call_operand.vmem [shape: f32[1,120], index: 10, kind: input, shape index: {}]
  %s11 = inlined_call_operand.vmem [shape: bf16[120,84], index: 11, kind: input, shape index: {}]
  %s12 = inlined_call_operand.vmem [shape: f32[1,84], index: 12, kind: input, shape index: {}]
  %s13 = inlined_call_operand.vmem [shape: bf16[84,10], index: 13, kind: input, shape index: {}]
  %s14 = inlined_call_operand.vmem [shape: f32[1,10], index: 14, kind: input, shape index: {}]
  %s15 = inlined_call_operand.vmem [shape: f32[8,10], index: 15, kind: output, shape index: {}]
  %s16 = sld [smem:[#allocation0]]
  $region70: #{lenet5_forward.1} parent=0
    _
  %s18 = ssub.s32 1, %s16
  %s19 = scalar_select 0, %s18, %s16
  // Predicated region
  $region2: #{lenet5_forward.1} parent=0 // pred_check
    _
  $region3: #{lenet5_forward.1} parent=0 // pred_check_branch
    %21 = sbr.rel (0) target = $region5
  $region4: #{lenet5_forward.1} parent=0 // pred_region
    _
  $region5: #{lenet5_forward.1} parent=0 // pred_fallthru
    _
  // Predicated region
  $region6: #{lenet5_forward.1} parent=0 // pred_check
    _
  $region7: #{lenet5_forward.1} parent=0 // pred_check_branch
    %23 = sbr.rel (0) target = $region9
  $region8: #{lenet5_forward.1} parent=0 // pred_region
    _
  $region9: #{lenet5_forward.1} parent=0 // pred_fallthru
    _
  // Predicated region
  $region10: #{lenet5_forward.1} parent=0 // pred_check
    _
  $region11: #{lenet5_forward.1} parent=0 // pred_check_branch
    %25 = sbr.rel (0) target = $region13
  $region12: #{lenet5_forward.1} parent=0 // pred_region
    _
  $region13: #{lenet5_forward.1} parent=0 // pred_fallthru
    _
  // Predicated region
  $region14: #{lenet5_forward.1} parent=0 // pred_check
    _
  $region15: #{lenet5_forward.1} parent=0 // pred_check_branch
    %27 = sbr.rel (0) target = $region17
  $region16: #{lenet5_forward.1} parent=0 // pred_region
    _
  $region17: #{lenet5_forward.1} parent=0 // pred_fallthru
    _
  // Predicated region
  $region18: #{lenet5_forward.1} parent=0 // pred_check
    _
  $region19: #{lenet5_forward.1} parent=0 // pred_check_branch
    %29 = sbr.rel (0) target = $region21
  $region20: #{lenet5_forward.1} parent=0 // pred_region
    _
  $region21: #{lenet5_forward.1} parent=0 // pred_fallthru
    _
  // Predicated region
  $region22: #{lenet5_forward.1} parent=0 // pred_check
    _
  $region23: #{lenet5_forward.1} parent=0 // pred_check_branch
    %31 = sbr.rel (0) target = $region25
  $region24: #{lenet5_forward.1} parent=0 // pred_region
    _
  $region25: #{lenet5_forward.1} parent=0 // pred_fallthru
    _
  // Predicated region
  $region26: #{lenet5_forward.1} parent=0 // pred_check
    _
  $region27: #{lenet5_forward.1} parent=0 // pred_check_branch
    %33 = sbr.rel (0) target = $region29
  $region28: #{lenet5_forward.1} parent=0 // pred_region
    _
  $region29: #{lenet5_forward.1} parent=0 // pred_fallthru
    _
  // Predicated region
  $region30: #{lenet5_forward.1} parent=0 // pred_check
    _
  $region31: #{lenet5_forward.1} parent=0 // pred_check_branch
    %35 = sbr.rel (0) target = $region33
  $region32: #{lenet5_forward.1} parent=0 // pred_region
    _
  $region33: #{lenet5_forward.1} parent=0 // pred_fallthru
    _
  // Predicated region
  $region34: #{lenet5_forward.1} parent=0 // pred_check
    _
  $region35: #{lenet5_forward.1} parent=0 // pred_check_branch
    %37 = sbr.rel (0) target = $region37
  $region36: #{lenet5_forward.1} parent=0 // pred_region
    _
  $region37: #{lenet5_forward.1} parent=0 // pred_fallthru
    _
  // Predicated region
  $region38: #{lenet5_forward.1} parent=0 // pred_check
    _
  $region39: #{lenet5_forward.1} parent=0 // pred_check_branch
    %39 = sbr.rel (0) target = $region41
  $region40: #{lenet5_forward.1} parent=0 // pred_region
    _
  $region41: #{lenet5_forward.1} parent=0 // pred_fallthru
    _
  // Predicated region
  $region42: #{lenet5_forward.1} parent=0 // pred_check
    _
  $region43: #{lenet5_forward.1} parent=0 // pred_check_branch
    %41 = sbr.rel (0) target = $region45
  $region44: #{lenet5_forward.1} parent=0 // pred_region
    _
  $region45: #{lenet5_forward.1} parent=0 // pred_fallthru
    _
  // Predicated region
  $region46: #{lenet5_forward.1} parent=0 // pred_check
    _
  $region47: #{lenet5_forward.1} parent=0 // pred_check_branch
    %43 = sbr.rel (0) target = $region49
  $region48: #{lenet5_forward.1} parent=0 // pred_region
    _
  $region49: #{lenet5_forward.1} parent=0 // pred_fallthru
    _
  // Predicated region
  $region50: #{lenet5_forward.1} parent=0 // pred_check
    _
  $region51: #{lenet5_forward.1} parent=0 // pred_check_branch
    %45 = sbr.rel (0) target = $region53
  $region52: #{lenet5_forward.1} parent=0 // pred_region
    _
  $region53: #{lenet5_forward.1} parent=0 // pred_fallthru
    _
  // Predicated region
  $region54: #{lenet5_forward.1} parent=0 // pred_check
    _
  $region55: #{lenet5_forward.1} parent=0 // pred_check_branch
    %47 = sbr.rel (0) target = $region57
  $region56: #{lenet5_forward.1} parent=0 // pred_region
    _
  $region57: #{lenet5_forward.1} parent=0 // pred_fallthru
    _
  // Predicated region
  $region58: #{lenet5_forward.1} parent=0 // pred_check
    _
  $region59: #{lenet5_forward.1} parent=0 // pred_check_branch
    %49 = sbr.rel (0) target = $region61
  $region60: #{lenet5_forward.1} parent=0 // pred_region
    _
  $region61: #{lenet5_forward.1} parent=0 // pred_fallthru
    _
  %v51 = vld [vmem:[%s0] sm:$0xf]
  %v52 = vld [vmem:[%s0 + $0x4] sm:$0xf]
  %v53 = vld [vmem:[%s0 + $0x8] sm:$0xf]
  %v54 = vld [vmem:[%s0 + $0xc] sm:$0xf]
  %v55 = vld [vmem:[%s1] sm:$0xff]
  %v56 = vld [vmem:[%s1 + $0x8] sm:$0xff]
  %v57 = vld [vmem:[%s1 + $0x10] sm:$0xff]
  %v58 = vld [vmem:[%s1 + $0x18] sm:$0xff]
  %s59 = scalar_lea.vmem %s1, 32
  %v60 = vld [vmem:[%s59] sm:$0xff]
  %v61 = vld [vmem:[%s59 + $0x8] sm:$0xff]
  %v62 = vld [vmem:[%s59 + $0x10] sm:$0xff]
  %v63 = vld [vmem:[%s59 + $0x18] sm:$0xff]
  %v68 = vunpack.c.l.b16 %v51
  %v69 = vunpack.c.l.b16 %v52
  %v70 = vunpack.c.l.b16 %v53
  %v71 = vunpack.c.l.b16 %v54
  %v72 = vpack.c.b16 %v69, %v68
  %v73 = vpack.c.b16 %v71, %v70
  %vm74 = vsmask.f32 7424
  %v76 = vshrl.u32 %v72, 16
  %v78 = vshll.u32 %v72, 16
  %v80 = vrot.slane %v78, 1
  %v81 = vor.u32 %v76, %v80
  %v83 = vshll.u32 %v73, 16
  %v85 = vrot.slane %v83, 1
  %v86 = vsel %vm74, %v81, %v85
  %v87 = vshrl.u32 %v73, 16
  %v89 = vor.u32 %v87, %v85
  %v94 = vunpack.c.l.b16 %v60
  %v95 = vunpack.c.h.b16 %v60
  %v96 = vunpack.c.l.b16 %v61
  %v97 = vunpack.c.h.b16 %v61
  %v98 = vunpack.c.l.b16 %v62
  %v99 = vunpack.c.h.b16 %v62
  %v100 = vunpack.c.l.b16 %v63
  %v101 = vunpack.c.h.b16 %v63
  %v102 = vpack.c.b16 %v96, %v94
  %v103 = vpack.c.b16 %v97, %v95
  %v104 = vpack.c.b16 %v100, %v98
  %v105 = vpack.c.b16 %v101, %v99
  %vm110 = vcmask 261120
  %v112 = vsel %vm110, %v86, 0
  %v115 = vsel %vm110, %v89, 0
  %117 = vmatprep.subr.bf16.mxu0 %v103
  %118 = vmatpush1.bf16.msra.mxu0 %v102
  %119 = vmatprep.subr.bf16.mxu0 %v105
  %120 = vmatpush1.bf16.msra.mxu0 %v104
  %121 = vmatprep.subr.bf16.mxu0 0
  %122 = vmatpush1.bf16.msra.mxu0 0
  %123 = vmatprep.subr.bf16.mxu0 0
  %124 = vmatpush1.bf16.msra.mxu0 0
  %125 = vmatprep.subr.bf16.mxu0 0
  %126 = vmatpush1.bf16.msra.mxu0 0
  %127 = vmatprep.subr.bf16.mxu0 0
  %128 = vmatpush1.bf16.msra.mxu0 0
  %129 = vmatprep.subr.bf16.mxu0 0
  %130 = vmatpush1.bf16.msra.mxu0 0
  %131 = vmatprep.subr.bf16.mxu0 0
  %132 = vmatpush1.bf16.msra.mxu0 0
  %133 = vmatprep.subr.bf16.mxu0 0
  %134 = vmatpush1.bf16.msra.mxu0 0
  %135 = vmatprep.subr.bf16.mxu0 0
  %136 = vmatpush1.bf16.msra.mxu0 0
  %137 = vmatprep.subr.bf16.mxu0 0
  %138 = vmatpush1.bf16.msra.mxu0 0
  %139 = vmatprep.subr.bf16.mxu0 0
  %140 = vmatpush1.bf16.msra.mxu0 0
  %141 = vmatprep.subr.bf16.mxu0 0
  %142 = vmatpush1.bf16.msra.mxu0 0
  %143 = vmatprep.subr.bf16.mxu0 0
  %144 = vmatpush1.bf16.msra.mxu0 0
  %145 = vmatprep.subr.bf16.mxu0 0
  %146 = vmatpush1.bf16.msra.mxu0 0
  %147 = vmatprep.subr.bf16.mxu0 0
  %148 = vmatpush1.bf16.msra.mxu0 0
  %149 = vmatprep.mubr.bf16.mxu0 0
  %150 = vmatmul.mubr.bf16.gmra.mrb[0].mxu0 %v112
  %v151 = vpop.f32.mrb[0].mxu0
  %v152 = vadd.f32 0.0, %v151
  %v153 = vpop.f32.mrb[0].mxu0
  %v154 = vadd.f32 0.0, %v153
  %v155 = vpop.f32.mrb[0].mxu0
  %v156 = vadd.f32 0.0, %v155
  %v157 = vpop.f32.mrb[0].mxu0
  %v158 = vadd.f32 0.0, %v157
  %159 = vmatprep.mubr.bf16.mxu0 0
  %160 = vmatmul.mubr.bf16.gmra.mrb[0].mxu0 %v115
  %v161 = vpop.f32.mrb[0].mxu0
  %v162 = vadd.f32 0.0, %v161
  %v163 = vpop.f32.mrb[0].mxu0
  %v164 = vadd.f32 0.0, %v163
  %v165 = vpop.f32.mrb[0].mxu0
  %v166 = vadd.f32 0.0, %v165
  %v167 = vpop.f32.mrb[0].mxu0
  %v168 = vadd.f32 0.0, %v167
  %169 = vdwg.mxu0
  %v174 = vunpack.c.l.b16 %v55
  %v175 = vunpack.c.h.b16 %v55
  %v176 = vunpack.c.l.b16 %v56
  %v177 = vunpack.c.h.b16 %v56
  %v178 = vunpack.c.l.b16 %v57
  %v179 = vunpack.c.h.b16 %v57
  %v180 = vunpack.c.l.b16 %v58
  %v181 = vunpack.c.h.b16 %v58
  %v182 = vpack.c.b16 %v176, %v174
  %v183 = vpack.c.b16 %v177, %v175
  %v184 = vpack.c.b16 %v180, %v178
  %v185 = vpack.c.b16 %v181, %v179
  %v190 = vsel %vm110, %v72, 0
  %v192 = vsel %vm110, %v73, 0
  %194 = vmatprep.subr.bf16.mxu0 %v183
  %195 = vmatpush1.bf16.msra.mxu0 %v182
  %196 = vmatprep.subr.bf16.mxu0 %v185
  %197 = vmatpush1.bf16.msra.mxu0 %v184
  %198 = vmatprep.subr.bf16.mxu0 0
  %199 = vmatpush1.bf16.msra.mxu0 0
  %200 = vmatprep.subr.bf16.mxu0 0
  %201 = vmatpush1.bf16.msra.mxu0 0
  %202 = vmatprep.subr.bf16.mxu0 0
  %203 = vmatpush1.bf16.msra.mxu0 0
  %204 = vmatprep.subr.bf16.mxu0 0
  %205 = vmatpush1.bf16.msra.mxu0 0
  %206 = vmatprep.subr.bf16.mxu0 0
  %207 = vmatpush1.bf16.msra.mxu0 0
  %208 = vmatprep.subr.bf16.mxu0 0
  %209 = vmatpush1.bf16.msra.mxu0 0
  %210 = vmatprep.subr.bf16.mxu0 0
  %211 = vmatpush1.bf16.msra.mxu0 0
  %212 = vmatprep.subr.bf16.mxu0 0
  %213 = vmatpush1.bf16.msra.mxu0 0
  %214 = vmatprep.subr.bf16.mxu0 0
  %215 = vmatpush1.bf16.msra.mxu0 0
  %216 = vmatprep.subr.bf16.mxu0 0
  %217 = vmatpush1.bf16.msra.mxu0 0
  %218 = vmatprep.subr.bf16.mxu0 0
  %219 = vmatpush1.bf16.msra.mxu0 0
  %220 = vmatprep.subr.bf16.mxu0 0
  %221 = vmatpush1.bf16.msra.mxu0 0
  %222 = vmatprep.subr.bf16.mxu0 0
  %223 = vmatpush1.bf16.msra.mxu0 0
  %224 = vmatprep.subr.bf16.mxu0 0
  %225 = vmatpush1.bf16.msra.mxu0 0
  %226 = vmatprep.mubr.bf16.mxu0 0
  %227 = vmatmul.mubr.bf16.gmra.mrb[0].mxu0 %v190
  %v228 = vpop.f32.mrb[0].mxu0
  %v229 = vadd.f32 %v152, %v228
  %v230 = vpop.f32.mrb[0].mxu0
  %v231 = vadd.f32 %v154, %v230
  %v232 = vpop.f32.mrb[0].mxu0
  %v233 = vadd.f32 %v156, %v232
  %v234 = vpop.f32.mrb[0].mxu0
  %v235 = vadd.f32 %v158, %v234
  %236 = vmatprep.mubr.bf16.mxu0 0
  %237 = vmatmul.mubr.bf16.gmra.mrb[0].mxu0 %v192
  %v238 = vpop.f32.mrb[0].mxu0
  %v239 = vadd.f32 %v162, %v238
  %v240 = vpop.f32.mrb[0].mxu0
  %v241 = vadd.f32 %v164, %v240
  %v242 = vpop.f32.mrb[0].mxu0
  %v243 = vadd.f32 %v166, %v242
  %v244 = vpop.f32.mrb[0].mxu0
  %v245 = vadd.f32 %v168, %v244
  %246 = vdwg.mxu0
  %s247 = scalar_lea.vmem %s1, 64
  %v248 = vld [vmem:[%s247] sm:$0xff]
  %v249 = vld [vmem:[%s247 + $0x8] sm:$0xff]
  %v250 = vld [vmem:[%s247 + $0x10] sm:$0xff]
  %v251 = vld [vmem:[%s247 + $0x18] sm:$0xff]
  %vm252 = vcmask 1046528
  %v253 = vrot.slane %v72, 1
  %v254 = vrot.slane %v73, 1
  %v255 = vsel %vm252, %v253, %v254
  %v260 = vunpack.c.l.b16 %v248
  %v261 = vunpack.c.h.b16 %v248
  %v262 = vunpack.c.l.b16 %v249
  %v263 = vunpack.c.h.b16 %v249
  %v264 = vunpack.c.l.b16 %v250
  %v265 = vunpack.c.h.b16 %v250
  %v266 = vunpack.c.l.b16 %v251
  %v267 = vunpack.c.h.b16 %v251
  %v268 = vpack.c.b16 %v262, %v260
  %v269 = vpack.c.b16 %v263, %v261
  %v270 = vpack.c.b16 %v266, %v264
  %v271 = vpack.c.b16 %v267, %v265
  %v277 = vsel %vm110, %v255, 0
  %v280 = vsel %vm110, %v254, 0
  %282 = vmatprep.subr.bf16.mxu0 %v269
  %283 = vmatpush1.bf16.msra.mxu0 %v268
  %284 = vmatprep.subr.bf16.mxu0 %v271
  %285 = vmatpush1.bf16.msra.mxu0 %v270
  %286 = vmatprep.subr.bf16.mxu0 0
  %287 = vmatpush1.bf16.msra.mxu0 0
  %288 = vmatprep.subr.bf16.mxu0 0
  %289 = vmatpush1.bf16.msra.mxu0 0
  %290 = vmatprep.subr.bf16.mxu0 0
  %291 = vmatpush1.bf16.msra.mxu0 0
  %292 = vmatprep.subr.bf16.mxu0 0
  %293 = vmatpush1.bf16.msra.mxu0 0
  %294 = vmatprep.subr.bf16.mxu0 0
  %295 = vmatpush1.bf16.msra.mxu0 0
  %296 = vmatprep.subr.bf16.mxu0 0
  %297 = vmatpush1.bf16.msra.mxu0 0
  %298 = vmatprep.subr.bf16.mxu0 0
  %299 = vmatpush1.bf16.msra.mxu0 0
  %300 = vmatprep.subr.bf16.mxu0 0
  %301 = vmatpush1.bf16.msra.mxu0 0
  %302 = vmatprep.subr.bf16.mxu0 0
  %303 = vmatpush1.bf16.msra.mxu0 0
  %304 = vmatprep.subr.bf16.mxu0 0
  %305 = vmatpush1.bf16.msra.mxu0 0
  %306 = vmatprep.subr.bf16.mxu0 0
  %307 = vmatpush1.bf16.msra.mxu0 0
  %308 = vmatprep.subr.bf16.mxu0 0
  %309 = vmatpush1.bf16.msra.mxu0 0
  %310 = vmatprep.subr.bf16.mxu0 0
  %311 = vmatpush1.bf16.msra.mxu0 0
  %312 = vmatprep.subr.bf16.mxu0 0
  %313 = vmatpush1.bf16.msra.mxu0 0
  %314 = vmatprep.mubr.bf16.mxu0 0
  %315 = vmatmul.mubr.bf16.gmra.mrb[0].mxu0 %v277
  %v316 = vpop.f32.mrb[0].mxu0
  %v317 = vadd.f32 0.0, %v316
  %v318 = vpop.f32.mrb[0].mxu0
  %v319 = vadd.f32 0.0, %v318
  %v320 = vpop.f32.mrb[0].mxu0
  %v321 = vadd.f32 0.0, %v320
  %v322 = vpop.f32.mrb[0].mxu0
  %v323 = vadd.f32 0.0, %v322
  %324 = vmatprep.mubr.bf16.mxu0 0
  %325 = vmatmul.mubr.bf16.gmra.mrb[0].mxu0 %v280
  %v326 = vpop.f32.mrb[0].mxu0
  %v327 = vadd.f32 0.0, %v326
  %v328 = vpop.f32.mrb[0].mxu0
  %v329 = vadd.f32 0.0, %v328
  %v330 = vpop.f32.mrb[0].mxu0
  %v331 = vadd.f32 0.0, %v330
  %v332 = vpop.f32.mrb[0].mxu0
  %v333 = vadd.f32 0.0, %v332
  %334 = vdwg.mxu0
  %v335 = vadd.f32 %v229, %v317
  %v336 = vadd.f32 %v231, %v319
  %v337 = vadd.f32 %v233, %v321
  %v338 = vadd.f32 %v235, %v323
  %v339 = vadd.f32 %v239, %v327
  %v340 = vadd.f32 %v241, %v329
  %v341 = vadd.f32 %v243, %v331
  %v342 = vadd.f32 %v245, %v333
  %s343 = scalar_lea.vmem %s1, 96
  %v344 = vld [vmem:[%s343] sm:$0xff]
  %v345 = vld [vmem:[%s343 + $0x8] sm:$0xff]
  %v346 = vld [vmem:[%s343 + $0x10] sm:$0xff]
  %v347 = vld [vmem:[%s343 + $0x18] sm:$0xff]
  %vm348 = vsmask.f32 6400
  %v349 = vrot.slane %v76, 1
  %v350 = vrot.slane %v78, 2
  %v351 = vor.u32 %v349, %v350
  %v352 = vrot.slane %v87, 1
  %v353 = vrot.slane %v83, 2
  %v354 = vor.u32 %v352, %v353
  %v355 = vsel %vm348, %v351, %v354
  %v360 = vunpack.c.l.b16 %v344
  %v361 = vunpack.c.h.b16 %v344
  %v362 = vunpack.c.l.b16 %v345
  %v363 = vunpack.c.h.b16 %v345
  %v364 = vunpack.c.l.b16 %v346
  %v365 = vunpack.c.h.b16 %v346
  %v366 = vunpack.c.l.b16 %v347
  %v367 = vunpack.c.h.b16 %v347
  %v368 = vpack.c.b16 %v362, %v360
  %v369 = vpack.c.b16 %v363, %v361
  %v370 = vpack.c.b16 %v366, %v364
  %v371 = vpack.c.b16 %v367, %v365
  %v377 = vsel %vm110, %v355, 0
  %v380 = vsel %vm110, %v354, 0
  %382 = vmatprep.subr.bf16.mxu0 %v369
  %383 = vmatpush1.bf16.msra.mxu0 %v368
  %384 = vmatprep.subr.bf16.mxu0 %v371
  %385 = vmatpush1.bf16.msra.mxu0 %v370
  %386 = vmatprep.subr.bf16.mxu0 0
  %387 = vmatpush1.bf16.msra.mxu0 0
  %388 = vmatprep.subr.bf16.mxu0 0
  %389 = vmatpush1.bf16.msra.mxu0 0
  %390 = vmatprep.subr.bf16.mxu0 0
  %391 = vmatpush1.bf16.msra.mxu0 0
  %392 = vmatprep.subr.bf16.mxu0 0
  %393 = vmatpush1.bf16.msra.mxu0 0
  %394 = vmatprep.subr.bf16.mxu0 0
  %395 = vmatpush1.bf16.msra.mxu0 0
  %396 = vmatprep.subr.bf16.mxu0 0
  %397 = vmatpush1.bf16.msra.mxu0 0
  %398 = vmatprep.subr.bf16.mxu0 0
  %399 = vmatpush1.bf16.msra.mxu0 0
  %400 = vmatprep.subr.bf16.mxu0 0
  %401 = vmatpush1.bf16.msra.mxu0 0
  %402 = vmatprep.subr.bf16.mxu0 0
  %403 = vmatpush1.bf16.msra.mxu0 0
  %404 = vmatprep.subr.bf16.mxu0 0
  %405 = vmatpush1.bf16.msra.mxu0 0
  %406 = vmatprep.subr.bf16.mxu0 0
  %407 = vmatpush1.bf16.msra.mxu0 0
  %408 = vmatprep.subr.bf16.mxu0 0
  %409 = vmatpush1.bf16.msra.mxu0 0
  %410 = vmatprep.subr.bf16.mxu0 0
  %411 = vmatpush1.bf16.msra.mxu0 0
  %412 = vmatprep.subr.bf16.mxu0 0
  %413 = vmatpush1.bf16.msra.mxu0 0
  %414 = vmatprep.mubr.bf16.mxu0 0
  %415 = vmatmul.mubr.bf16.gmra.mrb[0].mxu0 %v377
  %v416 = vpop.f32.mrb[0].mxu0
  %v417 = vadd.f32 0.0, %v416
  %v418 = vpop.f32.mrb[0].mxu0
  %v419 = vadd.f32 0.0, %v418
  %v420 = vpop.f32.mrb[0].mxu0
  %v421 = vadd.f32 0.0, %v420
  %v422 = vpop.f32.mrb[0].mxu0
  %v423 = vadd.f32 0.0, %v422
  %424 = vmatprep.mubr.bf16.mxu0 0
  %425 = vmatmul.mubr.bf16.gmra.mrb[0].mxu0 %v380
  %v426 = vpop.f32.mrb[0].mxu0
  %v427 = vadd.f32 0.0, %v426
  %v428 = vpop.f32.mrb[0].mxu0
  %v429 = vadd.f32 0.0, %v428
  %v430 = vpop.f32.mrb[0].mxu0
  %v431 = vadd.f32 0.0, %v430
  %v432 = vpop.f32.mrb[0].mxu0
  %v433 = vadd.f32 0.0, %v432
  %434 = vdwg.mxu0
  %v435 = vadd.f32 %v335, %v417
  %v436 = vadd.f32 %v336, %v419
  %v437 = vadd.f32 %v337, %v421
  %v438 = vadd.f32 %v338, %v423
  %v439 = vadd.f32 %v339, %v427
  %v440 = vadd.f32 %v340, %v429
  %v441 = vadd.f32 %v341, %v431
  %v442 = vadd.f32 %v342, %v433
  %s443 = scalar_lea.vmem %s1, 128
  %v444 = vld [vmem:[%s443] sm:$0xff]
  %v445 = vld [vmem:[%s443 + $0x8] sm:$0xff]
  %v446 = vld [vmem:[%s443 + $0x10] sm:$0xff]
  %v447 = vld [vmem:[%s443 + $0x18] sm:$0xff]
  %vm448 = vcmask 1045504
  %v449 = vrot.slane %v72, 2
  %v450 = vrot.slane %v73, 2
  %v451 = vsel %vm448, %v449, %v450
  %v456 = vunpack.c.l.b16 %v444
  %v457 = vunpack.c.h.b16 %v444
  %v458 = vunpack.c.l.b16 %v445
  %v459 = vunpack.c.h.b16 %v445
  %v460 = vunpack.c.l.b16 %v446
  %v461 = vunpack.c.h.b16 %v446
  %v462 = vunpack.c.l.b16 %v447
  %v463 = vunpack.c.h.b16 %v447
  %v464 = vpack.c.b16 %v458, %v456
  %v465 = vpack.c.b16 %v459, %v457
  %v466 = vpack.c.b16 %v462, %v460
  %v467 = vpack.c.b16 %v463, %v461
  %v473 = vsel %vm110, %v451, 0
  %v476 = vsel %vm110, %v450, 0
  %478 = vmatprep.subr.bf16.mxu0 %v465
  %479 = vmatpush1.bf16.msra.mxu0 %v464
  %480 = vmatprep.subr.bf16.mxu0 %v467
  %481 = vmatpush1.bf16.msra.mxu0 %v466
  %482 = vmatprep.subr.bf16.mxu0 0
  %483 = vmatpush1.bf16.msra.mxu0 0
  %484 = vmatprep.subr.bf16.mxu0 0
  %485 = vmatpush1.bf16.msra.mxu0 0
  %486 = vmatprep.subr.bf16.mxu0 0
  %487 = vmatpush1.bf16.msra.mxu0 0
  %488 = vmatprep.subr.bf16.mxu0 0
  %489 = vmatpush1.bf16.msra.mxu0 0
  %490 = vmatprep.subr.bf16.mxu0 0
  %491 = vmatpush1.bf16.msra.mxu0 0
  %492 = vmatprep.subr.bf16.mxu0 0
  %493 = vmatpush1.bf16.msra.mxu0 0
  %494 = vmatprep.subr.bf16.mxu0 0
  %495 = vmatpush1.bf16.msra.mxu0 0
  %496 = vmatprep.subr.bf16.mxu0 0
  %497 = vmatpush1.bf16.msra.mxu0 0
  %498 = vmatprep.subr.bf16.mxu0 0
  %499 = vmatpush1.bf16.msra.mxu0 0
  %500 = vmatprep.subr.bf16.mxu0 0
  %501 = vmatpush1.bf16.msra.mxu0 0
  %502 = vmatprep.subr.bf16.mxu0 0
  %503 = vmatpush1.bf16.msra.mxu0 0
  %504 = vmatprep.subr.bf16.mxu0 0
  %505 = vmatpush1.bf16.msra.mxu0 0
  %506 = vmatprep.subr.bf16.mxu0 0
  %507 = vmatpush1.bf16.msra.mxu0 0
  %508 = vmatprep.subr.bf16.mxu0 0
  %509 = vmatpush1.bf16.msra.mxu0 0
  %510 = vmatprep.mubr.bf16.mxu0 0
  %511 = vmatmul.mubr.bf16.gmra.mrb[0].mxu0 %v473
  %v512 = vpop.f32.mrb[0].mxu0
  %v513 = vadd.f32 0.0, %v512
  %v514 = vpop.f32.mrb[0].mxu0
  %v515 = vadd.f32 0.0, %v514
  %v516 = vpop.f32.mrb[0].mxu0
  %v517 = vadd.f32 0.0, %v516
  %v518 = vpop.f32.mrb[0].mxu0
  %v519 = vadd.f32 0.0, %v518
  %520 = vmatprep.mubr.bf16.mxu0 0
  %521 = vmatmul.mubr.bf16.gmra.mrb[0].mxu0 %v476
  %v522 = vpop.f32.mrb[0].mxu0
  %v523 = vadd.f32 0.0, %v522
  %v524 = vpop.f32.mrb[0].mxu0
  %v525 = vadd.f32 0.0, %v524
  %v526 = vpop.f32.mrb[0].mxu0
  %v527 = vadd.f32 0.0, %v526
  %v528 = vpop.f32.mrb[0].mxu0
  %v529 = vadd.f32 0.0, %v528
  %530 = vdwg.mxu0
  %v531 = vadd.f32 %v435, %v513
  %v532 = vadd.f32 %v436, %v515
  %v533 = vadd.f32 %v437, %v517
  %v534 = vadd.f32 %v438, %v519
  %v535 = vadd.f32 %v439, %v523
  %v536 = vadd.f32 %v440, %v525
  %v537 = vadd.f32 %v441, %v527
  %v538 = vadd.f32 %v442, %v529
  %v539 = vld [vmem:[%s2] sm:$0x3]
  %v541 = vlaneseq
  %v542 = vshrl.u32 %v541, 7
  %v543 = vsub.s32 0, %v542
  %v544 = vrot.slane %v539, %v543
  %v545 = vlaneseq
  %v546 = vshrl.u32 %v545, 7
  %v547 = vsub.s32 1, %v546
  %v548 = vrot.slane %v539, %v547
  %v551 = vadd.f32 %v531, %v544
  %v552 = vadd.f32 %v532, %v548
  %v553 = vadd.f32 %v533, %v544
  %v554 = vadd.f32 %v534, %v548
  %v555 = vadd.f32 %v535, %v544
  %v556 = vadd.f32 %v536, %v548
  %v557 = vadd.f32 %v537, %v544
  %v558 = vadd.f32 %v538, %v548
  %v559 = vmax.f32 %v551, 0.0
  %v560 = vmax.f32 %v552, 0.0
  %v561 = vmax.f32 %v553, 0.0
  %v562 = vmax.f32 %v554, 0.0
  %v563 = vmax.f32 %v555, 0.0
  %v564 = vmax.f32 %v556, 0.0
  %v565 = vmax.f32 %v557, 0.0
  %v566 = vmax.f32 %v558, 0.0
  %v567 = vpack.c.bf16 %v561, %v559
  %v568 = vpack.c.bf16 %v562, %v560
  %v569 = vpack.c.bf16 %v565, %v563
  %v570 = vpack.c.bf16 %v566, %v564
  %v571 = vld [vmem:[%s3] sm:$0xf]
  %v572 = vld [vmem:[%s3 + $0x4] sm:$0x7]
  %v575 = vunpack.c.l.b16 %v571
  %v576 = vunpack.c.l.b16 %v572
  %v577 = vpack.c.b16 %v576, %v575
  %vm578 = vcmask 228352
  %v580 = vsel %vm578, %v577, 0
  %vm582 = vcmask 1045504
  %v584 = vsel %vm582, %v569, 0
  %v587 = vsel %vm582, %v570, 0
  %589 = vmatprep.subr.bf16.mxu0 %v568
  %590 = vmatpush1.bf16.msra.mxu0 %v567
  %591 = vmatprep.subr.bf16.mxu0 %v587
  %592 = vmatpush1.bf16.msra.mxu0 %v584
  %593 = vmatprep.subr.bf16.mxu0 0
  %594 = vmatpush1.bf16.msra.mxu0 0
  %595 = vmatprep.subr.bf16.mxu0 0
  %596 = vmatpush1.bf16.msra.mxu0 0
  %597 = vmatprep.subr.bf16.mxu0 0
  %598 = vmatpush1.bf16.msra.mxu0 0
  %599 = vmatprep.subr.bf16.mxu0 0
  %600 = vmatpush1.bf16.msra.mxu0 0
  %601 = vmatprep.subr.bf16.mxu0 0
  %602 = vmatpush1.bf16.msra.mxu0 0
  %603 = vmatprep.subr.bf16.mxu0 0
  %604 = vmatpush1.bf16.msra.mxu0 0
  %605 = vmatprep.subr.bf16.mxu0 0
  %606 = vmatpush1.bf16.msra.mxu0 0
  %607 = vmatprep.subr.bf16.mxu0 0
  %608 = vmatpush1.bf16.msra.mxu0 0
  %609 = vmatprep.subr.bf16.mxu0 0
  %610 = vmatpush1.bf16.msra.mxu0 0
  %611 = vmatprep.subr.bf16.mxu0 0
  %612 = vmatpush1.bf16.msra.mxu0 0
  %613 = vmatprep.subr.bf16.mxu0 0
  %614 = vmatpush1.bf16.msra.mxu0 0
  %615 = vmatprep.subr.bf16.mxu0 0
  %616 = vmatpush1.bf16.msra.mxu0 0
  %617 = vmatprep.subr.bf16.mxu0 0
  %618 = vmatpush1.bf16.msra.mxu0 0
  %619 = vmatprep.subr.bf16.mxu0 0
  %620 = vmatpush1.bf16.msra.mxu0 0
  %621 = vmatprep.mubr.bf16.mxu0 0
  %622 = vmatmul.mubr.bf16.gmra.mrb[0].mxu0 %v580
  %v623 = vpop.f32.mrb[0].mxu0
  %v624 = vadd.f32 0.0, %v623
  %v625 = vpop.f32.mrb[0].mxu0
  %v626 = vadd.f32 0.0, %v625
  %v627 = vpop.f32.mrb[0].mxu0
  %v628 = vadd.f32 0.0, %v627
  %v629 = vpop.f32.mrb[0].mxu0
  %v630 = vadd.f32 0.0, %v629
  %631 = vdwg.mxu0
  %v632 = vpack.c.bf16 %v628, %v624
  %v633 = vpack.c.bf16 %v630, %v626
  %v634 = vld [vmem:[%s4] sm:$0xf]
  %v635 = vld [vmem:[%s4 + $0x4] sm:$0xf]
  %v636 = vld [vmem:[%s4 + $0x8] sm:$0xf]
  %v637 = vld [vmem:[%s4 + $0xc] sm:$0xf]
  %v638 = vld [vmem:[%s4 + $0x10] sm:$0xf]
  %v639 = vld [vmem:[%s4 + $0x14] sm:$0xf]
  %v640 = vld [vmem:[%s4 + $0x18] sm:$0xf]
  %v641 = vld [vmem:[%s4 + $0x1c] sm:$0xf]
  %v642 = vld [vmem:[%s4 + $0x20] sm:$0xf]
  %v643 = vld [vmem:[%s4 + $0x24] sm:$0xf]
  %v644 = vld [vmem:[%s4 + $0x28] sm:$0xf]
  %v645 = vld [vmem:[%s4 + $0x2c] sm:$0xf]
  %v646 = vld [vmem:[%s4 + $0x30] sm:$0xf]
  %v647 = vld [vmem:[%s4 + $0x34] sm:$0xf]
  %v648 = vld [vmem:[%s4 + $0x38] sm:$0xf]
  %v649 = vld [vmem:[%s4 + $0x3c] sm:$0xf]
  %v650 = vld [vmem:[%s4 + $0x40] sm:$0xf]
  %v651 = vld [vmem:[%s4 + $0x44] sm:$0xf]
  %v652 = vld [vmem:[%s4 + $0x48] sm:$0xf]
  %v653 = vld [vmem:[%s4 + $0x4c] sm:$0xf]
  %v654 = vld [vmem:[%s4 + $0x50] sm:$0xf]
  %v676 = vunpack.c.l.b16 %v634
  %v677 = vunpack.c.l.b16 %v635
  %v678 = vunpack.c.l.b16 %v636
  %v679 = vunpack.c.l.b16 %v637
  %v680 = vunpack.c.l.b16 %v638
  %v681 = vunpack.c.l.b16 %v639
  %v682 = vunpack.c.l.b16 %v640
  %v683 = vunpack.c.l.b16 %v641
  %v684 = vunpack.c.l.b16 %v642
  %v685 = vunpack.c.l.b16 %v643
  %v686 = vunpack.c.l.b16 %v644
  %v687 = vunpack.c.l.b16 %v645
  %v688 = vunpack.c.l.b16 %v646
  %v689 = vunpack.c.l.b16 %v647
  %v690 = vunpack.c.l.b16 %v648
  %v691 = vunpack.c.l.b16 %v649
  %v692 = vunpack.c.l.b16 %v650
  %v693 = vunpack.c.l.b16 %v651
  %v694 = vunpack.c.l.b16 %v652
  %v695 = vunpack.c.l.b16 %v653
  %v696 = vunpack.c.l.b16 %v654
  %v697 = vpack.c.b16 %v677, %v676
  %v698 = vpack.c.b16 %v679, %v678
  %v699 = vpack.c.b16 %v681, %v680
  %v700 = vpack.c.b16 %v683, %v682
  %v701 = vpack.c.b16 %v685, %v684
  %v702 = vpack.c.b16 %v687, %v686
  %v703 = vpack.c.b16 %v689, %v688
  %v704 = vpack.c.b16 %v691, %v690
  %v705 = vpack.c.b16 %v693, %v692
  %v706 = vpack.c.b16 %v695, %v694
  %v707 = vpack.c.b16 %v696, %v696
  %vm718 = vcmask 326656
  %v720 = vsel %vm718, %v633, 0
  %vm722 = vcmask 1043456
  %v724 = vsel %vm722, %v707, 0
  %726 = vmatprep.subr.bf16.mxu0 0
  %727 = vmatpush1.bf16.msra.mxu0 %v697
  %728 = vmatprep.subr.bf16.mxu0 0
  %729 = vmatpush1.bf16.msra.mxu0 %v698
  %730 = vmatprep.subr.bf16.mxu0 0
  %731 = vmatpush1.bf16.msra.mxu0 %v699
  %732 = vmatprep.subr.bf16.mxu0 0
  %733 = vmatpush1.bf16.msra.mxu0 %v700
  %734 = vmatprep.subr.bf16.mxu0 0
  %735 = vmatpush1.bf16.msra.mxu0 %v701
  %736 = vmatprep.subr.bf16.mxu0 0
  %737 = vmatpush1.bf16.msra.mxu0 %v702
  %738 = vmatprep.subr.bf16.mxu0 0
  %739 = vmatpush1.bf16.msra.mxu0 %v703
  %740 = vmatprep.subr.bf16.mxu0 0
  %741 = vmatpush1.bf16.msra.mxu0 %v704
  %742 = vmatprep.subr.bf16.mxu0 0
  %743 = vmatpush1.bf16.msra.mxu0 %v705
  %744 = vmatprep.subr.bf16.mxu0 0
  %745 = vmatpush1.bf16.msra.mxu0 %v706
  %746 = vmatprep.subr.bf16.mxu0 0
  %747 = vmatpush1.bf16.msra.mxu0 %v724
  %748 = vmatprep.subr.bf16.mxu0 0
  %749 = vmatpush1.bf16.msra.mxu0 0
  %750 = vmatprep.subr.bf16.mxu0 0
  %751 = vmatpush1.bf16.msra.mxu0 0
  %752 = vmatprep.subr.bf16.mxu0 0
  %753 = vmatpush1.bf16.msra.mxu0 0
  %754 = vmatprep.subr.bf16.mxu0 0
  %755 = vmatpush1.bf16.msra.mxu0 0
  %756 = vmatprep.subr.bf16.mxu0 0
  %757 = vmatpush1.bf16.msra.mxu0 0
  %758 = vmatprep.mubr.bf16.mxu0 %v720
  %759 = vmatmul.mubr.bf16.gmra.mrb[0].mxu0 %v632
  %v760 = vpop.f32.mrb[0].mxu0
  %v761 = vadd.f32 0.0, %v760
  %v762 = vpop.f32.mrb[0].mxu0
  %v763 = vpop.f32.mrb[0].mxu0
  %v764 = vadd.f32 0.0, %v763
  %v765 = vpop.f32.mrb[0].mxu0
  %766 = vdwg.mxu0
  %v767 = vpack.c.bf16 %v764, %v761
  %v768 = vld [vmem:[%s5] sm:$0xff]
  %v769 = vld [vmem:[%s5 + $0x8] sm:$0xff]
  %v770 = vld [vmem:[%s5 + $0x10] sm:$0xff]
  %v771 = vld [vmem:[%s5 + $0x18] sm:$0xff]
  %v772 = vld [vmem:[%s5 + $0x20] sm:$0xff]
  %v773 = vld [vmem:[%s5 + $0x28] sm:$0xff]
  %v774 = vld [vmem:[%s5 + $0x30] sm:$0xff]
  %v775 = vld [vmem:[%s5 + $0x38] sm:$0xff]
  %v776 = vld [vmem:[%s5 + $0x40] sm:$0xff]
  %v777 = vld [vmem:[%s5 + $0x48] sm:$0xff]
  %v778 = vld [vmem:[%s5 + $0x50] sm:$0x33]
  %s779 = scalar_lea.vmem %s5, 88
  %v780 = vld [vmem:[%s779] sm:$0xff]
  %v781 = vld [vmem:[%s779 + $0x8] sm:$0xff]
  %v782 = vld [vmem:[%s779 + $0x10] sm:$0xff]
  %v783 = vld [vmem:[%s779 + $0x18] sm:$0xff]
  %v784 = vld [vmem:[%s779 + $0x20] sm:$0xff]
  %v785 = vld [vmem:[%s779 + $0x28] sm:$0xff]
  %v786 = vld [vmem:[%s779 + $0x30] sm:$0xff]
  %v787 = vld [vmem:[%s779 + $0x38] sm:$0xff]
  %v788 = vld [vmem:[%s779 + $0x40] sm:$0xff]
  %v789 = vld [vmem:[%s779 + $0x48] sm:$0xff]
  %v790 = vld [vmem:[%s779 + $0x50] sm:$0x33]
  %v792 = vshrl.u32 %v767, 16
  %v794 = vshll.u32 %v767, 16
  %v796 = vrot.slane %v794, 1
  %v797 = vor.u32 %v792, %v796
  %v809 = vunpack.c.l.b16 %v780
  %v810 = vunpack.c.h.b16 %v780
  %v811 = vunpack.c.l.b16 %v781
  %v812 = vunpack.c.h.b16 %v781
  %v813 = vunpack.c.l.b16 %v782
  %v814 = vunpack.c.h.b16 %v782
  %v815 = vunpack.c.l.b16 %v783
  %v816 = vunpack.c.h.b16 %v783
  %v817 = vunpack.c.l.b16 %v784
  %v818 = vunpack.c.h.b16 %v784
  %v819 = vunpack.c.l.b16 %v785
  %v820 = vunpack.c.h.b16 %v785
  %v821 = vunpack.c.l.b16 %v786
  %v822 = vunpack.c.h.b16 %v786
  %v823 = vunpack.c.l.b16 %v787
  %v824 = vunpack.c.h.b16 %v787
  %v825 = vunpack.c.l.b16 %v788
  %v826 = vunpack.c.h.b16 %v788
  %v827 = vunpack.c.l.b16 %v789
  %v828 = vunpack.c.h.b16 %v789
  %v829 = vunpack.c.l.b16 %v790
  %v830 = vunpack.c.h.b16 %v790
  %v831 = vpack.c.b16 %v811, %v809
  %v832 = vpack.c.b16 %v812, %v810
  %v833 = vpack.c.b16 %v815, %v813
  %v834 = vpack.c.b16 %v816, %v814
  %v835 = vpack.c.b16 %v819, %v817
  %v836 = vpack.c.b16 %v820, %v818
  %v837 = vpack.c.b16 %v823, %v821
  %v838 = vpack.c.b16 %v824, %v822
  %v839 = vpack.c.b16 %v827, %v825
  %v840 = vpack.c.b16 %v828, %v826
  %v841 = vpack.c.b16 %v829, %v829
  %v842 = vpack.c.b16 %v830, %v830
  %vm853 = vcmask 687104
  %v855 = vsel %vm853, %v797, 0
  %vm857 = vcmask 1041408
  %v859 = vsel %vm857, %v841, 0
  %v862 = vsel %vm857, %v842, 0
  %864 = vmatprep.subr.bf16.mxu0 %v832
  %865 = vmatpush1.bf16.msra.mxu0 %v831
  %866 = vmatprep.subr.bf16.mxu0 %v834
  %867 = vmatpush1.bf16.msra.mxu0 %v833
  %868 = vmatprep.subr.bf16.mxu0 %v836
  %869 = vmatpush1.bf16.msra.mxu0 %v835
  %870 = vmatprep.subr.bf16.mxu0 %v838
  %871 = vmatpush1.bf16.msra.mxu0 %v837
  %872 = vmatprep.subr.bf16.mxu0 %v840
  %873 = vmatpush1.bf16.msra.mxu0 %v839
  %874 = vmatprep.subr.bf16.mxu0 %v862
  %875 = vmatpush1.bf16.msra.mxu0 %v859
  %876 = vmatprep.subr.bf16.mxu0 0
  %877 = vmatpush1.bf16.msra.mxu0 0
  %878 = vmatprep.subr.bf16.mxu0 0
  %879 = vmatpush1.bf16.msra.mxu0 0
  %880 = vmatprep.subr.bf16.mxu0 0
  %881 = vmatpush1.bf16.msra.mxu0 0
  %882 = vmatprep.subr.bf16.mxu0 0
  %883 = vmatpush1.bf16.msra.mxu0 0
  %884 = vmatprep.subr.bf16.mxu0 0
  %885 = vmatpush1.bf16.msra.mxu0 0
  %886 = vmatprep.subr.bf16.mxu0 0
  %887 = vmatpush1.bf16.msra.mxu0 0
  %888 = vmatprep.subr.bf16.mxu0 0
  %889 = vmatpush1.bf16.msra.mxu0 0
  %890 = vmatprep.subr.bf16.mxu0 0
  %891 = vmatpush1.bf16.msra.mxu0 0
  %892 = vmatprep.subr.bf16.mxu0 0
  %893 = vmatpush1.bf16.msra.mxu0 0
  %894 = vmatprep.subr.bf16.mxu0 0
  %895 = vmatpush1.bf16.msra.mxu0 0
  %896 = vmatprep.mubr.bf16.mxu0 0
  %897 = vmatmul.mubr.bf16.gmra.mrb[0].mxu0 %v855
  %v898 = vpop.f32.mrb[0].mxu0
  %v899 = vadd.f32 0.0, %v898
  %v900 = vpop.f32.mrb[0].mxu0
  %v901 = vadd.f32 0.0, %v900
  %v902 = vpop.f32.mrb[0].mxu0
  %v903 = vadd.f32 0.0, %v902
  %v904 = vpop.f32.mrb[0].mxu0
  %v905 = vadd.f32 0.0, %v904
  %906 = vdwg.mxu0
  %v918 = vunpack.c.l.b16 %v768
  %v919 = vunpack.c.h.b16 %v768
  %v920 = vunpack.c.l.b16 %v769
  %v921 = vunpack.c.h.b16 %v769
  %v922 = vunpack.c.l.b16 %v770
  %v923 = vunpack.c.h.b16 %v770
  %v924 = vunpack.c.l.b16 %v771
  %v925 = vunpack.c.h.b16 %v771
  %v926 = vunpack.c.l.b16 %v772
  %v927 = vunpack.c.h.b16 %v772
  %v928 = vunpack.c.l.b16 %v773
  %v929 = vunpack.c.h.b16 %v773
  %v930 = vunpack.c.l.b16 %v774
  %v931 = vunpack.c.h.b16 %v774
  %v932 = vunpack.c.l.b16 %v775
  %v933 = vunpack.c.h.b16 %v775
  %v934 = vunpack.c.l.b16 %v776
  %v935 = vunpack.c.h.b16 %v776
  %v936 = vunpack.c.l.b16 %v777
  %v937 = vunpack.c.h.b16 %v777
  %v938 = vunpack.c.l.b16 %v778
  %v939 = vunpack.c.h.b16 %v778
  %v940 = vpack.c.b16 %v920, %v918
  %v941 = vpack.c.b16 %v921, %v919
  %v942 = vpack.c.b16 %v924, %v922
  %v943 = vpack.c.b16 %v925, %v923
  %v944 = vpack.c.b16 %v928, %v926
  %v945 = vpack.c.b16 %v929, %v927
  %v946 = vpack.c.b16 %v932, %v930
  %v947 = vpack.c.b16 %v933, %v931
  %v948 = vpack.c.b16 %v936, %v934
  %v949 = vpack.c.b16 %v937, %v935
  %v950 = vpack.c.b16 %v938, %v938
  %v951 = vpack.c.b16 %v939, %v939
  %v962 = vsel %vm853, %v767, 0
  %v965 = vsel %vm857, %v950, 0
  %v968 = vsel %vm857, %v951, 0
  %970 = vmatprep.subr.bf16.mxu0 %v941
  %971 = vmatpush1.bf16.msra.mxu0 %v940
  %972 = vmatprep.subr.bf16.mxu0 %v943
  %973 = vmatpush1.bf16.msra.mxu0 %v942
  %974 = vmatprep.subr.bf16.mxu0 %v945
  %975 = vmatpush1.bf16.msra.mxu0 %v944
  %976 = vmatprep.subr.bf16.mxu0 %v947
  %977 = vmatpush1.bf16.msra.mxu0 %v946
  %978 = vmatprep.subr.bf16.mxu0 %v949
  %979 = vmatpush1.bf16.msra.mxu0 %v948
  %980 = vmatprep.subr.bf16.mxu0 %v968
  %981 = vmatpush1.bf16.msra.mxu0 %v965
  %982 = vmatprep.subr.bf16.mxu0 0
  %983 = vmatpush1.bf16.msra.mxu0 0
  %984 = vmatprep.subr.bf16.mxu0 0
  %985 = vmatpush1.bf16.msra.mxu0 0
  %986 = vmatprep.subr.bf16.mxu0 0
  %987 = vmatpush1.bf16.msra.mxu0 0
  %988 = vmatprep.subr.bf16.mxu0 0
  %989 = vmatpush1.bf16.msra.mxu0 0
  %990 = vmatprep.subr.bf16.mxu0 0
  %991 = vmatpush1.bf16.msra.mxu0 0
  %992 = vmatprep.subr.bf16.mxu0 0
  %993 = vmatpush1.bf16.msra.mxu0 0
  %994 = vmatprep.subr.bf16.mxu0 0
  %995 = vmatpush1.bf16.msra.mxu0 0
  %996 = vmatprep.subr.bf16.mxu0 0
  %997 = vmatpush1.bf16.msra.mxu0 0
  %998 = vmatprep.subr.bf16.mxu0 0
  %999 = vmatpush1.bf16.msra.mxu0 0
  %1000 = vmatprep.subr.bf16.mxu0 0
  %1001 = vmatpush1.bf16.msra.mxu0 0
  %1002 = vmatprep.mubr.bf16.mxu0 0
  %1003 = vmatmul.mubr.bf16.gmra.mrb[0].mxu0 %v962
  %v1004 = vpop.f32.mrb[0].mxu0
  %v1005 = vadd.f32 %v899, %v1004
  %v1006 = vpop.f32.mrb[0].mxu0
  %v1007 = vadd.f32 %v901, %v1006
  %v1008 = vpop.f32.mrb[0].mxu0
  %v1009 = vadd.f32 %v903, %v1008
  %v1010 = vpop.f32.mrb[0].mxu0
  %v1011 = vadd.f32 %v905, %v1010
  %1012 = vdwg.mxu0
  %s1013 = scalar_lea.vmem %s5, 176
  %v1014 = vld [vmem:[%s1013] sm:$0xff]
  %v1015 = vld [vmem:[%s1013 + $0x8] sm:$0xff]
  %v1016 = vld [vmem:[%s1013 + $0x10] sm:$0xff]
  %v1017 = vld [vmem:[%s1013 + $0x18] sm:$0xff]
  %v1018 = vld [vmem:[%s1013 + $0x20] sm:$0xff]
  %v1019 = vld [vmem:[%s1013 + $0x28] sm:$0xff]
  %v1020 = vld [vmem:[%s1013 + $0x30] sm:$0xff]
  %v1021 = vld [vmem:[%s1013 + $0x38] sm:$0xff]
  %v1022 = vld [vmem:[%s1013 + $0x40] sm:$0xff]
  %v1023 = vld [vmem:[%s1013 + $0x48] sm:$0xff]
  %v1024 = vld [vmem:[%s1013 + $0x50] sm:$0x33]
  %v1026 = vrot.slane %v767, 1
  %v1038 = vunpack.c.l.b16 %v1014
  %v1039 = vunpack.c.h.b16 %v1014
  %v1040 = vunpack.c.l.b16 %v1015
  %v1041 = vunpack.c.h.b16 %v1015
  %v1042 = vunpack.c.l.b16 %v1016
  %v1043 = vunpack.c.h.b16 %v1016
  %v1044 = vunpack.c.l.b16 %v1017
  %v1045 = vunpack.c.h.b16 %v1017
  %v1046 = vunpack.c.l.b16 %v1018
  %v1047 = vunpack.c.h.b16 %v1018
  %v1048 = vunpack.c.l.b16 %v1019
  %v1049 = vunpack.c.h.b16 %v1019
  %v1050 = vunpack.c.l.b16 %v1020
  %v1051 = vunpack.c.h.b16 %v1020
  %v1052 = vunpack.c.l.b16 %v1021
  %v1053 = vunpack.c.h.b16 %v1021
  %v1054 = vunpack.c.l.b16 %v1022
  %v1055 = vunpack.c.h.b16 %v1022
  %v1056 = vunpack.c.l.b16 %v1023
  %v1057 = vunpack.c.h.b16 %v1023
  %v1058 = vunpack.c.l.b16 %v1024
  %v1059 = vunpack.c.h.b16 %v1024
  %v1060 = vpack.c.b16 %v1040, %v1038
  %v1061 = vpack.c.b16 %v1041, %v1039
  %v1062 = vpack.c.b16 %v1044, %v1042
  %v1063 = vpack.c.b16 %v1045, %v1043
  %v1064 = vpack.c.b16 %v1048, %v1046
  %v1065 = vpack.c.b16 %v1049, %v1047
  %v1066 = vpack.c.b16 %v1052, %v1050
  %v1067 = vpack.c.b16 %v1053, %v1051
  %v1068 = vpack.c.b16 %v1056, %v1054
  %v1069 = vpack.c.b16 %v1057, %v1055
  %v1070 = vpack.c.b16 %v1058, %v1058
  %v1071 = vpack.c.b16 %v1059, %v1059
  %v1083 = vsel %vm853, %v1026, 0
  %v1086 = vsel %vm857, %v1070, 0
  %v1089 = vsel %vm857, %v1071, 0
  %1091 = vmatprep.subr.bf16.mxu0 %v1061
  %1092 = vmatpush1.bf16.msra.mxu0 %v1060
  %1093 = vmatprep.subr.bf16.mxu0 %v1063
  %1094 = vmatpush1.bf16.msra.mxu0 %v1062
  %1095 = vmatprep.subr.bf16.mxu0 %v1065
  %1096 = vmatpush1.bf16.msra.mxu0 %v1064
  %1097 = vmatprep.subr.bf16.mxu0 %v1067
  %1098 = vmatpush1.bf16.msra.mxu0 %v1066
  %1099 = vmatprep.subr.bf16.mxu0 %v1069
  %1100 = vmatpush1.bf16.msra.mxu0 %v1068
  %1101 = vmatprep.subr.bf16.mxu0 %v1089
  %1102 = vmatpush1.bf16.msra.mxu0 %v1086
  %1103 = vmatprep.subr.bf16.mxu0 0
  %1104 = vmatpush1.bf16.msra.mxu0 0
  %1105 = vmatprep.subr.bf16.mxu0 0
  %1106 = vmatpush1.bf16.msra.mxu0 0
  %1107 = vmatprep.subr.bf16.mxu0 0
  %1108 = vmatpush1.bf16.msra.mxu0 0
  %1109 = vmatprep.subr.bf16.mxu0 0
  %1110 = vmatpush1.bf16.msra.mxu0 0
  %1111 = vmatprep.subr.bf16.mxu0 0
  %1112 = vmatpush1.bf16.msra.mxu0 0
  %1113 = vmatprep.subr.bf16.mxu0 0
  %1114 = vmatpush1.bf16.msra.mxu0 0
  %1115 = vmatprep.subr.bf16.mxu0 0
  %1116 = vmatpush1.bf16.msra.mxu0 0
  %1117 = vmatprep.subr.bf16.mxu0 0
  %1118 = vmatpush1.bf16.msra.mxu0 0
  %1119 = vmatprep.subr.bf16.mxu0 0
  %1120 = vmatpush1.bf16.msra.mxu0 0
  %1121 = vmatprep.subr.bf16.mxu0 0
  %1122 = vmatpush1.bf16.msra.mxu0 0
  %1123 = vmatprep.mubr.bf16.mxu0 0
  %1124 = vmatmul.mubr.bf16.gmra.mrb[0].mxu0 %v1083
  %v1125 = vpop.f32.mrb[0].mxu0
  %v1126 = vadd.f32 0.0, %v1125
  %v1127 = vpop.f32.mrb[0].mxu0
  %v1128 = vadd.f32 0.0, %v1127
  %v1129 = vpop.f32.mrb[0].mxu0
  %v1130 = vadd.f32 0.0, %v1129
  %v1131 = vpop.f32.mrb[0].mxu0
  %v1132 = vadd.f32 0.0, %v1131
  %1133 = vdwg.mxu0
  %v1134 = vadd.f32 %v1005, %v1126
  %v1135 = vadd.f32 %v1007, %v1128
  %v1136 = vadd.f32 %v1009, %v1130
  %v1137 = vadd.f32 %v1011, %v1132
  %s1138 = scalar_lea.vmem %s5, 264
  %v1139 = vld [vmem:[%s1138] sm:$0xff]
  %v1140 = vld [vmem:[%s1138 + $0x8] sm:$0xff]
  %v1141 = vld [vmem:[%s1138 + $0x10] sm:$0xff]
  %v1142 = vld [vmem:[%s1138 + $0x18] sm:$0xff]
  %v1143 = vld [vmem:[%s1138 + $0x20] sm:$0xff]
  %v1144 = vld [vmem:[%s1138 + $0x28] sm:$0xff]
  %v1145 = vld [vmem:[%s1138 + $0x30] sm:$0xff]
  %v1146 = vld [vmem:[%s1138 + $0x38] sm:$0xff]
  %v1147 = vld [vmem:[%s1138 + $0x40] sm:$0xff]
  %v1148 = vld [vmem:[%s1138 + $0x48] sm:$0xff]
  %v1149 = vld [vmem:[%s1138 + $0x50] sm:$0x33]
  %v1150 = vrot.slane %v792, 1
  %v1151 = vrot.slane %v794, 2
  %v1152 = vor.u32 %v1150, %v1151
  %v1164 = vunpack.c.l.b16 %v1139
  %v1165 = vunpack.c.h.b16 %v1139
  %v1166 = vunpack.c.l.b16 %v1140
  %v1167 = vunpack.c.h.b16 %v1140
  %v1168 = vunpack.c.l.b16 %v1141
  %v1169 = vunpack.c.h.b16 %v1141
  %v1170 = vunpack.c.l.b16 %v1142
  %v1171 = vunpack.c.h.b16 %v1142
  %v1172 = vunpack.c.l.b16 %v1143
  %v1173 = vunpack.c.h.b16 %v1143
  %v1174 = vunpack.c.l.b16 %v1144
  %v1175 = vunpack.c.h.b16 %v1144
  %v1176 = vunpack.c.l.b16 %v1145
  %v1177 = vunpack.c.h.b16 %v1145
  %v1178 = vunpack.c.l.b16 %v1146
  %v1179 = vunpack.c.h.b16 %v1146
  %v1180 = vunpack.c.l.b16 %v1147
  %v1181 = vunpack.c.h.b16 %v1147
  %v1182 = vunpack.c.l.b16 %v1148
  %v1183 = vunpack.c.h.b16 %v1148
  %v1184 = vunpack.c.l.b16 %v1149
  %v1185 = vunpack.c.h.b16 %v1149
  %v1186 = vpack.c.b16 %v1166, %v1164
  %v1187 = vpack.c.b16 %v1167, %v1165
  %v1188 = vpack.c.b16 %v1170, %v1168
  %v1189 = vpack.c.b16 %v1171, %v1169
  %v1190 = vpack.c.b16 %v1174, %v1172
  %v1191 = vpack.c.b16 %v1175, %v1173
  %v1192 = vpack.c.b16 %v1178, %v1176
  %v1193 = vpack.c.b16 %v1179, %v1177
  %v1194 = vpack.c.b16 %v1182, %v1180
  %v1195 = vpack.c.b16 %v1183, %v1181
  %v1196 = vpack.c.b16 %v1184, %v1184
  %v1197 = vpack.c.b16 %v1185, %v1185
  %v1209 = vsel %vm853, %v1152, 0
  %v1212 = vsel %vm857, %v1196, 0
  %v1215 = vsel %vm857, %v1197, 0
  %1217 = vmatprep.subr.bf16.mxu0 %v1187
  %1218 = vmatpush1.bf16.msra.mxu0 %v1186
  %1219 = vmatprep.subr.bf16.mxu0 %v1189
  %1220 = vmatpush1.bf16.msra.mxu0 %v1188
  %1221 = vmatprep.subr.bf16.mxu0 %v1191
  %1222 = vmatpush1.bf16.msra.mxu0 %v1190
  %1223 = vmatprep.subr.bf16.mxu0 %v1193
  %1224 = vmatpush1.bf16.msra.mxu0 %v1192
  %1225 = vmatprep.subr.bf16.mxu0 %v1195
  %1226 = vmatpush1.bf16.msra.mxu0 %v1194
  %1227 = vmatprep.subr.bf16.mxu0 %v1215
  %1228 = vmatpush1.bf16.msra.mxu0 %v1212
  %1229 = vmatprep.subr.bf16.mxu0 0
  %1230 = vmatpush1.bf16.msra.mxu0 0
  %1231 = vmatprep.subr.bf16.mxu0 0
  %1232 = vmatpush1.bf16.msra.mxu0 0
  %1233 = vmatprep.subr.bf16.mxu0 0
  %1234 = vmatpush1.bf16.msra.mxu0 0
  %1235 = vmatprep.subr.bf16.mxu0 0
  %1236 = vmatpush1.bf16.msra.mxu0 0
  %1237 = vmatprep.subr.bf16.mxu0 0
  %1238 = vmatpush1.bf16.msra.mxu0 0
  %1239 = vmatprep.subr.bf16.mxu0 0
  %1240 = vmatpush1.bf16.msra.mxu0 0
  %1241 = vmatprep.subr.bf16.mxu0 0
  %1242 = vmatpush1.bf16.msra.mxu0 0
  %1243 = vmatprep.subr.bf16.mxu0 0
  %1244 = vmatpush1.bf16.msra.mxu0 0
  %1245 = vmatprep.subr.bf16.mxu0 0
  %1246 = vmatpush1.bf16.msra.mxu0 0
  %1247 = vmatprep.subr.bf16.mxu0 0
  %1248 = vmatpush1.bf16.msra.mxu0 0
  %1249 = vmatprep.mubr.bf16.mxu0 0
  %1250 = vmatmul.mubr.bf16.gmra.mrb[0].mxu0 %v1209
  %v1251 = vpop.f32.mrb[0].mxu0
  %v1252 = vadd.f32 0.0, %v1251
  %v1253 = vpop.f32.mrb[0].mxu0
  %v1254 = vadd.f32 0.0, %v1253
  %v1255 = vpop.f32.mrb[0].mxu0
  %v1256 = vadd.f32 0.0, %v1255
  %v1257 = vpop.f32.mrb[0].mxu0
  %v1258 = vadd.f32 0.0, %v1257
  %1259 = vdwg.mxu0
  %v1260 = vadd.f32 %v1134, %v1252
  %v1261 = vadd.f32 %v1135, %v1254
  %v1262 = vadd.f32 %v1136, %v1256
  %v1263 = vadd.f32 %v1137, %v1258
  %s1264 = scalar_lea.vmem %s5, 352
  %v1265 = vld [vmem:[%s1264] sm:$0xff]
  %v1266 = vld [vmem:[%s1264 + $0x8] sm:$0xff]
  %v1267 = vld [vmem:[%s1264 + $0x10] sm:$0xff]
  %v1268 = vld [vmem:[%s1264 + $0x18] sm:$0xff]
  %v1269 = vld [vmem:[%s1264 + $0x20] sm:$0xff]
  %v1270 = vld [vmem:[%s1264 + $0x28] sm:$0xff]
  %v1271 = vld [vmem:[%s1264 + $0x30] sm:$0xff]
  %v1272 = vld [vmem:[%s1264 + $0x38] sm:$0xff]
  %v1273 = vld [vmem:[%s1264 + $0x40] sm:$0xff]
  %v1274 = vld [vmem:[%s1264 + $0x48] sm:$0xff]
  %v1275 = vld [vmem:[%s1264 + $0x50] sm:$0x33]
  %v1276 = vrot.slane %v767, 2
  %v1288 = vunpack.c.l.b16 %v1265
  %v1289 = vunpack.c.h.b16 %v1265
  %v1290 = vunpack.c.l.b16 %v1266
  %v1291 = vunpack.c.h.b16 %v1266
  %v1292 = vunpack.c.l.b16 %v1267
  %v1293 = vunpack.c.h.b16 %v1267
  %v1294 = vunpack.c.l.b16 %v1268
  %v1295 = vunpack.c.h.b16 %v1268
  %v1296 = vunpack.c.l.b16 %v1269
  %v1297 = vunpack.c.h.b16 %v1269
  %v1298 = vunpack.c.l.b16 %v1270
  %v1299 = vunpack.c.h.b16 %v1270
  %v1300 = vunpack.c.l.b16 %v1271
  %v1301 = vunpack.c.h.b16 %v1271
  %v1302 = vunpack.c.l.b16 %v1272
  %v1303 = vunpack.c.h.b16 %v1272
  %v1304 = vunpack.c.l.b16 %v1273
  %v1305 = vunpack.c.h.b16 %v1273
  %v1306 = vunpack.c.l.b16 %v1274
  %v1307 = vunpack.c.h.b16 %v1274
  %v1308 = vunpack.c.l.b16 %v1275
  %v1309 = vunpack.c.h.b16 %v1275
  %v1310 = vpack.c.b16 %v1290, %v1288
  %v1311 = vpack.c.b16 %v1291, %v1289
  %v1312 = vpack.c.b16 %v1294, %v1292
  %v1313 = vpack.c.b16 %v1295, %v1293
  %v1314 = vpack.c.b16 %v1298, %v1296
  %v1315 = vpack.c.b16 %v1299, %v1297
  %v1316 = vpack.c.b16 %v1302, %v1300
  %v1317 = vpack.c.b16 %v1303, %v1301
  %v1318 = vpack.c.b16 %v1306, %v1304
  %v1319 = vpack.c.b16 %v1307, %v1305
  %v1320 = vpack.c.b16 %v1308, %v1308
  %v1321 = vpack.c.b16 %v1309, %v1309
  %v1333 = vsel %vm853, %v1276, 0
  %v1336 = vsel %vm857, %v1320, 0
  %v1339 = vsel %vm857, %v1321, 0
  %1341 = vmatprep.subr.bf16.mxu0 %v1311
  %1342 = vmatpush1.bf16.msra.mxu0 %v1310
  %1343 = vmatprep.subr.bf16.mxu0 %v1313
  %1344 = vmatpush1.bf16.msra.mxu0 %v1312
  %1345 = vmatprep.subr.bf16.mxu0 %v1315
  %1346 = vmatpush1.bf16.msra.mxu0 %v1314
  %1347 = vmatprep.subr.bf16.mxu0 %v1317
  %1348 = vmatpush1.bf16.msra.mxu0 %v1316
  %1349 = vmatprep.subr.bf16.mxu0 %v1319
  %1350 = vmatpush1.bf16.msra.mxu0 %v1318
  %1351 = vmatprep.subr.bf16.mxu0 %v1339
  %1352 = vmatpush1.bf16.msra.mxu0 %v1336
  %1353 = vmatprep.subr.bf16.mxu0 0
  %1354 = vmatpush1.bf16.msra.mxu0 0
  %1355 = vmatprep.subr.bf16.mxu0 0
  %1356 = vmatpush1.bf16.msra.mxu0 0
  %1357 = vmatprep.subr.bf16.mxu0 0
  %1358 = vmatpush1.bf16.msra.mxu0 0
  %1359 = vmatprep.subr.bf16.mxu0 0
  %1360 = vmatpush1.bf16.msra.mxu0 0
  %1361 = vmatprep.subr.bf16.mxu0 0
  %1362 = vmatpush1.bf16.msra.mxu0 0
  %1363 = vmatprep.subr.bf16.mxu0 0
  %1364 = vmatpush1.bf16.msra.mxu0 0
  %1365 = vmatprep.subr.bf16.mxu0 0
  %1366 = vmatpush1.bf16.msra.mxu0 0
  %1367 = vmatprep.subr.bf16.mxu0 0
  %1368 = vmatpush1.bf16.msra.mxu0 0
  %1369 = vmatprep.subr.bf16.mxu0 0
  %1370 = vmatpush1.bf16.msra.mxu0 0
  %1371 = vmatprep.subr.bf16.mxu0 0
  %1372 = vmatpush1.bf16.msra.mxu0 0
  %1373 = vmatprep.mubr.bf16.mxu0 0
  %1374 = vmatmul.mubr.bf16.gmra.mrb[0].mxu0 %v1333
  %v1375 = vpop.f32.mrb[0].mxu0
  %v1376 = vadd.f32 0.0, %v1375
  %v1377 = vpop.f32.mrb[0].mxu0
  %v1378 = vadd.f32 0.0, %v1377
  %v1379 = vpop.f32.mrb[0].mxu0
  %v1380 = vadd.f32 0.0, %v1379
  %v1381 = vpop.f32.mrb[0].mxu0
  %v1382 = vadd.f32 0.0, %v1381
  %1383 = vdwg.mxu0
  %v1384 = vadd.f32 %v1260, %v1376
  %v1385 = vadd.f32 %v1261, %v1378
  %v1386 = vadd.f32 %v1262, %v1380
  %v1387 = vadd.f32 %v1263, %v1382
  %v1388 = vld [vmem:[%s6] sm:$0x3]
  %v1390 = vlaneseq
  %v1391 = vshrl.u32 %v1390, 7
  %v1392 = vsub.s32 0, %v1391
  %v1393 = vrot.slane %v1388, %v1392
  %v1394 = vlaneseq
  %v1395 = vshrl.u32 %v1394, 7
  %v1396 = vsub.s32 1, %v1395
  %v1397 = vrot.slane %v1388, %v1396
  %v1400 = vadd.f32 %v1384, %v1393
  %v1401 = vadd.f32 %v1385, %v1397
  %v1402 = vadd.f32 %v1386, %v1393
  %v1403 = vadd.f32 %v1387, %v1397
  %v1404 = vmax.f32 %v1400, 0.0
  %v1405 = vmax.f32 %v1401, 0.0
  %v1406 = vmax.f32 %v1402, 0.0
  %v1407 = vmax.f32 %v1403, 0.0
  %v1408 = vpack.c.bf16 %v1406, %v1404
  %v1409 = vpack.c.bf16 %v1407, %v1405
  %v1410 = vld [vmem:[%s7] sm:$0x7]
  %vm1411 = vcmask 80896
  %v1413 = vsel %vm1411, %v1410, 0
  %vm1415 = vcmask 1044480
  %v1417 = vsel %vm1415, %v1408, 0
  %v1420 = vsel %vm1415, %v1409, 0
  %1422 = vmatprep.subr.bf16.mxu0 %v1420
  %1423 = vmatpush1.bf16.msra.mxu0 %v1417
  %1424 = vmatprep.subr.bf16.mxu0 0
  %1425 = vmatpush1.bf16.msra.mxu0 0
  %1426 = vmatprep.subr.bf16.mxu0 0
  %1427 = vmatpush1.bf16.msra.mxu0 0
  %1428 = vmatprep.subr.bf16.mxu0 0
  %1429 = vmatpush1.bf16.msra.mxu0 0
  %1430 = vmatprep.subr.bf16.mxu0 0
  %1431 = vmatpush1.bf16.msra.mxu0 0
  %1432 = vmatprep.subr.bf16.mxu0 0
  %1433 = vmatpush1.bf16.msra.mxu0 0
  %1434 = vmatprep.subr.bf16.mxu0 0
  %1435 = vmatpush1.bf16.msra.mxu0 0
  %1436 = vmatprep.subr.bf16.mxu0 0
  %1437 = vmatpush1.bf16.msra.mxu0 0
  %1438 = vmatprep.subr.bf16.mxu0 0
  %1439 = vmatpush1.bf16.msra.mxu0 0
  %1440 = vmatprep.subr.bf16.mxu0 0
  %1441 = vmatpush1.bf16.msra.mxu0 0
  %1442 = vmatprep.subr.bf16.mxu0 0
  %1443 = vmatpush1.bf16.msra.mxu0 0
  %1444 = vmatprep.subr.bf16.mxu0 0
  %1445 = vmatpush1.bf16.msra.mxu0 0
  %1446 = vmatprep.subr.bf16.mxu0 0
  %1447 = vmatpush1.bf16.msra.mxu0 0
  %1448 = vmatprep.subr.bf16.mxu0 0
  %1449 = vmatpush1.bf16.msra.mxu0 0
  %1450 = vmatprep.subr.bf16.mxu0 0
  %1451 = vmatpush1.bf16.msra.mxu0 0
  %1452 = vmatprep.subr.bf16.mxu0 0
  %1453 = vmatpush1.bf16.msra.mxu0 0
  %1454 = vmatprep.mubr.bf16.mxu0 0
  %1455 = vmatmul.mubr.bf16.gmra.mrb[0].mxu0 %v1413
  %v1456 = vpop.f32.mrb[0].mxu0
  %v1457 = vadd.f32 0.0, %v1456
  %v1458 = vpop.f32.mrb[0].mxu0
  %v1459 = vadd.f32 0.0, %v1458
  %v1460 = vpop.f32.mrb[0].mxu0
  %v1461 = vpop.f32.mrb[0].mxu0
  %1462 = vdwg.mxu0
  %v1463 = vpack.c.bf16 %v1457, %v1457
  %v1464 = vpack.c.bf16 %v1459, %v1459
  %v1465 = vld [vmem:[%s8] sm:$0xf]
  %v1466 = vld [vmem:[%s8 + $0x4] sm:$0xf]
  %v1467 = vld [vmem:[%s8 + $0x8] sm:$0xf]
  %v1468 = vld [vmem:[%s8 + $0xc] sm:$0xf]
  %v1469 = vld [vmem:[%s8 + $0x10] sm:$0xf]
  %v1470 = vld [vmem:[%s8 + $0x14] sm:$0xf]
  %v1471 = vld [vmem:[%s8 + $0x18] sm:$0xf]
  %v1472 = vld [vmem:[%s8 + $0x1c] sm:$0xf]
  %v1473 = vld [vmem:[%s8 + $0x20] sm:$0xf]
  %v1474 = vld [vmem:[%s8 + $0x24] sm:$0xf]
  %v1475 = vld [vmem:[%s8 + $0x28] sm:$0xf]
  %v1476 = vld [vmem:[%s8 + $0x2c] sm:$0xf]
  %v1477 = vld [vmem:[%s8 + $0x30] sm:$0xf]
  %v1478 = vld [vmem:[%s8 + $0x34] sm:$0xf]
  %v1479 = vld [vmem:[%s8 + $0x38] sm:$0xf]
  %v1480 = vld [vmem:[%s8 + $0x3c] sm:$0xf]
  %v1481 = vld [vmem:[%s8 + $0x40] sm:$0xf]
  %v1482 = vld [vmem:[%s8 + $0x44] sm:$0xf]
  %v1483 = vld [vmem:[%s8 + $0x48] sm:$0xf]
  %v1484 = vld [vmem:[%s8 + $0x4c] sm:$0xf]
  %v1505 = vunpack.c.l.b16 %v1465
  %v1506 = vunpack.c.l.b16 %v1466
  %v1507 = vunpack.c.l.b16 %v1467
  %v1508 = vunpack.c.l.b16 %v1468
  %v1509 = vunpack.c.l.b16 %v1469
  %v1510 = vunpack.c.l.b16 %v1470
  %v1511 = vunpack.c.l.b16 %v1471
  %v1512 = vunpack.c.l.b16 %v1472
  %v1513 = vunpack.c.l.b16 %v1473
  %v1514 = vunpack.c.l.b16 %v1474
  %v1515 = vunpack.c.l.b16 %v1475
  %v1516 = vunpack.c.l.b16 %v1476
  %v1517 = vunpack.c.l.b16 %v1477
  %v1518 = vunpack.c.l.b16 %v1478
  %v1519 = vunpack.c.l.b16 %v1479
  %v1520 = vunpack.c.l.b16 %v1480
  %v1521 = vunpack.c.l.b16 %v1481
  %v1522 = vunpack.c.l.b16 %v1482
  %v1523 = vunpack.c.l.b16 %v1483
  %v1524 = vunpack.c.l.b16 %v1484
  %v1525 = vpack.c.b16 %v1506, %v1505
  %v1526 = vpack.c.b16 %v1508, %v1507
  %v1527 = vpack.c.b16 %v1510, %v1509
  %v1528 = vpack.c.b16 %v1512, %v1511
  %v1529 = vpack.c.b16 %v1514, %v1513
  %v1530 = vpack.c.b16 %v1516, %v1515
  %v1531 = vpack.c.b16 %v1518, %v1517
  %v1532 = vpack.c.b16 %v1520, %v1519
  %v1533 = vpack.c.b16 %v1522, %v1521
  %v1534 = vpack.c.b16 %v1524, %v1523
  %v1546 = vsel %vm110, %v1464, 0
  %1548 = vmatprep.subr.bf16.mxu0 0
  %1549 = vmatpush1.bf16.msra.mxu0 %v1525
  %1550 = vmatprep.subr.bf16.mxu0 0
  %1551 = vmatpush1.bf16.msra.mxu0 %v1526
  %1552 = vmatprep.subr.bf16.mxu0 0
  %1553 = vmatpush1.bf16.msra.mxu0 %v1527
  %1554 = vmatprep.subr.bf16.mxu0 0
  %1555 = vmatpush1.bf16.msra.mxu0 %v1528
  %1556 = vmatprep.subr.bf16.mxu0 0
  %1557 = vmatpush1.bf16.msra.mxu0 %v1529
  %1558 = vmatprep.subr.bf16.mxu0 0
  %1559 = vmatpush1.bf16.msra.mxu0 %v1530
  %1560 = vmatprep.subr.bf16.mxu0 0
  %1561 = vmatpush1.bf16.msra.mxu0 %v1531
  %1562 = vmatprep.subr.bf16.mxu0 0
  %1563 = vmatpush1.bf16.msra.mxu0 %v1532
  %1564 = vmatprep.subr.bf16.mxu0 0
  %1565 = vmatpush1.bf16.msra.mxu0 %v1533
  %1566 = vmatprep.subr.bf16.mxu0 0
  %1567 = vmatpush1.bf16.msra.mxu0 %v1534
  %1568 = vmatprep.subr.bf16.mxu0 0
  %1569 = vmatpush1.bf16.msra.mxu0 0
  %1570 = vmatprep.subr.bf16.mxu0 0
  %1571 = vmatpush1.bf16.msra.mxu0 0
  %1572 = vmatprep.subr.bf16.mxu0 0
  %1573 = vmatpush1.bf16.msra.mxu0 0
  %1574 = vmatprep.subr.bf16.mxu0 0
  %1575 = vmatpush1.bf16.msra.mxu0 0
  %1576 = vmatprep.subr.bf16.mxu0 0
  %1577 = vmatpush1.bf16.msra.mxu0 0
  %1578 = vmatprep.subr.bf16.mxu0 0
  %1579 = vmatpush1.bf16.msra.mxu0 0
  %1580 = vmatprep.mubr.bf16.mxu0 %v1546
  %1581 = vmatmul.mubr.bf16.gmra.mrb[0].mxu0 %v1463
  %v1582 = vpop.f32.mrb[0].mxu0
  %v1583 = vadd.f32 0.0, %v1582
  %v1584 = vpop.f32.mrb[0].mxu0
  %v1585 = vpop.f32.mrb[0].mxu0
  %v1586 = vpop.f32.mrb[0].mxu0
  %1587 = vdwg.mxu0
  %v1588 = vld [vmem:[%s0 + $0x10] sm:$0xf]
  %v1589 = vld [vmem:[%s0 + $0x14] sm:$0xf]
  %v1590 = vld [vmem:[%s0 + $0x18] sm:$0xf]
  %v1591 = vld [vmem:[%s0 + $0x1c] sm:$0xf]
  %v1596 = vunpack.c.l.b16 %v1588
  %v1597 = vunpack.c.l.b16 %v1589
  %v1598 = vunpack.c.l.b16 %v1590
  %v1599 = vunpack.c.l.b16 %v1591
  %v1600 = vpack.c.b16 %v1597, %v1596
  %v1601 = vpack.c.b16 %v1599, %v1598
  %v1603 = vshrl.u32 %v1600, 16
  %v1605 = vshll.u32 %v1600, 16
  %v1607 = vrot.slane %v1605, 1
  %v1608 = vor.u32 %v1603, %v1607
  %v1610 = vshll.u32 %v1601, 16
  %v1612 = vrot.slane %v1610, 1
  %v1613 = vsel %vm74, %v1608, %v1612
  %v1614 = vshrl.u32 %v1601, 16
  %v1616 = vor.u32 %v1614, %v1612
  %v1618 = vsel %vm110, %v1613, 0
  %v1621 = vsel %vm110, %v1616, 0
  %1623 = vmatprep.subr.bf16.mxu0 %v103
  %1624 = vmatpush1.bf16.msra.mxu0 %v102
  %1625 = vmatprep.subr.bf16.mxu0 %v105
  %1626 = vmatpush1.bf16.msra.mxu0 %v104
  %1627 = vmatprep.subr.bf16.mxu0 0
  %1628 = vmatpush1.bf16.msra.mxu0 0
  %1629 = vmatprep.subr.bf16.mxu0 0
  %1630 = vmatpush1.bf16.msra.mxu0 0
  %1631 = vmatprep.subr.bf16.mxu0 0
  %1632 = vmatpush1.bf16.msra.mxu0 0
  %1633 = vmatprep.subr.bf16.mxu0 0
  %1634 = vmatpush1.bf16.msra.mxu0 0
  %1635 = vmatprep.subr.bf16.mxu0 0
  %1636 = vmatpush1.bf16.msra.mxu0 0
  %1637 = vmatprep.subr.bf16.mxu0 0
  %1638 = vmatpush1.bf16.msra.mxu0 0
  %1639 = vmatprep.subr.bf16.mxu0 0
  %1640 = vmatpush1.bf16.msra.mxu0 0
  %1641 = vmatprep.subr.bf16.mxu0 0
  %1642 = vmatpush1.bf16.msra.mxu0 0
  %1643 = vmatprep.subr.bf16.mxu0 0
  %1644 = vmatpush1.bf16.msra.mxu0 0
  %1645 = vmatprep.subr.bf16.mxu0 0
  %1646 = vmatpush1.bf16.msra.mxu0 0
  %1647 = vmatprep.subr.bf16.mxu0 0
  %1648 = vmatpush1.bf16.msra.mxu0 0
  %1649 = vmatprep.subr.bf16.mxu0 0
  %1650 = vmatpush1.bf16.msra.mxu0 0
  %1651 = vmatprep.subr.bf16.mxu0 0
  %1652 = vmatpush1.bf16.msra.mxu0 0
  %1653 = vmatprep.subr.bf16.mxu0 0
  %1654 = vmatpush1.bf16.msra.mxu0 0
  %1655 = vmatprep.mubr.bf16.mxu0 0
  %1656 = vmatmul.mubr.bf16.gmra.mrb[0].mxu0 %v1618
  %v1657 = vpop.f32.mrb[0].mxu0
  %v1658 = vadd.f32 0.0, %v1657
  %v1659 = vpop.f32.mrb[0].mxu0
  %v1660 = vadd.f32 0.0, %v1659
  %v1661 = vpop.f32.mrb[0].mxu0
  %v1662 = vadd.f32 0.0, %v1661
  %v1663 = vpop.f32.mrb[0].mxu0
  %v1664 = vadd.f32 0.0, %v1663
  %1665 = vmatprep.mubr.bf16.mxu0 0
  %1666 = vmatmul.mubr.bf16.gmra.mrb[0].mxu0 %v1621
  %v1667 = vpop.f32.mrb[0].mxu0
  %v1668 = vadd.f32 0.0, %v1667
  %v1669 = vpop.f32.mrb[0].mxu0
  %v1670 = vadd.f32 0.0, %v1669
  %v1671 = vpop.f32.mrb[0].mxu0
  %v1672 = vadd.f32 0.0, %v1671
  %v1673 = vpop.f32.mrb[0].mxu0
  %v1674 = vadd.f32 0.0, %v1673
  %1675 = vdwg.mxu0
  %v1676 = vsel %vm110, %v1600, 0
  %v1678 = vsel %vm110, %v1601, 0
  %1680 = vmatprep.subr.bf16.mxu0 %v183
  %1681 = vmatpush1.bf16.msra.mxu0 %v182
  %1682 = vmatprep.subr.bf16.mxu0 %v185
  %1683 = vmatpush1.bf16.msra.mxu0 %v184
  %1684 = vmatprep.subr.bf16.mxu0 0
  %1685 = vmatpush1.bf16.msra.mxu0 0
  %1686 = vmatprep.subr.bf16.mxu0 0
  %1687 = vmatpush1.bf16.msra.mxu0 0
  %1688 = vmatprep.subr.bf16.mxu0 0
  %1689 = vmatpush1.bf16.msra.mxu0 0
  %1690 = vmatprep.subr.bf16.mxu0 0
  %1691 = vmatpush1.bf16.msra.mxu0 0
  %1692 = vmatprep.subr.bf16.mxu0 0
  %1693 = vmatpush1.bf16.msra.mxu0 0
  %1694 = vmatprep.subr.bf16.mxu0 0
  %1695 = vmatpush1.bf16.msra.mxu0 0
  %1696 = vmatprep.subr.bf16.mxu0 0
  %1697 = vmatpush1.bf16.msra.mxu0 0
  %1698 = vmatprep.subr.bf16.mxu0 0
  %1699 = vmatpush1.bf16.msra.mxu0 0
  %1700 = vmatprep.subr.bf16.mxu0 0
  %1701 = vmatpush1.bf16.msra.mxu0 0
  %1702 = vmatprep.subr.bf16.mxu0 0
  %1703 = vmatpush1.bf16.msra.mxu0 0
  %1704 = vmatprep.subr.bf16.mxu0 0
  %1705 = vmatpush1.bf16.msra.mxu0 0
  %1706 = vmatprep.subr.bf16.mxu0 0
  %1707 = vmatpush1.bf16.msra.mxu0 0
  %1708 = vmatprep.subr.bf16.mxu0 0
  %1709 = vmatpush1.bf16.msra.mxu0 0
  %1710 = vmatprep.subr.bf16.mxu0 0
  %1711 = vmatpush1.bf16.msra.mxu0 0
  %1712 = vmatprep.mubr.bf16.mxu0 0
  %1713 = vmatmul.mubr.bf16.gmra.mrb[0].mxu0 %v1676
  %v1714 = vpop.f32.mrb[0].mxu0
  %v1715 = vadd.f32 %v1658, %v1714
  %v1716 = vpop.f32.mrb[0].mxu0
  %v1717 = vadd.f32 %v1660, %v1716
  %v1718 = vpop.f32.mrb[0].mxu0
  %v1719 = vadd.f32 %v1662, %v1718
  %v1720 = vpop.f32.mrb[0].mxu0
  %v1721 = vadd.f32 %v1664, %v1720
  %1722 = vmatprep.mubr.bf16.mxu0 0
  %1723 = vmatmul.mubr.bf16.gmra.mrb[0].mxu0 %v1678
  %v1724 = vpop.f32.mrb[0].mxu0
  %v1725 = vadd.f32 %v1668, %v1724
  %v1726 = vpop.f32.mrb[0].mxu0
  %v1727 = vadd.f32 %v1670, %v1726
  %v1728 = vpop.f32.mrb[0].mxu0
  %v1729 = vadd.f32 %v1672, %v1728
  %v1730 = vpop.f32.mrb[0].mxu0
  %v1731 = vadd.f32 %v1674, %v1730
  %1732 = vdwg.mxu0
  %v1733 = vrot.slane %v1600, 1
  %v1734 = vrot.slane %v1601, 1
  %v1735 = vsel %vm252, %v1733, %v1734
  %v1737 = vsel %vm110, %v1735, 0
  %v1740 = vsel %vm110, %v1734, 0
  %1742 = vmatprep.subr.bf16.mxu0 %v269
  %1743 = vmatpush1.bf16.msra.mxu0 %v268
  %1744 = vmatprep.subr.bf16.mxu0 %v271
  %1745 = vmatpush1.bf16.msra.mxu0 %v270
  %1746 = vmatprep.subr.bf16.mxu0 0
  %1747 = vmatpush1.bf16.msra.mxu0 0
  %1748 = vmatprep.subr.bf16.mxu0 0
  %1749 = vmatpush1.bf16.msra.mxu0 0
  %1750 = vmatprep.subr.bf16.mxu0 0
  %1751 = vmatpush1.bf16.msra.mxu0 0
  %1752 = vmatprep.subr.bf16.mxu0 0
  %1753 = vmatpush1.bf16.msra.mxu0 0
  %1754 = vmatprep.subr.bf16.mxu0 0
  %1755 = vmatpush1.bf16.msra.mxu0 0
  %1756 = vmatprep.subr.bf16.mxu0 0
  %1757 = vmatpush1.bf16.msra.mxu0 0
  %1758 = vmatprep.subr.bf16.mxu0 0
  %1759 = vmatpush1.bf16.msra.mxu0 0
  %1760 = vmatprep.subr.bf16.mxu0 0
  %1761 = vmatpush1.bf16.msra.mxu0 0
  %1762 = vmatprep.subr.bf16.mxu0 0
  %1763 = vmatpush1.bf16.msra.mxu0 0
  %1764 = vmatprep.subr.bf16.mxu0 0
  %1765 = vmatpush1.bf16.msra.mxu0 0
  %1766 = vmatprep.subr.bf16.mxu0 0
  %1767 = vmatpush1.bf16.msra.mxu0 0
  %1768 = vmatprep.subr.bf16.mxu0 0
  %1769 = vmatpush1.bf16.msra.mxu0 0
  %1770 = vmatprep.subr.bf16.mxu0 0
  %1771 = vmatpush1.bf16.msra.mxu0 0
  %1772 = vmatprep.subr.bf16.mxu0 0
  %1773 = vmatpush1.bf16.msra.mxu0 0
  %1774 = vmatprep.mubr.bf16.mxu0 0
  %1775 = vmatmul.mubr.bf16.gmra.mrb[0].mxu0 %v1737
  %v1776 = vpop.f32.mrb[0].mxu0
  %v1777 = vadd.f32 0.0, %v1776
  %v1778 = vpop.f32.mrb[0].mxu0
  %v1779 = vadd.f32 0.0, %v1778
  %v1780 = vpop.f32.mrb[0].mxu0
  %v1781 = vadd.f32 0.0, %v1780
  %v1782 = vpop.f32.mrb[0].mxu0
  %v1783 = vadd.f32 0.0, %v1782
  %1784 = vmatprep.mubr.bf16.mxu0 0
  %1785 = vmatmul.mubr.bf16.gmra.mrb[0].mxu0 %v1740
  %v1786 = vpop.f32.mrb[0].mxu0
  %v1787 = vadd.f32 0.0, %v1786
  %v1788 = vpop.f32.mrb[0].mxu0
  %v1789 = vadd.f32 0.0, %v1788
  %v1790 = vpop.f32.mrb[0].mxu0
  %v1791 = vadd.f32 0.0, %v1790
  %v1792 = vpop.f32.mrb[0].mxu0
  %v1793 = vadd.f32 0.0, %v1792
  %1794 = vdwg.mxu0
  %v1795 = vadd.f32 %v1715, %v1777
  %v1796 = vadd.f32 %v1717, %v1779
  %v1797 = vadd.f32 %v1719, %v1781
  %v1798 = vadd.f32 %v1721, %v1783
  %v1799 = vadd.f32 %v1725, %v1787
  %v1800 = vadd.f32 %v1727, %v1789
  %v1801 = vadd.f32 %v1729, %v1791
  %v1802 = vadd.f32 %v1731, %v1793
  %v1803 = vrot.slane %v1603, 1
  %v1804 = vrot.slane %v1605, 2
  %v1805 = vor.u32 %v1803, %v1804
  %v1806 = vrot.slane %v1614, 1
  %v1807 = vrot.slane %v1610, 2
  %v1808 = vor.u32 %v1806, %v1807
  %v1809 = vsel %vm348, %v1805, %v1808
  %v1811 = vsel %vm110, %v1809, 0
  %v1814 = vsel %vm110, %v1808, 0
  %1816 = vmatprep.subr.bf16.mxu0 %v369
  %1817 = vmatpush1.bf16.msra.mxu0 %v368
  %1818 = vmatprep.subr.bf16.mxu0 %v371
  %1819 = vmatpush1.bf16.msra.mxu0 %v370
  %1820 = vmatprep.subr.bf16.mxu0 0
  %1821 = vmatpush1.bf16.msra.mxu0 0
  %1822 = vmatprep.subr.bf16.mxu0 0
  %1823 = vmatpush1.bf16.msra.mxu0 0
  %1824 = vmatprep.subr.bf16.mxu0 0
  %1825 = vmatpush1.bf16.msra.mxu0 0
  %1826 = vmatprep.subr.bf16.mxu0 0
  %1827 = vmatpush1.bf16.msra.mxu0 0
  %1828 = vmatprep.subr.bf16.mxu0 0
  %1829 = vmatpush1.bf16.msra.mxu0 0
  %1830 = vmatprep.subr.bf16.mxu0 0
  %1831 = vmatpush1.bf16.msra.mxu0 0
  %1832 = vmatprep.subr.bf16.mxu0 0
  %1833 = vmatpush1.bf16.msra.mxu0 0
  %1834 = vmatprep.subr.bf16.mxu0 0
  %1835 = vmatpush1.bf16.msra.mxu0 0
  %1836 = vmatprep.subr.bf16.mxu0 0
  %1837 = vmatpush1.bf16.msra.mxu0 0
  %1838 = vmatprep.subr.bf16.mxu0 0
  %1839 = vmatpush1.bf16.msra.mxu0 0
  %1840 = vmatprep.subr.bf16.mxu0 0
  %1841 = vmatpush1.bf16.msra.mxu0 0
  %1842 = vmatprep.subr.bf16.mxu0 0
  %1843 = vmatpush1.bf16.msra.mxu0 0
  %1844 = vmatprep.subr.bf16.mxu0 0
  %1845 = vmatpush1.bf16.msra.mxu0 0
  %1846 = vmatprep.subr.bf16.mxu0 0
  %1847 = vmatpush1.bf16.msra.mxu0 0
  %1848 = vmatprep.mubr.bf16.mxu0 0
  %1849 = vmatmul.mubr.bf16.gmra.mrb[0].mxu0 %v1811
  %v1850 = vpop.f32.mrb[0].mxu0
  %v1851 = vadd.f32 0.0, %v1850
  %v1852 = vpop.f32.mrb[0].mxu0
  %v1853 = vadd.f32 0.0, %v1852
  %v1854 = vpop.f32.mrb[0].mxu0
  %v1855 = vadd.f32 0.0, %v1854
  %v1856 = vpop.f32.mrb[0].mxu0
  %v1857 = vadd.f32 0.0, %v1856
  %1858 = vmatprep.mubr.bf16.mxu0 0
  %1859 = vmatmul.mubr.bf16.gmra.mrb[0].mxu0 %v1814
  %v1860 = vpop.f32.mrb[0].mxu0
  %v1861 = vadd.f32 0.0, %v1860
  %v1862 = vpop.f32.mrb[0].mxu0
  %v1863 = vadd.f32 0.0, %v1862
  %v1864 = vpop.f32.mrb[0].mxu0
  %v1865 = vadd.f32 0.0, %v1864
  %v1866 = vpop.f32.mrb[0].mxu0
  %v1867 = vadd.f32 0.0, %v1866
  %1868 = vdwg.mxu0
  %v1869 = vadd.f32 %v1795, %v1851
  %v1870 = vadd.f32 %v1796, %v1853
  %v1871 = vadd.f32 %v1797, %v1855
  %v1872 = vadd.f32 %v1798, %v1857
  %v1873 = vadd.f32 %v1799, %v1861
  %v1874 = vadd.f32 %v1800, %v1863
  %v1875 = vadd.f32 %v1801, %v1865
  %v1876 = vadd.f32 %v1802, %v1867
  %v1877 = vrot.slane %v1600, 2
  %v1878 = vrot.slane %v1601, 2
  %v1879 = vsel %vm448, %v1877, %v1878
  %v1881 = vsel %vm110, %v1879, 0
  %v1884 = vsel %vm110, %v1878, 0
  %1886 = vmatprep.subr.bf16.mxu0 %v465
  %1887 = vmatpush1.bf16.msra.mxu0 %v464
  %1888 = vmatprep.subr.bf16.mxu0 %v467
  %1889 = vmatpush1.bf16.msra.mxu0 %v466
  %1890 = vmatprep.subr.bf16.mxu0 0
  %1891 = vmatpush1.bf16.msra.mxu0 0
  %1892 = vmatprep.subr.bf16.mxu0 0
  %1893 = vmatpush1.bf16.msra.mxu0 0
  %1894 = vmatprep.subr.bf16.mxu0 0
  %1895 = vmatpush1.bf16.msra.mxu0 0
  %1896 = vmatprep.subr.bf16.mxu0 0
  %1897 = vmatpush1.bf16.msra.mxu0 0
  %1898 = vmatprep.subr.bf16.mxu0 0
  %1899 = vmatpush1.bf16.msra.mxu0 0
  %1900 = vmatprep.subr.bf16.mxu0 0
  %1901 = vmatpush1.bf16.msra.mxu0 0
  %1902 = vmatprep.subr.bf16.mxu0 0
  %1903 = vmatpush1.bf16.msra.mxu0 0
  %1904 = vmatprep.subr.bf16.mxu0 0
  %1905 = vmatpush1.bf16.msra.mxu0 0
  %1906 = vmatprep.subr.bf16.mxu0 0
  %1907 = vmatpush1.bf16.msra.mxu0 0
  %1908 = vmatprep.subr.bf16.mxu0 0
  %1909 = vmatpush1.bf16.msra.mxu0 0
  %1910 = vmatprep.subr.bf16.mxu0 0
  %1911 = vmatpush1.bf16.msra.mxu0 0
  %1912 = vmatprep.subr.bf16.mxu0 0
  %1913 = vmatpush1.bf16.msra.mxu0 0
  %1914 = vmatprep.subr.bf16.mxu0 0
  %1915 = vmatpush1.bf16.msra.mxu0 0
  %1916 = vmatprep.subr.bf16.mxu0 0
  %1917 = vmatpush1.bf16.msra.mxu0 0
  %1918 = vmatprep.mubr.bf16.mxu0 0
  %1919 = vmatmul.mubr.bf16.gmra.mrb[0].mxu0 %v1881
  %v1920 = vpop.f32.mrb[0].mxu0
  %v1921 = vadd.f32 0.0, %v1920
  %v1922 = vpop.f32.mrb[0].mxu0
  %v1923 = vadd.f32 0.0, %v1922
  %v1924 = vpop.f32.mrb[0].mxu0
  %v1925 = vadd.f32 0.0, %v1924
  %v1926 = vpop.f32.mrb[0].mxu0
  %v1927 = vadd.f32 0.0, %v1926
  %1928 = vmatprep.mubr.bf16.mxu0 0
  %1929 = vmatmul.mubr.bf16.gmra.mrb[0].mxu0 %v1884
  %v1930 = vpop.f32.mrb[0].mxu0
  %v1931 = vadd.f32 0.0, %v1930
  %v1932 = vpop.f32.mrb[0].mxu0
  %v1933 = vadd.f32 0.0, %v1932
  %v1934 = vpop.f32.mrb[0].mxu0
  %v1935 = vadd.f32 0.0, %v1934
  %v1936 = vpop.f32.mrb[0].mxu0
  %v1937 = vadd.f32 0.0, %v1936
  %1938 = vdwg.mxu0
  %v1939 = vadd.f32 %v1869, %v1921
  %v1940 = vadd.f32 %v1870, %v1923
  %v1941 = vadd.f32 %v1871, %v1925
  %v1942 = vadd.f32 %v1872, %v1927
  %v1943 = vadd.f32 %v1873, %v1931
  %v1944 = vadd.f32 %v1874, %v1933
  %v1945 = vadd.f32 %v1875, %v1935
  %v1946 = vadd.f32 %v1876, %v1937
  %v1947 = vadd.f32 %v1939, %v544
  %v1948 = vadd.f32 %v1940, %v548
  %v1949 = vadd.f32 %v1941, %v544
  %v1950 = vadd.f32 %v1942, %v548
  %v1951 = vadd.f32 %v1943, %v544
  %v1952 = vadd.f32 %v1944, %v548
  %v1953 = vadd.f32 %v1945, %v544
  %v1954 = vadd.f32 %v1946, %v548
  %v1955 = vmax.f32 %v1947, 0.0
  %v1956 = vmax.f32 %v1948, 0.0
  %v1957 = vmax.f32 %v1949, 0.0
  %v1958 = vmax.f32 %v1950, 0.0
  %v1959 = vmax.f32 %v1951, 0.0
  %v1960 = vmax.f32 %v1952, 0.0
  %v1961 = vmax.f32 %v1953, 0.0
  %v1962 = vmax.f32 %v1954, 0.0
  %v1963 = vpack.c.bf16 %v1957, %v1955
  %v1964 = vpack.c.bf16 %v1958, %v1956
  %v1965 = vpack.c.bf16 %v1961, %v1959
  %v1966 = vpack.c.bf16 %v1962, %v1960
  %v1968 = vsel %vm582, %v1965, 0
  %v1971 = vsel %vm582, %v1966, 0
  %1973 = vmatprep.subr.bf16.mxu0 %v1964
  %1974 = vmatpush1.bf16.msra.mxu0 %v1963
  %1975 = vmatprep.subr.bf16.mxu0 %v1971
  %1976 = vmatpush1.bf16.msra.mxu0 %v1968
  %1977 = vmatprep.subr.bf16.mxu0 0
  %1978 = vmatpush1.bf16.msra.mxu0 0
  %1979 = vmatprep.subr.bf16.mxu0 0
  %1980 = vmatpush1.bf16.msra.mxu0 0
  %1981 = vmatprep.subr.bf16.mxu0 0
  %1982 = vmatpush1.bf16.msra.mxu0 0
  %1983 = vmatprep.subr.bf16.mxu0 0
  %1984 = vmatpush1.bf16.msra.mxu0 0
  %1985 = vmatprep.subr.bf16.mxu0 0
  %1986 = vmatpush1.bf16.msra.mxu0 0
  %1987 = vmatprep.subr.bf16.mxu0 0
  %1988 = vmatpush1.bf16.msra.mxu0 0
  %1989 = vmatprep.subr.bf16.mxu0 0
  %1990 = vmatpush1.bf16.msra.mxu0 0
  %1991 = vmatprep.subr.bf16.mxu0 0
  %1992 = vmatpush1.bf16.msra.mxu0 0
  %1993 = vmatprep.subr.bf16.mxu0 0
  %1994 = vmatpush1.bf16.msra.mxu0 0
  %1995 = vmatprep.subr.bf16.mxu0 0
  %1996 = vmatpush1.bf16.msra.mxu0 0
  %1997 = vmatprep.subr.bf16.mxu0 0
  %1998 = vmatpush1.bf16.msra.mxu0 0
  %1999 = vmatprep.subr.bf16.mxu0 0
  %2000 = vmatpush1.bf16.msra.mxu0 0
  %2001 = vmatprep.subr.bf16.mxu0 0
  %2002 = vmatpush1.bf16.msra.mxu0 0
  %2003 = vmatprep.subr.bf16.mxu0 0
  %2004 = vmatpush1.bf16.msra.mxu0 0
  %2005 = vmatprep.mubr.bf16.mxu0 0
  %2006 = vmatmul.mubr.bf16.gmra.mrb[0].mxu0 %v580
  %v2007 = vpop.f32.mrb[0].mxu0
  %v2008 = vadd.f32 0.0, %v2007
  %v2009 = vpop.f32.mrb[0].mxu0
  %v2010 = vadd.f32 0.0, %v2009
  %v2011 = vpop.f32.mrb[0].mxu0
  %v2012 = vadd.f32 0.0, %v2011
  %v2013 = vpop.f32.mrb[0].mxu0
  %v2014 = vadd.f32 0.0, %v2013
  %2015 = vdwg.mxu0
  %v2016 = vpack.c.bf16 %v2012, %v2008
  %v2017 = vpack.c.bf16 %v2014, %v2010
  %v2019 = vsel %vm718, %v2017, 0
  %2021 = vmatprep.subr.bf16.mxu0 0
  %2022 = vmatpush1.bf16.msra.mxu0 %v697
  %2023 = vmatprep.subr.bf16.mxu0 0
  %2024 = vmatpush1.bf16.msra.mxu0 %v698
  %2025 = vmatprep.subr.bf16.mxu0 0
  %2026 = vmatpush1.bf16.msra.mxu0 %v699
  %2027 = vmatprep.subr.bf16.mxu0 0
  %2028 = vmatpush1.bf16.msra.mxu0 %v700
  %2029 = vmatprep.subr.bf16.mxu0 0
  %2030 = vmatpush1.bf16.msra.mxu0 %v701
  %2031 = vmatprep.subr.bf16.mxu0 0
  %2032 = vmatpush1.bf16.msra.mxu0 %v702
  %2033 = vmatprep.subr.bf16.mxu0 0
  %2034 = vmatpush1.bf16.msra.mxu0 %v703
  %2035 = vmatprep.subr.bf16.mxu0 0
  %2036 = vmatpush1.bf16.msra.mxu0 %v704
  %2037 = vmatprep.subr.bf16.mxu0 0
  %2038 = vmatpush1.bf16.msra.mxu0 %v705
  %2039 = vmatprep.subr.bf16.mxu0 0
  %2040 = vmatpush1.bf16.msra.mxu0 %v706
  %2041 = vmatprep.subr.bf16.mxu0 0
  %2042 = vmatpush1.bf16.msra.mxu0 %v724
  %2043 = vmatprep.subr.bf16.mxu0 0
  %2044 = vmatpush1.bf16.msra.mxu0 0
  %2045 = vmatprep.subr.bf16.mxu0 0
  %2046 = vmatpush1.bf16.msra.mxu0 0
  %2047 = vmatprep.subr.bf16.mxu0 0
  %2048 = vmatpush1.bf16.msra.mxu0 0
  %2049 = vmatprep.subr.bf16.mxu0 0
  %2050 = vmatpush1.bf16.msra.mxu0 0
  %2051 = vmatprep.subr.bf16.mxu0 0
  %2052 = vmatpush1.bf16.msra.mxu0 0
  %2053 = vmatprep.mubr.bf16.mxu0 %v2019
  %2054 = vmatmul.mubr.bf16.gmra.mrb[0].mxu0 %v2016
  %v2055 = vpop.f32.mrb[0].mxu0
  %v2056 = vadd.f32 0.0, %v2055
  %v2057 = vpop.f32.mrb[0].mxu0
  %v2058 = vpop.f32.mrb[0].mxu0
  %v2059 = vadd.f32 0.0, %v2058
  %v2060 = vpop.f32.mrb[0].mxu0
  %2061 = vdwg.mxu0
  %v2062 = vpack.c.bf16 %v2059, %v2056
  %v2064 = vshrl.u32 %v2062, 16
  %v2066 = vshll.u32 %v2062, 16
  %v2068 = vrot.slane %v2066, 1
  %v2069 = vor.u32 %v2064, %v2068
  %v2071 = vsel %vm853, %v2069, 0
  %2073 = vmatprep.subr.bf16.mxu0 %v832
  %2074 = vmatpush1.bf16.msra.mxu0 %v831
  %2075 = vmatprep.subr.bf16.mxu0 %v834
  %2076 = vmatpush1.bf16.msra.mxu0 %v833
  %2077 = vmatprep.subr.bf16.mxu0 %v836
  %2078 = vmatpush1.bf16.msra.mxu0 %v835
  %2079 = vmatprep.subr.bf16.mxu0 %v838
  %2080 = vmatpush1.bf16.msra.mxu0 %v837
  %2081 = vmatprep.subr.bf16.mxu0 %v840
  %2082 = vmatpush1.bf16.msra.mxu0 %v839
  %2083 = vmatprep.subr.bf16.mxu0 %v862
  %2084 = vmatpush1.bf16.msra.mxu0 %v859
  %2085 = vmatprep.subr.bf16.mxu0 0
  %2086 = vmatpush1.bf16.msra.mxu0 0
  %2087 = vmatprep.subr.bf16.mxu0 0
  %2088 = vmatpush1.bf16.msra.mxu0 0
  %2089 = vmatprep.subr.bf16.mxu0 0
  %2090 = vmatpush1.bf16.msra.mxu0 0
  %2091 = vmatprep.subr.bf16.mxu0 0
  %2092 = vmatpush1.bf16.msra.mxu0 0
  %2093 = vmatprep.subr.bf16.mxu0 0
  %2094 = vmatpush1.bf16.msra.mxu0 0
  %2095 = vmatprep.subr.bf16.mxu0 0
  %2096 = vmatpush1.bf16.msra.mxu0 0
  %2097 = vmatprep.subr.bf16.mxu0 0
  %2098 = vmatpush1.bf16.msra.mxu0 0
  %2099 = vmatprep.subr.bf16.mxu0 0
  %2100 = vmatpush1.bf16.msra.mxu0 0
  %2101 = vmatprep.subr.bf16.mxu0 0
  %2102 = vmatpush1.bf16.msra.mxu0 0
  %2103 = vmatprep.subr.bf16.mxu0 0
  %2104 = vmatpush1.bf16.msra.mxu0 0
  %2105 = vmatprep.mubr.bf16.mxu0 0
  %2106 = vmatmul.mubr.bf16.gmra.mrb[0].mxu0 %v2071
  %v2107 = vpop.f32.mrb[0].mxu0
  %v2108 = vadd.f32 0.0, %v2107
  %v2109 = vpop.f32.mrb[0].mxu0
  %v2110 = vadd.f32 0.0, %v2109
  %v2111 = vpop.f32.mrb[0].mxu0
  %v2112 = vadd.f32 0.0, %v2111
  %v2113 = vpop.f32.mrb[0].mxu0
  %v2114 = vadd.f32 0.0, %v2113
  %2115 = vdwg.mxu0
  %v2116 = vsel %vm853, %v2062, 0
  %2118 = vmatprep.subr.bf16.mxu0 %v941
  %2119 = vmatpush1.bf16.msra.mxu0 %v940
  %2120 = vmatprep.subr.bf16.mxu0 %v943
  %2121 = vmatpush1.bf16.msra.mxu0 %v942
  %2122 = vmatprep.subr.bf16.mxu0 %v945
  %2123 = vmatpush1.bf16.msra.mxu0 %v944
  %2124 = vmatprep.subr.bf16.mxu0 %v947
  %2125 = vmatpush1.bf16.msra.mxu0 %v946
  %2126 = vmatprep.subr.bf16.mxu0 %v949
  %2127 = vmatpush1.bf16.msra.mxu0 %v948
  %2128 = vmatprep.subr.bf16.mxu0 %v968
  %2129 = vmatpush1.bf16.msra.mxu0 %v965
  %2130 = vmatprep.subr.bf16.mxu0 0
  %2131 = vmatpush1.bf16.msra.mxu0 0
  %2132 = vmatprep.subr.bf16.mxu0 0
  %2133 = vmatpush1.bf16.msra.mxu0 0
  %2134 = vmatprep.subr.bf16.mxu0 0
  %2135 = vmatpush1.bf16.msra.mxu0 0
  %2136 = vmatprep.subr.bf16.mxu0 0
  %2137 = vmatpush1.bf16.msra.mxu0 0
  %2138 = vmatprep.subr.bf16.mxu0 0
  %2139 = vmatpush1.bf16.msra.mxu0 0
  %2140 = vmatprep.subr.bf16.mxu0 0
  %2141 = vmatpush1.bf16.msra.mxu0 0
  %2142 = vmatprep.subr.bf16.mxu0 0
  %2143 = vmatpush1.bf16.msra.mxu0 0
  %2144 = vmatprep.subr.bf16.mxu0 0
  %2145 = vmatpush1.bf16.msra.mxu0 0
  %2146 = vmatprep.subr.bf16.mxu0 0
  %2147 = vmatpush1.bf16.msra.mxu0 0
  %2148 = vmatprep.subr.bf16.mxu0 0
  %2149 = vmatpush1.bf16.msra.mxu0 0
  %2150 = vmatprep.mubr.bf16.mxu0 0
  %2151 = vmatmul.mubr.bf16.gmra.mrb[0].mxu0 %v2116
  %v2152 = vpop.f32.mrb[0].mxu0
  %v2153 = vadd.f32 %v2108, %v2152
  %v2154 = vpop.f32.mrb[0].mxu0
  %v2155 = vadd.f32 %v2110, %v2154
  %v2156 = vpop.f32.mrb[0].mxu0
  %v2157 = vadd.f32 %v2112, %v2156
  %v2158 = vpop.f32.mrb[0].mxu0
  %v2159 = vadd.f32 %v2114, %v2158
  %2160 = vdwg.mxu0
  %v2162 = vrot.slane %v2062, 1
  %v2164 = vsel %vm853, %v2162, 0
  %2166 = vmatprep.subr.bf16.mxu0 %v1061
  %2167 = vmatpush1.bf16.msra.mxu0 %v1060
  %2168 = vmatprep.subr.bf16.mxu0 %v1063
  %2169 = vmatpush1.bf16.msra.mxu0 %v1062
  %2170 = vmatprep.subr.bf16.mxu0 %v1065
  %2171 = vmatpush1.bf16.msra.mxu0 %v1064
  %2172 = vmatprep.subr.bf16.mxu0 %v1067
  %2173 = vmatpush1.bf16.msra.mxu0 %v1066
  %2174 = vmatprep.subr.bf16.mxu0 %v1069
  %2175 = vmatpush1.bf16.msra.mxu0 %v1068
  %2176 = vmatprep.subr.bf16.mxu0 %v1089
  %2177 = vmatpush1.bf16.msra.mxu0 %v1086
  %2178 = vmatprep.subr.bf16.mxu0 0
  %2179 = vmatpush1.bf16.msra.mxu0 0
  %2180 = vmatprep.subr.bf16.mxu0 0
  %2181 = vmatpush1.bf16.msra.mxu0 0
  %2182 = vmatprep.subr.bf16.mxu0 0
  %2183 = vmatpush1.bf16.msra.mxu0 0
  %2184 = vmatprep.subr.bf16.mxu0 0
  %2185 = vmatpush1.bf16.msra.mxu0 0
  %2186 = vmatprep.subr.bf16.mxu0 0
  %2187 = vmatpush1.bf16.msra.mxu0 0
  %2188 = vmatprep.subr.bf16.mxu0 0
  %2189 = vmatpush1.bf16.msra.mxu0 0
  %2190 = vmatprep.subr.bf16.mxu0 0
  %2191 = vmatpush1.bf16.msra.mxu0 0
  %2192 = vmatprep.subr.bf16.mxu0 0
  %2193 = vmatpush1.bf16.msra.mxu0 0
  %2194 = vmatprep.subr.bf16.mxu0 0
  %2195 = vmatpush1.bf16.msra.mxu0 0
  %2196 = vmatprep.subr.bf16.mxu0 0
  %2197 = vmatpush1.bf16.msra.mxu0 0
  %2198 = vmatprep.mubr.bf16.mxu0 0
  %2199 = vmatmul.mubr.bf16.gmra.mrb[0].mxu0 %v2164
  %v2200 = vpop.f32.mrb[0].mxu0
  %v2201 = vadd.f32 0.0, %v2200
  %v2202 = vpop.f32.mrb[0].mxu0
  %v2203 = vadd.f32 0.0, %v2202
  %v2204 = vpop.f32.mrb[0].mxu0
  %v2205 = vadd.f32 0.0, %v2204
  %v2206 = vpop.f32.mrb[0].mxu0
  %v2207 = vadd.f32 0.0, %v2206
  %2208 = vdwg.mxu0
  %v2209 = vadd.f32 %v2153, %v2201
  %v2210 = vadd.f32 %v2155, %v2203
  %v2211 = vadd.f32 %v2157, %v2205
  %v2212 = vadd.f32 %v2159, %v2207
  %v2213 = vrot.slane %v2064, 1
  %v2214 = vrot.slane %v2066, 2
  %v2215 = vor.u32 %v2213, %v2214
  %v2217 = vsel %vm853, %v2215, 0
  %2219 = vmatprep.subr.bf16.mxu0 %v1187
  %2220 = vmatpush1.bf16.msra.mxu0 %v1186
  %2221 = vmatprep.subr.bf16.mxu0 %v1189
  %2222 = vmatpush1.bf16.msra.mxu0 %v1188
  %2223 = vmatprep.subr.bf16.mxu0 %v1191
  %2224 = vmatpush1.bf16.msra.mxu0 %v1190
  %2225 = vmatprep.subr.bf16.mxu0 %v1193
  %2226 = vmatpush1.bf16.msra.mxu0 %v1192
  %2227 = vmatprep.subr.bf16.mxu0 %v1195
  %2228 = vmatpush1.bf16.msra.mxu0 %v1194
  %2229 = vmatprep.subr.bf16.mxu0 %v1215
  %2230 = vmatpush1.bf16.msra.mxu0 %v1212
  %2231 = vmatprep.subr.bf16.mxu0 0
  %2232 = vmatpush1.bf16.msra.mxu0 0
  %2233 = vmatprep.subr.bf16.mxu0 0
  %2234 = vmatpush1.bf16.msra.mxu0 0
  %2235 = vmatprep.subr.bf16.mxu0 0
  %2236 = vmatpush1.bf16.msra.mxu0 0
  %2237 = vmatprep.subr.bf16.mxu0 0
  %2238 = vmatpush1.bf16.msra.mxu0 0
  %2239 = vmatprep.subr.bf16.mxu0 0
  %2240 = vmatpush1.bf16.msra.mxu0 0
  %2241 = vmatprep.subr.bf16.mxu0 0
  %2242 = vmatpush1.bf16.msra.mxu0 0
  %2243 = vmatprep.subr.bf16.mxu0 0
  %2244 = vmatpush1.bf16.msra.mxu0 0
  %2245 = vmatprep.subr.bf16.mxu0 0
  %2246 = vmatpush1.bf16.msra.mxu0 0
  %2247 = vmatprep.subr.bf16.mxu0 0
  %2248 = vmatpush1.bf16.msra.mxu0 0
  %2249 = vmatprep.subr.bf16.mxu0 0
  %2250 = vmatpush1.bf16.msra.mxu0 0
  %2251 = vmatprep.mubr.bf16.mxu0 0
  %2252 = vmatmul.mubr.bf16.gmra.mrb[0].mxu0 %v2217
  %v2253 = vpop.f32.mrb[0].mxu0
  %v2254 = vadd.f32 0.0, %v2253
  %v2255 = vpop.f32.mrb[0].mxu0
  %v2256 = vadd.f32 0.0, %v2255
  %v2257 = vpop.f32.mrb[0].mxu0
  %v2258 = vadd.f32 0.0, %v2257
  %v2259 = vpop.f32.mrb[0].mxu0
  %v2260 = vadd.f32 0.0, %v2259
  %2261 = vdwg.mxu0
  %v2262 = vadd.f32 %v2209, %v2254
  %v2263 = vadd.f32 %v2210, %v2256
  %v2264 = vadd.f32 %v2211, %v2258
  %v2265 = vadd.f32 %v2212, %v2260
  %v2266 = vrot.slane %v2062, 2
  %v2268 = vsel %vm853, %v2266, 0
  %2270 = vmatprep.subr.bf16.mxu0 %v1311
  %2271 = vmatpush1.bf16.msra.mxu0 %v1310
  %2272 = vmatprep.subr.bf16.mxu0 %v1313
  %2273 = vmatpush1.bf16.msra.mxu0 %v1312
  %2274 = vmatprep.subr.bf16.mxu0 %v1315
  %2275 = vmatpush1.bf16.msra.mxu0 %v1314
  %2276 = vmatprep.subr.bf16.mxu0 %v1317
  %2277 = vmatpush1.bf16.msra.mxu0 %v1316
  %2278 = vmatprep.subr.bf16.mxu0 %v1319
  %2279 = vmatpush1.bf16.msra.mxu0 %v1318
  %2280 = vmatprep.subr.bf16.mxu0 %v1339
  %2281 = vmatpush1.bf16.msra.mxu0 %v1336
  %2282 = vmatprep.subr.bf16.mxu0 0
  %2283 = vmatpush1.bf16.msra.mxu0 0
  %2284 = vmatprep.subr.bf16.mxu0 0
  %2285 = vmatpush1.bf16.msra.mxu0 0
  %2286 = vmatprep.subr.bf16.mxu0 0
  %2287 = vmatpush1.bf16.msra.mxu0 0
  %2288 = vmatprep.subr.bf16.mxu0 0
  %2289 = vmatpush1.bf16.msra.mxu0 0
  %2290 = vmatprep.subr.bf16.mxu0 0
  %2291 = vmatpush1.bf16.msra.mxu0 0
  %2292 = vmatprep.subr.bf16.mxu0 0
  %2293 = vmatpush1.bf16.msra.mxu0 0
  %2294 = vmatprep.subr.bf16.mxu0 0
  %2295 = vmatpush1.bf16.msra.mxu0 0
  %2296 = vmatprep.subr.bf16.mxu0 0
  %2297 = vmatpush1.bf16.msra.mxu0 0
  %2298 = vmatprep.subr.bf16.mxu0 0
  %2299 = vmatpush1.bf16.msra.mxu0 0
  %2300 = vmatprep.subr.bf16.mxu0 0
  %2301 = vmatpush1.bf16.msra.mxu0 0
  %2302 = vmatprep.mubr.bf16.mxu0 0
  %2303 = vmatmul.mubr.bf16.gmra.mrb[0].mxu0 %v2268
  %v2304 = vpop.f32.mrb[0].mxu0
  %v2305 = vadd.f32 0.0, %v2304
  %v2306 = vpop.f32.mrb[0].mxu0
  %v2307 = vadd.f32 0.0, %v2306
  %v2308 = vpop.f32.mrb[0].mxu0
  %v2309 = vadd.f32 0.0, %v2308
  %v2310 = vpop.f32.mrb[0].mxu0
  %v2311 = vadd.f32 0.0, %v2310
  %2312 = vdwg.mxu0
  %v2313 = vadd.f32 %v2262, %v2305
  %v2314 = vadd.f32 %v2263, %v2307
  %v2315 = vadd.f32 %v2264, %v2309
  %v2316 = vadd.f32 %v2265, %v2311
  %v2317 = vadd.f32 %v2313, %v1393
  %v2318 = vadd.f32 %v2314, %v1397
  %v2319 = vadd.f32 %v2315, %v1393
  %v2320 = vadd.f32 %v2316, %v1397
  %v2321 = vmax.f32 %v2317, 0.0
  %v2322 = vmax.f32 %v2318, 0.0
  %v2323 = vmax.f32 %v2319, 0.0
  %v2324 = vmax.f32 %v2320, 0.0
  %v2325 = vpack.c.bf16 %v2323, %v2321
  %v2326 = vpack.c.bf16 %v2324, %v2322
  %v2328 = vsel %vm1415, %v2325, 0
  %v2331 = vsel %vm1415, %v2326, 0
  %2333 = vmatprep.subr.bf16.mxu0 %v2331
  %2334 = vmatpush1.bf16.msra.mxu0 %v2328
  %2335 = vmatprep.subr.bf16.mxu0 0
  %2336 = vmatpush1.bf16.msra.mxu0 0
  %2337 = vmatprep.subr.bf16.mxu0 0
  %2338 = vmatpush1.bf16.msra.mxu0 0
  %2339 = vmatprep.subr.bf16.mxu0 0
  %2340 = vmatpush1.bf16.msra.mxu0 0
  %2341 = vmatprep.subr.bf16.mxu0 0
  %2342 = vmatpush1.bf16.msra.mxu0 0
  %2343 = vmatprep.subr.bf16.mxu0 0
  %2344 = vmatpush1.bf16.msra.mxu0 0
  %2345 = vmatprep.subr.bf16.mxu0 0
  %2346 = vmatpush1.bf16.msra.mxu0 0
  %2347 = vmatprep.subr.bf16.mxu0 0
  %2348 = vmatpush1.bf16.msra.mxu0 0
  %2349 = vmatprep.subr.bf16.mxu0 0
  %2350 = vmatpush1.bf16.msra.mxu0 0
  %2351 = vmatprep.subr.bf16.mxu0 0
  %2352 = vmatpush1.bf16.msra.mxu0 0
  %2353 = vmatprep.subr.bf16.mxu0 0
  %2354 = vmatpush1.bf16.msra.mxu0 0
  %2355 = vmatprep.subr.bf16.mxu0 0
  %2356 = vmatpush1.bf16.msra.mxu0 0
  %2357 = vmatprep.subr.bf16.mxu0 0
  %2358 = vmatpush1.bf16.msra.mxu0 0
  %2359 = vmatprep.subr.bf16.mxu0 0
  %2360 = vmatpush1.bf16.msra.mxu0 0
  %2361 = vmatprep.subr.bf16.mxu0 0
  %2362 = vmatpush1.bf16.msra.mxu0 0
  %2363 = vmatprep.subr.bf16.mxu0 0
  %2364 = vmatpush1.bf16.msra.mxu0 0
  %2365 = vmatprep.mubr.bf16.mxu0 0
  %2366 = vmatmul.mubr.bf16.gmra.mrb[0].mxu0 %v1413
  %v2367 = vpop.f32.mrb[0].mxu0
  %v2368 = vadd.f32 0.0, %v2367
  %v2369 = vpop.f32.mrb[0].mxu0
  %v2370 = vadd.f32 0.0, %v2369
  %v2371 = vpop.f32.mrb[0].mxu0
  %v2372 = vpop.f32.mrb[0].mxu0
  %2373 = vdwg.mxu0
  %v2374 = vpack.c.bf16 %v2368, %v2368
  %v2375 = vpack.c.bf16 %v2370, %v2370
  %v2377 = vsel %vm110, %v2375, 0
  %2379 = vmatprep.subr.bf16.mxu0 0
  %2380 = vmatpush1.bf16.msra.mxu0 %v1525
  %2381 = vmatprep.subr.bf16.mxu0 0
  %2382 = vmatpush1.bf16.msra.mxu0 %v1526
  %2383 = vmatprep.subr.bf16.mxu0 0
  %2384 = vmatpush1.bf16.msra.mxu0 %v1527
  %2385 = vmatprep.subr.bf16.mxu0 0
  %2386 = vmatpush1.bf16.msra.mxu0 %v1528
  %2387 = vmatprep.subr.bf16.mxu0 0
  %2388 = vmatpush1.bf16.msra.mxu0 %v1529
  %2389 = vmatprep.subr.bf16.mxu0 0
  %2390 = vmatpush1.bf16.msra.mxu0 %v1530
  %2391 = vmatprep.subr.bf16.mxu0 0
  %2392 = vmatpush1.bf16.msra.mxu0 %v1531
  %2393 = vmatprep.subr.bf16.mxu0 0
  %2394 = vmatpush1.bf16.msra.mxu0 %v1532
  %2395 = vmatprep.subr.bf16.mxu0 0
  %2396 = vmatpush1.bf16.msra.mxu0 %v1533
  %2397 = vmatprep.subr.bf16.mxu0 0
  %2398 = vmatpush1.bf16.msra.mxu0 %v1534
  %2399 = vmatprep.subr.bf16.mxu0 0
  %2400 = vmatpush1.bf16.msra.mxu0 0
  %2401 = vmatprep.subr.bf16.mxu0 0
  %2402 = vmatpush1.bf16.msra.mxu0 0
  %2403 = vmatprep.subr.bf16.mxu0 0
  %2404 = vmatpush1.bf16.msra.mxu0 0
  %2405 = vmatprep.subr.bf16.mxu0 0
  %2406 = vmatpush1.bf16.msra.mxu0 0
  %2407 = vmatprep.subr.bf16.mxu0 0
  %2408 = vmatpush1.bf16.msra.mxu0 0
  %2409 = vmatprep.subr.bf16.mxu0 0
  %2410 = vmatpush1.bf16.msra.mxu0 0
  %2411 = vmatprep.mubr.bf16.mxu0 %v2377
  %2412 = vmatmul.mubr.bf16.gmra.mrb[0].mxu0 %v2374
  %v2413 = vpop.f32.mrb[0].mxu0
  %v2414 = vadd.f32 0.0, %v2413
  %v2415 = vpop.f32.mrb[0].mxu0
  %v2416 = vpop.f32.mrb[0].mxu0
  %v2417 = vpop.f32.mrb[0].mxu0
  %2418 = vdwg.mxu0
  %v2419 = vld [vmem:[%s0 + $0x20] sm:$0xf]
  %v2420 = vld [vmem:[%s0 + $0x24] sm:$0xf]
  %v2421 = vld [vmem:[%s0 + $0x28] sm:$0xf]
  %v2422 = vld [vmem:[%s0 + $0x2c] sm:$0xf]
  %v2427 = vunpack.c.l.b16 %v2419
  %v2428 = vunpack.c.l.b16 %v2420
  %v2429 = vunpack.c.l.b16 %v2421
  %v2430 = vunpack.c.l.b16 %v2422
  %v2431 = vpack.c.b16 %v2428, %v2427
  %v2432 = vpack.c.b16 %v2430, %v2429
  %v2434 = vshrl.u32 %v2431, 16
  %v2436 = vshll.u32 %v2431, 16
  %v2438 = vrot.slane %v2436, 1
  %v2439 = vor.u32 %v2434, %v2438
  %v2441 = vshll.u32 %v2432, 16
  %v2443 = vrot.slane %v2441, 1
  %v2444 = vsel %vm74, %v2439, %v2443
  %v2445 = vshrl.u32 %v2432, 16
  %v2447 = vor.u32 %v2445, %v2443
  %v2449 = vsel %vm110, %v2444, 0
  %v2452 = vsel %vm110, %v2447, 0
  %2454 = vmatprep.subr.bf16.mxu0 %v103
  %2455 = vmatpush1.bf16.msra.mxu0 %v102
  %2456 = vmatprep.subr.bf16.mxu0 %v105
  %2457 = vmatpush1.bf16.msra.mxu0 %v104
  %2458 = vmatprep.subr.bf16.mxu0 0
  %2459 = vmatpush1.bf16.msra.mxu0 0
  %2460 = vmatprep.subr.bf16.mxu0 0
  %2461 = vmatpush1.bf16.msra.mxu0 0
  %2462 = vmatprep.subr.bf16.mxu0 0
  %2463 = vmatpush1.bf16.msra.mxu0 0
  %2464 = vmatprep.subr.bf16.mxu0 0
  %2465 = vmatpush1.bf16.msra.mxu0 0
  %2466 = vmatprep.subr.bf16.mxu0 0
  %2467 = vmatpush1.bf16.msra.mxu0 0
  %2468 = vmatprep.subr.bf16.mxu0 0
  %2469 = vmatpush1.bf16.msra.mxu0 0
  %2470 = vmatprep.subr.bf16.mxu0 0
  %2471 = vmatpush1.bf16.msra.mxu0 0
  %2472 = vmatprep.subr.bf16.mxu0 0
  %2473 = vmatpush1.bf16.msra.mxu0 0
  %2474 = vmatprep.subr.bf16.mxu0 0
  %2475 = vmatpush1.bf16.msra.mxu0 0
  %2476 = vmatprep.subr.bf16.mxu0 0
  %2477 = vmatpush1.bf16.msra.mxu0 0
  %2478 = vmatprep.subr.bf16.mxu0 0
  %2479 = vmatpush1.bf16.msra.mxu0 0
  %2480 = vmatprep.subr.bf16.mxu0 0
  %2481 = vmatpush1.bf16.msra.mxu0 0
  %2482 = vmatprep.subr.bf16.mxu0 0
  %2483 = vmatpush1.bf16.msra.mxu0 0
  %2484 = vmatprep.subr.bf16.mxu0 0
  %2485 = vmatpush1.bf16.msra.mxu0 0
  %2486 = vmatprep.mubr.bf16.mxu0 0
  %2487 = vmatmul.mubr.bf16.gmra.mrb[0].mxu0 %v2449
  %v2488 = vpop.f32.mrb[0].mxu0
  %v2489 = vadd.f32 0.0, %v2488
  %v2490 = vpop.f32.mrb[0].mxu0
  %v2491 = vadd.f32 0.0, %v2490
  %v2492 = vpop.f32.mrb[0].mxu0
  %v2493 = vadd.f32 0.0, %v2492
  %v2494 = vpop.f32.mrb[0].mxu0
  %v2495 = vadd.f32 0.0, %v2494
  %2496 = vmatprep.mubr.bf16.mxu0 0
  %2497 = vmatmul.mubr.bf16.gmra.mrb[0].mxu0 %v2452
  %v2498 = vpop.f32.mrb[0].mxu0
  %v2499 = vadd.f32 0.0, %v2498
  %v2500 = vpop.f32.mrb[0].mxu0
  %v2501 = vadd.f32 0.0, %v2500
  %v2502 = vpop.f32.mrb[0].mxu0
  %v2503 = vadd.f32 0.0, %v2502
  %v2504 = vpop.f32.mrb[0].mxu0
  %v2505 = vadd.f32 0.0, %v2504
  %2506 = vdwg.mxu0
  %v2507 = vsel %vm110, %v2431, 0
  %v2509 = vsel %vm110, %v2432, 0
  %2511 = vmatprep.subr.bf16.mxu0 %v183
  %2512 = vmatpush1.bf16.msra.mxu0 %v182
  %2513 = vmatprep.subr.bf16.mxu0 %v185
  %2514 = vmatpush1.bf16.msra.mxu0 %v184
  %2515 = vmatprep.subr.bf16.mxu0 0
  %2516 = vmatpush1.bf16.msra.mxu0 0
  %2517 = vmatprep.subr.bf16.mxu0 0
  %2518 = vmatpush1.bf16.msra.mxu0 0
  %2519 = vmatprep.subr.bf16.mxu0 0
  %2520 = vmatpush1.bf16.msra.mxu0 0
  %2521 = vmatprep.subr.bf16.mxu0 0
  %2522 = vmatpush1.bf16.msra.mxu0 0
  %2523 = vmatprep.subr.bf16.mxu0 0
  %2524 = vmatpush1.bf16.msra.mxu0 0
  %2525 = vmatprep.subr.bf16.mxu0 0
  %2526 = vmatpush1.bf16.msra.mxu0 0
  %2527 = vmatprep.subr.bf16.mxu0 0
  %2528 = vmatpush1.bf16.msra.mxu0 0
  %2529 = vmatprep.subr.bf16.mxu0 0
  %2530 = vmatpush1.bf16.msra.mxu0 0
  %2531 = vmatprep.subr.bf16.mxu0 0
  %2532 = vmatpush1.bf16.msra.mxu0 0
  %2533 = vmatprep.subr.bf16.mxu0 0
  %2534 = vmatpush1.bf16.msra.mxu0 0
  %2535 = vmatprep.subr.bf16.mxu0 0
  %2536 = vmatpush1.bf16.msra.mxu0 0
  %2537 = vmatprep.subr.bf16.mxu0 0
  %2538 = vmatpush1.bf16.msra.mxu0 0
  %2539 = vmatprep.subr.bf16.mxu0 0
  %2540 = vmatpush1.bf16.msra.mxu0 0
  %2541 = vmatprep.subr.bf16.mxu0 0
  %2542 = vmatpush1.bf16.msra.mxu0 0
  %2543 = vmatprep.mubr.bf16.mxu0 0
  %2544 = vmatmul.mubr.bf16.gmra.mrb[0].mxu0 %v2507
  %v2545 = vpop.f32.mrb[0].mxu0
  %v2546 = vadd.f32 %v2489, %v2545
  %v2547 = vpop.f32.mrb[0].mxu0
  %v2548 = vadd.f32 %v2491, %v2547
  %v2549 = vpop.f32.mrb[0].mxu0
  %v2550 = vadd.f32 %v2493, %v2549
  %v2551 = vpop.f32.mrb[0].mxu0
  %v2552 = vadd.f32 %v2495, %v2551
  %2553 = vmatprep.mubr.bf16.mxu0 0
  %2554 = vmatmul.mubr.bf16.gmra.mrb[0].mxu0 %v2509
  %v2555 = vpop.f32.mrb[0].mxu0
  %v2556 = vadd.f32 %v2499, %v2555
  %v2557 = vpop.f32.mrb[0].mxu0
  %v2558 = vadd.f32 %v2501, %v2557
  %v2559 = vpop.f32.mrb[0].mxu0
  %v2560 = vadd.f32 %v2503, %v2559
  %v2561 = vpop.f32.mrb[0].mxu0
  %v2562 = vadd.f32 %v2505, %v2561
  %2563 = vdwg.mxu0
  %v2564 = vrot.slane %v2431, 1
  %v2565 = vrot.slane %v2432, 1
  %v2566 = vsel %vm252, %v2564, %v2565
  %v2568 = vsel %vm110, %v2566, 0
  %v2571 = vsel %vm110, %v2565, 0
  %2573 = vmatprep.subr.bf16.mxu0 %v269
  %2574 = vmatpush1.bf16.msra.mxu0 %v268
  %2575 = vmatprep.subr.bf16.mxu0 %v271
  %2576 = vmatpush1.bf16.msra.mxu0 %v270
  %2577 = vmatprep.subr.bf16.mxu0 0
  %2578 = vmatpush1.bf16.msra.mxu0 0
  %2579 = vmatprep.subr.bf16.mxu0 0
  %2580 = vmatpush1.bf16.msra.mxu0 0
  %2581 = vmatprep.subr.bf16.mxu0 0
  %2582 = vmatpush1.bf16.msra.mxu0 0
  %2583 = vmatprep.subr.bf16.mxu0 0
  %2584 = vmatpush1.bf16.msra.mxu0 0
  %2585 = vmatprep.subr.bf16.mxu0 0
  %2586 = vmatpush1.bf16.msra.mxu0 0
  %2587 = vmatprep.subr.bf16.mxu0 0
  %2588 = vmatpush1.bf16.msra.mxu0 0
  %2589 = vmatprep.subr.bf16.mxu0 0
  %2590 = vmatpush1.bf16.msra.mxu0 0
  %2591 = vmatprep.subr.bf16.mxu0 0
  %2592 = vmatpush1.bf16.msra.mxu0 0
  %2593 = vmatprep.subr.bf16.mxu0 0
  %2594 = vmatpush1.bf16.msra.mxu0 0
  %2595 = vmatprep.subr.bf16.mxu0 0
  %2596 = vmatpush1.bf16.msra.mxu0 0
  %2597 = vmatprep.subr.bf16.mxu0 0
  %2598 = vmatpush1.bf16.msra.mxu0 0
  %2599 = vmatprep.subr.bf16.mxu0 0
  %2600 = vmatpush1.bf16.msra.mxu0 0
  %2601 = vmatprep.subr.bf16.mxu0 0
  %2602 = vmatpush1.bf16.msra.mxu0 0
  %2603 = vmatprep.subr.bf16.mxu0 0
  %2604 = vmatpush1.bf16.msra.mxu0 0
  %2605 = vmatprep.mubr.bf16.mxu0 0
  %2606 = vmatmul.mubr.bf16.gmra.mrb[0].mxu0 %v2568
  %v2607 = vpop.f32.mrb[0].mxu0
  %v2608 = vadd.f32 0.0, %v2607
  %v2609 = vpop.f32.mrb[0].mxu0
  %v2610 = vadd.f32 0.0, %v2609
  %v2611 = vpop.f32.mrb[0].mxu0
  %v2612 = vadd.f32 0.0, %v2611
  %v2613 = vpop.f32.mrb[0].mxu0
  %v2614 = vadd.f32 0.0, %v2613
  %2615 = vmatprep.mubr.bf16.mxu0 0
  %2616 = vmatmul.mubr.bf16.gmra.mrb[0].mxu0 %v2571
  %v2617 = vpop.f32.mrb[0].mxu0
  %v2618 = vadd.f32 0.0, %v2617
  %v2619 = vpop.f32.mrb[0].mxu0
  %v2620 = vadd.f32 0.0, %v2619
  %v2621 = vpop.f32.mrb[0].mxu0
  %v2622 = vadd.f32 0.0, %v2621
  %v2623 = vpop.f32.mrb[0].mxu0
  %v2624 = vadd.f32 0.0, %v2623
  %2625 = vdwg.mxu0
  %v2626 = vadd.f32 %v2546, %v2608
  %v2627 = vadd.f32 %v2548, %v2610
  %v2628 = vadd.f32 %v2550, %v2612
  %v2629 = vadd.f32 %v2552, %v2614
  %v2630 = vadd.f32 %v2556, %v2618
  %v2631 = vadd.f32 %v2558, %v2620
  %v2632 = vadd.f32 %v2560, %v2622
  %v2633 = vadd.f32 %v2562, %v2624
  %v2634 = vrot.slane %v2434, 1
  %v2635 = vrot.slane %v2436, 2
  %v2636 = vor.u32 %v2634, %v2635
  %v2637 = vrot.slane %v2445, 1
  %v2638 = vrot.slane %v2441, 2
  %v2639 = vor.u32 %v2637, %v2638
  %v2640 = vsel %vm348, %v2636, %v2639
  %v2642 = vsel %vm110, %v2640, 0
  %v2645 = vsel %vm110, %v2639, 0
  %2647 = vmatprep.subr.bf16.mxu0 %v369
  %2648 = vmatpush1.bf16.msra.mxu0 %v368
  %2649 = vmatprep.subr.bf16.mxu0 %v371
  %2650 = vmatpush1.bf16.msra.mxu0 %v370
  %2651 = vmatprep.subr.bf16.mxu0 0
  %2652 = vmatpush1.bf16.msra.mxu0 0
  %2653 = vmatprep.subr.bf16.mxu0 0
  %2654 = vmatpush1.bf16.msra.mxu0 0
  %2655 = vmatprep.subr.bf16.mxu0 0
  %2656 = vmatpush1.bf16.msra.mxu0 0
  %2657 = vmatprep.subr.bf16.mxu0 0
  %2658 = vmatpush1.bf16.msra.mxu0 0
  %2659 = vmatprep.subr.bf16.mxu0 0
  %2660 = vmatpush1.bf16.msra.mxu0 0
  %2661 = vmatprep.subr.bf16.mxu0 0
  %2662 = vmatpush1.bf16.msra.mxu0 0
  %2663 = vmatprep.subr.bf16.mxu0 0
  %2664 = vmatpush1.bf16.msra.mxu0 0
  %2665 = vmatprep.subr.bf16.mxu0 0
  %2666 = vmatpush1.bf16.msra.mxu0 0
  %2667 = vmatprep.subr.bf16.mxu0 0
  %2668 = vmatpush1.bf16.msra.mxu0 0
  %2669 = vmatprep.subr.bf16.mxu0 0
  %2670 = vmatpush1.bf16.msra.mxu0 0
  %2671 = vmatprep.subr.bf16.mxu0 0
  %2672 = vmatpush1.bf16.msra.mxu0 0
  %2673 = vmatprep.subr.bf16.mxu0 0
  %2674 = vmatpush1.bf16.msra.mxu0 0
  %2675 = vmatprep.subr.bf16.mxu0 0
  %2676 = vmatpush1.bf16.msra.mxu0 0
  %2677 = vmatprep.subr.bf16.mxu0 0
  %2678 = vmatpush1.bf16.msra.mxu0 0
  %2679 = vmatprep.mubr.bf16.mxu0 0
  %2680 = vmatmul.mubr.bf16.gmra.mrb[0].mxu0 %v2642
  %v2681 = vpop.f32.mrb[0].mxu0
  %v2682 = vadd.f32 0.0, %v2681
  %v2683 = vpop.f32.mrb[0].mxu0
  %v2684 = vadd.f32 0.0, %v2683
  %v2685 = vpop.f32.mrb[0].mxu0
  %v2686 = vadd.f32 0.0, %v2685
  %v2687 = vpop.f32.mrb[0].mxu0
  %v2688 = vadd.f32 0.0, %v2687
  %2689 = vmatprep.mubr.bf16.mxu0 0
  %2690 = vmatmul.mubr.bf16.gmra.mrb[0].mxu0 %v2645
  %v2691 = vpop.f32.mrb[0].mxu0
  %v2692 = vadd.f32 0.0, %v2691
  %v2693 = vpop.f32.mrb[0].mxu0
  %v2694 = vadd.f32 0.0, %v2693
  %v2695 = vpop.f32.mrb[0].mxu0
  %v2696 = vadd.f32 0.0, %v2695
  %v2697 = vpop.f32.mrb[0].mxu0
  %v2698 = vadd.f32 0.0, %v2697
  %2699 = vdwg.mxu0
  %v2700 = vadd.f32 %v2626, %v2682
  %v2701 = vadd.f32 %v2627, %v2684
  %v2702 = vadd.f32 %v2628, %v2686
  %v2703 = vadd.f32 %v2629, %v2688
  %v2704 = vadd.f32 %v2630, %v2692
  %v2705 = vadd.f32 %v2631, %v2694
  %v2706 = vadd.f32 %v2632, %v2696
  %v2707 = vadd.f32 %v2633, %v2698
  %v2708 = vrot.slane %v2431, 2
  %v2709 = vrot.slane %v2432, 2
  %v2710 = vsel %vm448, %v2708, %v2709
  %v2712 = vsel %vm110, %v2710, 0
  %v2715 = vsel %vm110, %v2709, 0
  %2717 = vmatprep.subr.bf16.mxu0 %v465
  %2718 = vmatpush1.bf16.msra.mxu0 %v464
  %2719 = vmatprep.subr.bf16.mxu0 %v467
  %2720 = vmatpush1.bf16.msra.mxu0 %v466
  %2721 = vmatprep.subr.bf16.mxu0 0
  %2722 = vmatpush1.bf16.msra.mxu0 0
  %2723 = vmatprep.subr.bf16.mxu0 0
  %2724 = vmatpush1.bf16.msra.mxu0 0
  %2725 = vmatprep.subr.bf16.mxu0 0
  %2726 = vmatpush1.bf16.msra.mxu0 0
  %2727 = vmatprep.subr.bf16.mxu0 0
  %2728 = vmatpush1.bf16.msra.mxu0 0
  %2729 = vmatprep.subr.bf16.mxu0 0
  %2730 = vmatpush1.bf16.msra.mxu0 0
  %2731 = vmatprep.subr.bf16.mxu0 0
  %2732 = vmatpush1.bf16.msra.mxu0 0
  %2733 = vmatprep.subr.bf16.mxu0 0
  %2734 = vmatpush1.bf16.msra.mxu0 0
  %2735 = vmatprep.subr.bf16.mxu0 0
  %2736 = vmatpush1.bf16.msra.mxu0 0
  %2737 = vmatprep.subr.bf16.mxu0 0
  %2738 = vmatpush1.bf16.msra.mxu0 0
  %2739 = vmatprep.subr.bf16.mxu0 0
  %2740 = vmatpush1.bf16.msra.mxu0 0
  %2741 = vmatprep.subr.bf16.mxu0 0
  %2742 = vmatpush1.bf16.msra.mxu0 0
  %2743 = vmatprep.subr.bf16.mxu0 0
  %2744 = vmatpush1.bf16.msra.mxu0 0
  %2745 = vmatprep.subr.bf16.mxu0 0
  %2746 = vmatpush1.bf16.msra.mxu0 0
  %2747 = vmatprep.subr.bf16.mxu0 0
  %2748 = vmatpush1.bf16.msra.mxu0 0
  %2749 = vmatprep.mubr.bf16.mxu0 0
  %2750 = vmatmul.mubr.bf16.gmra.mrb[0].mxu0 %v2712
  %v2751 = vpop.f32.mrb[0].mxu0
  %v2752 = vadd.f32 0.0, %v2751
  %v2753 = vpop.f32.mrb[0].mxu0
  %v2754 = vadd.f32 0.0, %v2753
  %v2755 = vpop.f32.mrb[0].mxu0
  %v2756 = vadd.f32 0.0, %v2755
  %v2757 = vpop.f32.mrb[0].mxu0
  %v2758 = vadd.f32 0.0, %v2757
  %2759 = vmatprep.mubr.bf16.mxu0 0
  %2760 = vmatmul.mubr.bf16.gmra.mrb[0].mxu0 %v2715
  %v2761 = vpop.f32.mrb[0].mxu0
  %v2762 = vadd.f32 0.0, %v2761
  %v2763 = vpop.f32.mrb[0].mxu0
  %v2764 = vadd.f32 0.0, %v2763
  %v2765 = vpop.f32.mrb[0].mxu0
  %v2766 = vadd.f32 0.0, %v2765
  %v2767 = vpop.f32.mrb[0].mxu0
  %v2768 = vadd.f32 0.0, %v2767
  %2769 = vdwg.mxu0
  %v2770 = vadd.f32 %v2700, %v2752
  %v2771 = vadd.f32 %v2701, %v2754
  %v2772 = vadd.f32 %v2702, %v2756
  %v2773 = vadd.f32 %v2703, %v2758
  %v2774 = vadd.f32 %v2704, %v2762
  %v2775 = vadd.f32 %v2705, %v2764
  %v2776 = vadd.f32 %v2706, %v2766
  %v2777 = vadd.f32 %v2707, %v2768
  %v2778 = vadd.f32 %v2770, %v544
  %v2779 = vadd.f32 %v2771, %v548
  %v2780 = vadd.f32 %v2772, %v544
  %v2781 = vadd.f32 %v2773, %v548
  %v2782 = vadd.f32 %v2774, %v544
  %v2783 = vadd.f32 %v2775, %v548
  %v2784 = vadd.f32 %v2776, %v544
  %v2785 = vadd.f32 %v2777, %v548
  %v2786 = vmax.f32 %v2778, 0.0
  %v2787 = vmax.f32 %v2779, 0.0
  %v2788 = vmax.f32 %v2780, 0.0
  %v2789 = vmax.f32 %v2781, 0.0
  %v2790 = vmax.f32 %v2782, 0.0
  %v2791 = vmax.f32 %v2783, 0.0
  %v2792 = vmax.f32 %v2784, 0.0
  %v2793 = vmax.f32 %v2785, 0.0
  %v2794 = vpack.c.bf16 %v2788, %v2786
  %v2795 = vpack.c.bf16 %v2789, %v2787
  %v2796 = vpack.c.bf16 %v2792, %v2790
  %v2797 = vpack.c.bf16 %v2793, %v2791
  %v2799 = vsel %vm582, %v2796, 0
  %v2802 = vsel %vm582, %v2797, 0
  %2804 = vmatprep.subr.bf16.mxu0 %v2795
  %2805 = vmatpush1.bf16.msra.mxu0 %v2794
  %2806 = vmatprep.subr.bf16.mxu0 %v2802
  %2807 = vmatpush1.bf16.msra.mxu0 %v2799
  %2808 = vmatprep.subr.bf16.mxu0 0
  %2809 = vmatpush1.bf16.msra.mxu0 0
  %2810 = vmatprep.subr.bf16.mxu0 0
  %2811 = vmatpush1.bf16.msra.mxu0 0
  %2812 = vmatprep.subr.bf16.mxu0 0
  %2813 = vmatpush1.bf16.msra.mxu0 0
  %2814 = vmatprep.subr.bf16.mxu0 0
  %2815 = vmatpush1.bf16.msra.mxu0 0
  %2816 = vmatprep.subr.bf16.mxu0 0
  %2817 = vmatpush1.bf16.msra.mxu0 0
  %2818 = vmatprep.subr.bf16.mxu0 0
  %2819 = vmatpush1.bf16.msra.mxu0 0
  %2820 = vmatprep.subr.bf16.mxu0 0
  %2821 = vmatpush1.bf16.msra.mxu0 0
  %2822 = vmatprep.subr.bf16.mxu0 0
  %2823 = vmatpush1.bf16.msra.mxu0 0
  %2824 = vmatprep.subr.bf16.mxu0 0
  %2825 = vmatpush1.bf16.msra.mxu0 0
  %2826 = vmatprep.subr.bf16.mxu0 0
  %2827 = vmatpush1.bf16.msra.mxu0 0
  %2828 = vmatprep.subr.bf16.mxu0 0
  %2829 = vmatpush1.bf16.msra.mxu0 0
  %2830 = vmatprep.subr.bf16.mxu0 0
  %2831 = vmatpush1.bf16.msra.mxu0 0
  %2832 = vmatprep.subr.bf16.mxu0 0
  %2833 = vmatpush1.bf16.msra.mxu0 0
  %2834 = vmatprep.subr.bf16.mxu0 0
  %2835 = vmatpush1.bf16.msra.mxu0 0
  %2836 = vmatprep.mubr.bf16.mxu0 0
  %2837 = vmatmul.mubr.bf16.gmra.mrb[0].mxu0 %v580
  %v2838 = vpop.f32.mrb[0].mxu0
  %v2839 = vadd.f32 0.0, %v2838
  %v2840 = vpop.f32.mrb[0].mxu0
  %v2841 = vadd.f32 0.0, %v2840
  %v2842 = vpop.f32.mrb[0].mxu0
  %v2843 = vadd.f32 0.0, %v2842
  %v2844 = vpop.f32.mrb[0].mxu0
  %v2845 = vadd.f32 0.0, %v2844
  %2846 = vdwg.mxu0
  %v2847 = vpack.c.bf16 %v2843, %v2839
  %v2848 = vpack.c.bf16 %v2845, %v2841
  %v2850 = vsel %vm718, %v2848, 0
  %2852 = vmatprep.subr.bf16.mxu0 0
  %2853 = vmatpush1.bf16.msra.mxu0 %v697
  %2854 = vmatprep.subr.bf16.mxu0 0
  %2855 = vmatpush1.bf16.msra.mxu0 %v698
  %2856 = vmatprep.subr.bf16.mxu0 0
  %2857 = vmatpush1.bf16.msra.mxu0 %v699
  %2858 = vmatprep.subr.bf16.mxu0 0
  %2859 = vmatpush1.bf16.msra.mxu0 %v700
  %2860 = vmatprep.subr.bf16.mxu0 0
  %2861 = vmatpush1.bf16.msra.mxu0 %v701
  %2862 = vmatprep.subr.bf16.mxu0 0
  %2863 = vmatpush1.bf16.msra.mxu0 %v702
  %2864 = vmatprep.subr.bf16.mxu0 0
  %2865 = vmatpush1.bf16.msra.mxu0 %v703
  %2866 = vmatprep.subr.bf16.mxu0 0
  %2867 = vmatpush1.bf16.msra.mxu0 %v704
  %2868 = vmatprep.subr.bf16.mxu0 0
  %2869 = vmatpush1.bf16.msra.mxu0 %v705
  %2870 = vmatprep.subr.bf16.mxu0 0
  %2871 = vmatpush1.bf16.msra.mxu0 %v706
  %2872 = vmatprep.subr.bf16.mxu0 0
  %2873 = vmatpush1.bf16.msra.mxu0 %v724
  %2874 = vmatprep.subr.bf16.mxu0 0
  %2875 = vmatpush1.bf16.msra.mxu0 0
  %2876 = vmatprep.subr.bf16.mxu0 0
  %2877 = vmatpush1.bf16.msra.mxu0 0
  %2878 = vmatprep.subr.bf16.mxu0 0
  %2879 = vmatpush1.bf16.msra.mxu0 0
  %2880 = vmatprep.subr.bf16.mxu0 0
  %2881 = vmatpush1.bf16.msra.mxu0 0
  %2882 = vmatprep.subr.bf16.mxu0 0
  %2883 = vmatpush1.bf16.msra.mxu0 0
  %2884 = vmatprep.mubr.bf16.mxu0 %v2850
  %2885 = vmatmul.mubr.bf16.gmra.mrb[0].mxu0 %v2847
  %v2886 = vpop.f32.mrb[0].mxu0
  %v2887 = vadd.f32 0.0, %v2886
  %v2888 = vpop.f32.mrb[0].mxu0
  %v2889 = vpop.f32.mrb[0].mxu0
  %v2890 = vadd.f32 0.0, %v2889
  %v2891 = vpop.f32.mrb[0].mxu0
  %2892 = vdwg.mxu0
  %v2893 = vpack.c.bf16 %v2890, %v2887
  %v2895 = vshrl.u32 %v2893, 16
  %v2897 = vshll.u32 %v2893, 16
  %v2899 = vrot.slane %v2897, 1
  %v2900 = vor.u32 %v2895, %v2899
  %v2902 = vsel %vm853, %v2900, 0
  %2904 = vmatprep.subr.bf16.mxu0 %v832
  %2905 = vmatpush1.bf16.msra.mxu0 %v831
  %2906 = vmatprep.subr.bf16.mxu0 %v834
  %2907 = vmatpush1.bf16.msra.mxu0 %v833
  %2908 = vmatprep.subr.bf16.mxu0 %v836
  %2909 = vmatpush1.bf16.msra.mxu0 %v835
  %2910 = vmatprep.subr.bf16.mxu0 %v838
  %2911 = vmatpush1.bf16.msra.mxu0 %v837
  %2912 = vmatprep.subr.bf16.mxu0 %v840
  %2913 = vmatpush1.bf16.msra.mxu0 %v839
  %2914 = vmatprep.subr.bf16.mxu0 %v862
  %2915 = vmatpush1.bf16.msra.mxu0 %v859
  %2916 = vmatprep.subr.bf16.mxu0 0
  %2917 = vmatpush1.bf16.msra.mxu0 0
  %2918 = vmatprep.subr.bf16.mxu0 0
  %2919 = vmatpush1.bf16.msra.mxu0 0
  %2920 = vmatprep.subr.bf16.mxu0 0
  %2921 = vmatpush1.bf16.msra.mxu0 0
  %2922 = vmatprep.subr.bf16.mxu0 0
  %2923 = vmatpush1.bf16.msra.mxu0 0
  %2924 = vmatprep.subr.bf16.mxu0 0
  %2925 = vmatpush1.bf16.msra.mxu0 0
  %2926 = vmatprep.subr.bf16.mxu0 0
  %2927 = vmatpush1.bf16.msra.mxu0 0
  %2928 = vmatprep.subr.bf16.mxu0 0
  %2929 = vmatpush1.bf16.msra.mxu0 0
  %2930 = vmatprep.subr.bf16.mxu0 0
  %2931 = vmatpush1.bf16.msra.mxu0 0
  %2932 = vmatprep.subr.bf16.mxu0 0
  %2933 = vmatpush1.bf16.msra.mxu0 0
  %2934 = vmatprep.subr.bf16.mxu0 0
  %2935 = vmatpush1.bf16.msra.mxu0 0
  %2936 = vmatprep.mubr.bf16.mxu0 0
  %2937 = vmatmul.mubr.bf16.gmra.mrb[0].mxu0 %v2902
  %v2938 = vpop.f32.mrb[0].mxu0
  %v2939 = vadd.f32 0.0, %v2938
  %v2940 = vpop.f32.mrb[0].mxu0
  %v2941 = vadd.f32 0.0, %v2940
  %v2942 = vpop.f32.mrb[0].mxu0
  %v2943 = vadd.f32 0.0, %v2942
  %v2944 = vpop.f32.mrb[0].mxu0
  %v2945 = vadd.f32 0.0, %v2944
  %2946 = vdwg.mxu0
  %v2947 = vsel %vm853, %v2893, 0
  %2949 = vmatprep.subr.bf16.mxu0 %v941
  %2950 = vmatpush1.bf16.msra.mxu0 %v940
  %2951 = vmatprep.subr.bf16.mxu0 %v943
  %2952 = vmatpush1.bf16.msra.mxu0 %v942
  %2953 = vmatprep.subr.bf16.mxu0 %v945
  %2954 = vmatpush1.bf16.msra.mxu0 %v944
  %2955 = vmatprep.subr.bf16.mxu0 %v947
  %2956 = vmatpush1.bf16.msra.mxu0 %v946
  %2957 = vmatprep.subr.bf16.mxu0 %v949
  %2958 = vmatpush1.bf16.msra.mxu0 %v948
  %2959 = vmatprep.subr.bf16.mxu0 %v968
  %2960 = vmatpush1.bf16.msra.mxu0 %v965
  %2961 = vmatprep.subr.bf16.mxu0 0
  %2962 = vmatpush1.bf16.msra.mxu0 0
  %2963 = vmatprep.subr.bf16.mxu0 0
  %2964 = vmatpush1.bf16.msra.mxu0 0
  %2965 = vmatprep.subr.bf16.mxu0 0
  %2966 = vmatpush1.bf16.msra.mxu0 0
  %2967 = vmatprep.subr.bf16.mxu0 0
  %2968 = vmatpush1.bf16.msra.mxu0 0
  %2969 = vmatprep.subr.bf16.mxu0 0
  %2970 = vmatpush1.bf16.msra.mxu0 0
  %2971 = vmatprep.subr.bf16.mxu0 0
  %2972 = vmatpush1.bf16.msra.mxu0 0
  %2973 = vmatprep.subr.bf16.mxu0 0
  %2974 = vmatpush1.bf16.msra.mxu0 0
  %2975 = vmatprep.subr.bf16.mxu0 0
  %2976 = vmatpush1.bf16.msra.mxu0 0
  %2977 = vmatprep.subr.bf16.mxu0 0
  %2978 = vmatpush1.bf16.msra.mxu0 0
  %2979 = vmatprep.subr.bf16.mxu0 0
  %2980 = vmatpush1.bf16.msra.mxu0 0
  %2981 = vmatprep.mubr.bf16.mxu0 0
  %2982 = vmatmul.mubr.bf16.gmra.mrb[0].mxu0 %v2947
  %v2983 = vpop.f32.mrb[0].mxu0
  %v2984 = vadd.f32 %v2939, %v2983
  %v2985 = vpop.f32.mrb[0].mxu0
  %v2986 = vadd.f32 %v2941, %v2985
  %v2987 = vpop.f32.mrb[0].mxu0
  %v2988 = vadd.f32 %v2943, %v2987
  %v2989 = vpop.f32.mrb[0].mxu0
  %v2990 = vadd.f32 %v2945, %v2989
  %2991 = vdwg.mxu0
  %v2993 = vrot.slane %v2893, 1
  %v2995 = vsel %vm853, %v2993, 0
  %2997 = vmatprep.subr.bf16.mxu0 %v1061
  %2998 = vmatpush1.bf16.msra.mxu0 %v1060
  %2999 = vmatprep.subr.bf16.mxu0 %v1063
  %3000 = vmatpush1.bf16.msra.mxu0 %v1062
  %3001 = vmatprep.subr.bf16.mxu0 %v1065
  %3002 = vmatpush1.bf16.msra.mxu0 %v1064
  %3003 = vmatprep.subr.bf16.mxu0 %v1067
  %3004 = vmatpush1.bf16.msra.mxu0 %v1066
  %3005 = vmatprep.subr.bf16.mxu0 %v1069
  %3006 = vmatpush1.bf16.msra.mxu0 %v1068
  %3007 = vmatprep.subr.bf16.mxu0 %v1089
  %3008 = vmatpush1.bf16.msra.mxu0 %v1086
  %3009 = vmatprep.subr.bf16.mxu0 0
  %3010 = vmatpush1.bf16.msra.mxu0 0
  %3011 = vmatprep.subr.bf16.mxu0 0
  %3012 = vmatpush1.bf16.msra.mxu0 0
  %3013 = vmatprep.subr.bf16.mxu0 0
  %3014 = vmatpush1.bf16.msra.mxu0 0
  %3015 = vmatprep.subr.bf16.mxu0 0
  %3016 = vmatpush1.bf16.msra.mxu0 0
  %3017 = vmatprep.subr.bf16.mxu0 0
  %3018 = vmatpush1.bf16.msra.mxu0 0
  %3019 = vmatprep.subr.bf16.mxu0 0
  %3020 = vmatpush1.bf16.msra.mxu0 0
  %3021 = vmatprep.subr.bf16.mxu0 0
  %3022 = vmatpush1.bf16.msra.mxu0 0
  %3023 = vmatprep.subr.bf16.mxu0 0
  %3024 = vmatpush1.bf16.msra.mxu0 0
  %3025 = vmatprep.subr.bf16.mxu0 0
  %3026 = vmatpush1.bf16.msra.mxu0 0
  %3027 = vmatprep.subr.bf16.mxu0 0
  %3028 = vmatpush1.bf16.msra.mxu0 0
  %3029 = vmatprep.mubr.bf16.mxu0 0
  %3030 = vmatmul.mubr.bf16.gmra.mrb[0].mxu0 %v2995
  %v3031 = vpop.f32.mrb[0].mxu0
  %v3032 = vadd.f32 0.0, %v3031
  %v3033 = vpop.f32.mrb[0].mxu0
  %v3034 = vadd.f32 0.0, %v3033
  %v3035 = vpop.f32.mrb[0].mxu0
  %v3036 = vadd.f32 0.0, %v3035
  %v3037 = vpop.f32.mrb[0].mxu0
  %v3038 = vadd.f32 0.0, %v3037
  %3039 = vdwg.mxu0
  %v3040 = vadd.f32 %v2984, %v3032
  %v3041 = vadd.f32 %v2986, %v3034
  %v3042 = vadd.f32 %v2988, %v3036
  %v3043 = vadd.f32 %v2990, %v3038
  %v3044 = vrot.slane %v2895, 1
  %v3045 = vrot.slane %v2897, 2
  %v3046 = vor.u32 %v3044, %v3045
  %v3048 = vsel %vm853, %v3046, 0
  %3050 = vmatprep.subr.bf16.mxu0 %v1187
  %3051 = vmatpush1.bf16.msra.mxu0 %v1186
  %3052 = vmatprep.subr.bf16.mxu0 %v1189
  %3053 = vmatpush1.bf16.msra.mxu0 %v1188
  %3054 = vmatprep.subr.bf16.mxu0 %v1191
  %3055 = vmatpush1.bf16.msra.mxu0 %v1190
  %3056 = vmatprep.subr.bf16.mxu0 %v1193
  %3057 = vmatpush1.bf16.msra.mxu0 %v1192
  %3058 = vmatprep.subr.bf16.mxu0 %v1195
  %3059 = vmatpush1.bf16.msra.mxu0 %v1194
  %3060 = vmatprep.subr.bf16.mxu0 %v1215
  %3061 = vmatpush1.bf16.msra.mxu0 %v1212
  %3062 = vmatprep.subr.bf16.mxu0 0
  %3063 = vmatpush1.bf16.msra.mxu0 0
  %3064 = vmatprep.subr.bf16.mxu0 0
  %3065 = vmatpush1.bf16.msra.mxu0 0
  %3066 = vmatprep.subr.bf16.mxu0 0
  %3067 = vmatpush1.bf16.msra.mxu0 0
  %3068 = vmatprep.subr.bf16.mxu0 0
  %3069 = vmatpush1.bf16.msra.mxu0 0
  %3070 = vmatprep.subr.bf16.mxu0 0
  %3071 = vmatpush1.bf16.msra.mxu0 0
  %3072 = vmatprep.subr.bf16.mxu0 0
  %3073 = vmatpush1.bf16.msra.mxu0 0
  %3074 = vmatprep.subr.bf16.mxu0 0
  %3075 = vmatpush1.bf16.msra.mxu0 0
  %3076 = vmatprep.subr.bf16.mxu0 0
  %3077 = vmatpush1.bf16.msra.mxu0 0
  %3078 = vmatprep.subr.bf16.mxu0 0
  %3079 = vmatpush1.bf16.msra.mxu0 0
  %3080 = vmatprep.subr.bf16.mxu0 0
  %3081 = vmatpush1.bf16.msra.mxu0 0
  %3082 = vmatprep.mubr.bf16.mxu0 0
  %3083 = vmatmul.mubr.bf16.gmra.mrb[0].mxu0 %v3048
  %v3084 = vpop.f32.mrb[0].mxu0
  %v3085 = vadd.f32 0.0, %v3084
  %v3086 = vpop.f32.mrb[0].mxu0
  %v3087 = vadd.f32 0.0, %v3086
  %v3088 = vpop.f32.mrb[0].mxu0
  %v3089 = vadd.f32 0.0, %v3088
  %v3090 = vpop.f32.mrb[0].mxu0
  %v3091 = vadd.f32 0.0, %v3090
  %3092 = vdwg.mxu0
  %v3093 = vadd.f32 %v3040, %v3085
  %v3094 = vadd.f32 %v3041, %v3087
  %v3095 = vadd.f32 %v3042, %v3089
  %v3096 = vadd.f32 %v3043, %v3091
  %v3097 = vrot.slane %v2893, 2
  %v3099 = vsel %vm853, %v3097, 0
  %3101 = vmatprep.subr.bf16.mxu0 %v1311
  %3102 = vmatpush1.bf16.msra.mxu0 %v1310
  %3103 = vmatprep.subr.bf16.mxu0 %v1313
  %3104 = vmatpush1.bf16.msra.mxu0 %v1312
  %3105 = vmatprep.subr.bf16.mxu0 %v1315
  %3106 = vmatpush1.bf16.msra.mxu0 %v1314
  %3107 = vmatprep.subr.bf16.mxu0 %v1317
  %3108 = vmatpush1.bf16.msra.mxu0 %v1316
  %3109 = vmatprep.subr.bf16.mxu0 %v1319
  %3110 = vmatpush1.bf16.msra.mxu0 %v1318
  %3111 = vmatprep.subr.bf16.mxu0 %v1339
  %3112 = vmatpush1.bf16.msra.mxu0 %v1336
  %3113 = vmatprep.subr.bf16.mxu0 0
  %3114 = vmatpush1.bf16.msra.mxu0 0
  %3115 = vmatprep.subr.bf16.mxu0 0
  %3116 = vmatpush1.bf16.msra.mxu0 0
  %3117 = vmatprep.subr.bf16.mxu0 0
  %3118 = vmatpush1.bf16.msra.mxu0 0
  %3119 = vmatprep.subr.bf16.mxu0 0
  %3120 = vmatpush1.bf16.msra.mxu0 0
  %3121 = vmatprep.subr.bf16.mxu0 0
  %3122 = vmatpush1.bf16.msra.mxu0 0
  %3123 = vmatprep.subr.bf16.mxu0 0
  %3124 = vmatpush1.bf16.msra.mxu0 0
  %3125 = vmatprep.subr.bf16.mxu0 0
  %3126 = vmatpush1.bf16.msra.mxu0 0
  %3127 = vmatprep.subr.bf16.mxu0 0
  %3128 = vmatpush1.bf16.msra.mxu0 0
  %3129 = vmatprep.subr.bf16.mxu0 0
  %3130 = vmatpush1.bf16.msra.mxu0 0
  %3131 = vmatprep.subr.bf16.mxu0 0
  %3132 = vmatpush1.bf16.msra.mxu0 0
  %3133 = vmatprep.mubr.bf16.mxu0 0
  %3134 = vmatmul.mubr.bf16.gmra.mrb[0].mxu0 %v3099
  %v3135 = vpop.f32.mrb[0].mxu0
  %v3136 = vadd.f32 0.0, %v3135
  %v3137 = vpop.f32.mrb[0].mxu0
  %v3138 = vadd.f32 0.0, %v3137
  %v3139 = vpop.f32.mrb[0].mxu0
  %v3140 = vadd.f32 0.0, %v3139
  %v3141 = vpop.f32.mrb[0].mxu0
  %v3142 = vadd.f32 0.0, %v3141
  %3143 = vdwg.mxu0
  %v3144 = vadd.f32 %v3093, %v3136
  %v3145 = vadd.f32 %v3094, %v3138
  %v3146 = vadd.f32 %v3095, %v3140
  %v3147 = vadd.f32 %v3096, %v3142
  %v3148 = vadd.f32 %v3144, %v1393
  %v3149 = vadd.f32 %v3145, %v1397
  %v3150 = vadd.f32 %v3146, %v1393
  %v3151 = vadd.f32 %v3147, %v1397
  %v3152 = vmax.f32 %v3148, 0.0
  %v3153 = vmax.f32 %v3149, 0.0
  %v3154 = vmax.f32 %v3150, 0.0
  %v3155 = vmax.f32 %v3151, 0.0
  %v3156 = vpack.c.bf16 %v3154, %v3152
  %v3157 = vpack.c.bf16 %v3155, %v3153
  %v3159 = vsel %vm1415, %v3156, 0
  %v3162 = vsel %vm1415, %v3157, 0
  %3164 = vmatprep.subr.bf16.mxu0 %v3162
  %3165 = vmatpush1.bf16.msra.mxu0 %v3159
  %3166 = vmatprep.subr.bf16.mxu0 0
  %3167 = vmatpush1.bf16.msra.mxu0 0
  %3168 = vmatprep.subr.bf16.mxu0 0
  %3169 = vmatpush1.bf16.msra.mxu0 0
  %3170 = vmatprep.subr.bf16.mxu0 0
  %3171 = vmatpush1.bf16.msra.mxu0 0
  %3172 = vmatprep.subr.bf16.mxu0 0
  %3173 = vmatpush1.bf16.msra.mxu0 0
  %3174 = vmatprep.subr.bf16.mxu0 0
  %3175 = vmatpush1.bf16.msra.mxu0 0
  %3176 = vmatprep.subr.bf16.mxu0 0
  %3177 = vmatpush1.bf16.msra.mxu0 0
  %3178 = vmatprep.subr.bf16.mxu0 0
  %3179 = vmatpush1.bf16.msra.mxu0 0
  %3180 = vmatprep.subr.bf16.mxu0 0
  %3181 = vmatpush1.bf16.msra.mxu0 0
  %3182 = vmatprep.subr.bf16.mxu0 0
  %3183 = vmatpush1.bf16.msra.mxu0 0
  %3184 = vmatprep.subr.bf16.mxu0 0
  %3185 = vmatpush1.bf16.msra.mxu0 0
  %3186 = vmatprep.subr.bf16.mxu0 0
  %3187 = vmatpush1.bf16.msra.mxu0 0
  %3188 = vmatprep.subr.bf16.mxu0 0
  %3189 = vmatpush1.bf16.msra.mxu0 0
  %3190 = vmatprep.subr.bf16.mxu0 0
  %3191 = vmatpush1.bf16.msra.mxu0 0
  %3192 = vmatprep.subr.bf16.mxu0 0
  %3193 = vmatpush1.bf16.msra.mxu0 0
  %3194 = vmatprep.subr.bf16.mxu0 0
  %3195 = vmatpush1.bf16.msra.mxu0 0
  %3196 = vmatprep.mubr.bf16.mxu0 0
  %3197 = vmatmul.mubr.bf16.gmra.mrb[0].mxu0 %v1413
  %v3198 = vpop.f32.mrb[0].mxu0
  %v3199 = vadd.f32 0.0, %v3198
  %v3200 = vpop.f32.mrb[0].mxu0
  %v3201 = vadd.f32 0.0, %v3200
  %v3202 = vpop.f32.mrb[0].mxu0
  %v3203 = vpop.f32.mrb[0].mxu0
  %3204 = vdwg.mxu0
  %v3205 = vpack.c.bf16 %v3199, %v3199
  %v3206 = vpack.c.bf16 %v3201, %v3201
  %v3208 = vsel %vm110, %v3206, 0
  %3210 = vmatprep.subr.bf16.mxu0 0
  %3211 = vmatpush1.bf16.msra.mxu0 %v1525
  %3212 = vmatprep.subr.bf16.mxu0 0
  %3213 = vmatpush1.bf16.msra.mxu0 %v1526
  %3214 = vmatprep.subr.bf16.mxu0 0
  %3215 = vmatpush1.bf16.msra.mxu0 %v1527
  %3216 = vmatprep.subr.bf16.mxu0 0
  %3217 = vmatpush1.bf16.msra.mxu0 %v1528
  %3218 = vmatprep.subr.bf16.mxu0 0
  %3219 = vmatpush1.bf16.msra.mxu0 %v1529
  %3220 = vmatprep.subr.bf16.mxu0 0
  %3221 = vmatpush1.bf16.msra.mxu0 %v1530
  %3222 = vmatprep.subr.bf16.mxu0 0
  %3223 = vmatpush1.bf16.msra.mxu0 %v1531
  %3224 = vmatprep.subr.bf16.mxu0 0
  %3225 = vmatpush1.bf16.msra.mxu0 %v1532
  %3226 = vmatprep.subr.bf16.mxu0 0
  %3227 = vmatpush1.bf16.msra.mxu0 %v1533
  %3228 = vmatprep.subr.bf16.mxu0 0
  %3229 = vmatpush1.bf16.msra.mxu0 %v1534
  %3230 = vmatprep.subr.bf16.mxu0 0
  %3231 = vmatpush1.bf16.msra.mxu0 0
  %3232 = vmatprep.subr.bf16.mxu0 0
  %3233 = vmatpush1.bf16.msra.mxu0 0
  %3234 = vmatprep.subr.bf16.mxu0 0
  %3235 = vmatpush1.bf16.msra.mxu0 0
  %3236 = vmatprep.subr.bf16.mxu0 0
  %3237 = vmatpush1.bf16.msra.mxu0 0
  %3238 = vmatprep.subr.bf16.mxu0 0
  %3239 = vmatpush1.bf16.msra.mxu0 0
  %3240 = vmatprep.subr.bf16.mxu0 0
  %3241 = vmatpush1.bf16.msra.mxu0 0
  %3242 = vmatprep.mubr.bf16.mxu0 %v3208
  %3243 = vmatmul.mubr.bf16.gmra.mrb[0].mxu0 %v3205
  %v3244 = vpop.f32.mrb[0].mxu0
  %v3245 = vadd.f32 0.0, %v3244
  %v3246 = vpop.f32.mrb[0].mxu0
  %v3247 = vpop.f32.mrb[0].mxu0
  %v3248 = vpop.f32.mrb[0].mxu0
  %3249 = vdwg.mxu0
  %v3250 = vld [vmem:[%s0 + $0x30] sm:$0xf]
  %v3251 = vld [vmem:[%s0 + $0x34] sm:$0xf]
  %v3252 = vld [vmem:[%s0 + $0x38] sm:$0xf]
  %v3253 = vld [vmem:[%s0 + $0x3c] sm:$0xf]
  %v3258 = vunpack.c.l.b16 %v3250
  %v3259 = vunpack.c.l.b16 %v3251
  %v3260 = vunpack.c.l.b16 %v3252
  %v3261 = vunpack.c.l.b16 %v3253
  %v3262 = vpack.c.b16 %v3259, %v3258
  %v3263 = vpack.c.b16 %v3261, %v3260
  %v3265 = vshrl.u32 %v3262, 16
  %v3267 = vshll.u32 %v3262, 16
  %v3269 = vrot.slane %v3267, 1
  %v3270 = vor.u32 %v3265, %v3269
  %v3272 = vshll.u32 %v3263, 16
  %v3274 = vrot.slane %v3272, 1
  %v3275 = vsel %vm74, %v3270, %v3274
  %v3276 = vshrl.u32 %v3263, 16
  %v3278 = vor.u32 %v3276, %v3274
  %v3280 = vsel %vm110, %v3275, 0
  %v3283 = vsel %vm110, %v3278, 0
  %3285 = vmatprep.subr.bf16.mxu0 %v103
  %3286 = vmatpush1.bf16.msra.mxu0 %v102
  %3287 = vmatprep.subr.bf16.mxu0 %v105
  %3288 = vmatpush1.bf16.msra.mxu0 %v104
  %3289 = vmatprep.subr.bf16.mxu0 0
  %3290 = vmatpush1.bf16.msra.mxu0 0
  %3291 = vmatprep.subr.bf16.mxu0 0
  %3292 = vmatpush1.bf16.msra.mxu0 0
  %3293 = vmatprep.subr.bf16.mxu0 0
  %3294 = vmatpush1.bf16.msra.mxu0 0
  %3295 = vmatprep.subr.bf16.mxu0 0
  %3296 = vmatpush1.bf16.msra.mxu0 0
  %3297 = vmatprep.subr.bf16.mxu0 0
  %3298 = vmatpush1.bf16.msra.mxu0 0
  %3299 = vmatprep.subr.bf16.mxu0 0
  %3300 = vmatpush1.bf16.msra.mxu0 0
  %3301 = vmatprep.subr.bf16.mxu0 0
  %3302 = vmatpush1.bf16.msra.mxu0 0
  %3303 = vmatprep.subr.bf16.mxu0 0
  %3304 = vmatpush1.bf16.msra.mxu0 0
  %3305 = vmatprep.subr.bf16.mxu0 0
  %3306 = vmatpush1.bf16.msra.mxu0 0
  %3307 = vmatprep.subr.bf16.mxu0 0
  %3308 = vmatpush1.bf16.msra.mxu0 0
  %3309 = vmatprep.subr.bf16.mxu0 0
  %3310 = vmatpush1.bf16.msra.mxu0 0
  %3311 = vmatprep.subr.bf16.mxu0 0
  %3312 = vmatpush1.bf16.msra.mxu0 0
  %3313 = vmatprep.subr.bf16.mxu0 0
  %3314 = vmatpush1.bf16.msra.mxu0 0
  %3315 = vmatprep.subr.bf16.mxu0 0
  %3316 = vmatpush1.bf16.msra.mxu0 0
  %3317 = vmatprep.mubr.bf16.mxu0 0
  %3318 = vmatmul.mubr.bf16.gmra.mrb[0].mxu0 %v3280
  %v3319 = vpop.f32.mrb[0].mxu0
  %v3320 = vadd.f32 0.0, %v3319
  %v3321 = vpop.f32.mrb[0].mxu0
  %v3322 = vadd.f32 0.0, %v3321
  %v3323 = vpop.f32.mrb[0].mxu0
  %v3324 = vadd.f32 0.0, %v3323
  %v3325 = vpop.f32.mrb[0].mxu0
  %v3326 = vadd.f32 0.0, %v3325
  %3327 = vmatprep.mubr.bf16.mxu0 0
  %3328 = vmatmul.mubr.bf16.gmra.mrb[0].mxu0 %v3283
  %v3329 = vpop.f32.mrb[0].mxu0
  %v3330 = vadd.f32 0.0, %v3329
  %v3331 = vpop.f32.mrb[0].mxu0
  %v3332 = vadd.f32 0.0, %v3331
  %v3333 = vpop.f32.mrb[0].mxu0
  %v3334 = vadd.f32 0.0, %v3333
  %v3335 = vpop.f32.mrb[0].mxu0
  %v3336 = vadd.f32 0.0, %v3335
  %3337 = vdwg.mxu0
  %v3338 = vsel %vm110, %v3262, 0
  %v3340 = vsel %vm110, %v3263, 0
  %3342 = vmatprep.subr.bf16.mxu0 %v183
  %3343 = vmatpush1.bf16.msra.mxu0 %v182
  %3344 = vmatprep.subr.bf16.mxu0 %v185
  %3345 = vmatpush1.bf16.msra.mxu0 %v184
  %3346 = vmatprep.subr.bf16.mxu0 0
  %3347 = vmatpush1.bf16.msra.mxu0 0
  %3348 = vmatprep.subr.bf16.mxu0 0
  %3349 = vmatpush1.bf16.msra.mxu0 0
  %3350 = vmatprep.subr.bf16.mxu0 0
  %3351 = vmatpush1.bf16.msra.mxu0 0
  %3352 = vmatprep.subr.bf16.mxu0 0
  %3353 = vmatpush1.bf16.msra.mxu0 0
  %3354 = vmatprep.subr.bf16.mxu0 0
  %3355 = vmatpush1.bf16.msra.mxu0 0
  %3356 = vmatprep.subr.bf16.mxu0 0
  %3357 = vmatpush1.bf16.msra.mxu0 0
  %3358 = vmatprep.subr.bf16.mxu0 0
  %3359 = vmatpush1.bf16.msra.mxu0 0
  %3360 = vmatprep.subr.bf16.mxu0 0
  %3361 = vmatpush1.bf16.msra.mxu0 0
  %3362 = vmatprep.subr.bf16.mxu0 0
  %3363 = vmatpush1.bf16.msra.mxu0 0
  %3364 = vmatprep.subr.bf16.mxu0 0
  %3365 = vmatpush1.bf16.msra.mxu0 0
  %3366 = vmatprep.subr.bf16.mxu0 0
  %3367 = vmatpush1.bf16.msra.mxu0 0
  %3368 = vmatprep.subr.bf16.mxu0 0
  %3369 = vmatpush1.bf16.msra.mxu0 0
  %3370 = vmatprep.subr.bf16.mxu0 0
  %3371 = vmatpush1.bf16.msra.mxu0 0
  %3372 = vmatprep.subr.bf16.mxu0 0
  %3373 = vmatpush1.bf16.msra.mxu0 0
  %3374 = vmatprep.mubr.bf16.mxu0 0
  %3375 = vmatmul.mubr.bf16.gmra.mrb[0].mxu0 %v3338
  %v3376 = vpop.f32.mrb[0].mxu0
  %v3377 = vadd.f32 %v3320, %v3376
  %v3378 = vpop.f32.mrb[0].mxu0
  %v3379 = vadd.f32 %v3322, %v3378
  %v3380 = vpop.f32.mrb[0].mxu0
  %v3381 = vadd.f32 %v3324, %v3380
  %v3382 = vpop.f32.mrb[0].mxu0
  %v3383 = vadd.f32 %v3326, %v3382
  %3384 = vmatprep.mubr.bf16.mxu0 0
  %3385 = vmatmul.mubr.bf16.gmra.mrb[0].mxu0 %v3340
  %v3386 = vpop.f32.mrb[0].mxu0
  %v3387 = vadd.f32 %v3330, %v3386
  %v3388 = vpop.f32.mrb[0].mxu0
  %v3389 = vadd.f32 %v3332, %v3388
  %v3390 = vpop.f32.mrb[0].mxu0
  %v3391 = vadd.f32 %v3334, %v3390
  %v3392 = vpop.f32.mrb[0].mxu0
  %v3393 = vadd.f32 %v3336, %v3392
  %3394 = vdwg.mxu0
  %v3395 = vrot.slane %v3262, 1
  %v3396 = vrot.slane %v3263, 1
  %v3397 = vsel %vm252, %v3395, %v3396
  %v3399 = vsel %vm110, %v3397, 0
  %v3402 = vsel %vm110, %v3396, 0
  %3404 = vmatprep.subr.bf16.mxu0 %v269
  %3405 = vmatpush1.bf16.msra.mxu0 %v268
  %3406 = vmatprep.subr.bf16.mxu0 %v271
  %3407 = vmatpush1.bf16.msra.mxu0 %v270
  %3408 = vmatprep.subr.bf16.mxu0 0
  %3409 = vmatpush1.bf16.msra.mxu0 0
  %3410 = vmatprep.subr.bf16.mxu0 0
  %3411 = vmatpush1.bf16.msra.mxu0 0
  %3412 = vmatprep.subr.bf16.mxu0 0
  %3413 = vmatpush1.bf16.msra.mxu0 0
  %3414 = vmatprep.subr.bf16.mxu0 0
  %3415 = vmatpush1.bf16.msra.mxu0 0
  %3416 = vmatprep.subr.bf16.mxu0 0
  %3417 = vmatpush1.bf16.msra.mxu0 0
  %3418 = vmatprep.subr.bf16.mxu0 0
  %3419 = vmatpush1.bf16.msra.mxu0 0
  %3420 = vmatprep.subr.bf16.mxu0 0
  %3421 = vmatpush1.bf16.msra.mxu0 0
  %3422 = vmatprep.subr.bf16.mxu0 0
  %3423 = vmatpush1.bf16.msra.mxu0 0
  %3424 = vmatprep.subr.bf16.mxu0 0
  %3425 = vmatpush1.bf16.msra.mxu0 0
  %3426 = vmatprep.subr.bf16.mxu0 0
  %3427 = vmatpush1.bf16.msra.mxu0 0
  %3428 = vmatprep.subr.bf16.mxu0 0
  %3429 = vmatpush1.bf16.msra.mxu0 0
  %3430 = vmatprep.subr.bf16.mxu0 0
  %3431 = vmatpush1.bf16.msra.mxu0 0
  %3432 = vmatprep.subr.bf16.mxu0 0
  %3433 = vmatpush1.bf16.msra.mxu0 0
  %3434 = vmatprep.subr.bf16.mxu0 0
  %3435 = vmatpush1.bf16.msra.mxu0 0
  %3436 = vmatprep.mubr.bf16.mxu0 0
  %3437 = vmatmul.mubr.bf16.gmra.mrb[0].mxu0 %v3399
  %v3438 = vpop.f32.mrb[0].mxu0
  %v3439 = vadd.f32 0.0, %v3438
  %v3440 = vpop.f32.mrb[0].mxu0
  %v3441 = vadd.f32 0.0, %v3440
  %v3442 = vpop.f32.mrb[0].mxu0
  %v3443 = vadd.f32 0.0, %v3442
  %v3444 = vpop.f32.mrb[0].mxu0
  %v3445 = vadd.f32 0.0, %v3444
  %3446 = vmatprep.mubr.bf16.mxu0 0
  %3447 = vmatmul.mubr.bf16.gmra.mrb[0].mxu0 %v3402
  %v3448 = vpop.f32.mrb[0].mxu0
  %v3449 = vadd.f32 0.0, %v3448
  %v3450 = vpop.f32.mrb[0].mxu0
  %v3451 = vadd.f32 0.0, %v3450
  %v3452 = vpop.f32.mrb[0].mxu0
  %v3453 = vadd.f32 0.0, %v3452
  %v3454 = vpop.f32.mrb[0].mxu0
  %v3455 = vadd.f32 0.0, %v3454
  %3456 = vdwg.mxu0
  %v3457 = vadd.f32 %v3377, %v3439
  %v3458 = vadd.f32 %v3379, %v3441
  %v3459 = vadd.f32 %v3381, %v3443
  %v3460 = vadd.f32 %v3383, %v3445
  %v3461 = vadd.f32 %v3387, %v3449
  %v3462 = vadd.f32 %v3389, %v3451
  %v3463 = vadd.f32 %v3391, %v3453
  %v3464 = vadd.f32 %v3393, %v3455
  %v3465 = vrot.slane %v3265, 1
  %v3466 = vrot.slane %v3267, 2
  %v3467 = vor.u32 %v3465, %v3466
  %v3468 = vrot.slane %v3276, 1
  %v3469 = vrot.slane %v3272, 2
  %v3470 = vor.u32 %v3468, %v3469
  %v3471 = vsel %vm348, %v3467, %v3470
  %v3473 = vsel %vm110, %v3471, 0
  %v3476 = vsel %vm110, %v3470, 0
  %3478 = vmatprep.subr.bf16.mxu0 %v369
  %3479 = vmatpush1.bf16.msra.mxu0 %v368
  %3480 = vmatprep.subr.bf16.mxu0 %v371
  %3481 = vmatpush1.bf16.msra.mxu0 %v370
  %3482 = vmatprep.subr.bf16.mxu0 0
  %3483 = vmatpush1.bf16.msra.mxu0 0
  %3484 = vmatprep.subr.bf16.mxu0 0
  %3485 = vmatpush1.bf16.msra.mxu0 0
  %3486 = vmatprep.subr.bf16.mxu0 0
  %3487 = vmatpush1.bf16.msra.mxu0 0
  %3488 = vmatprep.subr.bf16.mxu0 0
  %3489 = vmatpush1.bf16.msra.mxu0 0
  %3490 = vmatprep.subr.bf16.mxu0 0
  %3491 = vmatpush1.bf16.msra.mxu0 0
  %3492 = vmatprep.subr.bf16.mxu0 0
  %3493 = vmatpush1.bf16.msra.mxu0 0
  %3494 = vmatprep.subr.bf16.mxu0 0
  %3495 = vmatpush1.bf16.msra.mxu0 0
  %3496 = vmatprep.subr.bf16.mxu0 0
  %3497 = vmatpush1.bf16.msra.mxu0 0
  %3498 = vmatprep.subr.bf16.mxu0 0
  %3499 = vmatpush1.bf16.msra.mxu0 0
  %3500 = vmatprep.subr.bf16.mxu0 0
  %3501 = vmatpush1.bf16.msra.mxu0 0
  %3502 = vmatprep.subr.bf16.mxu0 0
  %3503 = vmatpush1.bf16.msra.mxu0 0
  %3504 = vmatprep.subr.bf16.mxu0 0
  %3505 = vmatpush1.bf16.msra.mxu0 0
  %3506 = vmatprep.subr.bf16.mxu0 0
  %3507 = vmatpush1.bf16.msra.mxu0 0
  %3508 = vmatprep.subr.bf16.mxu0 0
  %3509 = vmatpush1.bf16.msra.mxu0 0
  %3510 = vmatprep.mubr.bf16.mxu0 0
  %3511 = vmatmul.mubr.bf16.gmra.mrb[0].mxu0 %v3473
  %v3512 = vpop.f32.mrb[0].mxu0
  %v3513 = vadd.f32 0.0, %v3512
  %v3514 = vpop.f32.mrb[0].mxu0
  %v3515 = vadd.f32 0.0, %v3514
  %v3516 = vpop.f32.mrb[0].mxu0
  %v3517 = vadd.f32 0.0, %v3516
  %v3518 = vpop.f32.mrb[0].mxu0
  %v3519 = vadd.f32 0.0, %v3518
  %3520 = vmatprep.mubr.bf16.mxu0 0
  %3521 = vmatmul.mubr.bf16.gmra.mrb[0].mxu0 %v3476
  %v3522 = vpop.f32.mrb[0].mxu0
  %v3523 = vadd.f32 0.0, %v3522
  %v3524 = vpop.f32.mrb[0].mxu0
  %v3525 = vadd.f32 0.0, %v3524
  %v3526 = vpop.f32.mrb[0].mxu0
  %v3527 = vadd.f32 0.0, %v3526
  %v3528 = vpop.f32.mrb[0].mxu0
  %v3529 = vadd.f32 0.0, %v3528
  %3530 = vdwg.mxu0
  %v3531 = vadd.f32 %v3457, %v3513
  %v3532 = vadd.f32 %v3458, %v3515
  %v3533 = vadd.f32 %v3459, %v3517
  %v3534 = vadd.f32 %v3460, %v3519
  %v3535 = vadd.f32 %v3461, %v3523
  %v3536 = vadd.f32 %v3462, %v3525
  %v3537 = vadd.f32 %v3463, %v3527
  %v3538 = vadd.f32 %v3464, %v3529
  %v3539 = vrot.slane %v3262, 2
  %v3540 = vrot.slane %v3263, 2
  %v3541 = vsel %vm448, %v3539, %v3540
  %v3543 = vsel %vm110, %v3541, 0
  %v3546 = vsel %vm110, %v3540, 0
  %3548 = vmatprep.subr.bf16.mxu0 %v465
  %3549 = vmatpush1.bf16.msra.mxu0 %v464
  %3550 = vmatprep.subr.bf16.mxu0 %v467
  %3551 = vmatpush1.bf16.msra.mxu0 %v466
  %3552 = vmatprep.subr.bf16.mxu0 0
  %3553 = vmatpush1.bf16.msra.mxu0 0
  %3554 = vmatprep.subr.bf16.mxu0 0
  %3555 = vmatpush1.bf16.msra.mxu0 0
  %3556 = vmatprep.subr.bf16.mxu0 0
  %3557 = vmatpush1.bf16.msra.mxu0 0
  %3558 = vmatprep.subr.bf16.mxu0 0
  %3559 = vmatpush1.bf16.msra.mxu0 0
  %3560 = vmatprep.subr.bf16.mxu0 0
  %3561 = vmatpush1.bf16.msra.mxu0 0
  %3562 = vmatprep.subr.bf16.mxu0 0
  %3563 = vmatpush1.bf16.msra.mxu0 0
  %3564 = vmatprep.subr.bf16.mxu0 0
  %3565 = vmatpush1.bf16.msra.mxu0 0
  %3566 = vmatprep.subr.bf16.mxu0 0
  %3567 = vmatpush1.bf16.msra.mxu0 0
  %3568 = vmatprep.subr.bf16.mxu0 0
  %3569 = vmatpush1.bf16.msra.mxu0 0
  %3570 = vmatprep.subr.bf16.mxu0 0
  %3571 = vmatpush1.bf16.msra.mxu0 0
  %3572 = vmatprep.subr.bf16.mxu0 0
  %3573 = vmatpush1.bf16.msra.mxu0 0
  %3574 = vmatprep.subr.bf16.mxu0 0
  %3575 = vmatpush1.bf16.msra.mxu0 0
  %3576 = vmatprep.subr.bf16.mxu0 0
  %3577 = vmatpush1.bf16.msra.mxu0 0
  %3578 = vmatprep.subr.bf16.mxu0 0
  %3579 = vmatpush1.bf16.msra.mxu0 0
  %3580 = vmatprep.mubr.bf16.mxu0 0
  %3581 = vmatmul.mubr.bf16.gmra.mrb[0].mxu0 %v3543
  %v3582 = vpop.f32.mrb[0].mxu0
  %v3583 = vadd.f32 0.0, %v3582
  %v3584 = vpop.f32.mrb[0].mxu0
  %v3585 = vadd.f32 0.0, %v3584
  %v3586 = vpop.f32.mrb[0].mxu0
  %v3587 = vadd.f32 0.0, %v3586
  %v3588 = vpop.f32.mrb[0].mxu0
  %v3589 = vadd.f32 0.0, %v3588
  %3590 = vmatprep.mubr.bf16.mxu0 0
  %3591 = vmatmul.mubr.bf16.gmra.mrb[0].mxu0 %v3546
  %v3592 = vpop.f32.mrb[0].mxu0
  %v3593 = vadd.f32 0.0, %v3592
  %v3594 = vpop.f32.mrb[0].mxu0
  %v3595 = vadd.f32 0.0, %v3594
  %v3596 = vpop.f32.mrb[0].mxu0
  %v3597 = vadd.f32 0.0, %v3596
  %v3598 = vpop.f32.mrb[0].mxu0
  %v3599 = vadd.f32 0.0, %v3598
  %3600 = vdwg.mxu0
  %v3601 = vadd.f32 %v3531, %v3583
  %v3602 = vadd.f32 %v3532, %v3585
  %v3603 = vadd.f32 %v3533, %v3587
  %v3604 = vadd.f32 %v3534, %v3589
  %v3605 = vadd.f32 %v3535, %v3593
  %v3606 = vadd.f32 %v3536, %v3595
  %v3607 = vadd.f32 %v3537, %v3597
  %v3608 = vadd.f32 %v3538, %v3599
  %v3609 = vadd.f32 %v3601, %v544
  %v3610 = vadd.f32 %v3602, %v548
  %v3611 = vadd.f32 %v3603, %v544
  %v3612 = vadd.f32 %v3604, %v548
  %v3613 = vadd.f32 %v3605, %v544
  %v3614 = vadd.f32 %v3606, %v548
  %v3615 = vadd.f32 %v3607, %v544
  %v3616 = vadd.f32 %v3608, %v548
  %v3617 = vmax.f32 %v3609, 0.0
  %v3618 = vmax.f32 %v3610, 0.0
  %v3619 = vmax.f32 %v3611, 0.0
  %v3620 = vmax.f32 %v3612, 0.0
  %v3621 = vmax.f32 %v3613, 0.0
  %v3622 = vmax.f32 %v3614, 0.0
  %v3623 = vmax.f32 %v3615, 0.0
  %v3624 = vmax.f32 %v3616, 0.0
  %v3625 = vpack.c.bf16 %v3619, %v3617
  %v3626 = vpack.c.bf16 %v3620, %v3618
  %v3627 = vpack.c.bf16 %v3623, %v3621
  %v3628 = vpack.c.bf16 %v3624, %v3622
  %v3630 = vsel %vm582, %v3627, 0
  %v3633 = vsel %vm582, %v3628, 0
  %3635 = vmatprep.subr.bf16.mxu0 %v3626
  %3636 = vmatpush1.bf16.msra.mxu0 %v3625
  %3637 = vmatprep.subr.bf16.mxu0 %v3633
  %3638 = vmatpush1.bf16.msra.mxu0 %v3630
  %3639 = vmatprep.subr.bf16.mxu0 0
  %3640 = vmatpush1.bf16.msra.mxu0 0
  %3641 = vmatprep.subr.bf16.mxu0 0
  %3642 = vmatpush1.bf16.msra.mxu0 0
  %3643 = vmatprep.subr.bf16.mxu0 0
  %3644 = vmatpush1.bf16.msra.mxu0 0
  %3645 = vmatprep.subr.bf16.mxu0 0
  %3646 = vmatpush1.bf16.msra.mxu0 0
  %3647 = vmatprep.subr.bf16.mxu0 0
  %3648 = vmatpush1.bf16.msra.mxu0 0
  %3649 = vmatprep.subr.bf16.mxu0 0
  %3650 = vmatpush1.bf16.msra.mxu0 0
  %3651 = vmatprep.subr.bf16.mxu0 0
  %3652 = vmatpush1.bf16.msra.mxu0 0
  %3653 = vmatprep.subr.bf16.mxu0 0
  %3654 = vmatpush1.bf16.msra.mxu0 0
  %3655 = vmatprep.subr.bf16.mxu0 0
  %3656 = vmatpush1.bf16.msra.mxu0 0
  %3657 = vmatprep.subr.bf16.mxu0 0
  %3658 = vmatpush1.bf16.msra.mxu0 0
  %3659 = vmatprep.subr.bf16.mxu0 0
  %3660 = vmatpush1.bf16.msra.mxu0 0
  %3661 = vmatprep.subr.bf16.mxu0 0
  %3662 = vmatpush1.bf16.msra.mxu0 0
  %3663 = vmatprep.subr.bf16.mxu0 0
  %3664 = vmatpush1.bf16.msra.mxu0 0
  %3665 = vmatprep.subr.bf16.mxu0 0
  %3666 = vmatpush1.bf16.msra.mxu0 0
  %3667 = vmatprep.mubr.bf16.mxu0 0
  %3668 = vmatmul.mubr.bf16.gmra.mrb[0].mxu0 %v580
  %v3669 = vpop.f32.mrb[0].mxu0
  %v3670 = vadd.f32 0.0, %v3669
  %v3671 = vpop.f32.mrb[0].mxu0
  %v3672 = vadd.f32 0.0, %v3671
  %v3673 = vpop.f32.mrb[0].mxu0
  %v3674 = vadd.f32 0.0, %v3673
  %v3675 = vpop.f32.mrb[0].mxu0
  %v3676 = vadd.f32 0.0, %v3675
  %3677 = vdwg.mxu0
  %v3678 = vpack.c.bf16 %v3674, %v3670
  %v3679 = vpack.c.bf16 %v3676, %v3672
  %v3681 = vsel %vm718, %v3679, 0
  %3683 = vmatprep.subr.bf16.mxu0 0
  %3684 = vmatpush1.bf16.msra.mxu0 %v697
  %3685 = vmatprep.subr.bf16.mxu0 0
  %3686 = vmatpush1.bf16.msra.mxu0 %v698
  %3687 = vmatprep.subr.bf16.mxu0 0
  %3688 = vmatpush1.bf16.msra.mxu0 %v699
  %3689 = vmatprep.subr.bf16.mxu0 0
  %3690 = vmatpush1.bf16.msra.mxu0 %v700
  %3691 = vmatprep.subr.bf16.mxu0 0
  %3692 = vmatpush1.bf16.msra.mxu0 %v701
  %3693 = vmatprep.subr.bf16.mxu0 0
  %3694 = vmatpush1.bf16.msra.mxu0 %v702
  %3695 = vmatprep.subr.bf16.mxu0 0
  %3696 = vmatpush1.bf16.msra.mxu0 %v703
  %3697 = vmatprep.subr.bf16.mxu0 0
  %3698 = vmatpush1.bf16.msra.mxu0 %v704
  %3699 = vmatprep.subr.bf16.mxu0 0
  %3700 = vmatpush1.bf16.msra.mxu0 %v705
  %3701 = vmatprep.subr.bf16.mxu0 0
  %3702 = vmatpush1.bf16.msra.mxu0 %v706
  %3703 = vmatprep.subr.bf16.mxu0 0
  %3704 = vmatpush1.bf16.msra.mxu0 %v724
  %3705 = vmatprep.subr.bf16.mxu0 0
  %3706 = vmatpush1.bf16.msra.mxu0 0
  %3707 = vmatprep.subr.bf16.mxu0 0
  %3708 = vmatpush1.bf16.msra.mxu0 0
  %3709 = vmatprep.subr.bf16.mxu0 0
  %3710 = vmatpush1.bf16.msra.mxu0 0
  %3711 = vmatprep.subr.bf16.mxu0 0
  %3712 = vmatpush1.bf16.msra.mxu0 0
  %3713 = vmatprep.subr.bf16.mxu0 0
  %3714 = vmatpush1.bf16.msra.mxu0 0
  %3715 = vmatprep.mubr.bf16.mxu0 %v3681
  %3716 = vmatmul.mubr.bf16.gmra.mrb[0].mxu0 %v3678
  %v3717 = vpop.f32.mrb[0].mxu0
  %v3718 = vadd.f32 0.0, %v3717
  %v3719 = vpop.f32.mrb[0].mxu0
  %v3720 = vpop.f32.mrb[0].mxu0
  %v3721 = vadd.f32 0.0, %v3720
  %v3722 = vpop.f32.mrb[0].mxu0
  %3723 = vdwg.mxu0
  %v3724 = vpack.c.bf16 %v3721, %v3718
  %v3726 = vshrl.u32 %v3724, 16
  %v3728 = vshll.u32 %v3724, 16
  %v3730 = vrot.slane %v3728, 1
  %v3731 = vor.u32 %v3726, %v3730
  %v3733 = vsel %vm853, %v3731, 0
  %3735 = vmatprep.subr.bf16.mxu0 %v832
  %3736 = vmatpush1.bf16.msra.mxu0 %v831
  %3737 = vmatprep.subr.bf16.mxu0 %v834
  %3738 = vmatpush1.bf16.msra.mxu0 %v833
  %3739 = vmatprep.subr.bf16.mxu0 %v836
  %3740 = vmatpush1.bf16.msra.mxu0 %v835
  %3741 = vmatprep.subr.bf16.mxu0 %v838
  %3742 = vmatpush1.bf16.msra.mxu0 %v837
  %3743 = vmatprep.subr.bf16.mxu0 %v840
  %3744 = vmatpush1.bf16.msra.mxu0 %v839
  %3745 = vmatprep.subr.bf16.mxu0 %v862
  %3746 = vmatpush1.bf16.msra.mxu0 %v859
  %3747 = vmatprep.subr.bf16.mxu0 0
  %3748 = vmatpush1.bf16.msra.mxu0 0
  %3749 = vmatprep.subr.bf16.mxu0 0
  %3750 = vmatpush1.bf16.msra.mxu0 0
  %3751 = vmatprep.subr.bf16.mxu0 0
  %3752 = vmatpush1.bf16.msra.mxu0 0
  %3753 = vmatprep.subr.bf16.mxu0 0
  %3754 = vmatpush1.bf16.msra.mxu0 0
  %3755 = vmatprep.subr.bf16.mxu0 0
  %3756 = vmatpush1.bf16.msra.mxu0 0
  %3757 = vmatprep.subr.bf16.mxu0 0
  %3758 = vmatpush1.bf16.msra.mxu0 0
  %3759 = vmatprep.subr.bf16.mxu0 0
  %3760 = vmatpush1.bf16.msra.mxu0 0
  %3761 = vmatprep.subr.bf16.mxu0 0
  %3762 = vmatpush1.bf16.msra.mxu0 0
  %3763 = vmatprep.subr.bf16.mxu0 0
  %3764 = vmatpush1.bf16.msra.mxu0 0
  %3765 = vmatprep.subr.bf16.mxu0 0
  %3766 = vmatpush1.bf16.msra.mxu0 0
  %3767 = vmatprep.mubr.bf16.mxu0 0
  %3768 = vmatmul.mubr.bf16.gmra.mrb[0].mxu0 %v3733
  %v3769 = vpop.f32.mrb[0].mxu0
  %v3770 = vadd.f32 0.0, %v3769
  %v3771 = vpop.f32.mrb[0].mxu0
  %v3772 = vadd.f32 0.0, %v3771
  %v3773 = vpop.f32.mrb[0].mxu0
  %v3774 = vadd.f32 0.0, %v3773
  %v3775 = vpop.f32.mrb[0].mxu0
  %v3776 = vadd.f32 0.0, %v3775
  %3777 = vdwg.mxu0
  %v3778 = vsel %vm853, %v3724, 0
  %3780 = vmatprep.subr.bf16.mxu0 %v941
  %3781 = vmatpush1.bf16.msra.mxu0 %v940
  %3782 = vmatprep.subr.bf16.mxu0 %v943
  %3783 = vmatpush1.bf16.msra.mxu0 %v942
  %3784 = vmatprep.subr.bf16.mxu0 %v945
  %3785 = vmatpush1.bf16.msra.mxu0 %v944
  %3786 = vmatprep.subr.bf16.mxu0 %v947
  %3787 = vmatpush1.bf16.msra.mxu0 %v946
  %3788 = vmatprep.subr.bf16.mxu0 %v949
  %3789 = vmatpush1.bf16.msra.mxu0 %v948
  %3790 = vmatprep.subr.bf16.mxu0 %v968
  %3791 = vmatpush1.bf16.msra.mxu0 %v965
  %3792 = vmatprep.subr.bf16.mxu0 0
  %3793 = vmatpush1.bf16.msra.mxu0 0
  %3794 = vmatprep.subr.bf16.mxu0 0
  %3795 = vmatpush1.bf16.msra.mxu0 0
  %3796 = vmatprep.subr.bf16.mxu0 0
  %3797 = vmatpush1.bf16.msra.mxu0 0
  %3798 = vmatprep.subr.bf16.mxu0 0
  %3799 = vmatpush1.bf16.msra.mxu0 0
  %3800 = vmatprep.subr.bf16.mxu0 0
  %3801 = vmatpush1.bf16.msra.mxu0 0
  %3802 = vmatprep.subr.bf16.mxu0 0
  %3803 = vmatpush1.bf16.msra.mxu0 0
  %3804 = vmatprep.subr.bf16.mxu0 0
  %3805 = vmatpush1.bf16.msra.mxu0 0
  %3806 = vmatprep.subr.bf16.mxu0 0
  %3807 = vmatpush1.bf16.msra.mxu0 0
  %3808 = vmatprep.subr.bf16.mxu0 0
  %3809 = vmatpush1.bf16.msra.mxu0 0
  %3810 = vmatprep.subr.bf16.mxu0 0
  %3811 = vmatpush1.bf16.msra.mxu0 0
  %3812 = vmatprep.mubr.bf16.mxu0 0
  %3813 = vmatmul.mubr.bf16.gmra.mrb[0].mxu0 %v3778
  %v3814 = vpop.f32.mrb[0].mxu0
  %v3815 = vadd.f32 %v3770, %v3814
  %v3816 = vpop.f32.mrb[0].mxu0
  %v3817 = vadd.f32 %v3772, %v3816
  %v3818 = vpop.f32.mrb[0].mxu0
  %v3819 = vadd.f32 %v3774, %v3818
  %v3820 = vpop.f32.mrb[0].mxu0
  %v3821 = vadd.f32 %v3776, %v3820
  %3822 = vdwg.mxu0
  %v3824 = vrot.slane %v3724, 1
  %v3826 = vsel %vm853, %v3824, 0
  %3828 = vmatprep.subr.bf16.mxu0 %v1061
  %3829 = vmatpush1.bf16.msra.mxu0 %v1060
  %3830 = vmatprep.subr.bf16.mxu0 %v1063
  %3831 = vmatpush1.bf16.msra.mxu0 %v1062
  %3832 = vmatprep.subr.bf16.mxu0 %v1065
  %3833 = vmatpush1.bf16.msra.mxu0 %v1064
  %3834 = vmatprep.subr.bf16.mxu0 %v1067
  %3835 = vmatpush1.bf16.msra.mxu0 %v1066
  %3836 = vmatprep.subr.bf16.mxu0 %v1069
  %3837 = vmatpush1.bf16.msra.mxu0 %v1068
  %3838 = vmatprep.subr.bf16.mxu0 %v1089
  %3839 = vmatpush1.bf16.msra.mxu0 %v1086
  %3840 = vmatprep.subr.bf16.mxu0 0
  %3841 = vmatpush1.bf16.msra.mxu0 0
  %3842 = vmatprep.subr.bf16.mxu0 0
  %3843 = vmatpush1.bf16.msra.mxu0 0
  %3844 = vmatprep.subr.bf16.mxu0 0
  %3845 = vmatpush1.bf16.msra.mxu0 0
  %3846 = vmatprep.subr.bf16.mxu0 0
  %3847 = vmatpush1.bf16.msra.mxu0 0
  %3848 = vmatprep.subr.bf16.mxu0 0
  %3849 = vmatpush1.bf16.msra.mxu0 0
  %3850 = vmatprep.subr.bf16.mxu0 0
  %3851 = vmatpush1.bf16.msra.mxu0 0
  %3852 = vmatprep.subr.bf16.mxu0 0
  %3853 = vmatpush1.bf16.msra.mxu0 0
  %3854 = vmatprep.subr.bf16.mxu0 0
  %3855 = vmatpush1.bf16.msra.mxu0 0
  %3856 = vmatprep.subr.bf16.mxu0 0
  %3857 = vmatpush1.bf16.msra.mxu0 0
  %3858 = vmatprep.subr.bf16.mxu0 0
  %3859 = vmatpush1.bf16.msra.mxu0 0
  %3860 = vmatprep.mubr.bf16.mxu0 0
  %3861 = vmatmul.mubr.bf16.gmra.mrb[0].mxu0 %v3826
  %v3862 = vpop.f32.mrb[0].mxu0
  %v3863 = vadd.f32 0.0, %v3862
  %v3864 = vpop.f32.mrb[0].mxu0
  %v3865 = vadd.f32 0.0, %v3864
  %v3866 = vpop.f32.mrb[0].mxu0
  %v3867 = vadd.f32 0.0, %v3866
  %v3868 = vpop.f32.mrb[0].mxu0
  %v3869 = vadd.f32 0.0, %v3868
  %3870 = vdwg.mxu0
  %v3871 = vadd.f32 %v3815, %v3863
  %v3872 = vadd.f32 %v3817, %v3865
  %v3873 = vadd.f32 %v3819, %v3867
  %v3874 = vadd.f32 %v3821, %v3869
  %v3875 = vrot.slane %v3726, 1
  %v3876 = vrot.slane %v3728, 2
  %v3877 = vor.u32 %v3875, %v3876
  %v3879 = vsel %vm853, %v3877, 0
  %3881 = vmatprep.subr.bf16.mxu0 %v1187
  %3882 = vmatpush1.bf16.msra.mxu0 %v1186
  %3883 = vmatprep.subr.bf16.mxu0 %v1189
  %3884 = vmatpush1.bf16.msra.mxu0 %v1188
  %3885 = vmatprep.subr.bf16.mxu0 %v1191
  %3886 = vmatpush1.bf16.msra.mxu0 %v1190
  %3887 = vmatprep.subr.bf16.mxu0 %v1193
  %3888 = vmatpush1.bf16.msra.mxu0 %v1192
  %3889 = vmatprep.subr.bf16.mxu0 %v1195
  %3890 = vmatpush1.bf16.msra.mxu0 %v1194
  %3891 = vmatprep.subr.bf16.mxu0 %v1215
  %3892 = vmatpush1.bf16.msra.mxu0 %v1212
  %3893 = vmatprep.subr.bf16.mxu0 0
  %3894 = vmatpush1.bf16.msra.mxu0 0
  %3895 = vmatprep.subr.bf16.mxu0 0
  %3896 = vmatpush1.bf16.msra.mxu0 0
  %3897 = vmatprep.subr.bf16.mxu0 0
  %3898 = vmatpush1.bf16.msra.mxu0 0
  %3899 = vmatprep.subr.bf16.mxu0 0
  %3900 = vmatpush1.bf16.msra.mxu0 0
  %3901 = vmatprep.subr.bf16.mxu0 0
  %3902 = vmatpush1.bf16.msra.mxu0 0
  %3903 = vmatprep.subr.bf16.mxu0 0
  %3904 = vmatpush1.bf16.msra.mxu0 0
  %3905 = vmatprep.subr.bf16.mxu0 0
  %3906 = vmatpush1.bf16.msra.mxu0 0
  %3907 = vmatprep.subr.bf16.mxu0 0
  %3908 = vmatpush1.bf16.msra.mxu0 0
  %3909 = vmatprep.subr.bf16.mxu0 0
  %3910 = vmatpush1.bf16.msra.mxu0 0
  %3911 = vmatprep.subr.bf16.mxu0 0
  %3912 = vmatpush1.bf16.msra.mxu0 0
  %3913 = vmatprep.mubr.bf16.mxu0 0
  %3914 = vmatmul.mubr.bf16.gmra.mrb[0].mxu0 %v3879
  %v3915 = vpop.f32.mrb[0].mxu0
  %v3916 = vadd.f32 0.0, %v3915
  %v3917 = vpop.f32.mrb[0].mxu0
  %v3918 = vadd.f32 0.0, %v3917
  %v3919 = vpop.f32.mrb[0].mxu0
  %v3920 = vadd.f32 0.0, %v3919
  %v3921 = vpop.f32.mrb[0].mxu0
  %v3922 = vadd.f32 0.0, %v3921
  %3923 = vdwg.mxu0
  %v3924 = vadd.f32 %v3871, %v3916
  %v3925 = vadd.f32 %v3872, %v3918
  %v3926 = vadd.f32 %v3873, %v3920
  %v3927 = vadd.f32 %v3874, %v3922
  %v3928 = vrot.slane %v3724, 2
  %v3930 = vsel %vm853, %v3928, 0
  %3932 = vmatprep.subr.bf16.mxu0 %v1311
  %3933 = vmatpush1.bf16.msra.mxu0 %v1310
  %3934 = vmatprep.subr.bf16.mxu0 %v1313
  %3935 = vmatpush1.bf16.msra.mxu0 %v1312
  %3936 = vmatprep.subr.bf16.mxu0 %v1315
  %3937 = vmatpush1.bf16.msra.mxu0 %v1314
  %3938 = vmatprep.subr.bf16.mxu0 %v1317
  %3939 = vmatpush1.bf16.msra.mxu0 %v1316
  %3940 = vmatprep.subr.bf16.mxu0 %v1319
  %3941 = vmatpush1.bf16.msra.mxu0 %v1318
  %3942 = vmatprep.subr.bf16.mxu0 %v1339
  %3943 = vmatpush1.bf16.msra.mxu0 %v1336
  %3944 = vmatprep.subr.bf16.mxu0 0
  %3945 = vmatpush1.bf16.msra.mxu0 0
  %3946 = vmatprep.subr.bf16.mxu0 0
  %3947 = vmatpush1.bf16.msra.mxu0 0
  %3948 = vmatprep.subr.bf16.mxu0 0
  %3949 = vmatpush1.bf16.msra.mxu0 0
  %3950 = vmatprep.subr.bf16.mxu0 0
  %3951 = vmatpush1.bf16.msra.mxu0 0
  %3952 = vmatprep.subr.bf16.mxu0 0
  %3953 = vmatpush1.bf16.msra.mxu0 0
  %3954 = vmatprep.subr.bf16.mxu0 0
  %3955 = vmatpush1.bf16.msra.mxu0 0
  %3956 = vmatprep.subr.bf16.mxu0 0
  %3957 = vmatpush1.bf16.msra.mxu0 0
  %3958 = vmatprep.subr.bf16.mxu0 0
  %3959 = vmatpush1.bf16.msra.mxu0 0
  %3960 = vmatprep.subr.bf16.mxu0 0
  %3961 = vmatpush1.bf16.msra.mxu0 0
  %3962 = vmatprep.subr.bf16.mxu0 0
  %3963 = vmatpush1.bf16.msra.mxu0 0
  %3964 = vmatprep.mubr.bf16.mxu0 0
  %3965 = vmatmul.mubr.bf16.gmra.mrb[0].mxu0 %v3930
  %v3966 = vpop.f32.mrb[0].mxu0
  %v3967 = vadd.f32 0.0, %v3966
  %v3968 = vpop.f32.mrb[0].mxu0
  %v3969 = vadd.f32 0.0, %v3968
  %v3970 = vpop.f32.mrb[0].mxu0
  %v3971 = vadd.f32 0.0, %v3970
  %v3972 = vpop.f32.mrb[0].mxu0
  %v3973 = vadd.f32 0.0, %v3972
  %3974 = vdwg.mxu0
  %v3975 = vadd.f32 %v3924, %v3967
  %v3976 = vadd.f32 %v3925, %v3969
  %v3977 = vadd.f32 %v3926, %v3971
  %v3978 = vadd.f32 %v3927, %v3973
  %v3979 = vadd.f32 %v3975, %v1393
  %v3980 = vadd.f32 %v3976, %v1397
  %v3981 = vadd.f32 %v3977, %v1393
  %v3982 = vadd.f32 %v3978, %v1397
  %v3983 = vmax.f32 %v3979, 0.0
  %v3984 = vmax.f32 %v3980, 0.0
  %v3985 = vmax.f32 %v3981, 0.0
  %v3986 = vmax.f32 %v3982, 0.0
  %v3987 = vpack.c.bf16 %v3985, %v3983
  %v3988 = vpack.c.bf16 %v3986, %v3984
  %v3990 = vsel %vm1415, %v3987, 0
  %v3993 = vsel %vm1415, %v3988, 0
  %3995 = vmatprep.subr.bf16.mxu0 %v3993
  %3996 = vmatpush1.bf16.msra.mxu0 %v3990
  %3997 = vmatprep.subr.bf16.mxu0 0
  %3998 = vmatpush1.bf16.msra.mxu0 0
  %3999 = vmatprep.subr.bf16.mxu0 0
  %4000 = vmatpush1.bf16.msra.mxu0 0
  %4001 = vmatprep.subr.bf16.mxu0 0
  %4002 = vmatpush1.bf16.msra.mxu0 0
  %4003 = vmatprep.subr.bf16.mxu0 0
  %4004 = vmatpush1.bf16.msra.mxu0 0
  %4005 = vmatprep.subr.bf16.mxu0 0
  %4006 = vmatpush1.bf16.msra.mxu0 0
  %4007 = vmatprep.subr.bf16.mxu0 0
  %4008 = vmatpush1.bf16.msra.mxu0 0
  %4009 = vmatprep.subr.bf16.mxu0 0
  %4010 = vmatpush1.bf16.msra.mxu0 0
  %4011 = vmatprep.subr.bf16.mxu0 0
  %4012 = vmatpush1.bf16.msra.mxu0 0
  %4013 = vmatprep.subr.bf16.mxu0 0
  %4014 = vmatpush1.bf16.msra.mxu0 0
  %4015 = vmatprep.subr.bf16.mxu0 0
  %4016 = vmatpush1.bf16.msra.mxu0 0
  %4017 = vmatprep.subr.bf16.mxu0 0
  %4018 = vmatpush1.bf16.msra.mxu0 0
  %4019 = vmatprep.subr.bf16.mxu0 0
  %4020 = vmatpush1.bf16.msra.mxu0 0
  %4021 = vmatprep.subr.bf16.mxu0 0
  %4022 = vmatpush1.bf16.msra.mxu0 0
  %4023 = vmatprep.subr.bf16.mxu0 0
  %4024 = vmatpush1.bf16.msra.mxu0 0
  %4025 = vmatprep.subr.bf16.mxu0 0
  %4026 = vmatpush1.bf16.msra.mxu0 0
  %4027 = vmatprep.mubr.bf16.mxu0 0
  %4028 = vmatmul.mubr.bf16.gmra.mrb[0].mxu0 %v1413
  %v4029 = vpop.f32.mrb[0].mxu0
  %v4030 = vadd.f32 0.0, %v4029
  %v4031 = vpop.f32.mrb[0].mxu0
  %v4032 = vadd.f32 0.0, %v4031
  %v4033 = vpop.f32.mrb[0].mxu0
  %v4034 = vpop.f32.mrb[0].mxu0
  %4035 = vdwg.mxu0
  %v4036 = vpack.c.bf16 %v4030, %v4030
  %v4037 = vpack.c.bf16 %v4032, %v4032
  %v4039 = vsel %vm110, %v4037, 0
  %4041 = vmatprep.subr.bf16.mxu0 0
  %4042 = vmatpush1.bf16.msra.mxu0 %v1525
  %4043 = vmatprep.subr.bf16.mxu0 0
  %4044 = vmatpush1.bf16.msra.mxu0 %v1526
  %4045 = vmatprep.subr.bf16.mxu0 0
  %4046 = vmatpush1.bf16.msra.mxu0 %v1527
  %4047 = vmatprep.subr.bf16.mxu0 0
  %4048 = vmatpush1.bf16.msra.mxu0 %v1528
  %4049 = vmatprep.subr.bf16.mxu0 0
  %4050 = vmatpush1.bf16.msra.mxu0 %v1529
  %4051 = vmatprep.subr.bf16.mxu0 0
  %4052 = vmatpush1.bf16.msra.mxu0 %v1530
  %4053 = vmatprep.subr.bf16.mxu0 0
  %4054 = vmatpush1.bf16.msra.mxu0 %v1531
  %4055 = vmatprep.subr.bf16.mxu0 0
  %4056 = vmatpush1.bf16.msra.mxu0 %v1532
  %4057 = vmatprep.subr.bf16.mxu0 0
  %4058 = vmatpush1.bf16.msra.mxu0 %v1533
  %4059 = vmatprep.subr.bf16.mxu0 0
  %4060 = vmatpush1.bf16.msra.mxu0 %v1534
  %4061 = vmatprep.subr.bf16.mxu0 0
  %4062 = vmatpush1.bf16.msra.mxu0 0
  %4063 = vmatprep.subr.bf16.mxu0 0
  %4064 = vmatpush1.bf16.msra.mxu0 0
  %4065 = vmatprep.subr.bf16.mxu0 0
  %4066 = vmatpush1.bf16.msra.mxu0 0
  %4067 = vmatprep.subr.bf16.mxu0 0
  %4068 = vmatpush1.bf16.msra.mxu0 0
  %4069 = vmatprep.subr.bf16.mxu0 0
  %4070 = vmatpush1.bf16.msra.mxu0 0
  %4071 = vmatprep.subr.bf16.mxu0 0
  %4072 = vmatpush1.bf16.msra.mxu0 0
  %4073 = vmatprep.mubr.bf16.mxu0 %v4039
  %4074 = vmatmul.mubr.bf16.gmra.mrb[0].mxu0 %v4036
  %v4075 = vpop.f32.mrb[0].mxu0
  %v4076 = vadd.f32 0.0, %v4075
  %v4077 = vpop.f32.mrb[0].mxu0
  %v4078 = vpop.f32.mrb[0].mxu0
  %v4079 = vpop.f32.mrb[0].mxu0
  %4080 = vdwg.mxu0
  %v4081 = vld [vmem:[%s0 + $0x40] sm:$0xf]
  %v4082 = vld [vmem:[%s0 + $0x44] sm:$0xf]
  %v4083 = vld [vmem:[%s0 + $0x48] sm:$0xf]
  %v4084 = vld [vmem:[%s0 + $0x4c] sm:$0xf]
  %v4089 = vunpack.c.l.b16 %v4081
  %v4090 = vunpack.c.l.b16 %v4082
  %v4091 = vunpack.c.l.b16 %v4083
  %v4092 = vunpack.c.l.b16 %v4084
  %v4093 = vpack.c.b16 %v4090, %v4089
  %v4094 = vpack.c.b16 %v4092, %v4091
  %v4096 = vshrl.u32 %v4093, 16
  %v4098 = vshll.u32 %v4093, 16
  %v4100 = vrot.slane %v4098, 1
  %v4101 = vor.u32 %v4096, %v4100
  %v4103 = vshll.u32 %v4094, 16
  %v4105 = vrot.slane %v4103, 1
  %v4106 = vsel %vm74, %v4101, %v4105
  %v4107 = vshrl.u32 %v4094, 16
  %v4109 = vor.u32 %v4107, %v4105
  %v4111 = vsel %vm110, %v4106, 0
  %v4114 = vsel %vm110, %v4109, 0
  %4116 = vmatprep.subr.bf16.mxu0 %v103
  %4117 = vmatpush1.bf16.msra.mxu0 %v102
  %4118 = vmatprep.subr.bf16.mxu0 %v105
  %4119 = vmatpush1.bf16.msra.mxu0 %v104
  %4120 = vmatprep.subr.bf16.mxu0 0
  %4121 = vmatpush1.bf16.msra.mxu0 0
  %4122 = vmatprep.subr.bf16.mxu0 0
  %4123 = vmatpush1.bf16.msra.mxu0 0
  %4124 = vmatprep.subr.bf16.mxu0 0
  %4125 = vmatpush1.bf16.msra.mxu0 0
  %4126 = vmatprep.subr.bf16.mxu0 0
  %4127 = vmatpush1.bf16.msra.mxu0 0
  %4128 = vmatprep.subr.bf16.mxu0 0
  %4129 = vmatpush1.bf16.msra.mxu0 0
  %4130 = vmatprep.subr.bf16.mxu0 0
  %4131 = vmatpush1.bf16.msra.mxu0 0
  %4132 = vmatprep.subr.bf16.mxu0 0
  %4133 = vmatpush1.bf16.msra.mxu0 0
  %4134 = vmatprep.subr.bf16.mxu0 0
  %4135 = vmatpush1.bf16.msra.mxu0 0
  %4136 = vmatprep.subr.bf16.mxu0 0
  %4137 = vmatpush1.bf16.msra.mxu0 0
  %4138 = vmatprep.subr.bf16.mxu0 0
  %4139 = vmatpush1.bf16.msra.mxu0 0
  %4140 = vmatprep.subr.bf16.mxu0 0
  %4141 = vmatpush1.bf16.msra.mxu0 0
  %4142 = vmatprep.subr.bf16.mxu0 0
  %4143 = vmatpush1.bf16.msra.mxu0 0
  %4144 = vmatprep.subr.bf16.mxu0 0
  %4145 = vmatpush1.bf16.msra.mxu0 0
  %4146 = vmatprep.subr.bf16.mxu0 0
  %4147 = vmatpush1.bf16.msra.mxu0 0
  %4148 = vmatprep.mubr.bf16.mxu0 0
  %4149 = vmatmul.mubr.bf16.gmra.mrb[0].mxu0 %v4111
  %v4150 = vpop.f32.mrb[0].mxu0
  %v4151 = vadd.f32 0.0, %v4150
  %v4152 = vpop.f32.mrb[0].mxu0
  %v4153 = vadd.f32 0.0, %v4152
  %v4154 = vpop.f32.mrb[0].mxu0
  %v4155 = vadd.f32 0.0, %v4154
  %v4156 = vpop.f32.mrb[0].mxu0
  %v4157 = vadd.f32 0.0, %v4156
  %4158 = vmatprep.mubr.bf16.mxu0 0
  %4159 = vmatmul.mubr.bf16.gmra.mrb[0].mxu0 %v4114
  %v4160 = vpop.f32.mrb[0].mxu0
  %v4161 = vadd.f32 0.0, %v4160
  %v4162 = vpop.f32.mrb[0].mxu0
  %v4163 = vadd.f32 0.0, %v4162
  %v4164 = vpop.f32.mrb[0].mxu0
  %v4165 = vadd.f32 0.0, %v4164
  %v4166 = vpop.f32.mrb[0].mxu0
  %v4167 = vadd.f32 0.0, %v4166
  %4168 = vdwg.mxu0
  %v4169 = vsel %vm110, %v4093, 0
  %v4171 = vsel %vm110, %v4094, 0
  %4173 = vmatprep.subr.bf16.mxu0 %v183
  %4174 = vmatpush1.bf16.msra.mxu0 %v182
  %4175 = vmatprep.subr.bf16.mxu0 %v185
  %4176 = vmatpush1.bf16.msra.mxu0 %v184
  %4177 = vmatprep.subr.bf16.mxu0 0
  %4178 = vmatpush1.bf16.msra.mxu0 0
  %4179 = vmatprep.subr.bf16.mxu0 0
  %4180 = vmatpush1.bf16.msra.mxu0 0
  %4181 = vmatprep.subr.bf16.mxu0 0
  %4182 = vmatpush1.bf16.msra.mxu0 0
  %4183 = vmatprep.subr.bf16.mxu0 0
  %4184 = vmatpush1.bf16.msra.mxu0 0
  %4185 = vmatprep.subr.bf16.mxu0 0
  %4186 = vmatpush1.bf16.msra.mxu0 0
  %4187 = vmatprep.subr.bf16.mxu0 0
  %4188 = vmatpush1.bf16.msra.mxu0 0
  %4189 = vmatprep.subr.bf16.mxu0 0
  %4190 = vmatpush1.bf16.msra.mxu0 0
  %4191 = vmatprep.subr.bf16.mxu0 0
  %4192 = vmatpush1.bf16.msra.mxu0 0
  %4193 = vmatprep.subr.bf16.mxu0 0
  %4194 = vmatpush1.bf16.msra.mxu0 0
  %4195 = vmatprep.subr.bf16.mxu0 0
  %4196 = vmatpush1.bf16.msra.mxu0 0
  %4197 = vmatprep.subr.bf16.mxu0 0
  %4198 = vmatpush1.bf16.msra.mxu0 0
  %4199 = vmatprep.subr.bf16.mxu0 0
  %4200 = vmatpush1.bf16.msra.mxu0 0
  %4201 = vmatprep.subr.bf16.mxu0 0
  %4202 = vmatpush1.bf16.msra.mxu0 0
  %4203 = vmatprep.subr.bf16.mxu0 0
  %4204 = vmatpush1.bf16.msra.mxu0 0
  %4205 = vmatprep.mubr.bf16.mxu0 0
  %4206 = vmatmul.mubr.bf16.gmra.mrb[0].mxu0 %v4169
  %v4207 = vpop.f32.mrb[0].mxu0
  %v4208 = vadd.f32 %v4151, %v4207
  %v4209 = vpop.f32.mrb[0].mxu0
  %v4210 = vadd.f32 %v4153, %v4209
  %v4211 = vpop.f32.mrb[0].mxu0
  %v4212 = vadd.f32 %v4155, %v4211
  %v4213 = vpop.f32.mrb[0].mxu0
  %v4214 = vadd.f32 %v4157, %v4213
  %4215 = vmatprep.mubr.bf16.mxu0 0
  %4216 = vmatmul.mubr.bf16.gmra.mrb[0].mxu0 %v4171
  %v4217 = vpop.f32.mrb[0].mxu0
  %v4218 = vadd.f32 %v4161, %v4217
  %v4219 = vpop.f32.mrb[0].mxu0
  %v4220 = vadd.f32 %v4163, %v4219
  %v4221 = vpop.f32.mrb[0].mxu0
  %v4222 = vadd.f32 %v4165, %v4221
  %v4223 = vpop.f32.mrb[0].mxu0
  %v4224 = vadd.f32 %v4167, %v4223
  %4225 = vdwg.mxu0
  %v4226 = vrot.slane %v4093, 1
  %v4227 = vrot.slane %v4094, 1
  %v4228 = vsel %vm252, %v4226, %v4227
  %v4230 = vsel %vm110, %v4228, 0
  %v4233 = vsel %vm110, %v4227, 0
  %4235 = vmatprep.subr.bf16.mxu0 %v269
  %4236 = vmatpush1.bf16.msra.mxu0 %v268
  %4237 = vmatprep.subr.bf16.mxu0 %v271
  %4238 = vmatpush1.bf16.msra.mxu0 %v270
  %4239 = vmatprep.subr.bf16.mxu0 0
  %4240 = vmatpush1.bf16.msra.mxu0 0
  %4241 = vmatprep.subr.bf16.mxu0 0
  %4242 = vmatpush1.bf16.msra.mxu0 0
  %4243 = vmatprep.subr.bf16.mxu0 0
  %4244 = vmatpush1.bf16.msra.mxu0 0
  %4245 = vmatprep.subr.bf16.mxu0 0
  %4246 = vmatpush1.bf16.msra.mxu0 0
  %4247 = vmatprep.subr.bf16.mxu0 0
  %4248 = vmatpush1.bf16.msra.mxu0 0
  %4249 = vmatprep.subr.bf16.mxu0 0
  %4250 = vmatpush1.bf16.msra.mxu0 0
  %4251 = vmatprep.subr.bf16.mxu0 0
  %4252 = vmatpush1.bf16.msra.mxu0 0
  %4253 = vmatprep.subr.bf16.mxu0 0
  %4254 = vmatpush1.bf16.msra.mxu0 0
  %4255 = vmatprep.subr.bf16.mxu0 0
  %4256 = vmatpush1.bf16.msra.mxu0 0
  %4257 = vmatprep.subr.bf16.mxu0 0
  %4258 = vmatpush1.bf16.msra.mxu0 0
  %4259 = vmatprep.subr.bf16.mxu0 0
  %4260 = vmatpush1.bf16.msra.mxu0 0
  %4261 = vmatprep.subr.bf16.mxu0 0
  %4262 = vmatpush1.bf16.msra.mxu0 0
  %4263 = vmatprep.subr.bf16.mxu0 0
  %4264 = vmatpush1.bf16.msra.mxu0 0
  %4265 = vmatprep.subr.bf16.mxu0 0
  %4266 = vmatpush1.bf16.msra.mxu0 0
  %4267 = vmatprep.mubr.bf16.mxu0 0
  %4268 = vmatmul.mubr.bf16.gmra.mrb[0].mxu0 %v4230
  %v4269 = vpop.f32.mrb[0].mxu0
  %v4270 = vadd.f32 0.0, %v4269
  %v4271 = vpop.f32.mrb[0].mxu0
  %v4272 = vadd.f32 0.0, %v4271
  %v4273 = vpop.f32.mrb[0].mxu0
  %v4274 = vadd.f32 0.0, %v4273
  %v4275 = vpop.f32.mrb[0].mxu0
  %v4276 = vadd.f32 0.0, %v4275
  %4277 = vmatprep.mubr.bf16.mxu0 0
  %4278 = vmatmul.mubr.bf16.gmra.mrb[0].mxu0 %v4233
  %v4279 = vpop.f32.mrb[0].mxu0
  %v4280 = vadd.f32 0.0, %v4279
  %v4281 = vpop.f32.mrb[0].mxu0
  %v4282 = vadd.f32 0.0, %v4281
  %v4283 = vpop.f32.mrb[0].mxu0
  %v4284 = vadd.f32 0.0, %v4283
  %v4285 = vpop.f32.mrb[0].mxu0
  %v4286 = vadd.f32 0.0, %v4285
  %4287 = vdwg.mxu0
  %v4288 = vadd.f32 %v4208, %v4270
  %v4289 = vadd.f32 %v4210, %v4272
  %v4290 = vadd.f32 %v4212, %v4274
  %v4291 = vadd.f32 %v4214, %v4276
  %v4292 = vadd.f32 %v4218, %v4280
  %v4293 = vadd.f32 %v4220, %v4282
  %v4294 = vadd.f32 %v4222, %v4284
  %v4295 = vadd.f32 %v4224, %v4286
  %v4296 = vrot.slane %v4096, 1
  %v4297 = vrot.slane %v4098, 2
  %v4298 = vor.u32 %v4296, %v4297
  %v4299 = vrot.slane %v4107, 1
  %v4300 = vrot.slane %v4103, 2
  %v4301 = vor.u32 %v4299, %v4300
  %v4302 = vsel %vm348, %v4298, %v4301
  %v4304 = vsel %vm110, %v4302, 0
  %v4307 = vsel %vm110, %v4301, 0
  %4309 = vmatprep.subr.bf16.mxu0 %v369
  %4310 = vmatpush1.bf16.msra.mxu0 %v368
  %4311 = vmatprep.subr.bf16.mxu0 %v371
  %4312 = vmatpush1.bf16.msra.mxu0 %v370
  %4313 = vmatprep.subr.bf16.mxu0 0
  %4314 = vmatpush1.bf16.msra.mxu0 0
  %4315 = vmatprep.subr.bf16.mxu0 0
  %4316 = vmatpush1.bf16.msra.mxu0 0
  %4317 = vmatprep.subr.bf16.mxu0 0
  %4318 = vmatpush1.bf16.msra.mxu0 0
  %4319 = vmatprep.subr.bf16.mxu0 0
  %4320 = vmatpush1.bf16.msra.mxu0 0
  %4321 = vmatprep.subr.bf16.mxu0 0
  %4322 = vmatpush1.bf16.msra.mxu0 0
  %4323 = vmatprep.subr.bf16.mxu0 0
  %4324 = vmatpush1.bf16.msra.mxu0 0
  %4325 = vmatprep.subr.bf16.mxu0 0
  %4326 = vmatpush1.bf16.msra.mxu0 0
  %4327 = vmatprep.subr.bf16.mxu0 0
  %4328 = vmatpush1.bf16.msra.mxu0 0
  %4329 = vmatprep.subr.bf16.mxu0 0
  %4330 = vmatpush1.bf16.msra.mxu0 0
  %4331 = vmatprep.subr.bf16.mxu0 0
  %4332 = vmatpush1.bf16.msra.mxu0 0
  %4333 = vmatprep.subr.bf16.mxu0 0
  %4334 = vmatpush1.bf16.msra.mxu0 0
  %4335 = vmatprep.subr.bf16.mxu0 0
  %4336 = vmatpush1.bf16.msra.mxu0 0
  %4337 = vmatprep.subr.bf16.mxu0 0
  %4338 = vmatpush1.bf16.msra.mxu0 0
  %4339 = vmatprep.subr.bf16.mxu0 0
  %4340 = vmatpush1.bf16.msra.mxu0 0
  %4341 = vmatprep.mubr.bf16.mxu0 0
  %4342 = vmatmul.mubr.bf16.gmra.mrb[0].mxu0 %v4304
  %v4343 = vpop.f32.mrb[0].mxu0
  %v4344 = vadd.f32 0.0, %v4343
  %v4345 = vpop.f32.mrb[0].mxu0
  %v4346 = vadd.f32 0.0, %v4345
  %v4347 = vpop.f32.mrb[0].mxu0
  %v4348 = vadd.f32 0.0, %v4347
  %v4349 = vpop.f32.mrb[0].mxu0
  %v4350 = vadd.f32 0.0, %v4349
  %4351 = vmatprep.mubr.bf16.mxu0 0
  %4352 = vmatmul.mubr.bf16.gmra.mrb[0].mxu0 %v4307
  %v4353 = vpop.f32.mrb[0].mxu0
  %v4354 = vadd.f32 0.0, %v4353
  %v4355 = vpop.f32.mrb[0].mxu0
  %v4356 = vadd.f32 0.0, %v4355
  %v4357 = vpop.f32.mrb[0].mxu0
  %v4358 = vadd.f32 0.0, %v4357
  %v4359 = vpop.f32.mrb[0].mxu0
  %v4360 = vadd.f32 0.0, %v4359
  %4361 = vdwg.mxu0
  %v4362 = vadd.f32 %v4288, %v4344
  %v4363 = vadd.f32 %v4289, %v4346
  %v4364 = vadd.f32 %v4290, %v4348
  %v4365 = vadd.f32 %v4291, %v4350
  %v4366 = vadd.f32 %v4292, %v4354
  %v4367 = vadd.f32 %v4293, %v4356
  %v4368 = vadd.f32 %v4294, %v4358
  %v4369 = vadd.f32 %v4295, %v4360
  %v4370 = vrot.slane %v4093, 2
  %v4371 = vrot.slane %v4094, 2
  %v4372 = vsel %vm448, %v4370, %v4371
  %v4374 = vsel %vm110, %v4372, 0
  %v4377 = vsel %vm110, %v4371, 0
  %4379 = vmatprep.subr.bf16.mxu0 %v465
  %4380 = vmatpush1.bf16.msra.mxu0 %v464
  %4381 = vmatprep.subr.bf16.mxu0 %v467
  %4382 = vmatpush1.bf16.msra.mxu0 %v466
  %4383 = vmatprep.subr.bf16.mxu0 0
  %4384 = vmatpush1.bf16.msra.mxu0 0
  %4385 = vmatprep.subr.bf16.mxu0 0
  %4386 = vmatpush1.bf16.msra.mxu0 0
  %4387 = vmatprep.subr.bf16.mxu0 0
  %4388 = vmatpush1.bf16.msra.mxu0 0
  %4389 = vmatprep.subr.bf16.mxu0 0
  %4390 = vmatpush1.bf16.msra.mxu0 0
  %4391 = vmatprep.subr.bf16.mxu0 0
  %4392 = vmatpush1.bf16.msra.mxu0 0
  %4393 = vmatprep.subr.bf16.mxu0 0
  %4394 = vmatpush1.bf16.msra.mxu0 0
  %4395 = vmatprep.subr.bf16.mxu0 0
  %4396 = vmatpush1.bf16.msra.mxu0 0
  %4397 = vmatprep.subr.bf16.mxu0 0
  %4398 = vmatpush1.bf16.msra.mxu0 0
  %4399 = vmatprep.subr.bf16.mxu0 0
  %4400 = vmatpush1.bf16.msra.mxu0 0
  %4401 = vmatprep.subr.bf16.mxu0 0
  %4402 = vmatpush1.bf16.msra.mxu0 0
  %4403 = vmatprep.subr.bf16.mxu0 0
  %4404 = vmatpush1.bf16.msra.mxu0 0
  %4405 = vmatprep.subr.bf16.mxu0 0
  %4406 = vmatpush1.bf16.msra.mxu0 0
  %4407 = vmatprep.subr.bf16.mxu0 0
  %4408 = vmatpush1.bf16.msra.mxu0 0
  %4409 = vmatprep.subr.bf16.mxu0 0
  %4410 = vmatpush1.bf16.msra.mxu0 0
  %4411 = vmatprep.mubr.bf16.mxu0 0
  %4412 = vmatmul.mubr.bf16.gmra.mrb[0].mxu0 %v4374
  %v4413 = vpop.f32.mrb[0].mxu0
  %v4414 = vadd.f32 0.0, %v4413
  %v4415 = vpop.f32.mrb[0].mxu0
  %v4416 = vadd.f32 0.0, %v4415
  %v4417 = vpop.f32.mrb[0].mxu0
  %v4418 = vadd.f32 0.0, %v4417
  %v4419 = vpop.f32.mrb[0].mxu0
  %v4420 = vadd.f32 0.0, %v4419
  %4421 = vmatprep.mubr.bf16.mxu0 0
  %4422 = vmatmul.mubr.bf16.gmra.mrb[0].mxu0 %v4377
  %v4423 = vpop.f32.mrb[0].mxu0
  %v4424 = vadd.f32 0.0, %v4423
  %v4425 = vpop.f32.mrb[0].mxu0
  %v4426 = vadd.f32 0.0, %v4425
  %v4427 = vpop.f32.mrb[0].mxu0
  %v4428 = vadd.f32 0.0, %v4427
  %v4429 = vpop.f32.mrb[0].mxu0
  %v4430 = vadd.f32 0.0, %v4429
  %4431 = vdwg.mxu0
  %v4432 = vadd.f32 %v4362, %v4414
  %v4433 = vadd.f32 %v4363, %v4416
  %v4434 = vadd.f32 %v4364, %v4418
  %v4435 = vadd.f32 %v4365, %v4420
  %v4436 = vadd.f32 %v4366, %v4424
  %v4437 = vadd.f32 %v4367, %v4426
  %v4438 = vadd.f32 %v4368, %v4428
  %v4439 = vadd.f32 %v4369, %v4430
  %v4440 = vadd.f32 %v4432, %v544
  %v4441 = vadd.f32 %v4433, %v548
  %v4442 = vadd.f32 %v4434, %v544
  %v4443 = vadd.f32 %v4435, %v548
  %v4444 = vadd.f32 %v4436, %v544
  %v4445 = vadd.f32 %v4437, %v548
  %v4446 = vadd.f32 %v4438, %v544
  %v4447 = vadd.f32 %v4439, %v548
  %v4448 = vmax.f32 %v4440, 0.0
  %v4449 = vmax.f32 %v4441, 0.0
  %v4450 = vmax.f32 %v4442, 0.0
  %v4451 = vmax.f32 %v4443, 0.0
  %v4452 = vmax.f32 %v4444, 0.0
  %v4453 = vmax.f32 %v4445, 0.0
  %v4454 = vmax.f32 %v4446, 0.0
  %v4455 = vmax.f32 %v4447, 0.0
  %v4456 = vpack.c.bf16 %v4450, %v4448
  %v4457 = vpack.c.bf16 %v4451, %v4449
  %v4458 = vpack.c.bf16 %v4454, %v4452
  %v4459 = vpack.c.bf16 %v4455, %v4453
  %v4461 = vsel %vm582, %v4458, 0
  %v4464 = vsel %vm582, %v4459, 0
  %4466 = vmatprep.subr.bf16.mxu0 %v4457
  %4467 = vmatpush1.bf16.msra.mxu0 %v4456
  %4468 = vmatprep.subr.bf16.mxu0 %v4464
  %4469 = vmatpush1.bf16.msra.mxu0 %v4461
  %4470 = vmatprep.subr.bf16.mxu0 0
  %4471 = vmatpush1.bf16.msra.mxu0 0
  %4472 = vmatprep.subr.bf16.mxu0 0
  %4473 = vmatpush1.bf16.msra.mxu0 0
  %4474 = vmatprep.subr.bf16.mxu0 0
  %4475 = vmatpush1.bf16.msra.mxu0 0
  %4476 = vmatprep.subr.bf16.mxu0 0
  %4477 = vmatpush1.bf16.msra.mxu0 0
  %4478 = vmatprep.subr.bf16.mxu0 0
  %4479 = vmatpush1.bf16.msra.mxu0 0
  %4480 = vmatprep.subr.bf16.mxu0 0
  %4481 = vmatpush1.bf16.msra.mxu0 0
  %4482 = vmatprep.subr.bf16.mxu0 0
  %4483 = vmatpush1.bf16.msra.mxu0 0
  %4484 = vmatprep.subr.bf16.mxu0 0
  %4485 = vmatpush1.bf16.msra.mxu0 0
  %4486 = vmatprep.subr.bf16.mxu0 0
  %4487 = vmatpush1.bf16.msra.mxu0 0
  %4488 = vmatprep.subr.bf16.mxu0 0
  %4489 = vmatpush1.bf16.msra.mxu0 0
  %4490 = vmatprep.subr.bf16.mxu0 0
  %4491 = vmatpush1.bf16.msra.mxu0 0
  %4492 = vmatprep.subr.bf16.mxu0 0
  %4493 = vmatpush1.bf16.msra.mxu0 0
  %4494 = vmatprep.subr.bf16.mxu0 0
  %4495 = vmatpush1.bf16.msra.mxu0 0
  %4496 = vmatprep.subr.bf16.mxu0 0
  %4497 = vmatpush1.bf16.msra.mxu0 0
  %4498 = vmatprep.mubr.bf16.mxu0 0
  %4499 = vmatmul.mubr.bf16.gmra.mrb[0].mxu0 %v580
  %v4500 = vpop.f32.mrb[0].mxu0
  %v4501 = vadd.f32 0.0, %v4500
  %v4502 = vpop.f32.mrb[0].mxu0
  %v4503 = vadd.f32 0.0, %v4502
  %v4504 = vpop.f32.mrb[0].mxu0
  %v4505 = vadd.f32 0.0, %v4504
  %v4506 = vpop.f32.mrb[0].mxu0
  %v4507 = vadd.f32 0.0, %v4506
  %4508 = vdwg.mxu0
  %v4509 = vpack.c.bf16 %v4505, %v4501
  %v4510 = vpack.c.bf16 %v4507, %v4503
  %v4512 = vsel %vm718, %v4510, 0
  %4514 = vmatprep.subr.bf16.mxu0 0
  %4515 = vmatpush1.bf16.msra.mxu0 %v697
  %4516 = vmatprep.subr.bf16.mxu0 0
  %4517 = vmatpush1.bf16.msra.mxu0 %v698
  %4518 = vmatprep.subr.bf16.mxu0 0
  %4519 = vmatpush1.bf16.msra.mxu0 %v699
  %4520 = vmatprep.subr.bf16.mxu0 0
  %4521 = vmatpush1.bf16.msra.mxu0 %v700
  %4522 = vmatprep.subr.bf16.mxu0 0
  %4523 = vmatpush1.bf16.msra.mxu0 %v701
  %4524 = vmatprep.subr.bf16.mxu0 0
  %4525 = vmatpush1.bf16.msra.mxu0 %v702
  %4526 = vmatprep.subr.bf16.mxu0 0
  %4527 = vmatpush1.bf16.msra.mxu0 %v703
  %4528 = vmatprep.subr.bf16.mxu0 0
  %4529 = vmatpush1.bf16.msra.mxu0 %v704
  %4530 = vmatprep.subr.bf16.mxu0 0
  %4531 = vmatpush1.bf16.msra.mxu0 %v705
  %4532 = vmatprep.subr.bf16.mxu0 0
  %4533 = vmatpush1.bf16.msra.mxu0 %v706
  %4534 = vmatprep.subr.bf16.mxu0 0
  %4535 = vmatpush1.bf16.msra.mxu0 %v724
  %4536 = vmatprep.subr.bf16.mxu0 0
  %4537 = vmatpush1.bf16.msra.mxu0 0
  %4538 = vmatprep.subr.bf16.mxu0 0
  %4539 = vmatpush1.bf16.msra.mxu0 0
  %4540 = vmatprep.subr.bf16.mxu0 0
  %4541 = vmatpush1.bf16.msra.mxu0 0
  %4542 = vmatprep.subr.bf16.mxu0 0
  %4543 = vmatpush1.bf16.msra.mxu0 0
  %4544 = vmatprep.subr.bf16.mxu0 0
  %4545 = vmatpush1.bf16.msra.mxu0 0
  %4546 = vmatprep.mubr.bf16.mxu0 %v4512
  %4547 = vmatmul.mubr.bf16.gmra.mrb[0].mxu0 %v4509
  %v4548 = vpop.f32.mrb[0].mxu0
  %v4549 = vadd.f32 0.0, %v4548
  %v4550 = vpop.f32.mrb[0].mxu0
  %v4551 = vpop.f32.mrb[0].mxu0
  %v4552 = vadd.f32 0.0, %v4551
  %v4553 = vpop.f32.mrb[0].mxu0
  %4554 = vdwg.mxu0
  %v4555 = vpack.c.bf16 %v4552, %v4549
  %v4557 = vshrl.u32 %v4555, 16
  %v4559 = vshll.u32 %v4555, 16
  %v4561 = vrot.slane %v4559, 1
  %v4562 = vor.u32 %v4557, %v4561
  %v4564 = vsel %vm853, %v4562, 0
  %4566 = vmatprep.subr.bf16.mxu0 %v832
  %4567 = vmatpush1.bf16.msra.mxu0 %v831
  %4568 = vmatprep.subr.bf16.mxu0 %v834
  %4569 = vmatpush1.bf16.msra.mxu0 %v833
  %4570 = vmatprep.subr.bf16.mxu0 %v836
  %4571 = vmatpush1.bf16.msra.mxu0 %v835
  %4572 = vmatprep.subr.bf16.mxu0 %v838
  %4573 = vmatpush1.bf16.msra.mxu0 %v837
  %4574 = vmatprep.subr.bf16.mxu0 %v840
  %4575 = vmatpush1.bf16.msra.mxu0 %v839
  %4576 = vmatprep.subr.bf16.mxu0 %v862
  %4577 = vmatpush1.bf16.msra.mxu0 %v859
  %4578 = vmatprep.subr.bf16.mxu0 0
  %4579 = vmatpush1.bf16.msra.mxu0 0
  %4580 = vmatprep.subr.bf16.mxu0 0
  %4581 = vmatpush1.bf16.msra.mxu0 0
  %4582 = vmatprep.subr.bf16.mxu0 0
  %4583 = vmatpush1.bf16.msra.mxu0 0
  %4584 = vmatprep.subr.bf16.mxu0 0
  %4585 = vmatpush1.bf16.msra.mxu0 0
  %4586 = vmatprep.subr.bf16.mxu0 0
  %4587 = vmatpush1.bf16.msra.mxu0 0
  %4588 = vmatprep.subr.bf16.mxu0 0
  %4589 = vmatpush1.bf16.msra.mxu0 0
  %4590 = vmatprep.subr.bf16.mxu0 0
  %4591 = vmatpush1.bf16.msra.mxu0 0
  %4592 = vmatprep.subr.bf16.mxu0 0
  %4593 = vmatpush1.bf16.msra.mxu0 0
  %4594 = vmatprep.subr.bf16.mxu0 0
  %4595 = vmatpush1.bf16.msra.mxu0 0
  %4596 = vmatprep.subr.bf16.mxu0 0
  %4597 = vmatpush1.bf16.msra.mxu0 0
  %4598 = vmatprep.mubr.bf16.mxu0 0
  %4599 = vmatmul.mubr.bf16.gmra.mrb[0].mxu0 %v4564
  %v4600 = vpop.f32.mrb[0].mxu0
  %v4601 = vadd.f32 0.0, %v4600
  %v4602 = vpop.f32.mrb[0].mxu0
  %v4603 = vadd.f32 0.0, %v4602
  %v4604 = vpop.f32.mrb[0].mxu0
  %v4605 = vadd.f32 0.0, %v4604
  %v4606 = vpop.f32.mrb[0].mxu0
  %v4607 = vadd.f32 0.0, %v4606
  %4608 = vdwg.mxu0
  %v4609 = vsel %vm853, %v4555, 0
  %4611 = vmatprep.subr.bf16.mxu0 %v941
  %4612 = vmatpush1.bf16.msra.mxu0 %v940
  %4613 = vmatprep.subr.bf16.mxu0 %v943
  %4614 = vmatpush1.bf16.msra.mxu0 %v942
  %4615 = vmatprep.subr.bf16.mxu0 %v945
  %4616 = vmatpush1.bf16.msra.mxu0 %v944
  %4617 = vmatprep.subr.bf16.mxu0 %v947
  %4618 = vmatpush1.bf16.msra.mxu0 %v946
  %4619 = vmatprep.subr.bf16.mxu0 %v949
  %4620 = vmatpush1.bf16.msra.mxu0 %v948
  %4621 = vmatprep.subr.bf16.mxu0 %v968
  %4622 = vmatpush1.bf16.msra.mxu0 %v965
  %4623 = vmatprep.subr.bf16.mxu0 0
  %4624 = vmatpush1.bf16.msra.mxu0 0
  %4625 = vmatprep.subr.bf16.mxu0 0
  %4626 = vmatpush1.bf16.msra.mxu0 0
  %4627 = vmatprep.subr.bf16.mxu0 0
  %4628 = vmatpush1.bf16.msra.mxu0 0
  %4629 = vmatprep.subr.bf16.mxu0 0
  %4630 = vmatpush1.bf16.msra.mxu0 0
  %4631 = vmatprep.subr.bf16.mxu0 0
  %4632 = vmatpush1.bf16.msra.mxu0 0
  %4633 = vmatprep.subr.bf16.mxu0 0
  %4634 = vmatpush1.bf16.msra.mxu0 0
  %4635 = vmatprep.subr.bf16.mxu0 0
  %4636 = vmatpush1.bf16.msra.mxu0 0
  %4637 = vmatprep.subr.bf16.mxu0 0
  %4638 = vmatpush1.bf16.msra.mxu0 0
  %4639 = vmatprep.subr.bf16.mxu0 0
  %4640 = vmatpush1.bf16.msra.mxu0 0
  %4641 = vmatprep.subr.bf16.mxu0 0
  %4642 = vmatpush1.bf16.msra.mxu0 0
  %4643 = vmatprep.mubr.bf16.mxu0 0
  %4644 = vmatmul.mubr.bf16.gmra.mrb[0].mxu0 %v4609
  %v4645 = vpop.f32.mrb[0].mxu0
  %v4646 = vadd.f32 %v4601, %v4645
  %v4647 = vpop.f32.mrb[0].mxu0
  %v4648 = vadd.f32 %v4603, %v4647
  %v4649 = vpop.f32.mrb[0].mxu0
  %v4650 = vadd.f32 %v4605, %v4649
  %v4651 = vpop.f32.mrb[0].mxu0
  %v4652 = vadd.f32 %v4607, %v4651
  %4653 = vdwg.mxu0
  %v4655 = vrot.slane %v4555, 1
  %v4657 = vsel %vm853, %v4655, 0
  %4659 = vmatprep.subr.bf16.mxu0 %v1061
  %4660 = vmatpush1.bf16.msra.mxu0 %v1060
  %4661 = vmatprep.subr.bf16.mxu0 %v1063
  %4662 = vmatpush1.bf16.msra.mxu0 %v1062
  %4663 = vmatprep.subr.bf16.mxu0 %v1065
  %4664 = vmatpush1.bf16.msra.mxu0 %v1064
  %4665 = vmatprep.subr.bf16.mxu0 %v1067
  %4666 = vmatpush1.bf16.msra.mxu0 %v1066
  %4667 = vmatprep.subr.bf16.mxu0 %v1069
  %4668 = vmatpush1.bf16.msra.mxu0 %v1068
  %4669 = vmatprep.subr.bf16.mxu0 %v1089
  %4670 = vmatpush1.bf16.msra.mxu0 %v1086
  %4671 = vmatprep.subr.bf16.mxu0 0
  %4672 = vmatpush1.bf16.msra.mxu0 0
  %4673 = vmatprep.subr.bf16.mxu0 0
  %4674 = vmatpush1.bf16.msra.mxu0 0
  %4675 = vmatprep.subr.bf16.mxu0 0
  %4676 = vmatpush1.bf16.msra.mxu0 0
  %4677 = vmatprep.subr.bf16.mxu0 0
  %4678 = vmatpush1.bf16.msra.mxu0 0
  %4679 = vmatprep.subr.bf16.mxu0 0
  %4680 = vmatpush1.bf16.msra.mxu0 0
  %4681 = vmatprep.subr.bf16.mxu0 0
  %4682 = vmatpush1.bf16.msra.mxu0 0
  %4683 = vmatprep.subr.bf16.mxu0 0
  %4684 = vmatpush1.bf16.msra.mxu0 0
  %4685 = vmatprep.subr.bf16.mxu0 0
  %4686 = vmatpush1.bf16.msra.mxu0 0
  %4687 = vmatprep.subr.bf16.mxu0 0
  %4688 = vmatpush1.bf16.msra.mxu0 0
  %4689 = vmatprep.subr.bf16.mxu0 0
  %4690 = vmatpush1.bf16.msra.mxu0 0
  %4691 = vmatprep.mubr.bf16.mxu0 0
  %4692 = vmatmul.mubr.bf16.gmra.mrb[0].mxu0 %v4657
  %v4693 = vpop.f32.mrb[0].mxu0
  %v4694 = vadd.f32 0.0, %v4693
  %v4695 = vpop.f32.mrb[0].mxu0
  %v4696 = vadd.f32 0.0, %v4695
  %v4697 = vpop.f32.mrb[0].mxu0
  %v4698 = vadd.f32 0.0, %v4697
  %v4699 = vpop.f32.mrb[0].mxu0
  %v4700 = vadd.f32 0.0, %v4699
  %4701 = vdwg.mxu0
  %v4702 = vadd.f32 %v4646, %v4694
  %v4703 = vadd.f32 %v4648, %v4696
  %v4704 = vadd.f32 %v4650, %v4698
  %v4705 = vadd.f32 %v4652, %v4700
  %v4706 = vrot.slane %v4557, 1
  %v4707 = vrot.slane %v4559, 2
  %v4708 = vor.u32 %v4706, %v4707
  %v4710 = vsel %vm853, %v4708, 0
  %4712 = vmatprep.subr.bf16.mxu0 %v1187
  %4713 = vmatpush1.bf16.msra.mxu0 %v1186
  %4714 = vmatprep.subr.bf16.mxu0 %v1189
  %4715 = vmatpush1.bf16.msra.mxu0 %v1188
  %4716 = vmatprep.subr.bf16.mxu0 %v1191
  %4717 = vmatpush1.bf16.msra.mxu0 %v1190
  %4718 = vmatprep.subr.bf16.mxu0 %v1193
  %4719 = vmatpush1.bf16.msra.mxu0 %v1192
  %4720 = vmatprep.subr.bf16.mxu0 %v1195
  %4721 = vmatpush1.bf16.msra.mxu0 %v1194
  %4722 = vmatprep.subr.bf16.mxu0 %v1215
  %4723 = vmatpush1.bf16.msra.mxu0 %v1212
  %4724 = vmatprep.subr.bf16.mxu0 0
  %4725 = vmatpush1.bf16.msra.mxu0 0
  %4726 = vmatprep.subr.bf16.mxu0 0
  %4727 = vmatpush1.bf16.msra.mxu0 0
  %4728 = vmatprep.subr.bf16.mxu0 0
  %4729 = vmatpush1.bf16.msra.mxu0 0
  %4730 = vmatprep.subr.bf16.mxu0 0
  %4731 = vmatpush1.bf16.msra.mxu0 0
  %4732 = vmatprep.subr.bf16.mxu0 0
  %4733 = vmatpush1.bf16.msra.mxu0 0
  %4734 = vmatprep.subr.bf16.mxu0 0
  %4735 = vmatpush1.bf16.msra.mxu0 0
  %4736 = vmatprep.subr.bf16.mxu0 0
  %4737 = vmatpush1.bf16.msra.mxu0 0
  %4738 = vmatprep.subr.bf16.mxu0 0
  %4739 = vmatpush1.bf16.msra.mxu0 0
  %4740 = vmatprep.subr.bf16.mxu0 0
  %4741 = vmatpush1.bf16.msra.mxu0 0
  %4742 = vmatprep.subr.bf16.mxu0 0
  %4743 = vmatpush1.bf16.msra.mxu0 0
  %4744 = vmatprep.mubr.bf16.mxu0 0
  %4745 = vmatmul.mubr.bf16.gmra.mrb[0].mxu0 %v4710
  %v4746 = vpop.f32.mrb[0].mxu0
  %v4747 = vadd.f32 0.0, %v4746
  %v4748 = vpop.f32.mrb[0].mxu0
  %v4749 = vadd.f32 0.0, %v4748
  %v4750 = vpop.f32.mrb[0].mxu0
  %v4751 = vadd.f32 0.0, %v4750
  %v4752 = vpop.f32.mrb[0].mxu0
  %v4753 = vadd.f32 0.0, %v4752
  %4754 = vdwg.mxu0
  %v4755 = vadd.f32 %v4702, %v4747
  %v4756 = vadd.f32 %v4703, %v4749
  %v4757 = vadd.f32 %v4704, %v4751
  %v4758 = vadd.f32 %v4705, %v4753
  %v4759 = vrot.slane %v4555, 2
  %v4761 = vsel %vm853, %v4759, 0
  %4763 = vmatprep.subr.bf16.mxu0 %v1311
  %4764 = vmatpush1.bf16.msra.mxu0 %v1310
  %4765 = vmatprep.subr.bf16.mxu0 %v1313
  %4766 = vmatpush1.bf16.msra.mxu0 %v1312
  %4767 = vmatprep.subr.bf16.mxu0 %v1315
  %4768 = vmatpush1.bf16.msra.mxu0 %v1314
  %4769 = vmatprep.subr.bf16.mxu0 %v1317
  %4770 = vmatpush1.bf16.msra.mxu0 %v1316
  %4771 = vmatprep.subr.bf16.mxu0 %v1319
  %4772 = vmatpush1.bf16.msra.mxu0 %v1318
  %4773 = vmatprep.subr.bf16.mxu0 %v1339
  %4774 = vmatpush1.bf16.msra.mxu0 %v1336
  %4775 = vmatprep.subr.bf16.mxu0 0
  %4776 = vmatpush1.bf16.msra.mxu0 0
  %4777 = vmatprep.subr.bf16.mxu0 0
  %4778 = vmatpush1.bf16.msra.mxu0 0
  %4779 = vmatprep.subr.bf16.mxu0 0
  %4780 = vmatpush1.bf16.msra.mxu0 0
  %4781 = vmatprep.subr.bf16.mxu0 0
  %4782 = vmatpush1.bf16.msra.mxu0 0
  %4783 = vmatprep.subr.bf16.mxu0 0
  %4784 = vmatpush1.bf16.msra.mxu0 0
  %4785 = vmatprep.subr.bf16.mxu0 0
  %4786 = vmatpush1.bf16.msra.mxu0 0
  %4787 = vmatprep.subr.bf16.mxu0 0
  %4788 = vmatpush1.bf16.msra.mxu0 0
  %4789 = vmatprep.subr.bf16.mxu0 0
  %4790 = vmatpush1.bf16.msra.mxu0 0
  %4791 = vmatprep.subr.bf16.mxu0 0
  %4792 = vmatpush1.bf16.msra.mxu0 0
  %4793 = vmatprep.subr.bf16.mxu0 0
  %4794 = vmatpush1.bf16.msra.mxu0 0
  %4795 = vmatprep.mubr.bf16.mxu0 0
  %4796 = vmatmul.mubr.bf16.gmra.mrb[0].mxu0 %v4761
  %v4797 = vpop.f32.mrb[0].mxu0
  %v4798 = vadd.f32 0.0, %v4797
  %v4799 = vpop.f32.mrb[0].mxu0
  %v4800 = vadd.f32 0.0, %v4799
  %v4801 = vpop.f32.mrb[0].mxu0
  %v4802 = vadd.f32 0.0, %v4801
  %v4803 = vpop.f32.mrb[0].mxu0
  %v4804 = vadd.f32 0.0, %v4803
  %4805 = vdwg.mxu0
  %v4806 = vadd.f32 %v4755, %v4798
  %v4807 = vadd.f32 %v4756, %v4800
  %v4808 = vadd.f32 %v4757, %v4802
  %v4809 = vadd.f32 %v4758, %v4804
  %v4810 = vadd.f32 %v4806, %v1393
  %v4811 = vadd.f32 %v4807, %v1397
  %v4812 = vadd.f32 %v4808, %v1393
  %v4813 = vadd.f32 %v4809, %v1397
  %v4814 = vmax.f32 %v4810, 0.0
  %v4815 = vmax.f32 %v4811, 0.0
  %v4816 = vmax.f32 %v4812, 0.0
  %v4817 = vmax.f32 %v4813, 0.0
  %v4818 = vpack.c.bf16 %v4816, %v4814
  %v4819 = vpack.c.bf16 %v4817, %v4815
  %v4821 = vsel %vm1415, %v4818, 0
  %v4824 = vsel %vm1415, %v4819, 0
  %4826 = vmatprep.subr.bf16.mxu0 %v4824
  %4827 = vmatpush1.bf16.msra.mxu0 %v4821
  %4828 = vmatprep.subr.bf16.mxu0 0
  %4829 = vmatpush1.bf16.msra.mxu0 0
  %4830 = vmatprep.subr.bf16.mxu0 0
  %4831 = vmatpush1.bf16.msra.mxu0 0
  %4832 = vmatprep.subr.bf16.mxu0 0
  %4833 = vmatpush1.bf16.msra.mxu0 0
  %4834 = vmatprep.subr.bf16.mxu0 0
  %4835 = vmatpush1.bf16.msra.mxu0 0
  %4836 = vmatprep.subr.bf16.mxu0 0
  %4837 = vmatpush1.bf16.msra.mxu0 0
  %4838 = vmatprep.subr.bf16.mxu0 0
  %4839 = vmatpush1.bf16.msra.mxu0 0
  %4840 = vmatprep.subr.bf16.mxu0 0
  %4841 = vmatpush1.bf16.msra.mxu0 0
  %4842 = vmatprep.subr.bf16.mxu0 0
  %4843 = vmatpush1.bf16.msra.mxu0 0
  %4844 = vmatprep.subr.bf16.mxu0 0
  %4845 = vmatpush1.bf16.msra.mxu0 0
  %4846 = vmatprep.subr.bf16.mxu0 0
  %4847 = vmatpush1.bf16.msra.mxu0 0
  %4848 = vmatprep.subr.bf16.mxu0 0
  %4849 = vmatpush1.bf16.msra.mxu0 0
  %4850 = vmatprep.subr.bf16.mxu0 0
  %4851 = vmatpush1.bf16.msra.mxu0 0
  %4852 = vmatprep.subr.bf16.mxu0 0
  %4853 = vmatpush1.bf16.msra.mxu0 0
  %4854 = vmatprep.subr.bf16.mxu0 0
  %4855 = vmatpush1.bf16.msra.mxu0 0
  %4856 = vmatprep.subr.bf16.mxu0 0
  %4857 = vmatpush1.bf16.msra.mxu0 0
  %4858 = vmatprep.mubr.bf16.mxu0 0
  %4859 = vmatmul.mubr.bf16.gmra.mrb[0].mxu0 %v1413
  %v4860 = vpop.f32.mrb[0].mxu0
  %v4861 = vadd.f32 0.0, %v4860
  %v4862 = vpop.f32.mrb[0].mxu0
  %v4863 = vadd.f32 0.0, %v4862
  %v4864 = vpop.f32.mrb[0].mxu0
  %v4865 = vpop.f32.mrb[0].mxu0
  %4866 = vdwg.mxu0
  %v4867 = vpack.c.bf16 %v4861, %v4861
  %v4868 = vpack.c.bf16 %v4863, %v4863
  %v4870 = vsel %vm110, %v4868, 0
  %4872 = vmatprep.subr.bf16.mxu0 0
  %4873 = vmatpush1.bf16.msra.mxu0 %v1525
  %4874 = vmatprep.subr.bf16.mxu0 0
  %4875 = vmatpush1.bf16.msra.mxu0 %v1526
  %4876 = vmatprep.subr.bf16.mxu0 0
  %4877 = vmatpush1.bf16.msra.mxu0 %v1527
  %4878 = vmatprep.subr.bf16.mxu0 0
  %4879 = vmatpush1.bf16.msra.mxu0 %v1528
  %4880 = vmatprep.subr.bf16.mxu0 0
  %4881 = vmatpush1.bf16.msra.mxu0 %v1529
  %4882 = vmatprep.subr.bf16.mxu0 0
  %4883 = vmatpush1.bf16.msra.mxu0 %v1530
  %4884 = vmatprep.subr.bf16.mxu0 0
  %4885 = vmatpush1.bf16.msra.mxu0 %v1531
  %4886 = vmatprep.subr.bf16.mxu0 0
  %4887 = vmatpush1.bf16.msra.mxu0 %v1532
  %4888 = vmatprep.subr.bf16.mxu0 0
  %4889 = vmatpush1.bf16.msra.mxu0 %v1533
  %4890 = vmatprep.subr.bf16.mxu0 0
  %4891 = vmatpush1.bf16.msra.mxu0 %v1534
  %4892 = vmatprep.subr.bf16.mxu0 0
  %4893 = vmatpush1.bf16.msra.mxu0 0
  %4894 = vmatprep.subr.bf16.mxu0 0
  %4895 = vmatpush1.bf16.msra.mxu0 0
  %4896 = vmatprep.subr.bf16.mxu0 0
  %4897 = vmatpush1.bf16.msra.mxu0 0
  %4898 = vmatprep.subr.bf16.mxu0 0
  %4899 = vmatpush1.bf16.msra.mxu0 0
  %4900 = vmatprep.subr.bf16.mxu0 0
  %4901 = vmatpush1.bf16.msra.mxu0 0
  %4902 = vmatprep.subr.bf16.mxu0 0
  %4903 = vmatpush1.bf16.msra.mxu0 0
  %4904 = vmatprep.mubr.bf16.mxu0 %v4870
  %4905 = vmatmul.mubr.bf16.gmra.mrb[0].mxu0 %v4867
  %v4906 = vpop.f32.mrb[0].mxu0
  %v4907 = vadd.f32 0.0, %v4906
  %v4908 = vpop.f32.mrb[0].mxu0
  %v4909 = vpop.f32.mrb[0].mxu0
  %v4910 = vpop.f32.mrb[0].mxu0
  %4911 = vdwg.mxu0
  %v4912 = vld [vmem:[%s0 + $0x50] sm:$0xf]
  %v4913 = vld [vmem:[%s0 + $0x54] sm:$0xf]
  %v4914 = vld [vmem:[%s0 + $0x58] sm:$0xf]
  %v4915 = vld [vmem:[%s0 + $0x5c] sm:$0xf]
  %v4920 = vunpack.c.l.b16 %v4912
  %v4921 = vunpack.c.l.b16 %v4913
  %v4922 = vunpack.c.l.b16 %v4914
  %v4923 = vunpack.c.l.b16 %v4915
  %v4924 = vpack.c.b16 %v4921, %v4920
  %v4925 = vpack.c.b16 %v4923, %v4922
  %v4927 = vshrl.u32 %v4924, 16
  %v4929 = vshll.u32 %v4924, 16
  %v4931 = vrot.slane %v4929, 1
  %v4932 = vor.u32 %v4927, %v4931
  %v4934 = vshll.u32 %v4925, 16
  %v4936 = vrot.slane %v4934, 1
  %v4937 = vsel %vm74, %v4932, %v4936
  %v4938 = vshrl.u32 %v4925, 16
  %v4940 = vor.u32 %v4938, %v4936
  %v4942 = vsel %vm110, %v4937, 0
  %v4945 = vsel %vm110, %v4940, 0
  %4947 = vmatprep.subr.bf16.mxu0 %v103
  %4948 = vmatpush1.bf16.msra.mxu0 %v102
  %4949 = vmatprep.subr.bf16.mxu0 %v105
  %4950 = vmatpush1.bf16.msra.mxu0 %v104
  %4951 = vmatprep.subr.bf16.mxu0 0
  %4952 = vmatpush1.bf16.msra.mxu0 0
  %4953 = vmatprep.subr.bf16.mxu0 0
  %4954 = vmatpush1.bf16.msra.mxu0 0
  %4955 = vmatprep.subr.bf16.mxu0 0
  %4956 = vmatpush1.bf16.msra.mxu0 0
  %4957 = vmatprep.subr.bf16.mxu0 0
  %4958 = vmatpush1.bf16.msra.mxu0 0
  %4959 = vmatprep.subr.bf16.mxu0 0
  %4960 = vmatpush1.bf16.msra.mxu0 0
  %4961 = vmatprep.subr.bf16.mxu0 0
  %4962 = vmatpush1.bf16.msra.mxu0 0
  %4963 = vmatprep.subr.bf16.mxu0 0
  %4964 = vmatpush1.bf16.msra.mxu0 0
  %4965 = vmatprep.subr.bf16.mxu0 0
  %4966 = vmatpush1.bf16.msra.mxu0 0
  %4967 = vmatprep.subr.bf16.mxu0 0
  %4968 = vmatpush1.bf16.msra.mxu0 0
  %4969 = vmatprep.subr.bf16.mxu0 0
  %4970 = vmatpush1.bf16.msra.mxu0 0
  %4971 = vmatprep.subr.bf16.mxu0 0
  %4972 = vmatpush1.bf16.msra.mxu0 0
  %4973 = vmatprep.subr.bf16.mxu0 0
  %4974 = vmatpush1.bf16.msra.mxu0 0
  %4975 = vmatprep.subr.bf16.mxu0 0
  %4976 = vmatpush1.bf16.msra.mxu0 0
  %4977 = vmatprep.subr.bf16.mxu0 0
  %4978 = vmatpush1.bf16.msra.mxu0 0
  %4979 = vmatprep.mubr.bf16.mxu0 0
  %4980 = vmatmul.mubr.bf16.gmra.mrb[0].mxu0 %v4942
  %v4981 = vpop.f32.mrb[0].mxu0
  %v4982 = vadd.f32 0.0, %v4981
  %v4983 = vpop.f32.mrb[0].mxu0
  %v4984 = vadd.f32 0.0, %v4983
  %v4985 = vpop.f32.mrb[0].mxu0
  %v4986 = vadd.f32 0.0, %v4985
  %v4987 = vpop.f32.mrb[0].mxu0
  %v4988 = vadd.f32 0.0, %v4987
  %4989 = vmatprep.mubr.bf16.mxu0 0
  %4990 = vmatmul.mubr.bf16.gmra.mrb[0].mxu0 %v4945
  %v4991 = vpop.f32.mrb[0].mxu0
  %v4992 = vadd.f32 0.0, %v4991
  %v4993 = vpop.f32.mrb[0].mxu0
  %v4994 = vadd.f32 0.0, %v4993
  %v4995 = vpop.f32.mrb[0].mxu0
  %v4996 = vadd.f32 0.0, %v4995
  %v4997 = vpop.f32.mrb[0].mxu0
  %v4998 = vadd.f32 0.0, %v4997
  %4999 = vdwg.mxu0
  %v5000 = vsel %vm110, %v4924, 0
  %v5002 = vsel %vm110, %v4925, 0
  %5004 = vmatprep.subr.bf16.mxu0 %v183
  %5005 = vmatpush1.bf16.msra.mxu0 %v182
  %5006 = vmatprep.subr.bf16.mxu0 %v185
  %5007 = vmatpush1.bf16.msra.mxu0 %v184
  %5008 = vmatprep.subr.bf16.mxu0 0
  %5009 = vmatpush1.bf16.msra.mxu0 0
  %5010 = vmatprep.subr.bf16.mxu0 0
  %5011 = vmatpush1.bf16.msra.mxu0 0
  %5012 = vmatprep.subr.bf16.mxu0 0
  %5013 = vmatpush1.bf16.msra.mxu0 0
  %5014 = vmatprep.subr.bf16.mxu0 0
  %5015 = vmatpush1.bf16.msra.mxu0 0
  %5016 = vmatprep.subr.bf16.mxu0 0
  %5017 = vmatpush1.bf16.msra.mxu0 0
  %5018 = vmatprep.subr.bf16.mxu0 0
  %5019 = vmatpush1.bf16.msra.mxu0 0
  %5020 = vmatprep.subr.bf16.mxu0 0
  %5021 = vmatpush1.bf16.msra.mxu0 0
  %5022 = vmatprep.subr.bf16.mxu0 0
  %5023 = vmatpush1.bf16.msra.mxu0 0
  %5024 = vmatprep.subr.bf16.mxu0 0
  %5025 = vmatpush1.bf16.msra.mxu0 0
  %5026 = vmatprep.subr.bf16.mxu0 0
  %5027 = vmatpush1.bf16.msra.mxu0 0
  %5028 = vmatprep.subr.bf16.mxu0 0
  %5029 = vmatpush1.bf16.msra.mxu0 0
  %5030 = vmatprep.subr.bf16.mxu0 0
  %5031 = vmatpush1.bf16.msra.mxu0 0
  %5032 = vmatprep.subr.bf16.mxu0 0
  %5033 = vmatpush1.bf16.msra.mxu0 0
  %5034 = vmatprep.subr.bf16.mxu0 0
  %5035 = vmatpush1.bf16.msra.mxu0 0
  %5036 = vmatprep.mubr.bf16.mxu0 0
  %5037 = vmatmul.mubr.bf16.gmra.mrb[0].mxu0 %v5000
  %v5038 = vpop.f32.mrb[0].mxu0
  %v5039 = vadd.f32 %v4982, %v5038
  %v5040 = vpop.f32.mrb[0].mxu0
  %v5041 = vadd.f32 %v4984, %v5040
  %v5042 = vpop.f32.mrb[0].mxu0
  %v5043 = vadd.f32 %v4986, %v5042
  %v5044 = vpop.f32.mrb[0].mxu0
  %v5045 = vadd.f32 %v4988, %v5044
  %5046 = vmatprep.mubr.bf16.mxu0 0
  %5047 = vmatmul.mubr.bf16.gmra.mrb[0].mxu0 %v5002
  %v5048 = vpop.f32.mrb[0].mxu0
  %v5049 = vadd.f32 %v4992, %v5048
  %v5050 = vpop.f32.mrb[0].mxu0
  %v5051 = vadd.f32 %v4994, %v5050
  %v5052 = vpop.f32.mrb[0].mxu0
  %v5053 = vadd.f32 %v4996, %v5052
  %v5054 = vpop.f32.mrb[0].mxu0
  %v5055 = vadd.f32 %v4998, %v5054
  %5056 = vdwg.mxu0
  %v5057 = vrot.slane %v4924, 1
  %v5058 = vrot.slane %v4925, 1
  %v5059 = vsel %vm252, %v5057, %v5058
  %v5061 = vsel %vm110, %v5059, 0
  %v5064 = vsel %vm110, %v5058, 0
  %5066 = vmatprep.subr.bf16.mxu0 %v269
  %5067 = vmatpush1.bf16.msra.mxu0 %v268
  %5068 = vmatprep.subr.bf16.mxu0 %v271
  %5069 = vmatpush1.bf16.msra.mxu0 %v270
  %5070 = vmatprep.subr.bf16.mxu0 0
  %5071 = vmatpush1.bf16.msra.mxu0 0
  %5072 = vmatprep.subr.bf16.mxu0 0
  %5073 = vmatpush1.bf16.msra.mxu0 0
  %5074 = vmatprep.subr.bf16.mxu0 0
  %5075 = vmatpush1.bf16.msra.mxu0 0
  %5076 = vmatprep.subr.bf16.mxu0 0
  %5077 = vmatpush1.bf16.msra.mxu0 0
  %5078 = vmatprep.subr.bf16.mxu0 0
  %5079 = vmatpush1.bf16.msra.mxu0 0
  %5080 = vmatprep.subr.bf16.mxu0 0
  %5081 = vmatpush1.bf16.msra.mxu0 0
  %5082 = vmatprep.subr.bf16.mxu0 0
  %5083 = vmatpush1.bf16.msra.mxu0 0
  %5084 = vmatprep.subr.bf16.mxu0 0
  %5085 = vmatpush1.bf16.msra.mxu0 0
  %5086 = vmatprep.subr.bf16.mxu0 0
  %5087 = vmatpush1.bf16.msra.mxu0 0
  %5088 = vmatprep.subr.bf16.mxu0 0
  %5089 = vmatpush1.bf16.msra.mxu0 0
  %5090 = vmatprep.subr.bf16.mxu0 0
  %5091 = vmatpush1.bf16.msra.mxu0 0
  %5092 = vmatprep.subr.bf16.mxu0 0
  %5093 = vmatpush1.bf16.msra.mxu0 0
  %5094 = vmatprep.subr.bf16.mxu0 0
  %5095 = vmatpush1.bf16.msra.mxu0 0
  %5096 = vmatprep.subr.bf16.mxu0 0
  %5097 = vmatpush1.bf16.msra.mxu0 0
  %5098 = vmatprep.mubr.bf16.mxu0 0
  %5099 = vmatmul.mubr.bf16.gmra.mrb[0].mxu0 %v5061
  %v5100 = vpop.f32.mrb[0].mxu0
  %v5101 = vadd.f32 0.0, %v5100
  %v5102 = vpop.f32.mrb[0].mxu0
  %v5103 = vadd.f32 0.0, %v5102
  %v5104 = vpop.f32.mrb[0].mxu0
  %v5105 = vadd.f32 0.0, %v5104
  %v5106 = vpop.f32.mrb[0].mxu0
  %v5107 = vadd.f32 0.0, %v5106
  %5108 = vmatprep.mubr.bf16.mxu0 0
  %5109 = vmatmul.mubr.bf16.gmra.mrb[0].mxu0 %v5064
  %v5110 = vpop.f32.mrb[0].mxu0
  %v5111 = vadd.f32 0.0, %v5110
  %v5112 = vpop.f32.mrb[0].mxu0
  %v5113 = vadd.f32 0.0, %v5112
  %v5114 = vpop.f32.mrb[0].mxu0
  %v5115 = vadd.f32 0.0, %v5114
  %v5116 = vpop.f32.mrb[0].mxu0
  %v5117 = vadd.f32 0.0, %v5116
  %5118 = vdwg.mxu0
  %v5119 = vadd.f32 %v5039, %v5101
  %v5120 = vadd.f32 %v5041, %v5103
  %v5121 = vadd.f32 %v5043, %v5105
  %v5122 = vadd.f32 %v5045, %v5107
  %v5123 = vadd.f32 %v5049, %v5111
  %v5124 = vadd.f32 %v5051, %v5113
  %v5125 = vadd.f32 %v5053, %v5115
  %v5126 = vadd.f32 %v5055, %v5117
  %v5127 = vrot.slane %v4927, 1
  %v5128 = vrot.slane %v4929, 2
  %v5129 = vor.u32 %v5127, %v5128
  %v5130 = vrot.slane %v4938, 1
  %v5131 = vrot.slane %v4934, 2
  %v5132 = vor.u32 %v5130, %v5131
  %v5133 = vsel %vm348, %v5129, %v5132
  %v5135 = vsel %vm110, %v5133, 0
  %v5138 = vsel %vm110, %v5132, 0
  %5140 = vmatprep.subr.bf16.mxu0 %v369
  %5141 = vmatpush1.bf16.msra.mxu0 %v368
  %5142 = vmatprep.subr.bf16.mxu0 %v371
  %5143 = vmatpush1.bf16.msra.mxu0 %v370
  %5144 = vmatprep.subr.bf16.mxu0 0
  %5145 = vmatpush1.bf16.msra.mxu0 0
  %5146 = vmatprep.subr.bf16.mxu0 0
  %5147 = vmatpush1.bf16.msra.mxu0 0
  %5148 = vmatprep.subr.bf16.mxu0 0
  %5149 = vmatpush1.bf16.msra.mxu0 0
  %5150 = vmatprep.subr.bf16.mxu0 0
  %5151 = vmatpush1.bf16.msra.mxu0 0
  %5152 = vmatprep.subr.bf16.mxu0 0
  %5153 = vmatpush1.bf16.msra.mxu0 0
  %5154 = vmatprep.subr.bf16.mxu0 0
  %5155 = vmatpush1.bf16.msra.mxu0 0
  %5156 = vmatprep.subr.bf16.mxu0 0
  %5157 = vmatpush1.bf16.msra.mxu0 0
  %5158 = vmatprep.subr.bf16.mxu0 0
  %5159 = vmatpush1.bf16.msra.mxu0 0
  %5160 = vmatprep.subr.bf16.mxu0 0
  %5161 = vmatpush1.bf16.msra.mxu0 0
  %5162 = vmatprep.subr.bf16.mxu0 0
  %5163 = vmatpush1.bf16.msra.mxu0 0
  %5164 = vmatprep.subr.bf16.mxu0 0
  %5165 = vmatpush1.bf16.msra.mxu0 0
  %5166 = vmatprep.subr.bf16.mxu0 0
  %5167 = vmatpush1.bf16.msra.mxu0 0
  %5168 = vmatprep.subr.bf16.mxu0 0
  %5169 = vmatpush1.bf16.msra.mxu0 0
  %5170 = vmatprep.subr.bf16.mxu0 0
  %5171 = vmatpush1.bf16.msra.mxu0 0
  %5172 = vmatprep.mubr.bf16.mxu0 0
  %5173 = vmatmul.mubr.bf16.gmra.mrb[0].mxu0 %v5135
  %v5174 = vpop.f32.mrb[0].mxu0
  %v5175 = vadd.f32 0.0, %v5174
  %v5176 = vpop.f32.mrb[0].mxu0
  %v5177 = vadd.f32 0.0, %v5176
  %v5178 = vpop.f32.mrb[0].mxu0
  %v5179 = vadd.f32 0.0, %v5178
  %v5180 = vpop.f32.mrb[0].mxu0
  %v5181 = vadd.f32 0.0, %v5180
  %5182 = vmatprep.mubr.bf16.mxu0 0
  %5183 = vmatmul.mubr.bf16.gmra.mrb[0].mxu0 %v5138
  %v5184 = vpop.f32.mrb[0].mxu0
  %v5185 = vadd.f32 0.0, %v5184
  %v5186 = vpop.f32.mrb[0].mxu0
  %v5187 = vadd.f32 0.0, %v5186
  %v5188 = vpop.f32.mrb[0].mxu0
  %v5189 = vadd.f32 0.0, %v5188
  %v5190 = vpop.f32.mrb[0].mxu0
  %v5191 = vadd.f32 0.0, %v5190
  %5192 = vdwg.mxu0
  %v5193 = vadd.f32 %v5119, %v5175
  %v5194 = vadd.f32 %v5120, %v5177
  %v5195 = vadd.f32 %v5121, %v5179
  %v5196 = vadd.f32 %v5122, %v5181
  %v5197 = vadd.f32 %v5123, %v5185
  %v5198 = vadd.f32 %v5124, %v5187
  %v5199 = vadd.f32 %v5125, %v5189
  %v5200 = vadd.f32 %v5126, %v5191
  %v5201 = vrot.slane %v4924, 2
  %v5202 = vrot.slane %v4925, 2
  %v5203 = vsel %vm448, %v5201, %v5202
  %v5205 = vsel %vm110, %v5203, 0
  %v5208 = vsel %vm110, %v5202, 0
  %5210 = vmatprep.subr.bf16.mxu0 %v465
  %5211 = vmatpush1.bf16.msra.mxu0 %v464
  %5212 = vmatprep.subr.bf16.mxu0 %v467
  %5213 = vmatpush1.bf16.msra.mxu0 %v466
  %5214 = vmatprep.subr.bf16.mxu0 0
  %5215 = vmatpush1.bf16.msra.mxu0 0
  %5216 = vmatprep.subr.bf16.mxu0 0
  %5217 = vmatpush1.bf16.msra.mxu0 0
  %5218 = vmatprep.subr.bf16.mxu0 0
  %5219 = vmatpush1.bf16.msra.mxu0 0
  %5220 = vmatprep.subr.bf16.mxu0 0
  %5221 = vmatpush1.bf16.msra.mxu0 0
  %5222 = vmatprep.subr.bf16.mxu0 0
  %5223 = vmatpush1.bf16.msra.mxu0 0
  %5224 = vmatprep.subr.bf16.mxu0 0
  %5225 = vmatpush1.bf16.msra.mxu0 0
  %5226 = vmatprep.subr.bf16.mxu0 0
  %5227 = vmatpush1.bf16.msra.mxu0 0
  %5228 = vmatprep.subr.bf16.mxu0 0
  %5229 = vmatpush1.bf16.msra.mxu0 0
  %5230 = vmatprep.subr.bf16.mxu0 0
  %5231 = vmatpush1.bf16.msra.mxu0 0
  %5232 = vmatprep.subr.bf16.mxu0 0
  %5233 = vmatpush1.bf16.msra.mxu0 0
  %5234 = vmatprep.subr.bf16.mxu0 0
  %5235 = vmatpush1.bf16.msra.mxu0 0
  %5236 = vmatprep.subr.bf16.mxu0 0
  %5237 = vmatpush1.bf16.msra.mxu0 0
  %5238 = vmatprep.subr.bf16.mxu0 0
  %5239 = vmatpush1.bf16.msra.mxu0 0
  %5240 = vmatprep.subr.bf16.mxu0 0
  %5241 = vmatpush1.bf16.msra.mxu0 0
  %5242 = vmatprep.mubr.bf16.mxu0 0
  %5243 = vmatmul.mubr.bf16.gmra.mrb[0].mxu0 %v5205
  %v5244 = vpop.f32.mrb[0].mxu0
  %v5245 = vadd.f32 0.0, %v5244
  %v5246 = vpop.f32.mrb[0].mxu0
  %v5247 = vadd.f32 0.0, %v5246
  %v5248 = vpop.f32.mrb[0].mxu0
  %v5249 = vadd.f32 0.0, %v5248
  %v5250 = vpop.f32.mrb[0].mxu0
  %v5251 = vadd.f32 0.0, %v5250
  %5252 = vmatprep.mubr.bf16.mxu0 0
  %5253 = vmatmul.mubr.bf16.gmra.mrb[0].mxu0 %v5208
  %v5254 = vpop.f32.mrb[0].mxu0
  %v5255 = vadd.f32 0.0, %v5254
  %v5256 = vpop.f32.mrb[0].mxu0
  %v5257 = vadd.f32 0.0, %v5256
  %v5258 = vpop.f32.mrb[0].mxu0
  %v5259 = vadd.f32 0.0, %v5258
  %v5260 = vpop.f32.mrb[0].mxu0
  %v5261 = vadd.f32 0.0, %v5260
  %5262 = vdwg.mxu0
  %v5263 = vadd.f32 %v5193, %v5245
  %v5264 = vadd.f32 %v5194, %v5247
  %v5265 = vadd.f32 %v5195, %v5249
  %v5266 = vadd.f32 %v5196, %v5251
  %v5267 = vadd.f32 %v5197, %v5255
  %v5268 = vadd.f32 %v5198, %v5257
  %v5269 = vadd.f32 %v5199, %v5259
  %v5270 = vadd.f32 %v5200, %v5261
  %v5271 = vadd.f32 %v5263, %v544
  %v5272 = vadd.f32 %v5264, %v548
  %v5273 = vadd.f32 %v5265, %v544
  %v5274 = vadd.f32 %v5266, %v548
  %v5275 = vadd.f32 %v5267, %v544
  %v5276 = vadd.f32 %v5268, %v548
  %v5277 = vadd.f32 %v5269, %v544
  %v5278 = vadd.f32 %v5270, %v548
  %v5279 = vmax.f32 %v5271, 0.0
  %v5280 = vmax.f32 %v5272, 0.0
  %v5281 = vmax.f32 %v5273, 0.0
  %v5282 = vmax.f32 %v5274, 0.0
  %v5283 = vmax.f32 %v5275, 0.0
  %v5284 = vmax.f32 %v5276, 0.0
  %v5285 = vmax.f32 %v5277, 0.0
  %v5286 = vmax.f32 %v5278, 0.0
  %v5287 = vpack.c.bf16 %v5281, %v5279
  %v5288 = vpack.c.bf16 %v5282, %v5280
  %v5289 = vpack.c.bf16 %v5285, %v5283
  %v5290 = vpack.c.bf16 %v5286, %v5284
  %v5292 = vsel %vm582, %v5289, 0
  %v5295 = vsel %vm582, %v5290, 0
  %5297 = vmatprep.subr.bf16.mxu0 %v5288
  %5298 = vmatpush1.bf16.msra.mxu0 %v5287
  %5299 = vmatprep.subr.bf16.mxu0 %v5295
  %5300 = vmatpush1.bf16.msra.mxu0 %v5292
  %5301 = vmatprep.subr.bf16.mxu0 0
  %5302 = vmatpush1.bf16.msra.mxu0 0
  %5303 = vmatprep.subr.bf16.mxu0 0
  %5304 = vmatpush1.bf16.msra.mxu0 0
  %5305 = vmatprep.subr.bf16.mxu0 0
  %5306 = vmatpush1.bf16.msra.mxu0 0
  %5307 = vmatprep.subr.bf16.mxu0 0
  %5308 = vmatpush1.bf16.msra.mxu0 0
  %5309 = vmatprep.subr.bf16.mxu0 0
  %5310 = vmatpush1.bf16.msra.mxu0 0
  %5311 = vmatprep.subr.bf16.mxu0 0
  %5312 = vmatpush1.bf16.msra.mxu0 0
  %5313 = vmatprep.subr.bf16.mxu0 0
  %5314 = vmatpush1.bf16.msra.mxu0 0
  %5315 = vmatprep.subr.bf16.mxu0 0
  %5316 = vmatpush1.bf16.msra.mxu0 0
  %5317 = vmatprep.subr.bf16.mxu0 0
  %5318 = vmatpush1.bf16.msra.mxu0 0
  %5319 = vmatprep.subr.bf16.mxu0 0
  %5320 = vmatpush1.bf16.msra.mxu0 0
  %5321 = vmatprep.subr.bf16.mxu0 0
  %5322 = vmatpush1.bf16.msra.mxu0 0
  %5323 = vmatprep.subr.bf16.mxu0 0
  %5324 = vmatpush1.bf16.msra.mxu0 0
  %5325 = vmatprep.subr.bf16.mxu0 0
  %5326 = vmatpush1.bf16.msra.mxu0 0
  %5327 = vmatprep.subr.bf16.mxu0 0
  %5328 = vmatpush1.bf16.msra.mxu0 0
  %5329 = vmatprep.mubr.bf16.mxu0 0
  %5330 = vmatmul.mubr.bf16.gmra.mrb[0].mxu0 %v580
  %v5331 = vpop.f32.mrb[0].mxu0
  %v5332 = vadd.f32 0.0, %v5331
  %v5333 = vpop.f32.mrb[0].mxu0
  %v5334 = vadd.f32 0.0, %v5333
  %v5335 = vpop.f32.mrb[0].mxu0
  %v5336 = vadd.f32 0.0, %v5335
  %v5337 = vpop.f32.mrb[0].mxu0
  %v5338 = vadd.f32 0.0, %v5337
  %5339 = vdwg.mxu0
  %v5340 = vpack.c.bf16 %v5336, %v5332
  %v5341 = vpack.c.bf16 %v5338, %v5334
  %v5343 = vsel %vm718, %v5341, 0
  %5345 = vmatprep.subr.bf16.mxu0 0
  %5346 = vmatpush1.bf16.msra.mxu0 %v697
  %5347 = vmatprep.subr.bf16.mxu0 0
  %5348 = vmatpush1.bf16.msra.mxu0 %v698
  %5349 = vmatprep.subr.bf16.mxu0 0
  %5350 = vmatpush1.bf16.msra.mxu0 %v699
  %5351 = vmatprep.subr.bf16.mxu0 0
  %5352 = vmatpush1.bf16.msra.mxu0 %v700
  %5353 = vmatprep.subr.bf16.mxu0 0
  %5354 = vmatpush1.bf16.msra.mxu0 %v701
  %5355 = vmatprep.subr.bf16.mxu0 0
  %5356 = vmatpush1.bf16.msra.mxu0 %v702
  %5357 = vmatprep.subr.bf16.mxu0 0
  %5358 = vmatpush1.bf16.msra.mxu0 %v703
  %5359 = vmatprep.subr.bf16.mxu0 0
  %5360 = vmatpush1.bf16.msra.mxu0 %v704
  %5361 = vmatprep.subr.bf16.mxu0 0
  %5362 = vmatpush1.bf16.msra.mxu0 %v705
  %5363 = vmatprep.subr.bf16.mxu0 0
  %5364 = vmatpush1.bf16.msra.mxu0 %v706
  %5365 = vmatprep.subr.bf16.mxu0 0
  %5366 = vmatpush1.bf16.msra.mxu0 %v724
  %5367 = vmatprep.subr.bf16.mxu0 0
  %5368 = vmatpush1.bf16.msra.mxu0 0
  %5369 = vmatprep.subr.bf16.mxu0 0
  %5370 = vmatpush1.bf16.msra.mxu0 0
  %5371 = vmatprep.subr.bf16.mxu0 0
  %5372 = vmatpush1.bf16.msra.mxu0 0
  %5373 = vmatprep.subr.bf16.mxu0 0
  %5374 = vmatpush1.bf16.msra.mxu0 0
  %5375 = vmatprep.subr.bf16.mxu0 0
  %5376 = vmatpush1.bf16.msra.mxu0 0
  %5377 = vmatprep.mubr.bf16.mxu0 %v5343
  %5378 = vmatmul.mubr.bf16.gmra.mrb[0].mxu0 %v5340
  %v5379 = vpop.f32.mrb[0].mxu0
  %v5380 = vadd.f32 0.0, %v5379
  %v5381 = vpop.f32.mrb[0].mxu0
  %v5382 = vpop.f32.mrb[0].mxu0
  %v5383 = vadd.f32 0.0, %v5382
  %v5384 = vpop.f32.mrb[0].mxu0
  %5385 = vdwg.mxu0
  %v5386 = vpack.c.bf16 %v5383, %v5380
  %v5388 = vshrl.u32 %v5386, 16
  %v5390 = vshll.u32 %v5386, 16
  %v5392 = vrot.slane %v5390, 1
  %v5393 = vor.u32 %v5388, %v5392
  %v5395 = vsel %vm853, %v5393, 0
  %5397 = vmatprep.subr.bf16.mxu0 %v832
  %5398 = vmatpush1.bf16.msra.mxu0 %v831
  %5399 = vmatprep.subr.bf16.mxu0 %v834
  %5400 = vmatpush1.bf16.msra.mxu0 %v833
  %5401 = vmatprep.subr.bf16.mxu0 %v836
  %5402 = vmatpush1.bf16.msra.mxu0 %v835
  %5403 = vmatprep.subr.bf16.mxu0 %v838
  %5404 = vmatpush1.bf16.msra.mxu0 %v837
  %5405 = vmatprep.subr.bf16.mxu0 %v840
  %5406 = vmatpush1.bf16.msra.mxu0 %v839
  %5407 = vmatprep.subr.bf16.mxu0 %v862
  %5408 = vmatpush1.bf16.msra.mxu0 %v859
  %5409 = vmatprep.subr.bf16.mxu0 0
  %5410 = vmatpush1.bf16.msra.mxu0 0
  %5411 = vmatprep.subr.bf16.mxu0 0
  %5412 = vmatpush1.bf16.msra.mxu0 0
  %5413 = vmatprep.subr.bf16.mxu0 0
  %5414 = vmatpush1.bf16.msra.mxu0 0
  %5415 = vmatprep.subr.bf16.mxu0 0
  %5416 = vmatpush1.bf16.msra.mxu0 0
  %5417 = vmatprep.subr.bf16.mxu0 0
  %5418 = vmatpush1.bf16.msra.mxu0 0
  %5419 = vmatprep.subr.bf16.mxu0 0
  %5420 = vmatpush1.bf16.msra.mxu0 0
  %5421 = vmatprep.subr.bf16.mxu0 0
  %5422 = vmatpush1.bf16.msra.mxu0 0
  %5423 = vmatprep.subr.bf16.mxu0 0
  %5424 = vmatpush1.bf16.msra.mxu0 0
  %5425 = vmatprep.subr.bf16.mxu0 0
  %5426 = vmatpush1.bf16.msra.mxu0 0
  %5427 = vmatprep.subr.bf16.mxu0 0
  %5428 = vmatpush1.bf16.msra.mxu0 0
  %5429 = vmatprep.mubr.bf16.mxu0 0
  %5430 = vmatmul.mubr.bf16.gmra.mrb[0].mxu0 %v5395
  %v5431 = vpop.f32.mrb[0].mxu0
  %v5432 = vadd.f32 0.0, %v5431
  %v5433 = vpop.f32.mrb[0].mxu0
  %v5434 = vadd.f32 0.0, %v5433
  %v5435 = vpop.f32.mrb[0].mxu0
  %v5436 = vadd.f32 0.0, %v5435
  %v5437 = vpop.f32.mrb[0].mxu0
  %v5438 = vadd.f32 0.0, %v5437
  %5439 = vdwg.mxu0
  %v5440 = vsel %vm853, %v5386, 0
  %5442 = vmatprep.subr.bf16.mxu0 %v941
  %5443 = vmatpush1.bf16.msra.mxu0 %v940
  %5444 = vmatprep.subr.bf16.mxu0 %v943
  %5445 = vmatpush1.bf16.msra.mxu0 %v942
  %5446 = vmatprep.subr.bf16.mxu0 %v945
  %5447 = vmatpush1.bf16.msra.mxu0 %v944
  %5448 = vmatprep.subr.bf16.mxu0 %v947
  %5449 = vmatpush1.bf16.msra.mxu0 %v946
  %5450 = vmatprep.subr.bf16.mxu0 %v949
  %5451 = vmatpush1.bf16.msra.mxu0 %v948
  %5452 = vmatprep.subr.bf16.mxu0 %v968
  %5453 = vmatpush1.bf16.msra.mxu0 %v965
  %5454 = vmatprep.subr.bf16.mxu0 0
  %5455 = vmatpush1.bf16.msra.mxu0 0
  %5456 = vmatprep.subr.bf16.mxu0 0
  %5457 = vmatpush1.bf16.msra.mxu0 0
  %5458 = vmatprep.subr.bf16.mxu0 0
  %5459 = vmatpush1.bf16.msra.mxu0 0
  %5460 = vmatprep.subr.bf16.mxu0 0
  %5461 = vmatpush1.bf16.msra.mxu0 0
  %5462 = vmatprep.subr.bf16.mxu0 0
  %5463 = vmatpush1.bf16.msra.mxu0 0
  %5464 = vmatprep.subr.bf16.mxu0 0
  %5465 = vmatpush1.bf16.msra.mxu0 0
  %5466 = vmatprep.subr.bf16.mxu0 0
  %5467 = vmatpush1.bf16.msra.mxu0 0
  %5468 = vmatprep.subr.bf16.mxu0 0
  %5469 = vmatpush1.bf16.msra.mxu0 0
  %5470 = vmatprep.subr.bf16.mxu0 0
  %5471 = vmatpush1.bf16.msra.mxu0 0
  %5472 = vmatprep.subr.bf16.mxu0 0
  %5473 = vmatpush1.bf16.msra.mxu0 0
  %5474 = vmatprep.mubr.bf16.mxu0 0
  %5475 = vmatmul.mubr.bf16.gmra.mrb[0].mxu0 %v5440
  %v5476 = vpop.f32.mrb[0].mxu0
  %v5477 = vadd.f32 %v5432, %v5476
  %v5478 = vpop.f32.mrb[0].mxu0
  %v5479 = vadd.f32 %v5434, %v5478
  %v5480 = vpop.f32.mrb[0].mxu0
  %v5481 = vadd.f32 %v5436, %v5480
  %v5482 = vpop.f32.mrb[0].mxu0
  %v5483 = vadd.f32 %v5438, %v5482
  %5484 = vdwg.mxu0
  %v5486 = vrot.slane %v5386, 1
  %v5488 = vsel %vm853, %v5486, 0
  %5490 = vmatprep.subr.bf16.mxu0 %v1061
  %5491 = vmatpush1.bf16.msra.mxu0 %v1060
  %5492 = vmatprep.subr.bf16.mxu0 %v1063
  %5493 = vmatpush1.bf16.msra.mxu0 %v1062
  %5494 = vmatprep.subr.bf16.mxu0 %v1065
  %5495 = vmatpush1.bf16.msra.mxu0 %v1064
  %5496 = vmatprep.subr.bf16.mxu0 %v1067
  %5497 = vmatpush1.bf16.msra.mxu0 %v1066
  %5498 = vmatprep.subr.bf16.mxu0 %v1069
  %5499 = vmatpush1.bf16.msra.mxu0 %v1068
  %5500 = vmatprep.subr.bf16.mxu0 %v1089
  %5501 = vmatpush1.bf16.msra.mxu0 %v1086
  %5502 = vmatprep.subr.bf16.mxu0 0
  %5503 = vmatpush1.bf16.msra.mxu0 0
  %5504 = vmatprep.subr.bf16.mxu0 0
  %5505 = vmatpush1.bf16.msra.mxu0 0
  %5506 = vmatprep.subr.bf16.mxu0 0
  %5507 = vmatpush1.bf16.msra.mxu0 0
  %5508 = vmatprep.subr.bf16.mxu0 0
  %5509 = vmatpush1.bf16.msra.mxu0 0
  %5510 = vmatprep.subr.bf16.mxu0 0
  %5511 = vmatpush1.bf16.msra.mxu0 0
  %5512 = vmatprep.subr.bf16.mxu0 0
  %5513 = vmatpush1.bf16.msra.mxu0 0
  %5514 = vmatprep.subr.bf16.mxu0 0
  %5515 = vmatpush1.bf16.msra.mxu0 0
  %5516 = vmatprep.subr.bf16.mxu0 0
  %5517 = vmatpush1.bf16.msra.mxu0 0
  %5518 = vmatprep.subr.bf16.mxu0 0
  %5519 = vmatpush1.bf16.msra.mxu0 0
  %5520 = vmatprep.subr.bf16.mxu0 0
  %5521 = vmatpush1.bf16.msra.mxu0 0
  %5522 = vmatprep.mubr.bf16.mxu0 0
  %5523 = vmatmul.mubr.bf16.gmra.mrb[0].mxu0 %v5488
  %v5524 = vpop.f32.mrb[0].mxu0
  %v5525 = vadd.f32 0.0, %v5524
  %v5526 = vpop.f32.mrb[0].mxu0
  %v5527 = vadd.f32 0.0, %v5526
  %v5528 = vpop.f32.mrb[0].mxu0
  %v5529 = vadd.f32 0.0, %v5528
  %v5530 = vpop.f32.mrb[0].mxu0
  %v5531 = vadd.f32 0.0, %v5530
  %5532 = vdwg.mxu0
  %v5533 = vadd.f32 %v5477, %v5525
  %v5534 = vadd.f32 %v5479, %v5527
  %v5535 = vadd.f32 %v5481, %v5529
  %v5536 = vadd.f32 %v5483, %v5531
  %v5537 = vrot.slane %v5388, 1
  %v5538 = vrot.slane %v5390, 2
  %v5539 = vor.u32 %v5537, %v5538
  %v5541 = vsel %vm853, %v5539, 0
  %5543 = vmatprep.subr.bf16.mxu0 %v1187
  %5544 = vmatpush1.bf16.msra.mxu0 %v1186
  %5545 = vmatprep.subr.bf16.mxu0 %v1189
  %5546 = vmatpush1.bf16.msra.mxu0 %v1188
  %5547 = vmatprep.subr.bf16.mxu0 %v1191
  %5548 = vmatpush1.bf16.msra.mxu0 %v1190
  %5549 = vmatprep.subr.bf16.mxu0 %v1193
  %5550 = vmatpush1.bf16.msra.mxu0 %v1192
  %5551 = vmatprep.subr.bf16.mxu0 %v1195
  %5552 = vmatpush1.bf16.msra.mxu0 %v1194
  %5553 = vmatprep.subr.bf16.mxu0 %v1215
  %5554 = vmatpush1.bf16.msra.mxu0 %v1212
  %5555 = vmatprep.subr.bf16.mxu0 0
  %5556 = vmatpush1.bf16.msra.mxu0 0
  %5557 = vmatprep.subr.bf16.mxu0 0
  %5558 = vmatpush1.bf16.msra.mxu0 0
  %5559 = vmatprep.subr.bf16.mxu0 0
  %5560 = vmatpush1.bf16.msra.mxu0 0
  %5561 = vmatprep.subr.bf16.mxu0 0
  %5562 = vmatpush1.bf16.msra.mxu0 0
  %5563 = vmatprep.subr.bf16.mxu0 0
  %5564 = vmatpush1.bf16.msra.mxu0 0
  %5565 = vmatprep.subr.bf16.mxu0 0
  %5566 = vmatpush1.bf16.msra.mxu0 0
  %5567 = vmatprep.subr.bf16.mxu0 0
  %5568 = vmatpush1.bf16.msra.mxu0 0
  %5569 = vmatprep.subr.bf16.mxu0 0
  %5570 = vmatpush1.bf16.msra.mxu0 0
  %5571 = vmatprep.subr.bf16.mxu0 0
  %5572 = vmatpush1.bf16.msra.mxu0 0
  %5573 = vmatprep.subr.bf16.mxu0 0
  %5574 = vmatpush1.bf16.msra.mxu0 0
  %5575 = vmatprep.mubr.bf16.mxu0 0
  %5576 = vmatmul.mubr.bf16.gmra.mrb[0].mxu0 %v5541
  %v5577 = vpop.f32.mrb[0].mxu0
  %v5578 = vadd.f32 0.0, %v5577
  %v5579 = vpop.f32.mrb[0].mxu0
  %v5580 = vadd.f32 0.0, %v5579
  %v5581 = vpop.f32.mrb[0].mxu0
  %v5582 = vadd.f32 0.0, %v5581
  %v5583 = vpop.f32.mrb[0].mxu0
  %v5584 = vadd.f32 0.0, %v5583
  %5585 = vdwg.mxu0
  %v5586 = vadd.f32 %v5533, %v5578
  %v5587 = vadd.f32 %v5534, %v5580
  %v5588 = vadd.f32 %v5535, %v5582
  %v5589 = vadd.f32 %v5536, %v5584
  %v5590 = vrot.slane %v5386, 2
  %v5592 = vsel %vm853, %v5590, 0
  %5594 = vmatprep.subr.bf16.mxu0 %v1311
  %5595 = vmatpush1.bf16.msra.mxu0 %v1310
  %5596 = vmatprep.subr.bf16.mxu0 %v1313
  %5597 = vmatpush1.bf16.msra.mxu0 %v1312
  %5598 = vmatprep.subr.bf16.mxu0 %v1315
  %5599 = vmatpush1.bf16.msra.mxu0 %v1314
  %5600 = vmatprep.subr.bf16.mxu0 %v1317
  %5601 = vmatpush1.bf16.msra.mxu0 %v1316
  %5602 = vmatprep.subr.bf16.mxu0 %v1319
  %5603 = vmatpush1.bf16.msra.mxu0 %v1318
  %5604 = vmatprep.subr.bf16.mxu0 %v1339
  %5605 = vmatpush1.bf16.msra.mxu0 %v1336
  %5606 = vmatprep.subr.bf16.mxu0 0
  %5607 = vmatpush1.bf16.msra.mxu0 0
  %5608 = vmatprep.subr.bf16.mxu0 0
  %5609 = vmatpush1.bf16.msra.mxu0 0
  %5610 = vmatprep.subr.bf16.mxu0 0
  %5611 = vmatpush1.bf16.msra.mxu0 0
  %5612 = vmatprep.subr.bf16.mxu0 0
  %5613 = vmatpush1.bf16.msra.mxu0 0
  %5614 = vmatprep.subr.bf16.mxu0 0
  %5615 = vmatpush1.bf16.msra.mxu0 0
  %5616 = vmatprep.subr.bf16.mxu0 0
  %5617 = vmatpush1.bf16.msra.mxu0 0
  %5618 = vmatprep.subr.bf16.mxu0 0
  %5619 = vmatpush1.bf16.msra.mxu0 0
  %5620 = vmatprep.subr.bf16.mxu0 0
  %5621 = vmatpush1.bf16.msra.mxu0 0
  %5622 = vmatprep.subr.bf16.mxu0 0
  %5623 = vmatpush1.bf16.msra.mxu0 0
  %5624 = vmatprep.subr.bf16.mxu0 0
  %5625 = vmatpush1.bf16.msra.mxu0 0
  %5626 = vmatprep.mubr.bf16.mxu0 0
  %5627 = vmatmul.mubr.bf16.gmra.mrb[0].mxu0 %v5592
  %v5628 = vpop.f32.mrb[0].mxu0
  %v5629 = vadd.f32 0.0, %v5628
  %v5630 = vpop.f32.mrb[0].mxu0
  %v5631 = vadd.f32 0.0, %v5630
  %v5632 = vpop.f32.mrb[0].mxu0
  %v5633 = vadd.f32 0.0, %v5632
  %v5634 = vpop.f32.mrb[0].mxu0
  %v5635 = vadd.f32 0.0, %v5634
  %5636 = vdwg.mxu0
  %v5637 = vadd.f32 %v5586, %v5629
  %v5638 = vadd.f32 %v5587, %v5631
  %v5639 = vadd.f32 %v5588, %v5633
  %v5640 = vadd.f32 %v5589, %v5635
  %v5641 = vadd.f32 %v5637, %v1393
  %v5642 = vadd.f32 %v5638, %v1397
  %v5643 = vadd.f32 %v5639, %v1393
  %v5644 = vadd.f32 %v5640, %v1397
  %v5645 = vmax.f32 %v5641, 0.0
  %v5646 = vmax.f32 %v5642, 0.0
  %v5647 = vmax.f32 %v5643, 0.0
  %v5648 = vmax.f32 %v5644, 0.0
  %v5649 = vpack.c.bf16 %v5647, %v5645
  %v5650 = vpack.c.bf16 %v5648, %v5646
  %v5652 = vsel %vm1415, %v5649, 0
  %v5655 = vsel %vm1415, %v5650, 0
  %5657 = vmatprep.subr.bf16.mxu0 %v5655
  %5658 = vmatpush1.bf16.msra.mxu0 %v5652
  %5659 = vmatprep.subr.bf16.mxu0 0
  %5660 = vmatpush1.bf16.msra.mxu0 0
  %5661 = vmatprep.subr.bf16.mxu0 0
  %5662 = vmatpush1.bf16.msra.mxu0 0
  %5663 = vmatprep.subr.bf16.mxu0 0
  %5664 = vmatpush1.bf16.msra.mxu0 0
  %5665 = vmatprep.subr.bf16.mxu0 0
  %5666 = vmatpush1.bf16.msra.mxu0 0
  %5667 = vmatprep.subr.bf16.mxu0 0
  %5668 = vmatpush1.bf16.msra.mxu0 0
  %5669 = vmatprep.subr.bf16.mxu0 0
  %5670 = vmatpush1.bf16.msra.mxu0 0
  %5671 = vmatprep.subr.bf16.mxu0 0
  %5672 = vmatpush1.bf16.msra.mxu0 0
  %5673 = vmatprep.subr.bf16.mxu0 0
  %5674 = vmatpush1.bf16.msra.mxu0 0
  %5675 = vmatprep.subr.bf16.mxu0 0
  %5676 = vmatpush1.bf16.msra.mxu0 0
  %5677 = vmatprep.subr.bf16.mxu0 0
  %5678 = vmatpush1.bf16.msra.mxu0 0
  %5679 = vmatprep.subr.bf16.mxu0 0
  %5680 = vmatpush1.bf16.msra.mxu0 0
  %5681 = vmatprep.subr.bf16.mxu0 0
  %5682 = vmatpush1.bf16.msra.mxu0 0
  %5683 = vmatprep.subr.bf16.mxu0 0
  %5684 = vmatpush1.bf16.msra.mxu0 0
  %5685 = vmatprep.subr.bf16.mxu0 0
  %5686 = vmatpush1.bf16.msra.mxu0 0
  %5687 = vmatprep.subr.bf16.mxu0 0
  %5688 = vmatpush1.bf16.msra.mxu0 0
  %5689 = vmatprep.mubr.bf16.mxu0 0
  %5690 = vmatmul.mubr.bf16.gmra.mrb[0].mxu0 %v1413
  %v5691 = vpop.f32.mrb[0].mxu0
  %v5692 = vadd.f32 0.0, %v5691
  %v5693 = vpop.f32.mrb[0].mxu0
  %v5694 = vadd.f32 0.0, %v5693
  %v5695 = vpop.f32.mrb[0].mxu0
  %v5696 = vpop.f32.mrb[0].mxu0
  %5697 = vdwg.mxu0
  %v5698 = vpack.c.bf16 %v5692, %v5692
  %v5699 = vpack.c.bf16 %v5694, %v5694
  %v5701 = vsel %vm110, %v5699, 0
  %5703 = vmatprep.subr.bf16.mxu0 0
  %5704 = vmatpush1.bf16.msra.mxu0 %v1525
  %5705 = vmatprep.subr.bf16.mxu0 0
  %5706 = vmatpush1.bf16.msra.mxu0 %v1526
  %5707 = vmatprep.subr.bf16.mxu0 0
  %5708 = vmatpush1.bf16.msra.mxu0 %v1527
  %5709 = vmatprep.subr.bf16.mxu0 0
  %5710 = vmatpush1.bf16.msra.mxu0 %v1528
  %5711 = vmatprep.subr.bf16.mxu0 0
  %5712 = vmatpush1.bf16.msra.mxu0 %v1529
  %5713 = vmatprep.subr.bf16.mxu0 0
  %5714 = vmatpush1.bf16.msra.mxu0 %v1530
  %5715 = vmatprep.subr.bf16.mxu0 0
  %5716 = vmatpush1.bf16.msra.mxu0 %v1531
  %5717 = vmatprep.subr.bf16.mxu0 0
  %5718 = vmatpush1.bf16.msra.mxu0 %v1532
  %5719 = vmatprep.subr.bf16.mxu0 0
  %5720 = vmatpush1.bf16.msra.mxu0 %v1533
  %5721 = vmatprep.subr.bf16.mxu0 0
  %5722 = vmatpush1.bf16.msra.mxu0 %v1534
  %5723 = vmatprep.subr.bf16.mxu0 0
  %5724 = vmatpush1.bf16.msra.mxu0 0
  %5725 = vmatprep.subr.bf16.mxu0 0
  %5726 = vmatpush1.bf16.msra.mxu0 0
  %5727 = vmatprep.subr.bf16.mxu0 0
  %5728 = vmatpush1.bf16.msra.mxu0 0
  %5729 = vmatprep.subr.bf16.mxu0 0
  %5730 = vmatpush1.bf16.msra.mxu0 0
  %5731 = vmatprep.subr.bf16.mxu0 0
  %5732 = vmatpush1.bf16.msra.mxu0 0
  %5733 = vmatprep.subr.bf16.mxu0 0
  %5734 = vmatpush1.bf16.msra.mxu0 0
  %5735 = vmatprep.mubr.bf16.mxu0 %v5701
  %5736 = vmatmul.mubr.bf16.gmra.mrb[0].mxu0 %v5698
  %v5737 = vpop.f32.mrb[0].mxu0
  %v5738 = vadd.f32 0.0, %v5737
  %v5739 = vpop.f32.mrb[0].mxu0
  %v5740 = vpop.f32.mrb[0].mxu0
  %v5741 = vpop.f32.mrb[0].mxu0
  %5742 = vdwg.mxu0
  %v5743 = vld [vmem:[%s0 + $0x60] sm:$0xf]
  %v5744 = vld [vmem:[%s0 + $0x64] sm:$0xf]
  %v5745 = vld [vmem:[%s0 + $0x68] sm:$0xf]
  %v5746 = vld [vmem:[%s0 + $0x6c] sm:$0xf]
  %v5751 = vunpack.c.l.b16 %v5743
  %v5752 = vunpack.c.l.b16 %v5744
  %v5753 = vunpack.c.l.b16 %v5745
  %v5754 = vunpack.c.l.b16 %v5746
  %v5755 = vpack.c.b16 %v5752, %v5751
  %v5756 = vpack.c.b16 %v5754, %v5753
  %v5758 = vshrl.u32 %v5755, 16
  %v5760 = vshll.u32 %v5755, 16
  %v5762 = vrot.slane %v5760, 1
  %v5763 = vor.u32 %v5758, %v5762
  %v5765 = vshll.u32 %v5756, 16
  %v5767 = vrot.slane %v5765, 1
  %v5768 = vsel %vm74, %v5763, %v5767
  %v5769 = vshrl.u32 %v5756, 16
  %v5771 = vor.u32 %v5769, %v5767
  %v5773 = vsel %vm110, %v5768, 0
  %v5776 = vsel %vm110, %v5771, 0
  %5778 = vmatprep.subr.bf16.mxu0 %v103
  %5779 = vmatpush1.bf16.msra.mxu0 %v102
  %5780 = vmatprep.subr.bf16.mxu0 %v105
  %5781 = vmatpush1.bf16.msra.mxu0 %v104
  %5782 = vmatprep.subr.bf16.mxu0 0
  %5783 = vmatpush1.bf16.msra.mxu0 0
  %5784 = vmatprep.subr.bf16.mxu0 0
  %5785 = vmatpush1.bf16.msra.mxu0 0
  %5786 = vmatprep.subr.bf16.mxu0 0
  %5787 = vmatpush1.bf16.msra.mxu0 0
  %5788 = vmatprep.subr.bf16.mxu0 0
  %5789 = vmatpush1.bf16.msra.mxu0 0
  %5790 = vmatprep.subr.bf16.mxu0 0
  %5791 = vmatpush1.bf16.msra.mxu0 0
  %5792 = vmatprep.subr.bf16.mxu0 0
  %5793 = vmatpush1.bf16.msra.mxu0 0
  %5794 = vmatprep.subr.bf16.mxu0 0
  %5795 = vmatpush1.bf16.msra.mxu0 0
  %5796 = vmatprep.subr.bf16.mxu0 0
  %5797 = vmatpush1.bf16.msra.mxu0 0
  %5798 = vmatprep.subr.bf16.mxu0 0
  %5799 = vmatpush1.bf16.msra.mxu0 0
  %5800 = vmatprep.subr.bf16.mxu0 0
  %5801 = vmatpush1.bf16.msra.mxu0 0
  %5802 = vmatprep.subr.bf16.mxu0 0
  %5803 = vmatpush1.bf16.msra.mxu0 0
  %5804 = vmatprep.subr.bf16.mxu0 0
  %5805 = vmatpush1.bf16.msra.mxu0 0
  %5806 = vmatprep.subr.bf16.mxu0 0
  %5807 = vmatpush1.bf16.msra.mxu0 0
  %5808 = vmatprep.subr.bf16.mxu0 0
  %5809 = vmatpush1.bf16.msra.mxu0 0
  %5810 = vmatprep.mubr.bf16.mxu0 0
  %5811 = vmatmul.mubr.bf16.gmra.mrb[0].mxu0 %v5773
  %v5812 = vpop.f32.mrb[0].mxu0
  %v5813 = vadd.f32 0.0, %v5812
  %v5814 = vpop.f32.mrb[0].mxu0
  %v5815 = vadd.f32 0.0, %v5814
  %v5816 = vpop.f32.mrb[0].mxu0
  %v5817 = vadd.f32 0.0, %v5816
  %v5818 = vpop.f32.mrb[0].mxu0
  %v5819 = vadd.f32 0.0, %v5818
  %5820 = vmatprep.mubr.bf16.mxu0 0
  %5821 = vmatmul.mubr.bf16.gmra.mrb[0].mxu0 %v5776
  %v5822 = vpop.f32.mrb[0].mxu0
  %v5823 = vadd.f32 0.0, %v5822
  %v5824 = vpop.f32.mrb[0].mxu0
  %v5825 = vadd.f32 0.0, %v5824
  %v5826 = vpop.f32.mrb[0].mxu0
  %v5827 = vadd.f32 0.0, %v5826
  %v5828 = vpop.f32.mrb[0].mxu0
  %v5829 = vadd.f32 0.0, %v5828
  %5830 = vdwg.mxu0
  %v5831 = vsel %vm110, %v5755, 0
  %v5833 = vsel %vm110, %v5756, 0
  %5835 = vmatprep.subr.bf16.mxu0 %v183
  %5836 = vmatpush1.bf16.msra.mxu0 %v182
  %5837 = vmatprep.subr.bf16.mxu0 %v185
  %5838 = vmatpush1.bf16.msra.mxu0 %v184
  %5839 = vmatprep.subr.bf16.mxu0 0
  %5840 = vmatpush1.bf16.msra.mxu0 0
  %5841 = vmatprep.subr.bf16.mxu0 0
  %5842 = vmatpush1.bf16.msra.mxu0 0
  %5843 = vmatprep.subr.bf16.mxu0 0
  %5844 = vmatpush1.bf16.msra.mxu0 0
  %5845 = vmatprep.subr.bf16.mxu0 0
  %5846 = vmatpush1.bf16.msra.mxu0 0
  %5847 = vmatprep.subr.bf16.mxu0 0
  %5848 = vmatpush1.bf16.msra.mxu0 0
  %5849 = vmatprep.subr.bf16.mxu0 0
  %5850 = vmatpush1.bf16.msra.mxu0 0
  %5851 = vmatprep.subr.bf16.mxu0 0
  %5852 = vmatpush1.bf16.msra.mxu0 0
  %5853 = vmatprep.subr.bf16.mxu0 0
  %5854 = vmatpush1.bf16.msra.mxu0 0
  %5855 = vmatprep.subr.bf16.mxu0 0
  %5856 = vmatpush1.bf16.msra.mxu0 0
  %5857 = vmatprep.subr.bf16.mxu0 0
  %5858 = vmatpush1.bf16.msra.mxu0 0
  %5859 = vmatprep.subr.bf16.mxu0 0
  %5860 = vmatpush1.bf16.msra.mxu0 0
  %5861 = vmatprep.subr.bf16.mxu0 0
  %5862 = vmatpush1.bf16.msra.mxu0 0
  %5863 = vmatprep.subr.bf16.mxu0 0
  %5864 = vmatpush1.bf16.msra.mxu0 0
  %5865 = vmatprep.subr.bf16.mxu0 0
  %5866 = vmatpush1.bf16.msra.mxu0 0
  %5867 = vmatprep.mubr.bf16.mxu0 0
  %5868 = vmatmul.mubr.bf16.gmra.mrb[0].mxu0 %v5831
  %v5869 = vpop.f32.mrb[0].mxu0
  %v5870 = vadd.f32 %v5813, %v5869
  %v5871 = vpop.f32.mrb[0].mxu0
  %v5872 = vadd.f32 %v5815, %v5871
  %v5873 = vpop.f32.mrb[0].mxu0
  %v5874 = vadd.f32 %v5817, %v5873
  %v5875 = vpop.f32.mrb[0].mxu0
  %v5876 = vadd.f32 %v5819, %v5875
  %5877 = vmatprep.mubr.bf16.mxu0 0
  %5878 = vmatmul.mubr.bf16.gmra.mrb[0].mxu0 %v5833
  %v5879 = vpop.f32.mrb[0].mxu0
  %v5880 = vadd.f32 %v5823, %v5879
  %v5881 = vpop.f32.mrb[0].mxu0
  %v5882 = vadd.f32 %v5825, %v5881
  %v5883 = vpop.f32.mrb[0].mxu0
  %v5884 = vadd.f32 %v5827, %v5883
  %v5885 = vpop.f32.mrb[0].mxu0
  %v5886 = vadd.f32 %v5829, %v5885
  %5887 = vdwg.mxu0
  %v5888 = vrot.slane %v5755, 1
  %v5889 = vrot.slane %v5756, 1
  %v5890 = vsel %vm252, %v5888, %v5889
  %v5892 = vsel %vm110, %v5890, 0
  %v5895 = vsel %vm110, %v5889, 0
  %5897 = vmatprep.subr.bf16.mxu0 %v269
  %5898 = vmatpush1.bf16.msra.mxu0 %v268
  %5899 = vmatprep.subr.bf16.mxu0 %v271
  %5900 = vmatpush1.bf16.msra.mxu0 %v270
  %5901 = vmatprep.subr.bf16.mxu0 0
  %5902 = vmatpush1.bf16.msra.mxu0 0
  %5903 = vmatprep.subr.bf16.mxu0 0
  %5904 = vmatpush1.bf16.msra.mxu0 0
  %5905 = vmatprep.subr.bf16.mxu0 0
  %5906 = vmatpush1.bf16.msra.mxu0 0
  %5907 = vmatprep.subr.bf16.mxu0 0
  %5908 = vmatpush1.bf16.msra.mxu0 0
  %5909 = vmatprep.subr.bf16.mxu0 0
  %5910 = vmatpush1.bf16.msra.mxu0 0
  %5911 = vmatprep.subr.bf16.mxu0 0
  %5912 = vmatpush1.bf16.msra.mxu0 0
  %5913 = vmatprep.subr.bf16.mxu0 0
  %5914 = vmatpush1.bf16.msra.mxu0 0
  %5915 = vmatprep.subr.bf16.mxu0 0
  %5916 = vmatpush1.bf16.msra.mxu0 0
  %5917 = vmatprep.subr.bf16.mxu0 0
  %5918 = vmatpush1.bf16.msra.mxu0 0
  %5919 = vmatprep.subr.bf16.mxu0 0
  %5920 = vmatpush1.bf16.msra.mxu0 0
  %5921 = vmatprep.subr.bf16.mxu0 0
  %5922 = vmatpush1.bf16.msra.mxu0 0
  %5923 = vmatprep.subr.bf16.mxu0 0
  %5924 = vmatpush1.bf16.msra.mxu0 0
  %5925 = vmatprep.subr.bf16.mxu0 0
  %5926 = vmatpush1.bf16.msra.mxu0 0
  %5927 = vmatprep.subr.bf16.mxu0 0
  %5928 = vmatpush1.bf16.msra.mxu0 0
  %5929 = vmatprep.mubr.bf16.mxu0 0
  %5930 = vmatmul.mubr.bf16.gmra.mrb[0].mxu0 %v5892
  %v5931 = vpop.f32.mrb[0].mxu0
  %v5932 = vadd.f32 0.0, %v5931
  %v5933 = vpop.f32.mrb[0].mxu0
  %v5934 = vadd.f32 0.0, %v5933
  %v5935 = vpop.f32.mrb[0].mxu0
  %v5936 = vadd.f32 0.0, %v5935
  %v5937 = vpop.f32.mrb[0].mxu0
  %v5938 = vadd.f32 0.0, %v5937
  %5939 = vmatprep.mubr.bf16.mxu0 0
  %5940 = vmatmul.mubr.bf16.gmra.mrb[0].mxu0 %v5895
  %v5941 = vpop.f32.mrb[0].mxu0
  %v5942 = vadd.f32 0.0, %v5941
  %v5943 = vpop.f32.mrb[0].mxu0
  %v5944 = vadd.f32 0.0, %v5943
  %v5945 = vpop.f32.mrb[0].mxu0
  %v5946 = vadd.f32 0.0, %v5945
  %v5947 = vpop.f32.mrb[0].mxu0
  %v5948 = vadd.f32 0.0, %v5947
  %5949 = vdwg.mxu0
  %v5950 = vadd.f32 %v5870, %v5932
  %v5951 = vadd.f32 %v5872, %v5934
  %v5952 = vadd.f32 %v5874, %v5936
  %v5953 = vadd.f32 %v5876, %v5938
  %v5954 = vadd.f32 %v5880, %v5942
  %v5955 = vadd.f32 %v5882, %v5944
  %v5956 = vadd.f32 %v5884, %v5946
  %v5957 = vadd.f32 %v5886, %v5948
  %v5958 = vrot.slane %v5758, 1
  %v5959 = vrot.slane %v5760, 2
  %v5960 = vor.u32 %v5958, %v5959
  %v5961 = vrot.slane %v5769, 1
  %v5962 = vrot.slane %v5765, 2
  %v5963 = vor.u32 %v5961, %v5962
  %v5964 = vsel %vm348, %v5960, %v5963
  %v5966 = vsel %vm110, %v5964, 0
  %v5969 = vsel %vm110, %v5963, 0
  %5971 = vmatprep.subr.bf16.mxu0 %v369
  %5972 = vmatpush1.bf16.msra.mxu0 %v368
  %5973 = vmatprep.subr.bf16.mxu0 %v371
  %5974 = vmatpush1.bf16.msra.mxu0 %v370
  %5975 = vmatprep.subr.bf16.mxu0 0
  %5976 = vmatpush1.bf16.msra.mxu0 0
  %5977 = vmatprep.subr.bf16.mxu0 0
  %5978 = vmatpush1.bf16.msra.mxu0 0
  %5979 = vmatprep.subr.bf16.mxu0 0
  %5980 = vmatpush1.bf16.msra.mxu0 0
  %5981 = vmatprep.subr.bf16.mxu0 0
  %5982 = vmatpush1.bf16.msra.mxu0 0
  %5983 = vmatprep.subr.bf16.mxu0 0
  %5984 = vmatpush1.bf16.msra.mxu0 0
  %5985 = vmatprep.subr.bf16.mxu0 0
  %5986 = vmatpush1.bf16.msra.mxu0 0
  %5987 = vmatprep.subr.bf16.mxu0 0
  %5988 = vmatpush1.bf16.msra.mxu0 0
  %5989 = vmatprep.subr.bf16.mxu0 0
  %5990 = vmatpush1.bf16.msra.mxu0 0
  %5991 = vmatprep.subr.bf16.mxu0 0
  %5992 = vmatpush1.bf16.msra.mxu0 0
  %5993 = vmatprep.subr.bf16.mxu0 0
  %5994 = vmatpush1.bf16.msra.mxu0 0
  %5995 = vmatprep.subr.bf16.mxu0 0
  %5996 = vmatpush1.bf16.msra.mxu0 0
  %5997 = vmatprep.subr.bf16.mxu0 0
  %5998 = vmatpush1.bf16.msra.mxu0 0
  %5999 = vmatprep.subr.bf16.mxu0 0
  %6000 = vmatpush1.bf16.msra.mxu0 0
  %6001 = vmatprep.subr.bf16.mxu0 0
  %6002 = vmatpush1.bf16.msra.mxu0 0
  %6003 = vmatprep.mubr.bf16.mxu0 0
  %6004 = vmatmul.mubr.bf16.gmra.mrb[0].mxu0 %v5966
  %v6005 = vpop.f32.mrb[0].mxu0
  %v6006 = vadd.f32 0.0, %v6005
  %v6007 = vpop.f32.mrb[0].mxu0
  %v6008 = vadd.f32 0.0, %v6007
  %v6009 = vpop.f32.mrb[0].mxu0
  %v6010 = vadd.f32 0.0, %v6009
  %v6011 = vpop.f32.mrb[0].mxu0
  %v6012 = vadd.f32 0.0, %v6011
  %6013 = vmatprep.mubr.bf16.mxu0 0
  %6014 = vmatmul.mubr.bf16.gmra.mrb[0].mxu0 %v5969
  %v6015 = vpop.f32.mrb[0].mxu0
  %v6016 = vadd.f32 0.0, %v6015
  %v6017 = vpop.f32.mrb[0].mxu0
  %v6018 = vadd.f32 0.0, %v6017
  %v6019 = vpop.f32.mrb[0].mxu0
  %v6020 = vadd.f32 0.0, %v6019
  %v6021 = vpop.f32.mrb[0].mxu0
  %v6022 = vadd.f32 0.0, %v6021
  %6023 = vdwg.mxu0
  %v6024 = vadd.f32 %v5950, %v6006
  %v6025 = vadd.f32 %v5951, %v6008
  %v6026 = vadd.f32 %v5952, %v6010
  %v6027 = vadd.f32 %v5953, %v6012
  %v6028 = vadd.f32 %v5954, %v6016
  %v6029 = vadd.f32 %v5955, %v6018
  %v6030 = vadd.f32 %v5956, %v6020
  %v6031 = vadd.f32 %v5957, %v6022
  %v6032 = vrot.slane %v5755, 2
  %v6033 = vrot.slane %v5756, 2
  %v6034 = vsel %vm448, %v6032, %v6033
  %v6036 = vsel %vm110, %v6034, 0
  %v6039 = vsel %vm110, %v6033, 0
  %6041 = vmatprep.subr.bf16.mxu0 %v465
  %6042 = vmatpush1.bf16.msra.mxu0 %v464
  %6043 = vmatprep.subr.bf16.mxu0 %v467
  %6044 = vmatpush1.bf16.msra.mxu0 %v466
  %6045 = vmatprep.subr.bf16.mxu0 0
  %6046 = vmatpush1.bf16.msra.mxu0 0
  %6047 = vmatprep.subr.bf16.mxu0 0
  %6048 = vmatpush1.bf16.msra.mxu0 0
  %6049 = vmatprep.subr.bf16.mxu0 0
  %6050 = vmatpush1.bf16.msra.mxu0 0
  %6051 = vmatprep.subr.bf16.mxu0 0
  %6052 = vmatpush1.bf16.msra.mxu0 0
  %6053 = vmatprep.subr.bf16.mxu0 0
  %6054 = vmatpush1.bf16.msra.mxu0 0
  %6055 = vmatprep.subr.bf16.mxu0 0
  %6056 = vmatpush1.bf16.msra.mxu0 0
  %6057 = vmatprep.subr.bf16.mxu0 0
  %6058 = vmatpush1.bf16.msra.mxu0 0
  %6059 = vmatprep.subr.bf16.mxu0 0
  %6060 = vmatpush1.bf16.msra.mxu0 0
  %6061 = vmatprep.subr.bf16.mxu0 0
  %6062 = vmatpush1.bf16.msra.mxu0 0
  %6063 = vmatprep.subr.bf16.mxu0 0
  %6064 = vmatpush1.bf16.msra.mxu0 0
  %6065 = vmatprep.subr.bf16.mxu0 0
  %6066 = vmatpush1.bf16.msra.mxu0 0
  %6067 = vmatprep.subr.bf16.mxu0 0
  %6068 = vmatpush1.bf16.msra.mxu0 0
  %6069 = vmatprep.subr.bf16.mxu0 0
  %6070 = vmatpush1.bf16.msra.mxu0 0
  %6071 = vmatprep.subr.bf16.mxu0 0
  %6072 = vmatpush1.bf16.msra.mxu0 0
  %6073 = vmatprep.mubr.bf16.mxu0 0
  %6074 = vmatmul.mubr.bf16.gmra.mrb[0].mxu0 %v6036
  %v6075 = vpop.f32.mrb[0].mxu0
  %v6076 = vadd.f32 0.0, %v6075
  %v6077 = vpop.f32.mrb[0].mxu0
  %v6078 = vadd.f32 0.0, %v6077
  %v6079 = vpop.f32.mrb[0].mxu0
  %v6080 = vadd.f32 0.0, %v6079
  %v6081 = vpop.f32.mrb[0].mxu0
  %v6082 = vadd.f32 0.0, %v6081
  %6083 = vmatprep.mubr.bf16.mxu0 0
  %6084 = vmatmul.mubr.bf16.gmra.mrb[0].mxu0 %v6039
  %v6085 = vpop.f32.mrb[0].mxu0
  %v6086 = vadd.f32 0.0, %v6085
  %v6087 = vpop.f32.mrb[0].mxu0
  %v6088 = vadd.f32 0.0, %v6087
  %v6089 = vpop.f32.mrb[0].mxu0
  %v6090 = vadd.f32 0.0, %v6089
  %v6091 = vpop.f32.mrb[0].mxu0
  %v6092 = vadd.f32 0.0, %v6091
  %6093 = vdwg.mxu0
  %v6094 = vadd.f32 %v6024, %v6076
  %v6095 = vadd.f32 %v6025, %v6078
  %v6096 = vadd.f32 %v6026, %v6080
  %v6097 = vadd.f32 %v6027, %v6082
  %v6098 = vadd.f32 %v6028, %v6086
  %v6099 = vadd.f32 %v6029, %v6088
  %v6100 = vadd.f32 %v6030, %v6090
  %v6101 = vadd.f32 %v6031, %v6092
  %v6102 = vadd.f32 %v6094, %v544
  %v6103 = vadd.f32 %v6095, %v548
  %v6104 = vadd.f32 %v6096, %v544
  %v6105 = vadd.f32 %v6097, %v548
  %v6106 = vadd.f32 %v6098, %v544
  %v6107 = vadd.f32 %v6099, %v548
  %v6108 = vadd.f32 %v6100, %v544
  %v6109 = vadd.f32 %v6101, %v548
  %v6110 = vmax.f32 %v6102, 0.0
  %v6111 = vmax.f32 %v6103, 0.0
  %v6112 = vmax.f32 %v6104, 0.0
  %v6113 = vmax.f32 %v6105, 0.0
  %v6114 = vmax.f32 %v6106, 0.0
  %v6115 = vmax.f32 %v6107, 0.0
  %v6116 = vmax.f32 %v6108, 0.0
  %v6117 = vmax.f32 %v6109, 0.0
  %v6118 = vpack.c.bf16 %v6112, %v6110
  %v6119 = vpack.c.bf16 %v6113, %v6111
  %v6120 = vpack.c.bf16 %v6116, %v6114
  %v6121 = vpack.c.bf16 %v6117, %v6115
  %v6123 = vsel %vm582, %v6120, 0
  %v6126 = vsel %vm582, %v6121, 0
  %6128 = vmatprep.subr.bf16.mxu0 %v6119
  %6129 = vmatpush1.bf16.msra.mxu0 %v6118
  %6130 = vmatprep.subr.bf16.mxu0 %v6126
  %6131 = vmatpush1.bf16.msra.mxu0 %v6123
  %6132 = vmatprep.subr.bf16.mxu0 0
  %6133 = vmatpush1.bf16.msra.mxu0 0
  %6134 = vmatprep.subr.bf16.mxu0 0
  %6135 = vmatpush1.bf16.msra.mxu0 0
  %6136 = vmatprep.subr.bf16.mxu0 0
  %6137 = vmatpush1.bf16.msra.mxu0 0
  %6138 = vmatprep.subr.bf16.mxu0 0
  %6139 = vmatpush1.bf16.msra.mxu0 0
  %6140 = vmatprep.subr.bf16.mxu0 0
  %6141 = vmatpush1.bf16.msra.mxu0 0
  %6142 = vmatprep.subr.bf16.mxu0 0
  %6143 = vmatpush1.bf16.msra.mxu0 0
  %6144 = vmatprep.subr.bf16.mxu0 0
  %6145 = vmatpush1.bf16.msra.mxu0 0
  %6146 = vmatprep.subr.bf16.mxu0 0
  %6147 = vmatpush1.bf16.msra.mxu0 0
  %6148 = vmatprep.subr.bf16.mxu0 0
  %6149 = vmatpush1.bf16.msra.mxu0 0
  %6150 = vmatprep.subr.bf16.mxu0 0
  %6151 = vmatpush1.bf16.msra.mxu0 0
  %6152 = vmatprep.subr.bf16.mxu0 0
  %6153 = vmatpush1.bf16.msra.mxu0 0
  %6154 = vmatprep.subr.bf16.mxu0 0
  %6155 = vmatpush1.bf16.msra.mxu0 0
  %6156 = vmatprep.subr.bf16.mxu0 0
  %6157 = vmatpush1.bf16.msra.mxu0 0
  %6158 = vmatprep.subr.bf16.mxu0 0
  %6159 = vmatpush1.bf16.msra.mxu0 0
  %6160 = vmatprep.mubr.bf16.mxu0 0
  %6161 = vmatmul.mubr.bf16.gmra.mrb[0].mxu0 %v580
  %v6162 = vpop.f32.mrb[0].mxu0
  %v6163 = vadd.f32 0.0, %v6162
  %v6164 = vpop.f32.mrb[0].mxu0
  %v6165 = vadd.f32 0.0, %v6164
  %v6166 = vpop.f32.mrb[0].mxu0
  %v6167 = vadd.f32 0.0, %v6166
  %v6168 = vpop.f32.mrb[0].mxu0
  %v6169 = vadd.f32 0.0, %v6168
  %6170 = vdwg.mxu0
  %v6171 = vpack.c.bf16 %v6167, %v6163
  %v6172 = vpack.c.bf16 %v6169, %v6165
  %v6174 = vsel %vm718, %v6172, 0
  %6176 = vmatprep.subr.bf16.mxu0 0
  %6177 = vmatpush1.bf16.msra.mxu0 %v697
  %6178 = vmatprep.subr.bf16.mxu0 0
  %6179 = vmatpush1.bf16.msra.mxu0 %v698
  %6180 = vmatprep.subr.bf16.mxu0 0
  %6181 = vmatpush1.bf16.msra.mxu0 %v699
  %6182 = vmatprep.subr.bf16.mxu0 0
  %6183 = vmatpush1.bf16.msra.mxu0 %v700
  %6184 = vmatprep.subr.bf16.mxu0 0
  %6185 = vmatpush1.bf16.msra.mxu0 %v701
  %6186 = vmatprep.subr.bf16.mxu0 0
  %6187 = vmatpush1.bf16.msra.mxu0 %v702
  %6188 = vmatprep.subr.bf16.mxu0 0
  %6189 = vmatpush1.bf16.msra.mxu0 %v703
  %6190 = vmatprep.subr.bf16.mxu0 0
  %6191 = vmatpush1.bf16.msra.mxu0 %v704
  %6192 = vmatprep.subr.bf16.mxu0 0
  %6193 = vmatpush1.bf16.msra.mxu0 %v705
  %6194 = vmatprep.subr.bf16.mxu0 0
  %6195 = vmatpush1.bf16.msra.mxu0 %v706
  %6196 = vmatprep.subr.bf16.mxu0 0
  %6197 = vmatpush1.bf16.msra.mxu0 %v724
  %6198 = vmatprep.subr.bf16.mxu0 0
  %6199 = vmatpush1.bf16.msra.mxu0 0
  %6200 = vmatprep.subr.bf16.mxu0 0
  %6201 = vmatpush1.bf16.msra.mxu0 0
  %6202 = vmatprep.subr.bf16.mxu0 0
  %6203 = vmatpush1.bf16.msra.mxu0 0
  %6204 = vmatprep.subr.bf16.mxu0 0
  %6205 = vmatpush1.bf16.msra.mxu0 0
  %6206 = vmatprep.subr.bf16.mxu0 0
  %6207 = vmatpush1.bf16.msra.mxu0 0
  %6208 = vmatprep.mubr.bf16.mxu0 %v6174
  %6209 = vmatmul.mubr.bf16.gmra.mrb[0].mxu0 %v6171
  %v6210 = vpop.f32.mrb[0].mxu0
  %v6211 = vadd.f32 0.0, %v6210
  %v6212 = vpop.f32.mrb[0].mxu0
  %v6213 = vpop.f32.mrb[0].mxu0
  %v6214 = vadd.f32 0.0, %v6213
  %v6215 = vpop.f32.mrb[0].mxu0
  %6216 = vdwg.mxu0
  %v6217 = vpack.c.bf16 %v6214, %v6211
  %v6219 = vshrl.u32 %v6217, 16
  %v6221 = vshll.u32 %v6217, 16
  %v6223 = vrot.slane %v6221, 1
  %v6224 = vor.u32 %v6219, %v6223
  %v6226 = vsel %vm853, %v6224, 0
  %6228 = vmatprep.subr.bf16.mxu0 %v832
  %6229 = vmatpush1.bf16.msra.mxu0 %v831
  %6230 = vmatprep.subr.bf16.mxu0 %v834
  %6231 = vmatpush1.bf16.msra.mxu0 %v833
  %6232 = vmatprep.subr.bf16.mxu0 %v836
  %6233 = vmatpush1.bf16.msra.mxu0 %v835
  %6234 = vmatprep.subr.bf16.mxu0 %v838
  %6235 = vmatpush1.bf16.msra.mxu0 %v837
  %6236 = vmatprep.subr.bf16.mxu0 %v840
  %6237 = vmatpush1.bf16.msra.mxu0 %v839
  %6238 = vmatprep.subr.bf16.mxu0 %v862
  %6239 = vmatpush1.bf16.msra.mxu0 %v859
  %6240 = vmatprep.subr.bf16.mxu0 0
  %6241 = vmatpush1.bf16.msra.mxu0 0
  %6242 = vmatprep.subr.bf16.mxu0 0
  %6243 = vmatpush1.bf16.msra.mxu0 0
  %6244 = vmatprep.subr.bf16.mxu0 0
  %6245 = vmatpush1.bf16.msra.mxu0 0
  %6246 = vmatprep.subr.bf16.mxu0 0
  %6247 = vmatpush1.bf16.msra.mxu0 0
  %6248 = vmatprep.subr.bf16.mxu0 0
  %6249 = vmatpush1.bf16.msra.mxu0 0
  %6250 = vmatprep.subr.bf16.mxu0 0
  %6251 = vmatpush1.bf16.msra.mxu0 0
  %6252 = vmatprep.subr.bf16.mxu0 0
  %6253 = vmatpush1.bf16.msra.mxu0 0
  %6254 = vmatprep.subr.bf16.mxu0 0
  %6255 = vmatpush1.bf16.msra.mxu0 0
  %6256 = vmatprep.subr.bf16.mxu0 0
  %6257 = vmatpush1.bf16.msra.mxu0 0
  %6258 = vmatprep.subr.bf16.mxu0 0
  %6259 = vmatpush1.bf16.msra.mxu0 0
  %6260 = vmatprep.mubr.bf16.mxu0 0
  %6261 = vmatmul.mubr.bf16.gmra.mrb[0].mxu0 %v6226
  %v6262 = vpop.f32.mrb[0].mxu0
  %v6263 = vadd.f32 0.0, %v6262
  %v6264 = vpop.f32.mrb[0].mxu0
  %v6265 = vadd.f32 0.0, %v6264
  %v6266 = vpop.f32.mrb[0].mxu0
  %v6267 = vadd.f32 0.0, %v6266
  %v6268 = vpop.f32.mrb[0].mxu0
  %v6269 = vadd.f32 0.0, %v6268
  %6270 = vdwg.mxu0
  %v6271 = vsel %vm853, %v6217, 0
  %6273 = vmatprep.subr.bf16.mxu0 %v941
  %6274 = vmatpush1.bf16.msra.mxu0 %v940
  %6275 = vmatprep.subr.bf16.mxu0 %v943
  %6276 = vmatpush1.bf16.msra.mxu0 %v942
  %6277 = vmatprep.subr.bf16.mxu0 %v945
  %6278 = vmatpush1.bf16.msra.mxu0 %v944
  %6279 = vmatprep.subr.bf16.mxu0 %v947
  %6280 = vmatpush1.bf16.msra.mxu0 %v946
  %6281 = vmatprep.subr.bf16.mxu0 %v949
  %6282 = vmatpush1.bf16.msra.mxu0 %v948
  %6283 = vmatprep.subr.bf16.mxu0 %v968
  %6284 = vmatpush1.bf16.msra.mxu0 %v965
  %6285 = vmatprep.subr.bf16.mxu0 0
  %6286 = vmatpush1.bf16.msra.mxu0 0
  %6287 = vmatprep.subr.bf16.mxu0 0
  %6288 = vmatpush1.bf16.msra.mxu0 0
  %6289 = vmatprep.subr.bf16.mxu0 0
  %6290 = vmatpush1.bf16.msra.mxu0 0
  %6291 = vmatprep.subr.bf16.mxu0 0
  %6292 = vmatpush1.bf16.msra.mxu0 0
  %6293 = vmatprep.subr.bf16.mxu0 0
  %6294 = vmatpush1.bf16.msra.mxu0 0
  %6295 = vmatprep.subr.bf16.mxu0 0
  %6296 = vmatpush1.bf16.msra.mxu0 0
  %6297 = vmatprep.subr.bf16.mxu0 0
  %6298 = vmatpush1.bf16.msra.mxu0 0
  %6299 = vmatprep.subr.bf16.mxu0 0
  %6300 = vmatpush1.bf16.msra.mxu0 0
  %6301 = vmatprep.subr.bf16.mxu0 0
  %6302 = vmatpush1.bf16.msra.mxu0 0
  %6303 = vmatprep.subr.bf16.mxu0 0
  %6304 = vmatpush1.bf16.msra.mxu0 0
  %6305 = vmatprep.mubr.bf16.mxu0 0
  %6306 = vmatmul.mubr.bf16.gmra.mrb[0].mxu0 %v6271
  %v6307 = vpop.f32.mrb[0].mxu0
  %v6308 = vadd.f32 %v6263, %v6307
  %v6309 = vpop.f32.mrb[0].mxu0
  %v6310 = vadd.f32 %v6265, %v6309
  %v6311 = vpop.f32.mrb[0].mxu0
  %v6312 = vadd.f32 %v6267, %v6311
  %v6313 = vpop.f32.mrb[0].mxu0
  %v6314 = vadd.f32 %v6269, %v6313
  %6315 = vdwg.mxu0
  %v6317 = vrot.slane %v6217, 1
  %v6319 = vsel %vm853, %v6317, 0
  %6321 = vmatprep.subr.bf16.mxu0 %v1061
  %6322 = vmatpush1.bf16.msra.mxu0 %v1060
  %6323 = vmatprep.subr.bf16.mxu0 %v1063
  %6324 = vmatpush1.bf16.msra.mxu0 %v1062
  %6325 = vmatprep.subr.bf16.mxu0 %v1065
  %6326 = vmatpush1.bf16.msra.mxu0 %v1064
  %6327 = vmatprep.subr.bf16.mxu0 %v1067
  %6328 = vmatpush1.bf16.msra.mxu0 %v1066
  %6329 = vmatprep.subr.bf16.mxu0 %v1069
  %6330 = vmatpush1.bf16.msra.mxu0 %v1068
  %6331 = vmatprep.subr.bf16.mxu0 %v1089
  %6332 = vmatpush1.bf16.msra.mxu0 %v1086
  %6333 = vmatprep.subr.bf16.mxu0 0
  %6334 = vmatpush1.bf16.msra.mxu0 0
  %6335 = vmatprep.subr.bf16.mxu0 0
  %6336 = vmatpush1.bf16.msra.mxu0 0
  %6337 = vmatprep.subr.bf16.mxu0 0
  %6338 = vmatpush1.bf16.msra.mxu0 0
  %6339 = vmatprep.subr.bf16.mxu0 0
  %6340 = vmatpush1.bf16.msra.mxu0 0
  %6341 = vmatprep.subr.bf16.mxu0 0
  %6342 = vmatpush1.bf16.msra.mxu0 0
  %6343 = vmatprep.subr.bf16.mxu0 0
  %6344 = vmatpush1.bf16.msra.mxu0 0
  %6345 = vmatprep.subr.bf16.mxu0 0
  %6346 = vmatpush1.bf16.msra.mxu0 0
  %6347 = vmatprep.subr.bf16.mxu0 0
  %6348 = vmatpush1.bf16.msra.mxu0 0
  %6349 = vmatprep.subr.bf16.mxu0 0
  %6350 = vmatpush1.bf16.msra.mxu0 0
  %6351 = vmatprep.subr.bf16.mxu0 0
  %6352 = vmatpush1.bf16.msra.mxu0 0
  %6353 = vmatprep.mubr.bf16.mxu0 0
  %6354 = vmatmul.mubr.bf16.gmra.mrb[0].mxu0 %v6319
  %v6355 = vpop.f32.mrb[0].mxu0
  %v6356 = vadd.f32 0.0, %v6355
  %v6357 = vpop.f32.mrb[0].mxu0
  %v6358 = vadd.f32 0.0, %v6357
  %v6359 = vpop.f32.mrb[0].mxu0
  %v6360 = vadd.f32 0.0, %v6359
  %v6361 = vpop.f32.mrb[0].mxu0
  %v6362 = vadd.f32 0.0, %v6361
  %6363 = vdwg.mxu0
  %v6364 = vadd.f32 %v6308, %v6356
  %v6365 = vadd.f32 %v6310, %v6358
  %v6366 = vadd.f32 %v6312, %v6360
  %v6367 = vadd.f32 %v6314, %v6362
  %v6368 = vrot.slane %v6219, 1
  %v6369 = vrot.slane %v6221, 2
  %v6370 = vor.u32 %v6368, %v6369
  %v6372 = vsel %vm853, %v6370, 0
  %6374 = vmatprep.subr.bf16.mxu0 %v1187
  %6375 = vmatpush1.bf16.msra.mxu0 %v1186
  %6376 = vmatprep.subr.bf16.mxu0 %v1189
  %6377 = vmatpush1.bf16.msra.mxu0 %v1188
  %6378 = vmatprep.subr.bf16.mxu0 %v1191
  %6379 = vmatpush1.bf16.msra.mxu0 %v1190
  %6380 = vmatprep.subr.bf16.mxu0 %v1193
  %6381 = vmatpush1.bf16.msra.mxu0 %v1192
  %6382 = vmatprep.subr.bf16.mxu0 %v1195
  %6383 = vmatpush1.bf16.msra.mxu0 %v1194
  %6384 = vmatprep.subr.bf16.mxu0 %v1215
  %6385 = vmatpush1.bf16.msra.mxu0 %v1212
  %6386 = vmatprep.subr.bf16.mxu0 0
  %6387 = vmatpush1.bf16.msra.mxu0 0
  %6388 = vmatprep.subr.bf16.mxu0 0
  %6389 = vmatpush1.bf16.msra.mxu0 0
  %6390 = vmatprep.subr.bf16.mxu0 0
  %6391 = vmatpush1.bf16.msra.mxu0 0
  %6392 = vmatprep.subr.bf16.mxu0 0
  %6393 = vmatpush1.bf16.msra.mxu0 0
  %6394 = vmatprep.subr.bf16.mxu0 0
  %6395 = vmatpush1.bf16.msra.mxu0 0
  %6396 = vmatprep.subr.bf16.mxu0 0
  %6397 = vmatpush1.bf16.msra.mxu0 0
  %6398 = vmatprep.subr.bf16.mxu0 0
  %6399 = vmatpush1.bf16.msra.mxu0 0
  %6400 = vmatprep.subr.bf16.mxu0 0
  %6401 = vmatpush1.bf16.msra.mxu0 0
  %6402 = vmatprep.subr.bf16.mxu0 0
  %6403 = vmatpush1.bf16.msra.mxu0 0
  %6404 = vmatprep.subr.bf16.mxu0 0
  %6405 = vmatpush1.bf16.msra.mxu0 0
  %6406 = vmatprep.mubr.bf16.mxu0 0
  %6407 = vmatmul.mubr.bf16.gmra.mrb[0].mxu0 %v6372
  %v6408 = vpop.f32.mrb[0].mxu0
  %v6409 = vadd.f32 0.0, %v6408
  %v6410 = vpop.f32.mrb[0].mxu0
  %v6411 = vadd.f32 0.0, %v6410
  %v6412 = vpop.f32.mrb[0].mxu0
  %v6413 = vadd.f32 0.0, %v6412
  %v6414 = vpop.f32.mrb[0].mxu0
  %v6415 = vadd.f32 0.0, %v6414
  %6416 = vdwg.mxu0
  %v6417 = vadd.f32 %v6364, %v6409
  %v6418 = vadd.f32 %v6365, %v6411
  %v6419 = vadd.f32 %v6366, %v6413
  %v6420 = vadd.f32 %v6367, %v6415
  %v6421 = vrot.slane %v6217, 2
  %v6423 = vsel %vm853, %v6421, 0
  %6425 = vmatprep.subr.bf16.mxu0 %v1311
  %6426 = vmatpush1.bf16.msra.mxu0 %v1310
  %6427 = vmatprep.subr.bf16.mxu0 %v1313
  %6428 = vmatpush1.bf16.msra.mxu0 %v1312
  %6429 = vmatprep.subr.bf16.mxu0 %v1315
  %6430 = vmatpush1.bf16.msra.mxu0 %v1314
  %6431 = vmatprep.subr.bf16.mxu0 %v1317
  %6432 = vmatpush1.bf16.msra.mxu0 %v1316
  %6433 = vmatprep.subr.bf16.mxu0 %v1319
  %6434 = vmatpush1.bf16.msra.mxu0 %v1318
  %6435 = vmatprep.subr.bf16.mxu0 %v1339
  %6436 = vmatpush1.bf16.msra.mxu0 %v1336
  %6437 = vmatprep.subr.bf16.mxu0 0
  %6438 = vmatpush1.bf16.msra.mxu0 0
  %6439 = vmatprep.subr.bf16.mxu0 0
  %6440 = vmatpush1.bf16.msra.mxu0 0
  %6441 = vmatprep.subr.bf16.mxu0 0
  %6442 = vmatpush1.bf16.msra.mxu0 0
  %6443 = vmatprep.subr.bf16.mxu0 0
  %6444 = vmatpush1.bf16.msra.mxu0 0
  %6445 = vmatprep.subr.bf16.mxu0 0
  %6446 = vmatpush1.bf16.msra.mxu0 0
  %6447 = vmatprep.subr.bf16.mxu0 0
  %6448 = vmatpush1.bf16.msra.mxu0 0
  %6449 = vmatprep.subr.bf16.mxu0 0
  %6450 = vmatpush1.bf16.msra.mxu0 0
  %6451 = vmatprep.subr.bf16.mxu0 0
  %6452 = vmatpush1.bf16.msra.mxu0 0
  %6453 = vmatprep.subr.bf16.mxu0 0
  %6454 = vmatpush1.bf16.msra.mxu0 0
  %6455 = vmatprep.subr.bf16.mxu0 0
  %6456 = vmatpush1.bf16.msra.mxu0 0
  %6457 = vmatprep.mubr.bf16.mxu0 0
  %6458 = vmatmul.mubr.bf16.gmra.mrb[0].mxu0 %v6423
  %v6459 = vpop.f32.mrb[0].mxu0
  %v6460 = vadd.f32 0.0, %v6459
  %v6461 = vpop.f32.mrb[0].mxu0
  %v6462 = vadd.f32 0.0, %v6461
  %v6463 = vpop.f32.mrb[0].mxu0
  %v6464 = vadd.f32 0.0, %v6463
  %v6465 = vpop.f32.mrb[0].mxu0
  %v6466 = vadd.f32 0.0, %v6465
  %6467 = vdwg.mxu0
  %v6468 = vadd.f32 %v6417, %v6460
  %v6469 = vadd.f32 %v6418, %v6462
  %v6470 = vadd.f32 %v6419, %v6464
  %v6471 = vadd.f32 %v6420, %v6466
  %v6472 = vadd.f32 %v6468, %v1393
  %v6473 = vadd.f32 %v6469, %v1397
  %v6474 = vadd.f32 %v6470, %v1393
  %v6475 = vadd.f32 %v6471, %v1397
  %v6476 = vmax.f32 %v6472, 0.0
  %v6477 = vmax.f32 %v6473, 0.0
  %v6478 = vmax.f32 %v6474, 0.0
  %v6479 = vmax.f32 %v6475, 0.0
  %v6480 = vpack.c.bf16 %v6478, %v6476
  %v6481 = vpack.c.bf16 %v6479, %v6477
  %v6483 = vsel %vm1415, %v6480, 0
  %v6486 = vsel %vm1415, %v6481, 0
  %6488 = vmatprep.subr.bf16.mxu0 %v6486
  %6489 = vmatpush1.bf16.msra.mxu0 %v6483
  %6490 = vmatprep.subr.bf16.mxu0 0
  %6491 = vmatpush1.bf16.msra.mxu0 0
  %6492 = vmatprep.subr.bf16.mxu0 0
  %6493 = vmatpush1.bf16.msra.mxu0 0
  %6494 = vmatprep.subr.bf16.mxu0 0
  %6495 = vmatpush1.bf16.msra.mxu0 0
  %6496 = vmatprep.subr.bf16.mxu0 0
  %6497 = vmatpush1.bf16.msra.mxu0 0
  %6498 = vmatprep.subr.bf16.mxu0 0
  %6499 = vmatpush1.bf16.msra.mxu0 0
  %6500 = vmatprep.subr.bf16.mxu0 0
  %6501 = vmatpush1.bf16.msra.mxu0 0
  %6502 = vmatprep.subr.bf16.mxu0 0
  %6503 = vmatpush1.bf16.msra.mxu0 0
  %6504 = vmatprep.subr.bf16.mxu0 0
  %6505 = vmatpush1.bf16.msra.mxu0 0
  %6506 = vmatprep.subr.bf16.mxu0 0
  %6507 = vmatpush1.bf16.msra.mxu0 0
  %6508 = vmatprep.subr.bf16.mxu0 0
  %6509 = vmatpush1.bf16.msra.mxu0 0
  %6510 = vmatprep.subr.bf16.mxu0 0
  %6511 = vmatpush1.bf16.msra.mxu0 0
  %6512 = vmatprep.subr.bf16.mxu0 0
  %6513 = vmatpush1.bf16.msra.mxu0 0
  %6514 = vmatprep.subr.bf16.mxu0 0
  %6515 = vmatpush1.bf16.msra.mxu0 0
  %6516 = vmatprep.subr.bf16.mxu0 0
  %6517 = vmatpush1.bf16.msra.mxu0 0
  %6518 = vmatprep.subr.bf16.mxu0 0
  %6519 = vmatpush1.bf16.msra.mxu0 0
  %6520 = vmatprep.mubr.bf16.mxu0 0
  %6521 = vmatmul.mubr.bf16.gmra.mrb[0].mxu0 %v1413
  %v6522 = vpop.f32.mrb[0].mxu0
  %v6523 = vadd.f32 0.0, %v6522
  %v6524 = vpop.f32.mrb[0].mxu0
  %v6525 = vadd.f32 0.0, %v6524
  %v6526 = vpop.f32.mrb[0].mxu0
  %v6527 = vpop.f32.mrb[0].mxu0
  %6528 = vdwg.mxu0
  %v6529 = vpack.c.bf16 %v6523, %v6523
  %v6530 = vpack.c.bf16 %v6525, %v6525
  %v6532 = vsel %vm110, %v6530, 0
  %6534 = vmatprep.subr.bf16.mxu0 0
  %6535 = vmatpush1.bf16.msra.mxu0 %v1525
  %6536 = vmatprep.subr.bf16.mxu0 0
  %6537 = vmatpush1.bf16.msra.mxu0 %v1526
  %6538 = vmatprep.subr.bf16.mxu0 0
  %6539 = vmatpush1.bf16.msra.mxu0 %v1527
  %6540 = vmatprep.subr.bf16.mxu0 0
  %6541 = vmatpush1.bf16.msra.mxu0 %v1528
  %6542 = vmatprep.subr.bf16.mxu0 0
  %6543 = vmatpush1.bf16.msra.mxu0 %v1529
  %6544 = vmatprep.subr.bf16.mxu0 0
  %6545 = vmatpush1.bf16.msra.mxu0 %v1530
  %6546 = vmatprep.subr.bf16.mxu0 0
  %6547 = vmatpush1.bf16.msra.mxu0 %v1531
  %6548 = vmatprep.subr.bf16.mxu0 0
  %6549 = vmatpush1.bf16.msra.mxu0 %v1532
  %6550 = vmatprep.subr.bf16.mxu0 0
  %6551 = vmatpush1.bf16.msra.mxu0 %v1533
  %6552 = vmatprep.subr.bf16.mxu0 0
  %6553 = vmatpush1.bf16.msra.mxu0 %v1534
  %6554 = vmatprep.subr.bf16.mxu0 0
  %6555 = vmatpush1.bf16.msra.mxu0 0
  %6556 = vmatprep.subr.bf16.mxu0 0
  %6557 = vmatpush1.bf16.msra.mxu0 0
  %6558 = vmatprep.subr.bf16.mxu0 0
  %6559 = vmatpush1.bf16.msra.mxu0 0
  %6560 = vmatprep.subr.bf16.mxu0 0
  %6561 = vmatpush1.bf16.msra.mxu0 0
  %6562 = vmatprep.subr.bf16.mxu0 0
  %6563 = vmatpush1.bf16.msra.mxu0 0
  %6564 = vmatprep.subr.bf16.mxu0 0
  %6565 = vmatpush1.bf16.msra.mxu0 0
  %6566 = vmatprep.mubr.bf16.mxu0 %v6532
  %6567 = vmatmul.mubr.bf16.gmra.mrb[0].mxu0 %v6529
  %v6568 = vpop.f32.mrb[0].mxu0
  %v6569 = vadd.f32 0.0, %v6568
  %v6570 = vpop.f32.mrb[0].mxu0
  %v6571 = vpop.f32.mrb[0].mxu0
  %v6572 = vpop.f32.mrb[0].mxu0
  %6573 = vdwg.mxu0
  %v6574 = vld [vmem:[%s0 + $0x70] sm:$0xf]
  %v6575 = vld [vmem:[%s0 + $0x74] sm:$0xf]
  %v6576 = vld [vmem:[%s0 + $0x78] sm:$0xf]
  %v6577 = vld [vmem:[%s0 + $0x7c] sm:$0xf]
  %v6582 = vunpack.c.l.b16 %v6574
  %v6583 = vunpack.c.l.b16 %v6575
  %v6584 = vunpack.c.l.b16 %v6576
  %v6585 = vunpack.c.l.b16 %v6577
  %v6586 = vpack.c.b16 %v6583, %v6582
  %v6587 = vpack.c.b16 %v6585, %v6584
  %v6589 = vshrl.u32 %v6586, 16
  %v6591 = vshll.u32 %v6586, 16
  %v6593 = vrot.slane %v6591, 1
  %v6594 = vor.u32 %v6589, %v6593
  %v6596 = vshll.u32 %v6587, 16
  %v6598 = vrot.slane %v6596, 1
  %v6599 = vsel %vm74, %v6594, %v6598
  %v6600 = vshrl.u32 %v6587, 16
  %v6602 = vor.u32 %v6600, %v6598
  %v6604 = vsel %vm110, %v6599, 0
  %v6607 = vsel %vm110, %v6602, 0
  %6609 = vmatprep.subr.bf16.mxu0 %v103
  %6610 = vmatpush1.bf16.msra.mxu0 %v102
  %6611 = vmatprep.subr.bf16.mxu0 %v105
  %6612 = vmatpush1.bf16.msra.mxu0 %v104
  %6613 = vmatprep.subr.bf16.mxu0 0
  %6614 = vmatpush1.bf16.msra.mxu0 0
  %6615 = vmatprep.subr.bf16.mxu0 0
  %6616 = vmatpush1.bf16.msra.mxu0 0
  %6617 = vmatprep.subr.bf16.mxu0 0
  %6618 = vmatpush1.bf16.msra.mxu0 0
  %6619 = vmatprep.subr.bf16.mxu0 0
  %6620 = vmatpush1.bf16.msra.mxu0 0
  %6621 = vmatprep.subr.bf16.mxu0 0
  %6622 = vmatpush1.bf16.msra.mxu0 0
  %6623 = vmatprep.subr.bf16.mxu0 0
  %6624 = vmatpush1.bf16.msra.mxu0 0
  %6625 = vmatprep.subr.bf16.mxu0 0
  %6626 = vmatpush1.bf16.msra.mxu0 0
  %6627 = vmatprep.subr.bf16.mxu0 0
  %6628 = vmatpush1.bf16.msra.mxu0 0
  %6629 = vmatprep.subr.bf16.mxu0 0
  %6630 = vmatpush1.bf16.msra.mxu0 0
  %6631 = vmatprep.subr.bf16.mxu0 0
  %6632 = vmatpush1.bf16.msra.mxu0 0
  %6633 = vmatprep.subr.bf16.mxu0 0
  %6634 = vmatpush1.bf16.msra.mxu0 0
  %6635 = vmatprep.subr.bf16.mxu0 0
  %6636 = vmatpush1.bf16.msra.mxu0 0
  %6637 = vmatprep.subr.bf16.mxu0 0
  %6638 = vmatpush1.bf16.msra.mxu0 0
  %6639 = vmatprep.subr.bf16.mxu0 0
  %6640 = vmatpush1.bf16.msra.mxu0 0
  %6641 = vmatprep.mubr.bf16.mxu0 0
  %6642 = vmatmul.mubr.bf16.gmra.mrb[0].mxu0 %v6604
  %v6643 = vpop.f32.mrb[0].mxu0
  %v6644 = vadd.f32 0.0, %v6643
  %v6645 = vpop.f32.mrb[0].mxu0
  %v6646 = vadd.f32 0.0, %v6645
  %v6647 = vpop.f32.mrb[0].mxu0
  %v6648 = vadd.f32 0.0, %v6647
  %v6649 = vpop.f32.mrb[0].mxu0
  %v6650 = vadd.f32 0.0, %v6649
  %6651 = vmatprep.mubr.bf16.mxu0 0
  %6652 = vmatmul.mubr.bf16.gmra.mrb[0].mxu0 %v6607
  %v6653 = vpop.f32.mrb[0].mxu0
  %v6654 = vadd.f32 0.0, %v6653
  %v6655 = vpop.f32.mrb[0].mxu0
  %v6656 = vadd.f32 0.0, %v6655
  %v6657 = vpop.f32.mrb[0].mxu0
  %v6658 = vadd.f32 0.0, %v6657
  %v6659 = vpop.f32.mrb[0].mxu0
  %v6660 = vadd.f32 0.0, %v6659
  %6661 = vdwg.mxu0
  %v6662 = vsel %vm110, %v6586, 0
  %v6664 = vsel %vm110, %v6587, 0
  %6666 = vmatprep.subr.bf16.mxu0 %v183
  %6667 = vmatpush1.bf16.msra.mxu0 %v182
  %6668 = vmatprep.subr.bf16.mxu0 %v185
  %6669 = vmatpush1.bf16.msra.mxu0 %v184
  %6670 = vmatprep.subr.bf16.mxu0 0
  %6671 = vmatpush1.bf16.msra.mxu0 0
  %6672 = vmatprep.subr.bf16.mxu0 0
  %6673 = vmatpush1.bf16.msra.mxu0 0
  %6674 = vmatprep.subr.bf16.mxu0 0
  %6675 = vmatpush1.bf16.msra.mxu0 0
  %6676 = vmatprep.subr.bf16.mxu0 0
  %6677 = vmatpush1.bf16.msra.mxu0 0
  %6678 = vmatprep.subr.bf16.mxu0 0
  %6679 = vmatpush1.bf16.msra.mxu0 0
  %6680 = vmatprep.subr.bf16.mxu0 0
  %6681 = vmatpush1.bf16.msra.mxu0 0
  %6682 = vmatprep.subr.bf16.mxu0 0
  %6683 = vmatpush1.bf16.msra.mxu0 0
  %6684 = vmatprep.subr.bf16.mxu0 0
  %6685 = vmatpush1.bf16.msra.mxu0 0
  %6686 = vmatprep.subr.bf16.mxu0 0
  %6687 = vmatpush1.bf16.msra.mxu0 0
  %6688 = vmatprep.subr.bf16.mxu0 0
  %6689 = vmatpush1.bf16.msra.mxu0 0
  %6690 = vmatprep.subr.bf16.mxu0 0
  %6691 = vmatpush1.bf16.msra.mxu0 0
  %6692 = vmatprep.subr.bf16.mxu0 0
  %6693 = vmatpush1.bf16.msra.mxu0 0
  %6694 = vmatprep.subr.bf16.mxu0 0
  %6695 = vmatpush1.bf16.msra.mxu0 0
  %6696 = vmatprep.subr.bf16.mxu0 0
  %6697 = vmatpush1.bf16.msra.mxu0 0
  %6698 = vmatprep.mubr.bf16.mxu0 0
  %6699 = vmatmul.mubr.bf16.gmra.mrb[0].mxu0 %v6662
  %v6700 = vpop.f32.mrb[0].mxu0
  %v6701 = vadd.f32 %v6644, %v6700
  %v6702 = vpop.f32.mrb[0].mxu0
  %v6703 = vadd.f32 %v6646, %v6702
  %v6704 = vpop.f32.mrb[0].mxu0
  %v6705 = vadd.f32 %v6648, %v6704
  %v6706 = vpop.f32.mrb[0].mxu0
  %v6707 = vadd.f32 %v6650, %v6706
  %6708 = vmatprep.mubr.bf16.mxu0 0
  %6709 = vmatmul.mubr.bf16.gmra.mrb[0].mxu0 %v6664
  %v6710 = vpop.f32.mrb[0].mxu0
  %v6711 = vadd.f32 %v6654, %v6710
  %v6712 = vpop.f32.mrb[0].mxu0
  %v6713 = vadd.f32 %v6656, %v6712
  %v6714 = vpop.f32.mrb[0].mxu0
  %v6715 = vadd.f32 %v6658, %v6714
  %v6716 = vpop.f32.mrb[0].mxu0
  %v6717 = vadd.f32 %v6660, %v6716
  %6718 = vdwg.mxu0
  %v6719 = vrot.slane %v6586, 1
  %v6720 = vrot.slane %v6587, 1
  %v6721 = vsel %vm252, %v6719, %v6720
  %v6723 = vsel %vm110, %v6721, 0
  %v6726 = vsel %vm110, %v6720, 0
  %6728 = vmatprep.subr.bf16.mxu0 %v269
  %6729 = vmatpush1.bf16.msra.mxu0 %v268
  %6730 = vmatprep.subr.bf16.mxu0 %v271
  %6731 = vmatpush1.bf16.msra.mxu0 %v270
  %6732 = vmatprep.subr.bf16.mxu0 0
  %6733 = vmatpush1.bf16.msra.mxu0 0
  %6734 = vmatprep.subr.bf16.mxu0 0
  %6735 = vmatpush1.bf16.msra.mxu0 0
  %6736 = vmatprep.subr.bf16.mxu0 0
  %6737 = vmatpush1.bf16.msra.mxu0 0
  %6738 = vmatprep.subr.bf16.mxu0 0
  %6739 = vmatpush1.bf16.msra.mxu0 0
  %6740 = vmatprep.subr.bf16.mxu0 0
  %6741 = vmatpush1.bf16.msra.mxu0 0
  %6742 = vmatprep.subr.bf16.mxu0 0
  %6743 = vmatpush1.bf16.msra.mxu0 0
  %6744 = vmatprep.subr.bf16.mxu0 0
  %6745 = vmatpush1.bf16.msra.mxu0 0
  %6746 = vmatprep.subr.bf16.mxu0 0
  %6747 = vmatpush1.bf16.msra.mxu0 0
  %6748 = vmatprep.subr.bf16.mxu0 0
  %6749 = vmatpush1.bf16.msra.mxu0 0
  %6750 = vmatprep.subr.bf16.mxu0 0
  %6751 = vmatpush1.bf16.msra.mxu0 0
  %6752 = vmatprep.subr.bf16.mxu0 0
  %6753 = vmatpush1.bf16.msra.mxu0 0
  %6754 = vmatprep.subr.bf16.mxu0 0
  %6755 = vmatpush1.bf16.msra.mxu0 0
  %6756 = vmatprep.subr.bf16.mxu0 0
  %6757 = vmatpush1.bf16.msra.mxu0 0
  %6758 = vmatprep.subr.bf16.mxu0 0
  %6759 = vmatpush1.bf16.msra.mxu0 0
  %6760 = vmatprep.mubr.bf16.mxu0 0
  %6761 = vmatmul.mubr.bf16.gmra.mrb[0].mxu0 %v6723
  %v6762 = vpop.f32.mrb[0].mxu0
  %v6763 = vadd.f32 0.0, %v6762
  %v6764 = vpop.f32.mrb[0].mxu0
  %v6765 = vadd.f32 0.0, %v6764
  %v6766 = vpop.f32.mrb[0].mxu0
  %v6767 = vadd.f32 0.0, %v6766
  %v6768 = vpop.f32.mrb[0].mxu0
  %v6769 = vadd.f32 0.0, %v6768
  %6770 = vmatprep.mubr.bf16.mxu0 0
  %6771 = vmatmul.mubr.bf16.gmra.mrb[0].mxu0 %v6726
  %v6772 = vpop.f32.mrb[0].mxu0
  %v6773 = vadd.f32 0.0, %v6772
  %v6774 = vpop.f32.mrb[0].mxu0
  %v6775 = vadd.f32 0.0, %v6774
  %v6776 = vpop.f32.mrb[0].mxu0
  %v6777 = vadd.f32 0.0, %v6776
  %v6778 = vpop.f32.mrb[0].mxu0
  %v6779 = vadd.f32 0.0, %v6778
  %6780 = vdwg.mxu0
  %v6781 = vadd.f32 %v6701, %v6763
  %v6782 = vadd.f32 %v6703, %v6765
  %v6783 = vadd.f32 %v6705, %v6767
  %v6784 = vadd.f32 %v6707, %v6769
  %v6785 = vadd.f32 %v6711, %v6773
  %v6786 = vadd.f32 %v6713, %v6775
  %v6787 = vadd.f32 %v6715, %v6777
  %v6788 = vadd.f32 %v6717, %v6779
  %v6789 = vrot.slane %v6589, 1
  %v6790 = vrot.slane %v6591, 2
  %v6791 = vor.u32 %v6789, %v6790
  %v6792 = vrot.slane %v6600, 1
  %v6793 = vrot.slane %v6596, 2
  %v6794 = vor.u32 %v6792, %v6793
  %v6795 = vsel %vm348, %v6791, %v6794
  %v6797 = vsel %vm110, %v6795, 0
  %v6800 = vsel %vm110, %v6794, 0
  %6802 = vmatprep.subr.bf16.mxu0 %v369
  %6803 = vmatpush1.bf16.msra.mxu0 %v368
  %6804 = vmatprep.subr.bf16.mxu0 %v371
  %6805 = vmatpush1.bf16.msra.mxu0 %v370
  %6806 = vmatprep.subr.bf16.mxu0 0
  %6807 = vmatpush1.bf16.msra.mxu0 0
  %6808 = vmatprep.subr.bf16.mxu0 0
  %6809 = vmatpush1.bf16.msra.mxu0 0
  %6810 = vmatprep.subr.bf16.mxu0 0
  %6811 = vmatpush1.bf16.msra.mxu0 0
  %6812 = vmatprep.subr.bf16.mxu0 0
  %6813 = vmatpush1.bf16.msra.mxu0 0
  %6814 = vmatprep.subr.bf16.mxu0 0
  %6815 = vmatpush1.bf16.msra.mxu0 0
  %6816 = vmatprep.subr.bf16.mxu0 0
  %6817 = vmatpush1.bf16.msra.mxu0 0
  %6818 = vmatprep.subr.bf16.mxu0 0
  %6819 = vmatpush1.bf16.msra.mxu0 0
  %6820 = vmatprep.subr.bf16.mxu0 0
  %6821 = vmatpush1.bf16.msra.mxu0 0
  %6822 = vmatprep.subr.bf16.mxu0 0
  %6823 = vmatpush1.bf16.msra.mxu0 0
  %6824 = vmatprep.subr.bf16.mxu0 0
  %6825 = vmatpush1.bf16.msra.mxu0 0
  %6826 = vmatprep.subr.bf16.mxu0 0
  %6827 = vmatpush1.bf16.msra.mxu0 0
  %6828 = vmatprep.subr.bf16.mxu0 0
  %6829 = vmatpush1.bf16.msra.mxu0 0
  %6830 = vmatprep.subr.bf16.mxu0 0
  %6831 = vmatpush1.bf16.msra.mxu0 0
  %6832 = vmatprep.subr.bf16.mxu0 0
  %6833 = vmatpush1.bf16.msra.mxu0 0
  %6834 = vmatprep.mubr.bf16.mxu0 0
  %6835 = vmatmul.mubr.bf16.gmra.mrb[0].mxu0 %v6797
  %v6836 = vpop.f32.mrb[0].mxu0
  %v6837 = vadd.f32 0.0, %v6836
  %v6838 = vpop.f32.mrb[0].mxu0
  %v6839 = vadd.f32 0.0, %v6838
  %v6840 = vpop.f32.mrb[0].mxu0
  %v6841 = vadd.f32 0.0, %v6840
  %v6842 = vpop.f32.mrb[0].mxu0
  %v6843 = vadd.f32 0.0, %v6842
  %6844 = vmatprep.mubr.bf16.mxu0 0
  %6845 = vmatmul.mubr.bf16.gmra.mrb[0].mxu0 %v6800
  %v6846 = vpop.f32.mrb[0].mxu0
  %v6847 = vadd.f32 0.0, %v6846
  %v6848 = vpop.f32.mrb[0].mxu0
  %v6849 = vadd.f32 0.0, %v6848
  %v6850 = vpop.f32.mrb[0].mxu0
  %v6851 = vadd.f32 0.0, %v6850
  %v6852 = vpop.f32.mrb[0].mxu0
  %v6853 = vadd.f32 0.0, %v6852
  %6854 = vdwg.mxu0
  %v6855 = vadd.f32 %v6781, %v6837
  %v6856 = vadd.f32 %v6782, %v6839
  %v6857 = vadd.f32 %v6783, %v6841
  %v6858 = vadd.f32 %v6784, %v6843
  %v6859 = vadd.f32 %v6785, %v6847
  %v6860 = vadd.f32 %v6786, %v6849
  %v6861 = vadd.f32 %v6787, %v6851
  %v6862 = vadd.f32 %v6788, %v6853
  %v6863 = vrot.slane %v6586, 2
  %v6864 = vrot.slane %v6587, 2
  %v6865 = vsel %vm448, %v6863, %v6864
  %v6867 = vsel %vm110, %v6865, 0
  %v6870 = vsel %vm110, %v6864, 0
  %6872 = vmatprep.subr.bf16.mxu0 %v465
  %6873 = vmatpush1.bf16.msra.mxu0 %v464
  %6874 = vmatprep.subr.bf16.mxu0 %v467
  %6875 = vmatpush1.bf16.msra.mxu0 %v466
  %6876 = vmatprep.subr.bf16.mxu0 0
  %6877 = vmatpush1.bf16.msra.mxu0 0
  %6878 = vmatprep.subr.bf16.mxu0 0
  %6879 = vmatpush1.bf16.msra.mxu0 0
  %6880 = vmatprep.subr.bf16.mxu0 0
  %6881 = vmatpush1.bf16.msra.mxu0 0
  %6882 = vmatprep.subr.bf16.mxu0 0
  %6883 = vmatpush1.bf16.msra.mxu0 0
  %6884 = vmatprep.subr.bf16.mxu0 0
  %6885 = vmatpush1.bf16.msra.mxu0 0
  %6886 = vmatprep.subr.bf16.mxu0 0
  %6887 = vmatpush1.bf16.msra.mxu0 0
  %6888 = vmatprep.subr.bf16.mxu0 0
  %6889 = vmatpush1.bf16.msra.mxu0 0
  %6890 = vmatprep.subr.bf16.mxu0 0
  %6891 = vmatpush1.bf16.msra.mxu0 0
  %6892 = vmatprep.subr.bf16.mxu0 0
  %6893 = vmatpush1.bf16.msra.mxu0 0
  %6894 = vmatprep.subr.bf16.mxu0 0
  %6895 = vmatpush1.bf16.msra.mxu0 0
  %6896 = vmatprep.subr.bf16.mxu0 0
  %6897 = vmatpush1.bf16.msra.mxu0 0
  %6898 = vmatprep.subr.bf16.mxu0 0
  %6899 = vmatpush1.bf16.msra.mxu0 0
  %6900 = vmatprep.subr.bf16.mxu0 0
  %6901 = vmatpush1.bf16.msra.mxu0 0
  %6902 = vmatprep.subr.bf16.mxu0 0
  %6903 = vmatpush1.bf16.msra.mxu0 0
  %6904 = vmatprep.mubr.bf16.mxu0 0
  %6905 = vmatmul.mubr.bf16.gmra.mrb[0].mxu0 %v6867
  %v6906 = vpop.f32.mrb[0].mxu0
  %v6907 = vadd.f32 0.0, %v6906
  %v6908 = vpop.f32.mrb[0].mxu0
  %v6909 = vadd.f32 0.0, %v6908
  %v6910 = vpop.f32.mrb[0].mxu0
  %v6911 = vadd.f32 0.0, %v6910
  %v6912 = vpop.f32.mrb[0].mxu0
  %v6913 = vadd.f32 0.0, %v6912
  %6914 = vmatprep.mubr.bf16.mxu0 0
  %6915 = vmatmul.mubr.bf16.gmra.mrb[0].mxu0 %v6870
  %v6916 = vpop.f32.mrb[0].mxu0
  %v6917 = vadd.f32 0.0, %v6916
  %v6918 = vpop.f32.mrb[0].mxu0
  %v6919 = vadd.f32 0.0, %v6918
  %v6920 = vpop.f32.mrb[0].mxu0
  %v6921 = vadd.f32 0.0, %v6920
  %v6922 = vpop.f32.mrb[0].mxu0
  %v6923 = vadd.f32 0.0, %v6922
  %6924 = vdwg.mxu0
  %v6925 = vadd.f32 %v6855, %v6907
  %v6926 = vadd.f32 %v6856, %v6909
  %v6927 = vadd.f32 %v6857, %v6911
  %v6928 = vadd.f32 %v6858, %v6913
  %v6929 = vadd.f32 %v6859, %v6917
  %v6930 = vadd.f32 %v6860, %v6919
  %v6931 = vadd.f32 %v6861, %v6921
  %v6932 = vadd.f32 %v6862, %v6923
  %v6933 = vadd.f32 %v6925, %v544
  %v6934 = vadd.f32 %v6926, %v548
  %v6935 = vadd.f32 %v6927, %v544
  %v6936 = vadd.f32 %v6928, %v548
  %v6937 = vadd.f32 %v6929, %v544
  %v6938 = vadd.f32 %v6930, %v548
  %v6939 = vadd.f32 %v6931, %v544
  %v6940 = vadd.f32 %v6932, %v548
  %v6941 = vmax.f32 %v6933, 0.0
  %v6942 = vmax.f32 %v6934, 0.0
  %v6943 = vmax.f32 %v6935, 0.0
  %v6944 = vmax.f32 %v6936, 0.0
  %v6945 = vmax.f32 %v6937, 0.0
  %v6946 = vmax.f32 %v6938, 0.0
  %v6947 = vmax.f32 %v6939, 0.0
  %v6948 = vmax.f32 %v6940, 0.0
  %v6949 = vpack.c.bf16 %v6943, %v6941
  %v6950 = vpack.c.bf16 %v6944, %v6942
  %v6951 = vpack.c.bf16 %v6947, %v6945
  %v6952 = vpack.c.bf16 %v6948, %v6946
  %v6954 = vsel %vm582, %v6951, 0
  %v6957 = vsel %vm582, %v6952, 0
  %6959 = vmatprep.subr.bf16.mxu0 %v6950
  %6960 = vmatpush1.bf16.msra.mxu0 %v6949
  %6961 = vmatprep.subr.bf16.mxu0 %v6957
  %6962 = vmatpush1.bf16.msra.mxu0 %v6954
  %6963 = vmatprep.subr.bf16.mxu0 0
  %6964 = vmatpush1.bf16.msra.mxu0 0
  %6965 = vmatprep.subr.bf16.mxu0 0
  %6966 = vmatpush1.bf16.msra.mxu0 0
  %6967 = vmatprep.subr.bf16.mxu0 0
  %6968 = vmatpush1.bf16.msra.mxu0 0
  %6969 = vmatprep.subr.bf16.mxu0 0
  %6970 = vmatpush1.bf16.msra.mxu0 0
  %6971 = vmatprep.subr.bf16.mxu0 0
  %6972 = vmatpush1.bf16.msra.mxu0 0
  %6973 = vmatprep.subr.bf16.mxu0 0
  %6974 = vmatpush1.bf16.msra.mxu0 0
  %6975 = vmatprep.subr.bf16.mxu0 0
  %6976 = vmatpush1.bf16.msra.mxu0 0
  %6977 = vmatprep.subr.bf16.mxu0 0
  %6978 = vmatpush1.bf16.msra.mxu0 0
  %6979 = vmatprep.subr.bf16.mxu0 0
  %6980 = vmatpush1.bf16.msra.mxu0 0
  %6981 = vmatprep.subr.bf16.mxu0 0
  %6982 = vmatpush1.bf16.msra.mxu0 0
  %6983 = vmatprep.subr.bf16.mxu0 0
  %6984 = vmatpush1.bf16.msra.mxu0 0
  %6985 = vmatprep.subr.bf16.mxu0 0
  %6986 = vmatpush1.bf16.msra.mxu0 0
  %6987 = vmatprep.subr.bf16.mxu0 0
  %6988 = vmatpush1.bf16.msra.mxu0 0
  %6989 = vmatprep.subr.bf16.mxu0 0
  %6990 = vmatpush1.bf16.msra.mxu0 0
  %6991 = vmatprep.mubr.bf16.mxu0 0
  %6992 = vmatmul.mubr.bf16.gmra.mrb[0].mxu0 %v580
  %v6993 = vpop.f32.mrb[0].mxu0
  %v6994 = vadd.f32 0.0, %v6993
  %v6995 = vpop.f32.mrb[0].mxu0
  %v6996 = vadd.f32 0.0, %v6995
  %v6997 = vpop.f32.mrb[0].mxu0
  %v6998 = vadd.f32 0.0, %v6997
  %v6999 = vpop.f32.mrb[0].mxu0
  %v7000 = vadd.f32 0.0, %v6999
  %7001 = vdwg.mxu0
  %v7002 = vpack.c.bf16 %v6998, %v6994
  %v7003 = vpack.c.bf16 %v7000, %v6996
  %v7005 = vsel %vm718, %v7003, 0
  %7007 = vmatprep.subr.bf16.mxu0 0
  %7008 = vmatpush1.bf16.msra.mxu0 %v697
  %7009 = vmatprep.subr.bf16.mxu0 0
  %7010 = vmatpush1.bf16.msra.mxu0 %v698
  %7011 = vmatprep.subr.bf16.mxu0 0
  %7012 = vmatpush1.bf16.msra.mxu0 %v699
  %7013 = vmatprep.subr.bf16.mxu0 0
  %7014 = vmatpush1.bf16.msra.mxu0 %v700
  %7015 = vmatprep.subr.bf16.mxu0 0
  %7016 = vmatpush1.bf16.msra.mxu0 %v701
  %7017 = vmatprep.subr.bf16.mxu0 0
  %7018 = vmatpush1.bf16.msra.mxu0 %v702
  %7019 = vmatprep.subr.bf16.mxu0 0
  %7020 = vmatpush1.bf16.msra.mxu0 %v703
  %7021 = vmatprep.subr.bf16.mxu0 0
  %7022 = vmatpush1.bf16.msra.mxu0 %v704
  %7023 = vmatprep.subr.bf16.mxu0 0
  %7024 = vmatpush1.bf16.msra.mxu0 %v705
  %7025 = vmatprep.subr.bf16.mxu0 0
  %7026 = vmatpush1.bf16.msra.mxu0 %v706
  %7027 = vmatprep.subr.bf16.mxu0 0
  %7028 = vmatpush1.bf16.msra.mxu0 %v724
  %7029 = vmatprep.subr.bf16.mxu0 0
  %7030 = vmatpush1.bf16.msra.mxu0 0
  %7031 = vmatprep.subr.bf16.mxu0 0
  %7032 = vmatpush1.bf16.msra.mxu0 0
  %7033 = vmatprep.subr.bf16.mxu0 0
  %7034 = vmatpush1.bf16.msra.mxu0 0
  %7035 = vmatprep.subr.bf16.mxu0 0
  %7036 = vmatpush1.bf16.msra.mxu0 0
  %7037 = vmatprep.subr.bf16.mxu0 0
  %7038 = vmatpush1.bf16.msra.mxu0 0
  %7039 = vmatprep.mubr.bf16.mxu0 %v7005
  %7040 = vmatmul.mubr.bf16.gmra.mrb[0].mxu0 %v7002
  %v7041 = vpop.f32.mrb[0].mxu0
  %v7042 = vadd.f32 0.0, %v7041
  %v7043 = vpop.f32.mrb[0].mxu0
  %v7044 = vpop.f32.mrb[0].mxu0
  %v7045 = vadd.f32 0.0, %v7044
  %v7046 = vpop.f32.mrb[0].mxu0
  %7047 = vdwg.mxu0
  %v7048 = vpack.c.bf16 %v7045, %v7042
  %v7050 = vshrl.u32 %v7048, 16
  %v7052 = vshll.u32 %v7048, 16
  %v7054 = vrot.slane %v7052, 1
  %v7055 = vor.u32 %v7050, %v7054
  %v7057 = vsel %vm853, %v7055, 0
  %7059 = vmatprep.subr.bf16.mxu0 %v832
  %7060 = vmatpush1.bf16.msra.mxu0 %v831
  %7061 = vmatprep.subr.bf16.mxu0 %v834
  %7062 = vmatpush1.bf16.msra.mxu0 %v833
  %7063 = vmatprep.subr.bf16.mxu0 %v836
  %7064 = vmatpush1.bf16.msra.mxu0 %v835
  %7065 = vmatprep.subr.bf16.mxu0 %v838
  %7066 = vmatpush1.bf16.msra.mxu0 %v837
  %7067 = vmatprep.subr.bf16.mxu0 %v840
  %7068 = vmatpush1.bf16.msra.mxu0 %v839
  %7069 = vmatprep.subr.bf16.mxu0 %v862
  %7070 = vmatpush1.bf16.msra.mxu0 %v859
  %7071 = vmatprep.subr.bf16.mxu0 0
  %7072 = vmatpush1.bf16.msra.mxu0 0
  %7073 = vmatprep.subr.bf16.mxu0 0
  %7074 = vmatpush1.bf16.msra.mxu0 0
  %7075 = vmatprep.subr.bf16.mxu0 0
  %7076 = vmatpush1.bf16.msra.mxu0 0
  %7077 = vmatprep.subr.bf16.mxu0 0
  %7078 = vmatpush1.bf16.msra.mxu0 0
  %7079 = vmatprep.subr.bf16.mxu0 0
  %7080 = vmatpush1.bf16.msra.mxu0 0
  %7081 = vmatprep.subr.bf16.mxu0 0
  %7082 = vmatpush1.bf16.msra.mxu0 0
  %7083 = vmatprep.subr.bf16.mxu0 0
  %7084 = vmatpush1.bf16.msra.mxu0 0
  %7085 = vmatprep.subr.bf16.mxu0 0
  %7086 = vmatpush1.bf16.msra.mxu0 0
  %7087 = vmatprep.subr.bf16.mxu0 0
  %7088 = vmatpush1.bf16.msra.mxu0 0
  %7089 = vmatprep.subr.bf16.mxu0 0
  %7090 = vmatpush1.bf16.msra.mxu0 0
  %7091 = vmatprep.mubr.bf16.mxu0 0
  %7092 = vmatmul.mubr.bf16.gmra.mrb[0].mxu0 %v7057
  %v7093 = vpop.f32.mrb[0].mxu0
  %v7094 = vadd.f32 0.0, %v7093
  %v7095 = vpop.f32.mrb[0].mxu0
  %v7096 = vadd.f32 0.0, %v7095
  %v7097 = vpop.f32.mrb[0].mxu0
  %v7098 = vadd.f32 0.0, %v7097
  %v7099 = vpop.f32.mrb[0].mxu0
  %v7100 = vadd.f32 0.0, %v7099
  %7101 = vdwg.mxu0
  %v7102 = vsel %vm853, %v7048, 0
  %7104 = vmatprep.subr.bf16.mxu0 %v941
  %7105 = vmatpush1.bf16.msra.mxu0 %v940
  %7106 = vmatprep.subr.bf16.mxu0 %v943
  %7107 = vmatpush1.bf16.msra.mxu0 %v942
  %7108 = vmatprep.subr.bf16.mxu0 %v945
  %7109 = vmatpush1.bf16.msra.mxu0 %v944
  %7110 = vmatprep.subr.bf16.mxu0 %v947
  %7111 = vmatpush1.bf16.msra.mxu0 %v946
  %7112 = vmatprep.subr.bf16.mxu0 %v949
  %7113 = vmatpush1.bf16.msra.mxu0 %v948
  %7114 = vmatprep.subr.bf16.mxu0 %v968
  %7115 = vmatpush1.bf16.msra.mxu0 %v965
  %7116 = vmatprep.subr.bf16.mxu0 0
  %7117 = vmatpush1.bf16.msra.mxu0 0
  %7118 = vmatprep.subr.bf16.mxu0 0
  %7119 = vmatpush1.bf16.msra.mxu0 0
  %7120 = vmatprep.subr.bf16.mxu0 0
  %7121 = vmatpush1.bf16.msra.mxu0 0
  %7122 = vmatprep.subr.bf16.mxu0 0
  %7123 = vmatpush1.bf16.msra.mxu0 0
  %7124 = vmatprep.subr.bf16.mxu0 0
  %7125 = vmatpush1.bf16.msra.mxu0 0
  %7126 = vmatprep.subr.bf16.mxu0 0
  %7127 = vmatpush1.bf16.msra.mxu0 0
  %7128 = vmatprep.subr.bf16.mxu0 0
  %7129 = vmatpush1.bf16.msra.mxu0 0
  %7130 = vmatprep.subr.bf16.mxu0 0
  %7131 = vmatpush1.bf16.msra.mxu0 0
  %7132 = vmatprep.subr.bf16.mxu0 0
  %7133 = vmatpush1.bf16.msra.mxu0 0
  %7134 = vmatprep.subr.bf16.mxu0 0
  %7135 = vmatpush1.bf16.msra.mxu0 0
  %7136 = vmatprep.mubr.bf16.mxu0 0
  %7137 = vmatmul.mubr.bf16.gmra.mrb[0].mxu0 %v7102
  %v7138 = vpop.f32.mrb[0].mxu0
  %v7139 = vadd.f32 %v7094, %v7138
  %v7140 = vpop.f32.mrb[0].mxu0
  %v7141 = vadd.f32 %v7096, %v7140
  %v7142 = vpop.f32.mrb[0].mxu0
  %v7143 = vadd.f32 %v7098, %v7142
  %v7144 = vpop.f32.mrb[0].mxu0
  %v7145 = vadd.f32 %v7100, %v7144
  %7146 = vdwg.mxu0
  %v7148 = vrot.slane %v7048, 1
  %v7150 = vsel %vm853, %v7148, 0
  %7152 = vmatprep.subr.bf16.mxu0 %v1061
  %7153 = vmatpush1.bf16.msra.mxu0 %v1060
  %7154 = vmatprep.subr.bf16.mxu0 %v1063
  %7155 = vmatpush1.bf16.msra.mxu0 %v1062
  %7156 = vmatprep.subr.bf16.mxu0 %v1065
  %7157 = vmatpush1.bf16.msra.mxu0 %v1064
  %7158 = vmatprep.subr.bf16.mxu0 %v1067
  %7159 = vmatpush1.bf16.msra.mxu0 %v1066
  %7160 = vmatprep.subr.bf16.mxu0 %v1069
  %7161 = vmatpush1.bf16.msra.mxu0 %v1068
  %7162 = vmatprep.subr.bf16.mxu0 %v1089
  %7163 = vmatpush1.bf16.msra.mxu0 %v1086
  %7164 = vmatprep.subr.bf16.mxu0 0
  %7165 = vmatpush1.bf16.msra.mxu0 0
  %7166 = vmatprep.subr.bf16.mxu0 0
  %7167 = vmatpush1.bf16.msra.mxu0 0
  %7168 = vmatprep.subr.bf16.mxu0 0
  %7169 = vmatpush1.bf16.msra.mxu0 0
  %7170 = vmatprep.subr.bf16.mxu0 0
  %7171 = vmatpush1.bf16.msra.mxu0 0
  %7172 = vmatprep.subr.bf16.mxu0 0
  %7173 = vmatpush1.bf16.msra.mxu0 0
  %7174 = vmatprep.subr.bf16.mxu0 0
  %7175 = vmatpush1.bf16.msra.mxu0 0
  %7176 = vmatprep.subr.bf16.mxu0 0
  %7177 = vmatpush1.bf16.msra.mxu0 0
  %7178 = vmatprep.subr.bf16.mxu0 0
  %7179 = vmatpush1.bf16.msra.mxu0 0
  %7180 = vmatprep.subr.bf16.mxu0 0
  %7181 = vmatpush1.bf16.msra.mxu0 0
  %7182 = vmatprep.subr.bf16.mxu0 0
  %7183 = vmatpush1.bf16.msra.mxu0 0
  %7184 = vmatprep.mubr.bf16.mxu0 0
  %7185 = vmatmul.mubr.bf16.gmra.mrb[0].mxu0 %v7150
  %v7186 = vpop.f32.mrb[0].mxu0
  %v7187 = vadd.f32 0.0, %v7186
  %v7188 = vpop.f32.mrb[0].mxu0
  %v7189 = vadd.f32 0.0, %v7188
  %v7190 = vpop.f32.mrb[0].mxu0
  %v7191 = vadd.f32 0.0, %v7190
  %v7192 = vpop.f32.mrb[0].mxu0
  %v7193 = vadd.f32 0.0, %v7192
  %7194 = vdwg.mxu0
  %v7195 = vadd.f32 %v7139, %v7187
  %v7196 = vadd.f32 %v7141, %v7189
  %v7197 = vadd.f32 %v7143, %v7191
  %v7198 = vadd.f32 %v7145, %v7193
  %v7199 = vrot.slane %v7050, 1
  %v7200 = vrot.slane %v7052, 2
  %v7201 = vor.u32 %v7199, %v7200
  %v7203 = vsel %vm853, %v7201, 0
  %7205 = vmatprep.subr.bf16.mxu0 %v1187
  %7206 = vmatpush1.bf16.msra.mxu0 %v1186
  %7207 = vmatprep.subr.bf16.mxu0 %v1189
  %7208 = vmatpush1.bf16.msra.mxu0 %v1188
  %7209 = vmatprep.subr.bf16.mxu0 %v1191
  %7210 = vmatpush1.bf16.msra.mxu0 %v1190
  %7211 = vmatprep.subr.bf16.mxu0 %v1193
  %7212 = vmatpush1.bf16.msra.mxu0 %v1192
  %7213 = vmatprep.subr.bf16.mxu0 %v1195
  %7214 = vmatpush1.bf16.msra.mxu0 %v1194
  %7215 = vmatprep.subr.bf16.mxu0 %v1215
  %7216 = vmatpush1.bf16.msra.mxu0 %v1212
  %7217 = vmatprep.subr.bf16.mxu0 0
  %7218 = vmatpush1.bf16.msra.mxu0 0
  %7219 = vmatprep.subr.bf16.mxu0 0
  %7220 = vmatpush1.bf16.msra.mxu0 0
  %7221 = vmatprep.subr.bf16.mxu0 0
  %7222 = vmatpush1.bf16.msra.mxu0 0
  %7223 = vmatprep.subr.bf16.mxu0 0
  %7224 = vmatpush1.bf16.msra.mxu0 0
  %7225 = vmatprep.subr.bf16.mxu0 0
  %7226 = vmatpush1.bf16.msra.mxu0 0
  %7227 = vmatprep.subr.bf16.mxu0 0
  %7228 = vmatpush1.bf16.msra.mxu0 0
  %7229 = vmatprep.subr.bf16.mxu0 0
  %7230 = vmatpush1.bf16.msra.mxu0 0
  %7231 = vmatprep.subr.bf16.mxu0 0
  %7232 = vmatpush1.bf16.msra.mxu0 0
  %7233 = vmatprep.subr.bf16.mxu0 0
  %7234 = vmatpush1.bf16.msra.mxu0 0
  %7235 = vmatprep.subr.bf16.mxu0 0
  %7236 = vmatpush1.bf16.msra.mxu0 0
  %7237 = vmatprep.mubr.bf16.mxu0 0
  %7238 = vmatmul.mubr.bf16.gmra.mrb[0].mxu0 %v7203
  %v7239 = vpop.f32.mrb[0].mxu0
  %v7240 = vadd.f32 0.0, %v7239
  %v7241 = vpop.f32.mrb[0].mxu0
  %v7242 = vadd.f32 0.0, %v7241
  %v7243 = vpop.f32.mrb[0].mxu0
  %v7244 = vadd.f32 0.0, %v7243
  %v7245 = vpop.f32.mrb[0].mxu0
  %v7246 = vadd.f32 0.0, %v7245
  %7247 = vdwg.mxu0
  %v7248 = vadd.f32 %v7195, %v7240
  %v7249 = vadd.f32 %v7196, %v7242
  %v7250 = vadd.f32 %v7197, %v7244
  %v7251 = vadd.f32 %v7198, %v7246
  %v7252 = vrot.slane %v7048, 2
  %v7254 = vsel %vm853, %v7252, 0
  %7256 = vmatprep.subr.bf16.mxu0 %v1311
  %7257 = vmatpush1.bf16.msra.mxu0 %v1310
  %7258 = vmatprep.subr.bf16.mxu0 %v1313
  %7259 = vmatpush1.bf16.msra.mxu0 %v1312
  %7260 = vmatprep.subr.bf16.mxu0 %v1315
  %7261 = vmatpush1.bf16.msra.mxu0 %v1314
  %7262 = vmatprep.subr.bf16.mxu0 %v1317
  %7263 = vmatpush1.bf16.msra.mxu0 %v1316
  %7264 = vmatprep.subr.bf16.mxu0 %v1319
  %7265 = vmatpush1.bf16.msra.mxu0 %v1318
  %7266 = vmatprep.subr.bf16.mxu0 %v1339
  %7267 = vmatpush1.bf16.msra.mxu0 %v1336
  %7268 = vmatprep.subr.bf16.mxu0 0
  %7269 = vmatpush1.bf16.msra.mxu0 0
  %7270 = vmatprep.subr.bf16.mxu0 0
  %7271 = vmatpush1.bf16.msra.mxu0 0
  %7272 = vmatprep.subr.bf16.mxu0 0
  %7273 = vmatpush1.bf16.msra.mxu0 0
  %7274 = vmatprep.subr.bf16.mxu0 0
  %7275 = vmatpush1.bf16.msra.mxu0 0
  %7276 = vmatprep.subr.bf16.mxu0 0
  %7277 = vmatpush1.bf16.msra.mxu0 0
  %7278 = vmatprep.subr.bf16.mxu0 0
  %7279 = vmatpush1.bf16.msra.mxu0 0
  %7280 = vmatprep.subr.bf16.mxu0 0
  %7281 = vmatpush1.bf16.msra.mxu0 0
  %7282 = vmatprep.subr.bf16.mxu0 0
  %7283 = vmatpush1.bf16.msra.mxu0 0
  %7284 = vmatprep.subr.bf16.mxu0 0
  %7285 = vmatpush1.bf16.msra.mxu0 0
  %7286 = vmatprep.subr.bf16.mxu0 0
  %7287 = vmatpush1.bf16.msra.mxu0 0
  %7288 = vmatprep.mubr.bf16.mxu0 0
  %7289 = vmatmul.mubr.bf16.gmra.mrb[0].mxu0 %v7254
  %v7290 = vpop.f32.mrb[0].mxu0
  %v7291 = vadd.f32 0.0, %v7290
  %v7292 = vpop.f32.mrb[0].mxu0
  %v7293 = vadd.f32 0.0, %v7292
  %v7294 = vpop.f32.mrb[0].mxu0
  %v7295 = vadd.f32 0.0, %v7294
  %v7296 = vpop.f32.mrb[0].mxu0
  %v7297 = vadd.f32 0.0, %v7296
  %7298 = vdwg.mxu0
  %v7299 = vadd.f32 %v7248, %v7291
  %v7300 = vadd.f32 %v7249, %v7293
  %v7301 = vadd.f32 %v7250, %v7295
  %v7302 = vadd.f32 %v7251, %v7297
  %v7303 = vadd.f32 %v7299, %v1393
  %v7304 = vadd.f32 %v7300, %v1397
  %v7305 = vadd.f32 %v7301, %v1393
  %v7306 = vadd.f32 %v7302, %v1397
  %v7307 = vmax.f32 %v7303, 0.0
  %v7308 = vmax.f32 %v7304, 0.0
  %v7309 = vmax.f32 %v7305, 0.0
  %v7310 = vmax.f32 %v7306, 0.0
  %v7311 = vpack.c.bf16 %v7309, %v7307
  %v7312 = vpack.c.bf16 %v7310, %v7308
  %v7314 = vsel %vm1415, %v7311, 0
  %v7317 = vsel %vm1415, %v7312, 0
  %7319 = vmatprep.subr.bf16.mxu0 %v7317
  %7320 = vmatpush1.bf16.msra.mxu0 %v7314
  %7321 = vmatprep.subr.bf16.mxu0 0
  %7322 = vmatpush1.bf16.msra.mxu0 0
  %7323 = vmatprep.subr.bf16.mxu0 0
  %7324 = vmatpush1.bf16.msra.mxu0 0
  %7325 = vmatprep.subr.bf16.mxu0 0
  %7326 = vmatpush1.bf16.msra.mxu0 0
  %7327 = vmatprep.subr.bf16.mxu0 0
  %7328 = vmatpush1.bf16.msra.mxu0 0
  %7329 = vmatprep.subr.bf16.mxu0 0
  %7330 = vmatpush1.bf16.msra.mxu0 0
  %7331 = vmatprep.subr.bf16.mxu0 0
  %7332 = vmatpush1.bf16.msra.mxu0 0
  %7333 = vmatprep.subr.bf16.mxu0 0
  %7334 = vmatpush1.bf16.msra.mxu0 0
  %7335 = vmatprep.subr.bf16.mxu0 0
  %7336 = vmatpush1.bf16.msra.mxu0 0
  %7337 = vmatprep.subr.bf16.mxu0 0
  %7338 = vmatpush1.bf16.msra.mxu0 0
  %7339 = vmatprep.subr.bf16.mxu0 0
  %7340 = vmatpush1.bf16.msra.mxu0 0
  %7341 = vmatprep.subr.bf16.mxu0 0
  %7342 = vmatpush1.bf16.msra.mxu0 0
  %7343 = vmatprep.subr.bf16.mxu0 0
  %7344 = vmatpush1.bf16.msra.mxu0 0
  %7345 = vmatprep.subr.bf16.mxu0 0
  %7346 = vmatpush1.bf16.msra.mxu0 0
  %7347 = vmatprep.subr.bf16.mxu0 0
  %7348 = vmatpush1.bf16.msra.mxu0 0
  %7349 = vmatprep.subr.bf16.mxu0 0
  %7350 = vmatpush1.bf16.msra.mxu0 0
  %7351 = vmatprep.mubr.bf16.mxu0 0
  %7352 = vmatmul.mubr.bf16.gmra.mrb[0].mxu0 %v1413
  %v7353 = vpop.f32.mrb[0].mxu0
  %v7354 = vadd.f32 0.0, %v7353
  %v7355 = vpop.f32.mrb[0].mxu0
  %v7356 = vadd.f32 0.0, %v7355
  %v7357 = vpop.f32.mrb[0].mxu0
  %v7358 = vpop.f32.mrb[0].mxu0
  %7359 = vdwg.mxu0
  %v7360 = vpack.c.bf16 %v7354, %v7354
  %v7361 = vpack.c.bf16 %v7356, %v7356
  %v7363 = vsel %vm110, %v7361, 0
  %7365 = vmatprep.subr.bf16.mxu0 0
  %7366 = vmatpush1.bf16.msra.mxu0 %v1525
  %7367 = vmatprep.subr.bf16.mxu0 0
  %7368 = vmatpush1.bf16.msra.mxu0 %v1526
  %7369 = vmatprep.subr.bf16.mxu0 0
  %7370 = vmatpush1.bf16.msra.mxu0 %v1527
  %7371 = vmatprep.subr.bf16.mxu0 0
  %7372 = vmatpush1.bf16.msra.mxu0 %v1528
  %7373 = vmatprep.subr.bf16.mxu0 0
  %7374 = vmatpush1.bf16.msra.mxu0 %v1529
  %7375 = vmatprep.subr.bf16.mxu0 0
  %7376 = vmatpush1.bf16.msra.mxu0 %v1530
  %7377 = vmatprep.subr.bf16.mxu0 0
  %7378 = vmatpush1.bf16.msra.mxu0 %v1531
  %7379 = vmatprep.subr.bf16.mxu0 0
  %7380 = vmatpush1.bf16.msra.mxu0 %v1532
  %7381 = vmatprep.subr.bf16.mxu0 0
  %7382 = vmatpush1.bf16.msra.mxu0 %v1533
  %7383 = vmatprep.subr.bf16.mxu0 0
  %7384 = vmatpush1.bf16.msra.mxu0 %v1534
  %7385 = vmatprep.subr.bf16.mxu0 0
  %7386 = vmatpush1.bf16.msra.mxu0 0
  %7387 = vmatprep.subr.bf16.mxu0 0
  %7388 = vmatpush1.bf16.msra.mxu0 0
  %7389 = vmatprep.subr.bf16.mxu0 0
  %7390 = vmatpush1.bf16.msra.mxu0 0
  %7391 = vmatprep.subr.bf16.mxu0 0
  %7392 = vmatpush1.bf16.msra.mxu0 0
  %7393 = vmatprep.subr.bf16.mxu0 0
  %7394 = vmatpush1.bf16.msra.mxu0 0
  %7395 = vmatprep.subr.bf16.mxu0 0
  %7396 = vmatpush1.bf16.msra.mxu0 0
  %7397 = vmatprep.mubr.bf16.mxu0 %v7363
  %7398 = vmatmul.mubr.bf16.gmra.mrb[0].mxu0 %v7360
  %v7399 = vpop.f32.mrb[0].mxu0
  %v7400 = vadd.f32 0.0, %v7399
  %v7401 = vpop.f32.mrb[0].mxu0
  %v7402 = vpop.f32.mrb[0].mxu0
  %v7403 = vpop.f32.mrb[0].mxu0
  %7404 = vdwg.mxu0
  %v7406 = vrot.slane %v2414, 7
  %v7409 = vrot.slane %v3245, 6
  %v7412 = vrot.slane %v4076, 5
  %v7415 = vrot.slane %v4907, 4
  %v7418 = vrot.slane %v5738, 3
  %v7421 = vrot.slane %v6569, 2
  %v7424 = vrot.slane %v7400, 1
  %vm7426 = vcmask 1040384
  %v7427 = vsel %vm7426, %v1583, %v7406
  %v7428 = vsel %vm857, %v7427, %v7409
  %vm7429 = vcmask 1042432
  %v7430 = vsel %vm7429, %v7428, %v7412
  %v7431 = vsel %vm722, %v7430, %v7415
  %v7432 = vsel %vm1415, %v7431, %v7418
  %v7433 = vsel %vm582, %v7432, %v7421
  %vm7434 = vcmask 1046528
  %v7435 = vsel %vm7434, %v7433, %v7424
  %v7436 = vpack.c.bf16 %v7435, %v7435
  %v7437 = vld [vmem:[%s9] sm:$0xf]
  %v7438 = vld [vmem:[%s9 + $0x4] sm:$0xf]
  %v7439 = vld [vmem:[%s9 + $0x8] sm:$0xf]
  %v7440 = vld [vmem:[%s9 + $0xc] sm:$0xf]
  %v7441 = vld [vmem:[%s9 + $0x10] sm:$0xf]
  %v7442 = vld [vmem:[%s9 + $0x14] sm:$0xf]
  %v7443 = vld [vmem:[%s9 + $0x18] sm:$0xf]
  %v7444 = vld [vmem:[%s9 + $0x1c] sm:$0xf]
  %v7445 = vld [vmem:[%s9 + $0x20] sm:$0xf]
  %v7446 = vld [vmem:[%s9 + $0x24] sm:$0xf]
  %v7448 = vrot.slane %v1583, 1
  %v7450 = vrot.slane %v3245, 7
  %v7452 = vrot.slane %v4076, 6
  %v7454 = vrot.slane %v4907, 5
  %v7456 = vrot.slane %v5738, 4
  %v7458 = vrot.slane %v6569, 3
  %v7460 = vrot.slane %v7400, 2
  %v7462 = vsel %vm7426, %v7448, %v2414
  %v7463 = vsel %vm857, %v7462, %v7450
  %v7464 = vsel %vm7429, %v7463, %v7452
  %v7465 = vsel %vm722, %v7464, %v7454
  %v7466 = vsel %vm1415, %v7465, %v7456
  %v7467 = vsel %vm582, %v7466, %v7458
  %v7468 = vsel %vm7434, %v7467, %v7460
  %v7469 = vpack.c.bf16 %v7468, %v7468
  %s7470 = scalar_lea.vmem %s9, 40
  %v7471 = vld [vmem:[%s7470] sm:$0xf]
  %v7472 = vld [vmem:[%s7470 + $0x4] sm:$0xf]
  %v7473 = vld [vmem:[%s7470 + $0x8] sm:$0xf]
  %v7474 = vld [vmem:[%s7470 + $0xc] sm:$0xf]
  %v7475 = vld [vmem:[%s7470 + $0x10] sm:$0xf]
  %v7476 = vld [vmem:[%s7470 + $0x14] sm:$0xf]
  %v7477 = vld [vmem:[%s7470 + $0x18] sm:$0xf]
  %v7478 = vld [vmem:[%s7470 + $0x1c] sm:$0xf]
  %v7479 = vld [vmem:[%s7470 + $0x20] sm:$0xf]
  %v7480 = vld [vmem:[%s7470 + $0x24] sm:$0xf]
  %v7491 = vunpack.c.l.b16 %v7471
  %v7492 = vunpack.c.l.b16 %v7472
  %v7493 = vunpack.c.l.b16 %v7473
  %v7494 = vunpack.c.l.b16 %v7474
  %v7495 = vunpack.c.l.b16 %v7475
  %v7496 = vunpack.c.l.b16 %v7476
  %v7497 = vunpack.c.l.b16 %v7477
  %v7498 = vunpack.c.l.b16 %v7478
  %v7499 = vunpack.c.l.b16 %v7479
  %v7500 = vunpack.c.l.b16 %v7480
  %v7501 = vpack.c.b16 %v7492, %v7491
  %v7502 = vpack.c.b16 %v7494, %v7493
  %v7503 = vpack.c.b16 %v7496, %v7495
  %v7504 = vpack.c.b16 %v7498, %v7497
  %v7505 = vpack.c.b16 %v7500, %v7499
  %vm7511 = vcmask 654336
  %v7513 = vsel %vm7511, %v7469, 0
  %7515 = vmatprep.subr.bf16.mxu0 0
  %7516 = vmatpush1.bf16.msra.mxu0 %v7501
  %7517 = vmatprep.subr.bf16.mxu0 0
  %7518 = vmatpush1.bf16.msra.mxu0 %v7502
  %7519 = vmatprep.subr.bf16.mxu0 0
  %7520 = vmatpush1.bf16.msra.mxu0 %v7503
  %7521 = vmatprep.subr.bf16.mxu0 0
  %7522 = vmatpush1.bf16.msra.mxu0 %v7504
  %7523 = vmatprep.subr.bf16.mxu0 0
  %7524 = vmatpush1.bf16.msra.mxu0 %v7505
  %7525 = vmatprep.subr.bf16.mxu0 0
  %7526 = vmatpush1.bf16.msra.mxu0 0
  %7527 = vmatprep.subr.bf16.mxu0 0
  %7528 = vmatpush1.bf16.msra.mxu0 0
  %7529 = vmatprep.subr.bf16.mxu0 0
  %7530 = vmatpush1.bf16.msra.mxu0 0
  %7531 = vmatprep.subr.bf16.mxu0 0
  %7532 = vmatpush1.bf16.msra.mxu0 0
  %7533 = vmatprep.subr.bf16.mxu0 0
  %7534 = vmatpush1.bf16.msra.mxu0 0
  %7535 = vmatprep.subr.bf16.mxu0 0
  %7536 = vmatpush1.bf16.msra.mxu0 0
  %7537 = vmatprep.subr.bf16.mxu0 0
  %7538 = vmatpush1.bf16.msra.mxu0 0
  %7539 = vmatprep.subr.bf16.mxu0 0
  %7540 = vmatpush1.bf16.msra.mxu0 0
  %7541 = vmatprep.subr.bf16.mxu0 0
  %7542 = vmatpush1.bf16.msra.mxu0 0
  %7543 = vmatprep.subr.bf16.mxu0 0
  %7544 = vmatpush1.bf16.msra.mxu0 0
  %7545 = vmatprep.subr.bf16.mxu0 0
  %7546 = vmatpush1.bf16.msra.mxu0 0
  %7547 = vmatprep.mubr.bf16.mxu0 0
  %7548 = vmatmul.mubr.bf16.gmra.mrb[0].mxu0 %v7513
  %v7549 = vpop.f32.mrb[0].mxu0
  %v7550 = vadd.f32 0.0, %v7549
  %v7551 = vpop.f32.mrb[0].mxu0
  %v7552 = vpop.f32.mrb[0].mxu0
  %v7553 = vpop.f32.mrb[0].mxu0
  %7554 = vdwg.mxu0
  %v7565 = vunpack.c.l.b16 %v7437
  %v7566 = vunpack.c.l.b16 %v7438
  %v7567 = vunpack.c.l.b16 %v7439
  %v7568 = vunpack.c.l.b16 %v7440
  %v7569 = vunpack.c.l.b16 %v7441
  %v7570 = vunpack.c.l.b16 %v7442
  %v7571 = vunpack.c.l.b16 %v7443
  %v7572 = vunpack.c.l.b16 %v7444
  %v7573 = vunpack.c.l.b16 %v7445
  %v7574 = vunpack.c.l.b16 %v7446
  %v7575 = vpack.c.b16 %v7566, %v7565
  %v7576 = vpack.c.b16 %v7568, %v7567
  %v7577 = vpack.c.b16 %v7570, %v7569
  %v7578 = vpack.c.b16 %v7572, %v7571
  %v7579 = vpack.c.b16 %v7574, %v7573
  %v7586 = vsel %vm7511, %v7436, 0
  %7588 = vmatprep.subr.bf16.mxu0 0
  %7589 = vmatpush1.bf16.msra.mxu0 %v7575
  %7590 = vmatprep.subr.bf16.mxu0 0
  %7591 = vmatpush1.bf16.msra.mxu0 %v7576
  %7592 = vmatprep.subr.bf16.mxu0 0
  %7593 = vmatpush1.bf16.msra.mxu0 %v7577
  %7594 = vmatprep.subr.bf16.mxu0 0
  %7595 = vmatpush1.bf16.msra.mxu0 %v7578
  %7596 = vmatprep.subr.bf16.mxu0 0
  %7597 = vmatpush1.bf16.msra.mxu0 %v7579
  %7598 = vmatprep.subr.bf16.mxu0 0
  %7599 = vmatpush1.bf16.msra.mxu0 0
  %7600 = vmatprep.subr.bf16.mxu0 0
  %7601 = vmatpush1.bf16.msra.mxu0 0
  %7602 = vmatprep.subr.bf16.mxu0 0
  %7603 = vmatpush1.bf16.msra.mxu0 0
  %7604 = vmatprep.subr.bf16.mxu0 0
  %7605 = vmatpush1.bf16.msra.mxu0 0
  %7606 = vmatprep.subr.bf16.mxu0 0
  %7607 = vmatpush1.bf16.msra.mxu0 0
  %7608 = vmatprep.subr.bf16.mxu0 0
  %7609 = vmatpush1.bf16.msra.mxu0 0
  %7610 = vmatprep.subr.bf16.mxu0 0
  %7611 = vmatpush1.bf16.msra.mxu0 0
  %7612 = vmatprep.subr.bf16.mxu0 0
  %7613 = vmatpush1.bf16.msra.mxu0 0
  %7614 = vmatprep.subr.bf16.mxu0 0
  %7615 = vmatpush1.bf16.msra.mxu0 0
  %7616 = vmatprep.subr.bf16.mxu0 0
  %7617 = vmatpush1.bf16.msra.mxu0 0
  %7618 = vmatprep.subr.bf16.mxu0 0
  %7619 = vmatpush1.bf16.msra.mxu0 0
  %7620 = vmatprep.mubr.bf16.mxu0 0
  %7621 = vmatmul.mubr.bf16.gmra.mrb[0].mxu0 %v7586
  %v7622 = vpop.f32.mrb[0].mxu0
  %v7623 = vadd.f32 %v7550, %v7622
  %v7624 = vpop.f32.mrb[0].mxu0
  %v7625 = vpop.f32.mrb[0].mxu0
  %v7626 = vpop.f32.mrb[0].mxu0
  %7627 = vdwg.mxu0
  %v7628 = vrot.slane %v1583, 2
  %v7630 = vrot.slane %v2414, 1
  %v7632 = vrot.slane %v4076, 7
  %v7634 = vrot.slane %v4907, 6
  %v7636 = vrot.slane %v5738, 5
  %v7638 = vrot.slane %v6569, 4
  %v7640 = vrot.slane %v7400, 3
  %v7642 = vsel %vm7426, %v7628, %v7630
  %v7643 = vsel %vm857, %v7642, %v3245
  %v7644 = vsel %vm7429, %v7643, %v7632
  %v7645 = vsel %vm722, %v7644, %v7634
  %v7646 = vsel %vm1415, %v7645, %v7636
  %v7647 = vsel %vm582, %v7646, %v7638
  %v7648 = vsel %vm7434, %v7647, %v7640
  %v7649 = vpack.c.bf16 %v7648, %v7648
  %s7650 = scalar_lea.vmem %s9, 80
  %v7651 = vld [vmem:[%s7650] sm:$0xf]
  %v7652 = vld [vmem:[%s7650 + $0x4] sm:$0xf]
  %v7653 = vld [vmem:[%s7650 + $0x8] sm:$0xf]
  %v7654 = vld [vmem:[%s7650 + $0xc] sm:$0xf]
  %v7655 = vld [vmem:[%s7650 + $0x10] sm:$0xf]
  %v7656 = vld [vmem:[%s7650 + $0x14] sm:$0xf]
  %v7657 = vld [vmem:[%s7650 + $0x18] sm:$0xf]
  %v7658 = vld [vmem:[%s7650 + $0x1c] sm:$0xf]
  %v7659 = vld [vmem:[%s7650 + $0x20] sm:$0xf]
  %v7660 = vld [vmem:[%s7650 + $0x24] sm:$0xf]
  %v7671 = vunpack.c.l.b16 %v7651
  %v7672 = vunpack.c.l.b16 %v7652
  %v7673 = vunpack.c.l.b16 %v7653
  %v7674 = vunpack.c.l.b16 %v7654
  %v7675 = vunpack.c.l.b16 %v7655
  %v7676 = vunpack.c.l.b16 %v7656
  %v7677 = vunpack.c.l.b16 %v7657
  %v7678 = vunpack.c.l.b16 %v7658
  %v7679 = vunpack.c.l.b16 %v7659
  %v7680 = vunpack.c.l.b16 %v7660
  %v7681 = vpack.c.b16 %v7672, %v7671
  %v7682 = vpack.c.b16 %v7674, %v7673
  %v7683 = vpack.c.b16 %v7676, %v7675
  %v7684 = vpack.c.b16 %v7678, %v7677
  %v7685 = vpack.c.b16 %v7680, %v7679
  %v7692 = vsel %vm7511, %v7649, 0
  %7694 = vmatprep.subr.bf16.mxu0 0
  %7695 = vmatpush1.bf16.msra.mxu0 %v7681
  %7696 = vmatprep.subr.bf16.mxu0 0
  %7697 = vmatpush1.bf16.msra.mxu0 %v7682
  %7698 = vmatprep.subr.bf16.mxu0 0
  %7699 = vmatpush1.bf16.msra.mxu0 %v7683
  %7700 = vmatprep.subr.bf16.mxu0 0
  %7701 = vmatpush1.bf16.msra.mxu0 %v7684
  %7702 = vmatprep.subr.bf16.mxu0 0
  %7703 = vmatpush1.bf16.msra.mxu0 %v7685
  %7704 = vmatprep.subr.bf16.mxu0 0
  %7705 = vmatpush1.bf16.msra.mxu0 0
  %7706 = vmatprep.subr.bf16.mxu0 0
  %7707 = vmatpush1.bf16.msra.mxu0 0
  %7708 = vmatprep.subr.bf16.mxu0 0
  %7709 = vmatpush1.bf16.msra.mxu0 0
  %7710 = vmatprep.subr.bf16.mxu0 0
  %7711 = vmatpush1.bf16.msra.mxu0 0
  %7712 = vmatprep.subr.bf16.mxu0 0
  %7713 = vmatpush1.bf16.msra.mxu0 0
  %7714 = vmatprep.subr.bf16.mxu0 0
  %7715 = vmatpush1.bf16.msra.mxu0 0
  %7716 = vmatprep.subr.bf16.mxu0 0
  %7717 = vmatpush1.bf16.msra.mxu0 0
  %7718 = vmatprep.subr.bf16.mxu0 0
  %7719 = vmatpush1.bf16.msra.mxu0 0
  %7720 = vmatprep.subr.bf16.mxu0 0
  %7721 = vmatpush1.bf16.msra.mxu0 0
  %7722 = vmatprep.subr.bf16.mxu0 0
  %7723 = vmatpush1.bf16.msra.mxu0 0
  %7724 = vmatprep.subr.bf16.mxu0 0
  %7725 = vmatpush1.bf16.msra.mxu0 0
  %7726 = vmatprep.mubr.bf16.mxu0 0
  %7727 = vmatmul.mubr.bf16.gmra.mrb[0].mxu0 %v7692
  %v7728 = vpop.f32.mrb[0].mxu0
  %v7729 = vadd.f32 0.0, %v7728
  %v7730 = vpop.f32.mrb[0].mxu0
  %v7731 = vpop.f32.mrb[0].mxu0
  %v7732 = vpop.f32.mrb[0].mxu0
  %7733 = vdwg.mxu0
  %v7734 = vadd.f32 %v7623, %v7729
  %v7735 = vrot.slane %v1583, 3
  %v7737 = vrot.slane %v2414, 2
  %v7739 = vrot.slane %v3245, 1
  %v7741 = vrot.slane %v4907, 7
  %v7743 = vrot.slane %v5738, 6
  %v7745 = vrot.slane %v6569, 5
  %v7747 = vrot.slane %v7400, 4
  %v7749 = vsel %vm7426, %v7735, %v7737
  %v7750 = vsel %vm857, %v7749, %v7739
  %v7751 = vsel %vm7429, %v7750, %v4076
  %v7752 = vsel %vm722, %v7751, %v7741
  %v7753 = vsel %vm1415, %v7752, %v7743
  %v7754 = vsel %vm582, %v7753, %v7745
  %v7755 = vsel %vm7434, %v7754, %v7747
  %v7756 = vpack.c.bf16 %v7755, %v7755
  %s7757 = scalar_lea.vmem %s9, 120
  %v7758 = vld [vmem:[%s7757] sm:$0xf]
  %v7759 = vld [vmem:[%s7757 + $0x4] sm:$0xf]
  %v7760 = vld [vmem:[%s7757 + $0x8] sm:$0xf]
  %v7761 = vld [vmem:[%s7757 + $0xc] sm:$0xf]
  %v7762 = vld [vmem:[%s7757 + $0x10] sm:$0xf]
  %v7763 = vld [vmem:[%s7757 + $0x14] sm:$0xf]
  %v7764 = vld [vmem:[%s7757 + $0x18] sm:$0xf]
  %v7765 = vld [vmem:[%s7757 + $0x1c] sm:$0xf]
  %v7766 = vld [vmem:[%s7757 + $0x20] sm:$0xf]
  %v7767 = vld [vmem:[%s7757 + $0x24] sm:$0xf]
  %v7778 = vunpack.c.l.b16 %v7758
  %v7779 = vunpack.c.l.b16 %v7759
  %v7780 = vunpack.c.l.b16 %v7760
  %v7781 = vunpack.c.l.b16 %v7761
  %v7782 = vunpack.c.l.b16 %v7762
  %v7783 = vunpack.c.l.b16 %v7763
  %v7784 = vunpack.c.l.b16 %v7764
  %v7785 = vunpack.c.l.b16 %v7765
  %v7786 = vunpack.c.l.b16 %v7766
  %v7787 = vunpack.c.l.b16 %v7767
  %v7788 = vpack.c.b16 %v7779, %v7778
  %v7789 = vpack.c.b16 %v7781, %v7780
  %v7790 = vpack.c.b16 %v7783, %v7782
  %v7791 = vpack.c.b16 %v7785, %v7784
  %v7792 = vpack.c.b16 %v7787, %v7786
  %v7799 = vsel %vm7511, %v7756, 0
  %7801 = vmatprep.subr.bf16.mxu0 0
  %7802 = vmatpush1.bf16.msra.mxu0 %v7788
  %7803 = vmatprep.subr.bf16.mxu0 0
  %7804 = vmatpush1.bf16.msra.mxu0 %v7789
  %7805 = vmatprep.subr.bf16.mxu0 0
  %7806 = vmatpush1.bf16.msra.mxu0 %v7790
  %7807 = vmatprep.subr.bf16.mxu0 0
  %7808 = vmatpush1.bf16.msra.mxu0 %v7791
  %7809 = vmatprep.subr.bf16.mxu0 0
  %7810 = vmatpush1.bf16.msra.mxu0 %v7792
  %7811 = vmatprep.subr.bf16.mxu0 0
  %7812 = vmatpush1.bf16.msra.mxu0 0
  %7813 = vmatprep.subr.bf16.mxu0 0
  %7814 = vmatpush1.bf16.msra.mxu0 0
  %7815 = vmatprep.subr.bf16.mxu0 0
  %7816 = vmatpush1.bf16.msra.mxu0 0
  %7817 = vmatprep.subr.bf16.mxu0 0
  %7818 = vmatpush1.bf16.msra.mxu0 0
  %7819 = vmatprep.subr.bf16.mxu0 0
  %7820 = vmatpush1.bf16.msra.mxu0 0
  %7821 = vmatprep.subr.bf16.mxu0 0
  %7822 = vmatpush1.bf16.msra.mxu0 0
  %7823 = vmatprep.subr.bf16.mxu0 0
  %7824 = vmatpush1.bf16.msra.mxu0 0
  %7825 = vmatprep.subr.bf16.mxu0 0
  %7826 = vmatpush1.bf16.msra.mxu0 0
  %7827 = vmatprep.subr.bf16.mxu0 0
  %7828 = vmatpush1.bf16.msra.mxu0 0
  %7829 = vmatprep.subr.bf16.mxu0 0
  %7830 = vmatpush1.bf16.msra.mxu0 0
  %7831 = vmatprep.subr.bf16.mxu0 0
  %7832 = vmatpush1.bf16.msra.mxu0 0
  %7833 = vmatprep.mubr.bf16.mxu0 0
  %7834 = vmatmul.mubr.bf16.gmra.mrb[0].mxu0 %v7799
  %v7835 = vpop.f32.mrb[0].mxu0
  %v7836 = vadd.f32 0.0, %v7835
  %v7837 = vpop.f32.mrb[0].mxu0
  %v7838 = vpop.f32.mrb[0].mxu0
  %v7839 = vpop.f32.mrb[0].mxu0
  %7840 = vdwg.mxu0
  %v7841 = vadd.f32 %v7734, %v7836
  %v7842 = vrot.slane %v1583, 4
  %v7844 = vrot.slane %v2414, 3
  %v7846 = vrot.slane %v3245, 2
  %v7848 = vrot.slane %v4076, 1
  %v7850 = vrot.slane %v5738, 7
  %v7852 = vrot.slane %v6569, 6
  %v7854 = vrot.slane %v7400, 5
  %v7856 = vsel %vm7426, %v7842, %v7844
  %v7857 = vsel %vm857, %v7856, %v7846
  %v7858 = vsel %vm7429, %v7857, %v7848
  %v7859 = vsel %vm722, %v7858, %v4907
  %v7860 = vsel %vm1415, %v7859, %v7850
  %v7861 = vsel %vm582, %v7860, %v7852
  %v7862 = vsel %vm7434, %v7861, %v7854
  %v7863 = vpack.c.bf16 %v7862, %v7862
  %s7864 = scalar_lea.vmem %s9, 160
  %v7865 = vld [vmem:[%s7864] sm:$0xf]
  %v7866 = vld [vmem:[%s7864 + $0x4] sm:$0xf]
  %v7867 = vld [vmem:[%s7864 + $0x8] sm:$0xf]
  %v7868 = vld [vmem:[%s7864 + $0xc] sm:$0xf]
  %v7869 = vld [vmem:[%s7864 + $0x10] sm:$0xf]
  %v7870 = vld [vmem:[%s7864 + $0x14] sm:$0xf]
  %v7871 = vld [vmem:[%s7864 + $0x18] sm:$0xf]
  %v7872 = vld [vmem:[%s7864 + $0x1c] sm:$0xf]
  %v7873 = vld [vmem:[%s7864 + $0x20] sm:$0xf]
  %v7874 = vld [vmem:[%s7864 + $0x24] sm:$0xf]
  %v7885 = vunpack.c.l.b16 %v7865
  %v7886 = vunpack.c.l.b16 %v7866
  %v7887 = vunpack.c.l.b16 %v7867
  %v7888 = vunpack.c.l.b16 %v7868
  %v7889 = vunpack.c.l.b16 %v7869
  %v7890 = vunpack.c.l.b16 %v7870
  %v7891 = vunpack.c.l.b16 %v7871
  %v7892 = vunpack.c.l.b16 %v7872
  %v7893 = vunpack.c.l.b16 %v7873
  %v7894 = vunpack.c.l.b16 %v7874
  %v7895 = vpack.c.b16 %v7886, %v7885
  %v7896 = vpack.c.b16 %v7888, %v7887
  %v7897 = vpack.c.b16 %v7890, %v7889
  %v7898 = vpack.c.b16 %v7892, %v7891
  %v7899 = vpack.c.b16 %v7894, %v7893
  %v7906 = vsel %vm7511, %v7863, 0
  %7908 = vmatprep.subr.bf16.mxu0 0
  %7909 = vmatpush1.bf16.msra.mxu0 %v7895
  %7910 = vmatprep.subr.bf16.mxu0 0
  %7911 = vmatpush1.bf16.msra.mxu0 %v7896
  %7912 = vmatprep.subr.bf16.mxu0 0
  %7913 = vmatpush1.bf16.msra.mxu0 %v7897
  %7914 = vmatprep.subr.bf16.mxu0 0
  %7915 = vmatpush1.bf16.msra.mxu0 %v7898
  %7916 = vmatprep.subr.bf16.mxu0 0
  %7917 = vmatpush1.bf16.msra.mxu0 %v7899
  %7918 = vmatprep.subr.bf16.mxu0 0
  %7919 = vmatpush1.bf16.msra.mxu0 0
  %7920 = vmatprep.subr.bf16.mxu0 0
  %7921 = vmatpush1.bf16.msra.mxu0 0
  %7922 = vmatprep.subr.bf16.mxu0 0
  %7923 = vmatpush1.bf16.msra.mxu0 0
  %7924 = vmatprep.subr.bf16.mxu0 0
  %7925 = vmatpush1.bf16.msra.mxu0 0
  %7926 = vmatprep.subr.bf16.mxu0 0
  %7927 = vmatpush1.bf16.msra.mxu0 0
  %7928 = vmatprep.subr.bf16.mxu0 0
  %7929 = vmatpush1.bf16.msra.mxu0 0
  %7930 = vmatprep.subr.bf16.mxu0 0
  %7931 = vmatpush1.bf16.msra.mxu0 0
  %7932 = vmatprep.subr.bf16.mxu0 0
  %7933 = vmatpush1.bf16.msra.mxu0 0
  %7934 = vmatprep.subr.bf16.mxu0 0
  %7935 = vmatpush1.bf16.msra.mxu0 0
  %7936 = vmatprep.subr.bf16.mxu0 0
  %7937 = vmatpush1.bf16.msra.mxu0 0
  %7938 = vmatprep.subr.bf16.mxu0 0
  %7939 = vmatpush1.bf16.msra.mxu0 0
  %7940 = vmatprep.mubr.bf16.mxu0 0
  %7941 = vmatmul.mubr.bf16.gmra.mrb[0].mxu0 %v7906
  %v7942 = vpop.f32.mrb[0].mxu0
  %v7943 = vadd.f32 0.0, %v7942
  %v7944 = vpop.f32.mrb[0].mxu0
  %v7945 = vpop.f32.mrb[0].mxu0
  %v7946 = vpop.f32.mrb[0].mxu0
  %7947 = vdwg.mxu0
  %v7948 = vadd.f32 %v7841, %v7943
  %v7949 = vld [vmem:[%s10] sm:$0x1]
  %v7951 = vlaneseq
  %v7952 = vshrl.u32 %v7951, 7
  %v7953 = vsub.s32 0, %v7952
  %v7954 = vrot.slane %v7949, %v7953
  %v7956 = vadd.f32 %v7948, %v7954
  %v7957 = vmax.f32 %v7956, 0.0
  %v7958 = vpack.c.bf16 %v7957, %v7957
  %v7959 = vld [vmem:[%s11] sm:$0xf]
  %v7960 = vld [vmem:[%s11 + $0x4] sm:$0xf]
  %v7961 = vld [vmem:[%s11 + $0x8] sm:$0xf]
  %v7962 = vld [vmem:[%s11 + $0xc] sm:$0xf]
  %v7963 = vld [vmem:[%s11 + $0x10] sm:$0xf]
  %v7964 = vld [vmem:[%s11 + $0x14] sm:$0xf]
  %v7965 = vld [vmem:[%s11 + $0x18] sm:$0xf]
  %v7966 = vld [vmem:[%s11 + $0x1c] sm:$0xf]
  %v7967 = vld [vmem:[%s11 + $0x20] sm:$0xf]
  %v7968 = vld [vmem:[%s11 + $0x24] sm:$0xf]
  %v7969 = vld [vmem:[%s11 + $0x28] sm:$0xf]
  %v7970 = vld [vmem:[%s11 + $0x2c] sm:$0xf]
  %v7971 = vld [vmem:[%s11 + $0x30] sm:$0xf]
  %v7972 = vld [vmem:[%s11 + $0x34] sm:$0xf]
  %v7973 = vld [vmem:[%s11 + $0x38] sm:$0xf]
  %v7974 = vld [vmem:[%s12] sm:$0x1]
  %v7976 = vlaneseq
  %v7977 = vshrl.u32 %v7976, 7
  %v7978 = vsub.s32 0, %v7977
  %v7979 = vrot.slane %v7974, %v7978
  %v7996 = vunpack.c.l.b16 %v7959
  %v7997 = vunpack.c.l.b16 %v7960
  %v7998 = vunpack.c.l.b16 %v7961
  %v7999 = vunpack.c.l.b16 %v7962
  %v8000 = vunpack.c.l.b16 %v7963
  %v8001 = vunpack.c.l.b16 %v7964
  %v8002 = vunpack.c.l.b16 %v7965
  %v8003 = vunpack.c.l.b16 %v7966
  %v8004 = vunpack.c.l.b16 %v7967
  %v8005 = vunpack.c.l.b16 %v7968
  %v8006 = vunpack.c.l.b16 %v7969
  %v8007 = vunpack.c.l.b16 %v7970
  %v8008 = vunpack.c.l.b16 %v7971
  %v8009 = vunpack.c.l.b16 %v7972
  %v8010 = vunpack.c.l.b16 %v7973
  %v8011 = vpack.c.b16 %v7997, %v7996
  %v8012 = vpack.c.b16 %v7999, %v7998
  %v8013 = vpack.c.b16 %v8001, %v8000
  %v8014 = vpack.c.b16 %v8003, %v8002
  %v8015 = vpack.c.b16 %v8005, %v8004
  %v8016 = vpack.c.b16 %v8007, %v8006
  %v8017 = vpack.c.b16 %v8009, %v8008
  %v8018 = vpack.c.b16 %v8010, %v8010
  %vm8026 = vcmask 982016
  %v8028 = vsel %vm8026, %v7958, 0
  %v8031 = vsel %vm722, %v8018, 0
  %8033 = vmatprep.subr.bf16.mxu0 0
  %8034 = vmatpush1.bf16.msra.mxu0 %v8011
  %8035 = vmatprep.subr.bf16.mxu0 0
  %8036 = vmatpush1.bf16.msra.mxu0 %v8012
  %8037 = vmatprep.subr.bf16.mxu0 0
  %8038 = vmatpush1.bf16.msra.mxu0 %v8013
  %8039 = vmatprep.subr.bf16.mxu0 0
  %8040 = vmatpush1.bf16.msra.mxu0 %v8014
  %8041 = vmatprep.subr.bf16.mxu0 0
  %8042 = vmatpush1.bf16.msra.mxu0 %v8015
  %8043 = vmatprep.subr.bf16.mxu0 0
  %8044 = vmatpush1.bf16.msra.mxu0 %v8016
  %8045 = vmatprep.subr.bf16.mxu0 0
  %8046 = vmatpush1.bf16.msra.mxu0 %v8017
  %8047 = vmatprep.subr.bf16.mxu0 0
  %8048 = vmatpush1.bf16.msra.mxu0 %v8031
  %8049 = vmatprep.subr.bf16.mxu0 0
  %8050 = vmatpush1.bf16.msra.mxu0 0
  %8051 = vmatprep.subr.bf16.mxu0 0
  %8052 = vmatpush1.bf16.msra.mxu0 0
  %8053 = vmatprep.subr.bf16.mxu0 0
  %8054 = vmatpush1.bf16.msra.mxu0 0
  %8055 = vmatprep.subr.bf16.mxu0 0
  %8056 = vmatpush1.bf16.msra.mxu0 0
  %8057 = vmatprep.subr.bf16.mxu0 0
  %8058 = vmatpush1.bf16.msra.mxu0 0
  %8059 = vmatprep.subr.bf16.mxu0 0
  %8060 = vmatpush1.bf16.msra.mxu0 0
  %8061 = vmatprep.subr.bf16.mxu0 0
  %8062 = vmatpush1.bf16.msra.mxu0 0
  %8063 = vmatprep.subr.bf16.mxu0 0
  %8064 = vmatpush1.bf16.msra.mxu0 0
  %8065 = vmatprep.mubr.bf16.mxu0 0
  %8066 = vmatmul.mubr.bf16.gmra.mrb[0].mxu0 %v8028
  %v8067 = vpop.f32.mrb[0].mxu0
  %v8068 = vadd.f32 %v7979, %v8067
  %v8069 = vpop.f32.mrb[0].mxu0
  %v8070 = vpop.f32.mrb[0].mxu0
  %v8071 = vpop.f32.mrb[0].mxu0
  %8072 = vdwg.mxu0
  %v8073 = vmax.f32 %v8068, 0.0
  %v8074 = vpack.c.bf16 %v8073, %v8073
  %v8075 = vld [vmem:[%s13] sm:$0xf]
  %v8076 = vld [vmem:[%s13 + $0x4] sm:$0xf]
  %v8077 = vld [vmem:[%s13 + $0x8] sm:$0xf]
  %v8078 = vld [vmem:[%s13 + $0xc] sm:$0xf]
  %v8079 = vld [vmem:[%s13 + $0x10] sm:$0xf]
  %v8080 = vld [vmem:[%s13 + $0x14] sm:$0xf]
  %v8081 = vld [vmem:[%s13 + $0x18] sm:$0xf]
  %v8082 = vld [vmem:[%s13 + $0x1c] sm:$0xf]
  %v8083 = vld [vmem:[%s13 + $0x20] sm:$0xf]
  %v8084 = vld [vmem:[%s13 + $0x24] sm:$0xf]
  %v8085 = vld [vmem:[%s13 + $0x28] sm:$0x3]
  %v8086 = vld [vmem:[%s14] sm:$0x1]
  %v8088 = vlaneseq
  %v8089 = vshrl.u32 %v8088, 7
  %v8090 = vsub.s32 0, %v8089
  %v8091 = vrot.slane %v8086, %v8090
  %v8104 = vunpack.c.l.b16 %v8075
  %v8105 = vunpack.c.l.b16 %v8076
  %v8106 = vunpack.c.l.b16 %v8077
  %v8107 = vunpack.c.l.b16 %v8078
  %v8108 = vunpack.c.l.b16 %v8079
  %v8109 = vunpack.c.l.b16 %v8080
  %v8110 = vunpack.c.l.b16 %v8081
  %v8111 = vunpack.c.l.b16 %v8082
  %v8112 = vunpack.c.l.b16 %v8083
  %v8113 = vunpack.c.l.b16 %v8084
  %v8114 = vunpack.c.l.b16 %v8085
  %v8115 = vpack.c.b16 %v8105, %v8104
  %v8116 = vpack.c.b16 %v8107, %v8106
  %v8117 = vpack.c.b16 %v8109, %v8108
  %v8118 = vpack.c.b16 %v8111, %v8110
  %v8119 = vpack.c.b16 %v8113, %v8112
  %v8120 = vpack.c.b16 %v8114, %v8114
  %v8127 = vsel %vm853, %v8074, 0
  %v8130 = vsel %vm857, %v8120, 0
  %8132 = vmatprep.subr.bf16.mxu0 0
  %8133 = vmatpush1.bf16.msra.mxu0 %v8115
  %8134 = vmatprep.subr.bf16.mxu0 0
  %8135 = vmatpush1.bf16.msra.mxu0 %v8116
  %8136 = vmatprep.subr.bf16.mxu0 0
  %8137 = vmatpush1.bf16.msra.mxu0 %v8117
  %8138 = vmatprep.subr.bf16.mxu0 0
  %8139 = vmatpush1.bf16.msra.mxu0 %v8118
  %8140 = vmatprep.subr.bf16.mxu0 0
  %8141 = vmatpush1.bf16.msra.mxu0 %v8119
  %8142 = vmatprep.subr.bf16.mxu0 0
  %8143 = vmatpush1.bf16.msra.mxu0 %v8130
  %8144 = vmatprep.subr.bf16.mxu0 0
  %8145 = vmatpush1.bf16.msra.mxu0 0
  %8146 = vmatprep.subr.bf16.mxu0 0
  %8147 = vmatpush1.bf16.msra.mxu0 0
  %8148 = vmatprep.subr.bf16.mxu0 0
  %8149 = vmatpush1.bf16.msra.mxu0 0
  %8150 = vmatprep.subr.bf16.mxu0 0
  %8151 = vmatpush1.bf16.msra.mxu0 0
  %8152 = vmatprep.subr.bf16.mxu0 0
  %8153 = vmatpush1.bf16.msra.mxu0 0
  %8154 = vmatprep.subr.bf16.mxu0 0
  %8155 = vmatpush1.bf16.msra.mxu0 0
  %8156 = vmatprep.subr.bf16.mxu0 0
  %8157 = vmatpush1.bf16.msra.mxu0 0
  %8158 = vmatprep.subr.bf16.mxu0 0
  %8159 = vmatpush1.bf16.msra.mxu0 0
  %8160 = vmatprep.subr.bf16.mxu0 0
  %8161 = vmatpush1.bf16.msra.mxu0 0
  %8162 = vmatprep.subr.bf16.mxu0 0
  %8163 = vmatpush1.bf16.msra.mxu0 0
  %8164 = vmatprep.mubr.bf16.mxu0 0
  %8165 = vmatmul.mubr.bf16.gmra.mrb[0].mxu0 %v8127
  %v8166 = vpop.f32.mrb[0].mxu0
  %v8167 = vadd.f32 %v8091, %v8166
  %v8168 = vpop.f32.mrb[0].mxu0
  %v8169 = vpop.f32.mrb[0].mxu0
  %v8170 = vpop.f32.mrb[0].mxu0
  %8171 = vdwg.mxu0
  %8172 = vst.msk [vmem:[%s15] sm:$0xff] %vm1411, %v8167
  // Predicated region
  $region62: #{lenet5_forward.1} parent=0 // pred_check
    _
  $region63: #{lenet5_forward.1} parent=0 // pred_check_branch
    %8174 = sbr.rel (0) target = $region65
  $region64: #{lenet5_forward.1} parent=0 // pred_region
    _
  $region65: #{lenet5_forward.1} parent=0 // pred_fallthru
    _
  // Predicated region
  $region66: #{lenet5_forward.1} parent=0 // pred_check
    _
  $region67: #{lenet5_forward.1} parent=0 // pred_check_branch
    %8176 = sbr.rel (0) target = $region69
  $region68: #{lenet5_forward.1} parent=0 // pred_region
    _
  $region69: #{lenet5_forward.1} parent=0 // pred_fallthru
    _

</llo_original>
